<compile_context>
chip_gen: v7x
topology: tpu7x:2x2x1
jax: 0.10.0
libtpu: 0.0.40
codegen_flags: <defaults>
</compile_context>

<pallas_src>
import math
import numpy as np
import jax
import jax.numpy as jnp
from jax.experimental import pallas as pl
from jax.experimental.pallas import tpu as pltpu


def _round_up(x, m):
    return ((x + m - 1) // m) * m


# ----------------------------- Fused Pallas kernel ----------------------------

def make_fused_kernel(n_layers, B, T, Hp):
    """Build the fused RadarGRU kernel for fixed (n_layers, B, T, Hp).

    Ref order (inputs, output, scratch):
      x (T*B, F) VMEM,
      layer-0 w_ih (F,3Hp) / w_hh (Hp,3Hp)            VMEM,
      layers 1..L-1 w_ih / w_hh (Hp,3Hp each)         HBM (pl.ANY),
      per layer: b_fold (1,3Hp), b_hn (1,Hp)          VMEM,
      lin_w (Hp,1), lin_b (1,1)                       VMEM,
      out (B,1)                                       VMEM,
      scratch: w_ih_buf (L-1,Hp,3Hp), w_hh_buf (L-1,Hp,3Hp), dma_sems (L-1,2),
               gi_scr (T,B,3Hp), seq_scr (T,B,Hp).
    Gate order matches PyTorch: [r, z, n].
    """
    G = 3 * Hp

    def kernel(*refs):
        i = 0
        x_ref = refs[i]; i += 1
        w_ih0_ref, w_hh0_ref = refs[i], refs[i + 1]; i += 2
        hbm_w = refs[i: i + 2 * (n_layers - 1)]; i += 2 * (n_layers - 1)
        bias_refs = refs[i: i + 2 * n_layers]; i += 2 * n_layers
        lin_w_ref, lin_b_ref = refs[i], refs[i + 1]; i += 2
        out_ref = refs[i]; i += 1
        w_ih_buf, w_hh_buf, dma_sems, gi_scr, seq_scr = refs[i:]

        # Kick off the layer-1..L-1 weight DMAs immediately; they stream from HBM
        # while layer 0's serial recurrence runs.
        for l in range(1, n_layers):
            pltpu.make_async_copy(hbm_w[2 * (l - 1)], w_ih_buf.at[l - 1],
                                  dma_sems.at[l - 1, 0]).start()
            pltpu.make_async_copy(hbm_w[2 * (l - 1) + 1], w_hh_buf.at[l - 1],
                                  dma_sems.at[l - 1, 1]).start()

        cur = x_ref[...]                                      # (T*B, K0), row = t*B + b
        h = None
        for li in range(n_layers):
            b_fold_ref = bias_refs[2 * li]
            b_hn_ref = bias_refs[2 * li + 1]
            if li == 0:
                w_ih_r, w_hh_r = w_ih0_ref, w_hh0_ref
            else:
                # Block only when this layer's weights are actually needed.
                pltpu.make_async_copy(hbm_w[2 * (li - 1)], w_ih_buf.at[li - 1],
                                      dma_sems.at[li - 1, 0]).wait()
                pltpu.make_async_copy(hbm_w[2 * (li - 1) + 1], w_hh_buf.at[li - 1],
                                      dma_sems.at[li - 1, 1]).wait()
                w_ih_r = w_ih_buf.at[li - 1]
                w_hh_r = w_hh_buf.at[li - 1]

            # Hoisted, non-recurrent input projection for all T timesteps at once,
            # staged in VMEM (time-major) and read back per step with leading-dim
            # indexing (plain contiguous loads, no per-step sublane extraction).
            gi_all = (jnp.dot(cur, w_ih_r[...], preferred_element_type=jnp.float32)
                      + b_fold_ref[...])                      # (T*B, 3Hp)
            gi_scr[...] = gi_all.reshape(T, B, G)
            b_hn = jnp.broadcast_to(b_hn_ref[...], (B, Hp))   # hoisted broadcast

            h = jnp.zeros((B, Hp), jnp.float32)               # h0 = 0, as in the module
            for t in range(T):                                # fully unrolled recurrence
                gi = gi_scr[t]                                # (B, 3Hp) contiguous vld
                # w_hh read at point of use: no 48-vreg value kept live across the
                # unroll, so no spill risk.
                gh = jnp.dot(h, w_hh_r[...], preferred_element_type=jnp.float32)
                rz = jax.nn.sigmoid(gi[:, : 2 * Hp] + gh[:, : 2 * Hp])
                r = rz[:, :Hp]
                z = rz[:, Hp:]
                n = jnp.tanh(gi[:, 2 * Hp:] + r * (gh[:, 2 * Hp:] + b_hn))
                h = (1.0 - z) * n + z * h
                if li + 1 < n_layers:
                    seq_scr[t] = h                            # leading-dim VMEM store
            if li + 1 < n_layers:
                cur = seq_scr[...].reshape(T * B, Hp)         # next layer's input (VMEM)

            # TODO(synk): nn.GRU inter-layer dropout (p=0.01, training mode) omitted —
            # kernel reproduces eval/inference semantics only.

        # Linear head on output[:, -1, :].  Padded lanes of h are exactly zero.
        out_ref[...] = (jnp.dot(h, lin_w_ref[...], preferred_element_type=jnp.float32)
                        + lin_b_ref[...])

    return kernel


# ------------------------------- Wrapper ----------------------------------

def radar_gru_forward(x_btf, kparams):
    """x_btf: (B, T, F) batch-first, like the PyTorch module."""
    B, T, F = x_btf.shape
    L = len(kparams["gru"])
    assert L >= 2
    Hp = kparams["gru"][0]["w_hh_p"].shape[0]

    # (B,T,F) -> (T,B,F) -> (T*B,F): tiny (~2 KB) transpose in plain XLA, off the
    # kernel's serial path; gives time-major leading-dim indexing inside the kernel.
    x_tb = jnp.transpose(x_btf, (1, 0, 2)).reshape(T * B, F)

    vmem = pltpu.MemorySpace.VMEM

    inputs = [x_tb, kparams["gru"][0]["w_ih_p"], kparams["gru"][0]["w_hh_p"]]
    in_specs = [pl.BlockSpec(memory_space=vmem)] * 3
    for lp in kparams["gru"][1:]:                       # big weights stay in HBM
        inputs += [lp["w_ih_p"], lp["w_hh_p"]]
        in_specs += [pl.BlockSpec(memory_space=pl.ANY)] * 2
    for lp in kparams["gru"]:                           # tiny biases: VMEM
        inputs += [lp["b_fold"], lp["b_hn"]]
        in_specs += [pl.BlockSpec(memory_space=vmem)] * 2
    inputs += [kparams["lin_w_p"], kparams["lin_b"]]
    in_specs += [pl.BlockSpec(memory_space=vmem)] * 2

    kernel = make_fused_kernel(L, B, T, Hp)
    return pl.pallas_call(
        kernel,
        out_shape=jax.ShapeDtypeStruct((B, 1), jnp.float32),
        in_specs=in_specs,
        out_specs=pl.BlockSpec(memory_space=vmem),
        scratch_shapes=[
            pltpu.VMEM((L - 1, Hp, 3 * Hp), jnp.float32),   # layer-1.. w_ih staging
            pltpu.VMEM((L - 1, Hp, 3 * Hp), jnp.float32),   # layer-1.. w_hh staging
            pltpu.SemaphoreType.DMA((L - 1, 2)),            # per-layer DMA sems
            pltpu.VMEM((T, B, 3 * Hp), jnp.float32),        # hoisted gi staging
            pltpu.VMEM((T, B, Hp), jnp.float32),            # inter-layer activations
        ],
    )(*inputs)


# ----------------------- Deterministic parameter init ----------------------

def init_params(key, n_features, n_hidden, n_layers):
    k = 1.0 / math.sqrt(n_hidden)
    params = {"gru": []}
    for layer in range(n_layers):
        in_dim = n_features if layer == 0 else n_hidden
        key, k1, k2, k3, k4 = jax.random.split(key, 5)
        params["gru"].append(
            {
                # stored transposed: (in_dim, 3H) / (H, 3H); gate order [r, z, n]
                "w_ih_t": jax.random.uniform(k1, (in_dim, 3 * n_hidden), jnp.float32, -k, k),
                "w_hh_t": jax.random.uniform(k2, (n_hidden, 3 * n_hidden), jnp.float32, -k, k),
                "b_ih": jax.random.uniform(k3, (1, 3 * n_hidden), jnp.float32, -k, k),
                "b_hh": jax.random.uniform(k4, (1, 3 * n_hidden), jnp.float32, -k, k),
            }
        )
    key, k5, k6 = jax.random.split(key, 3)
    params["lin_w_t"] = jax.random.uniform(k5, (n_hidden, 1), jnp.float32, -k, k)
    params["lin_b"] = jax.random.uniform(k6, (1, 1), jnp.float32, -k, k)
    return params


def _pad_gates(w, H, Hp):
    """(rows, 3H) -> (rows, 3Hp); gate g lands in lane-aligned columns [g*Hp, g*Hp+H)."""
    parts = []
    for g in range(3):
        blk = w[:, g * H:(g + 1) * H]
        parts.append(jnp.pad(blk, ((0, 0), (0, Hp - H))))
    return jnp.concatenate(parts, axis=1)


def prepare_kernel_params(params, n_hidden):
    """One-time repack/zero-pad of the PyTorch-layout params for the fused kernel."""
    H = n_hidden
    Hp = _round_up(H, 128)
    kp = {"gru": []}
    for li, layer in enumerate(params["gru"]):
        w_ih_p = _pad_gates(layer["w_ih_t"], H, Hp)              # (K, 3Hp)
        if li > 0:                                               # pad K: H -> Hp (zero rows)
            w_ih_p = jnp.pad(w_ih_p, ((0, Hp - H), (0, 0)))
        w_hh_p = jnp.pad(_pad_gates(layer["w_hh_t"], H, Hp), ((0, Hp - H), (0, 0)))
        b_ih_p = _pad_gates(layer["b_ih"], H, Hp)                # (1, 3Hp)
        b_hh_p = _pad_gates(layer["b_hh"], H, Hp)                # (1, 3Hp)
        # Fold b_ih (all gates) and the r/z part of b_hh into the hoisted projection.
        b_fold = b_ih_p + jnp.concatenate(
            [b_hh_p[:, : 2 * Hp], jnp.zeros((1, Hp), jnp.float32)], axis=1)
        b_hn = b_hh_p[:, 2 * Hp:]                                # (1, Hp)
        kp["gru"].append(
            {"w_ih_p": w_ih_p, "w_hh_p": w_hh_p, "b_fold": b_fold, "b_hn": b_hn}
        )
    kp["lin_w_p"] = jnp.pad(params["lin_w_t"], ((0, Hp - H), (0, 0)))  # (Hp, 1)
    kp["lin_b"] = params["lin_b"]                                      # (1, 1)
    return kp


def assert_zero_padding(kparams, H, Hp):
    """Padded lanes of h stay 0 only if padded weight/bias lanes are exactly 0."""
    for li, lp in enumerate(kparams["gru"]):
        w_ih = np.asarray(lp["w_ih_p"]); w_hh = np.asarray(lp["w_hh_p"])
        b_fold = np.asarray(lp["b_fold"]); b_hn = np.asarray(lp["b_hn"])
        for g in range(3):
            assert not w_ih[:, g * Hp + H:(g + 1) * Hp].any()
            assert not w_hh[:, g * Hp + H:(g + 1) * Hp].any()
            assert not b_fold[:, g * Hp + H:(g + 1) * Hp].any()
        assert not w_hh[H:, :].any()
        if li > 0:
            assert not w_ih[H:, :].any()
        assert not b_hn[:, H:].any()
    assert not np.asarray(kparams["lin_w_p"])[H:, :].any()


# ---------------------------- Pure-JAX reference ---------------------------

def reference_forward(x_btf, params):
    h_seq = jnp.transpose(x_btf, (1, 0, 2))  # (T, B, F)
    for layer in params["gru"]:
        H = layer["w_hh_t"].shape[0]
        B = h_seq.shape[1]

        def step(h, x_t, layer=layer, H=H):
            gi = x_t @ layer["w_ih_t"] + layer["b_ih"]
            gh = h @ layer["w_hh_t"] + layer["b_hh"]
            r = jax.nn.sigmoid(gi[:, :H] + gh[:, :H])
            z = jax.nn.sigmoid(gi[:, H:2 * H] + gh[:, H:2 * H])
            n = jnp.tanh(gi[:, 2 * H:] + r * gh[:, 2 * H:])
            h_new = (1.0 - z) * n + z * h
            return h_new, h_new

        h0 = jnp.zeros((B, H), jnp.float32)
        _, h_seq = jax.lax.scan(step, h0, h_seq)
    return h_seq[-1] @ params["lin_w_t"] + params["lin_b"]


# ------------------------------------ Main ---------------------------------

if __name__ == "__main__":
    # Small shapes consistent with the module's forward (batch_first GRU input).
    B, T, F, H, L = 2, 8, 16, 32, 3
    Hp = _round_up(H, 128)

    key = jax.random.PRNGKey(0)
    key, kx = jax.random.split(key)
    x = jax.random.normal(kx, (B, T, F), jnp.float32)  # (batch, seq, features)

    params = init_params(key, n_features=F, n_hidden=H, n_layers=L)
    kparams = prepare_kernel_params(params, n_hidden=H)  # one-time repack, off the hot path
    assert_zero_padding(kparams, H, Hp)                  # padded lanes of h provably stay 0

    forward = jax.jit(radar_gru_forward)
    y = jax.block_until_ready(forward(x, kparams))

    y_ref = reference_forward(x, params)
    np.testing.assert_allclose(np.asarray(y), np.asarray(y_ref), rtol=1e-5, atol=1e-5)
    assert y.shape == (B, 1)

    print("KERNEL_OK")
</pallas_src>

<mosaic_0001>
module attributes {stable_mosaic.version = 11 : i64} {
  func.func @kernel(%arg0: memref<16x16xf32, #tpu.memory_space<vmem>>, %arg1: memref<16x384xf32, #tpu.memory_space<vmem>>, %arg2: memref<128x384xf32, #tpu.memory_space<vmem>>, %arg3: memref<128x384xf32, #tpu.memory_space<any>>, %arg4: memref<128x384xf32, #tpu.memory_space<any>>, %arg5: memref<128x384xf32, #tpu.memory_space<any>>, %arg6: memref<128x384xf32, #tpu.memory_space<any>>, %arg7: memref<1x384xf32, #tpu.memory_space<vmem>>, %arg8: memref<1x128xf32, #tpu.memory_space<vmem>>, %arg9: memref<1x384xf32, #tpu.memory_space<vmem>>, %arg10: memref<1x128xf32, #tpu.memory_space<vmem>>, %arg11: memref<1x384xf32, #tpu.memory_space<vmem>>, %arg12: memref<1x128xf32, #tpu.memory_space<vmem>>, %arg13: memref<128x1xf32, #tpu.memory_space<vmem>>, %arg14: memref<1x1xf32, #tpu.memory_space<vmem>>, %arg15: memref<2x1xf32, #tpu.memory_space<vmem>>, %arg16: memref<2x128x384xf32, #tpu.memory_space<vmem>>, %arg17: memref<2x128x384xf32, #tpu.memory_space<vmem>>, %arg18: memref<2x2x!tpu.dma_semaphore, #tpu.memory_space<semaphore_mem>>, %arg19: memref<8x2x384xf32, #tpu.memory_space<vmem>>, %arg20: memref<8x2x128xf32, #tpu.memory_space<vmem>>) attributes {dimension_semantics = [], scalar_prefetch = 0 : i64, scratch_operands = 5 : i64, tpu.core_type = #tpu.core_type<tc>} {
    %c0_i32 = arith.constant 0 : i32
    %c0_i32_0 = arith.constant 0 : i32
    %c0_i32_1 = arith.constant 0 : i32
    %c0_i32_2 = arith.constant 0 : i32
    %c0_i32_3 = arith.constant 0 : i32
    %0 = tpu.memref_slice %arg16[%c0_i32, %c0_i32_2, %c0_i32_3] : memref<2x128x384xf32, #tpu.memory_space<vmem>> -> memref<1x128x384xf32, #tpu.memory_space<vmem>>
    %1 = tpu.memref_squeeze %0 : memref<1x128x384xf32, #tpu.memory_space<vmem>> -> memref<128x384xf32, #tpu.memory_space<vmem>>
    %2 = tpu.memref_slice %arg18[%c0_i32_0, %c0_i32_1] : memref<2x2x!tpu.dma_semaphore, #tpu.memory_space<semaphore_mem>> -> memref<1x1x!tpu.dma_semaphore, #tpu.memory_space<semaphore_mem>>
    %3 = tpu.memref_squeeze %2 : memref<1x1x!tpu.dma_semaphore, #tpu.memory_space<semaphore_mem>> -> memref<!tpu.dma_semaphore, #tpu.memory_space<semaphore_mem>>
    tpu.enqueue_dma source(%arg3 : memref<128x384xf32, #tpu.memory_space<any>>) target(%1 : memref<128x384xf32, #tpu.memory_space<vmem>>) target_semaphore(%3 : memref<!tpu.dma_semaphore, #tpu.memory_space<semaphore_mem>>)
    %c0_i32_4 = arith.constant 0 : i32
    %c0_i32_5 = arith.constant 0 : i32
    %c1_i32 = arith.constant 1 : i32
    %c0_i32_6 = arith.constant 0 : i32
    %c0_i32_7 = arith.constant 0 : i32
    %4 = tpu.memref_slice %arg17[%c0_i32_4, %c0_i32_6, %c0_i32_7] : memref<2x128x384xf32, #tpu.memory_space<vmem>> -> memref<1x128x384xf32, #tpu.memory_space<vmem>>
    %5 = tpu.memref_squeeze %4 : memref<1x128x384xf32, #tpu.memory_space<vmem>> -> memref<128x384xf32, #tpu.memory_space<vmem>>
    %6 = tpu.memref_slice %arg18[%c0_i32_5, %c1_i32] : memref<2x2x!tpu.dma_semaphore, #tpu.memory_space<semaphore_mem>> -> memref<1x1x!tpu.dma_semaphore, #tpu.memory_space<semaphore_mem>>
    %7 = tpu.memref_squeeze %6 : memref<1x1x!tpu.dma_semaphore, #tpu.memory_space<semaphore_mem>> -> memref<!tpu.dma_semaphore, #tpu.memory_space<semaphore_mem>>
    tpu.enqueue_dma source(%arg4 : memref<128x384xf32, #tpu.memory_space<any>>) target(%5 : memref<128x384xf32, #tpu.memory_space<vmem>>) target_semaphore(%7 : memref<!tpu.dma_semaphore, #tpu.memory_space<semaphore_mem>>)
    %c1_i32_8 = arith.constant 1 : i32
    %c1_i32_9 = arith.constant 1 : i32
    %c0_i32_10 = arith.constant 0 : i32
    %c0_i32_11 = arith.constant 0 : i32
    %c0_i32_12 = arith.constant 0 : i32
    %8 = tpu.memref_slice %arg16[%c1_i32_8, %c0_i32_11, %c0_i32_12] : memref<2x128x384xf32, #tpu.memory_space<vmem>> -> memref<1x128x384xf32, #tpu.memory_space<vmem>>
    %9 = tpu.memref_squeeze %8 : memref<1x128x384xf32, #tpu.memory_space<vmem>> -> memref<128x384xf32, #tpu.memory_space<vmem>>
    %10 = tpu.memref_slice %arg18[%c1_i32_9, %c0_i32_10] : memref<2x2x!tpu.dma_semaphore, #tpu.memory_space<semaphore_mem>> -> memref<1x1x!tpu.dma_semaphore, #tpu.memory_space<semaphore_mem>>
    %11 = tpu.memref_squeeze %10 : memref<1x1x!tpu.dma_semaphore, #tpu.memory_space<semaphore_mem>> -> memref<!tpu.dma_semaphore, #tpu.memory_space<semaphore_mem>>
    tpu.enqueue_dma source(%arg5 : memref<128x384xf32, #tpu.memory_space<any>>) target(%9 : memref<128x384xf32, #tpu.memory_space<vmem>>) target_semaphore(%11 : memref<!tpu.dma_semaphore, #tpu.memory_space<semaphore_mem>>)
    %c1_i32_13 = arith.constant 1 : i32
    %c1_i32_14 = arith.constant 1 : i32
    %c1_i32_15 = arith.constant 1 : i32
    %c0_i32_16 = arith.constant 0 : i32
    %c0_i32_17 = arith.constant 0 : i32
    %12 = tpu.memref_slice %arg17[%c1_i32_13, %c0_i32_16, %c0_i32_17] : memref<2x128x384xf32, #tpu.memory_space<vmem>> -> memref<1x128x384xf32, #tpu.memory_space<vmem>>
    %13 = tpu.memref_squeeze %12 : memref<1x128x384xf32, #tpu.memory_space<vmem>> -> memref<128x384xf32, #tpu.memory_space<vmem>>
    %14 = tpu.memref_slice %arg18[%c1_i32_14, %c1_i32_15] : memref<2x2x!tpu.dma_semaphore, #tpu.memory_space<semaphore_mem>> -> memref<1x1x!tpu.dma_semaphore, #tpu.memory_space<semaphore_mem>>
    %15 = tpu.memref_squeeze %14 : memref<1x1x!tpu.dma_semaphore, #tpu.memory_space<semaphore_mem>> -> memref<!tpu.dma_semaphore, #tpu.memory_space<semaphore_mem>>
    tpu.enqueue_dma source(%arg6 : memref<128x384xf32, #tpu.memory_space<any>>) target(%13 : memref<128x384xf32, #tpu.memory_space<vmem>>) target_semaphore(%15 : memref<!tpu.dma_semaphore, #tpu.memory_space<semaphore_mem>>)
    %c0 = arith.constant 0 : index
    %c0_18 = arith.constant 0 : index
    %16 = vector.load %arg0[%c0, %c0_18] : memref<16x16xf32, #tpu.memory_space<vmem>>, vector<16x16xf32>
    %c0_19 = arith.constant 0 : index
    %c0_20 = arith.constant 0 : index
    %17 = vector.load %arg1[%c0_19, %c0_20] : memref<16x384xf32, #tpu.memory_space<vmem>>, vector<16x384xf32>
    %cst = arith.constant dense<0.000000e+00> : vector<16x384xf32>
    %18 = tpu.matmul %16, %17, %cst {dimension_numbers = #tpu.dot_dimension_numbers<[1], [0], [0], [1], [0, 0, 1, 1], [], []>} : vector<16x16xf32>, vector<16x384xf32>, vector<16x384xf32> -> vector<16x384xf32>
    %c0_21 = arith.constant 0 : index
    %c0_22 = arith.constant 0 : index
    %19 = vector.load %arg7[%c0_21, %c0_22] : memref<1x384xf32, #tpu.memory_space<vmem>>, vector<1x384xf32>
    %20 = vector.broadcast %19 : vector<1x384xf32> to vector<16x384xf32>
    %21 = arith.addf %18, %20 : vector<16x384xf32>
    %22 = vector.shape_cast %21 : vector<16x384xf32> to vector<8x2x384xf32>
    %c0_23 = arith.constant 0 : index
    %c0_24 = arith.constant 0 : index
    %c0_25 = arith.constant 0 : index
    %23 = vector.load %arg19[%c0_23, %c0_24, %c0_25] : memref<8x2x384xf32, #tpu.memory_space<vmem>>, vector<8x2x384xf32>
    tpu.vector_store %arg19[%c0_23, %c0_24, %c0_25], %22 {strides = array<i32>} : memref<8x2x384xf32, #tpu.memory_space<vmem>>, vector<8x2x384xf32>,
    %c0_26 = arith.constant 0 : index
    %c0_27 = arith.constant 0 : index
    %24 = vector.load %arg8[%c0_26, %c0_27] : memref<1x128xf32, #tpu.memory_space<vmem>>, vector<1x128xf32>
    %25 = vector.shape_cast %24 : vector<1x128xf32> to vector<1x128xf32>
    %26 = vector.broadcast %25 : vector<1x128xf32> to vector<2x128xf32>
    %cst_28 = arith.constant 0.000000e+00 : f32
    %27 = vector.broadcast %cst_28 : f32 to vector<2x128xf32>
    %c0_29 = arith.constant 0 : index
    %c0_30 = arith.constant 0 : index
    %c0_31 = arith.constant 0 : index
    %28 = vector.load %arg19[%c0_29, %c0_30, %c0_31] : memref<8x2x384xf32, #tpu.memory_space<vmem>>, vector<1x2x384xf32>
    %29 = vector.shape_cast %28 : vector<1x2x384xf32> to vector<2x384xf32>
    %c0_32 = arith.constant 0 : index
    %c0_33 = arith.constant 0 : index
    %30 = vector.load %arg2[%c0_32, %c0_33] : memref<128x384xf32, #tpu.memory_space<vmem>>, vector<128x384xf32>
    %cst_34 = arith.constant dense<0.000000e+00> : vector<2x384xf32>
    %31 = tpu.matmul %27, %30, %cst_34 {dimension_numbers = #tpu.dot_dimension_numbers<[1], [0], [0], [1], [0, 0, 1, 1], [], []>} : vector<2x128xf32>, vector<128x384xf32>, vector<2x384xf32> -> vector<2x384xf32>
    %32 = vector.extract_strided_slice %29 {offsets = [0, 0], sizes = [2, 256], strides = [1, 1]} : vector<2x384xf32> to vector<2x256xf32>
    %33 = vector.extract_strided_slice %31 {offsets = [0, 0], sizes = [2, 256], strides = [1, 1]} : vector<2x384xf32> to vector<2x256xf32>
    %34 = arith.addf %32, %33 : vector<2x256xf32>
    %35 = arith.negf %34 : vector<2x256xf32>
    %36 = math.exp %35 : vector<2x256xf32>
    %cst_35 = arith.constant 1.000000e+00 : f32
    %37 = vector.broadcast %cst_35 : f32 to vector<2x256xf32>
    %38 = arith.addf %37, %36 : vector<2x256xf32>
    %39 = arith.divf %37, %38 : vector<2x256xf32>
    %40 = vector.extract_strided_slice %39 {offsets = [0, 0], sizes = [2, 128], strides = [1, 1]} : vector<2x256xf32> to vector<2x128xf32>
    %41 = vector.extract_strided_slice %39 {offsets = [0, 128], sizes = [2, 128], strides = [1, 1]} : vector<2x256xf32> to vector<2x128xf32>
    %42 = vector.extract_strided_slice %29 {offsets = [0, 256], sizes = [2, 128], strides = [1, 1]} : vector<2x384xf32> to vector<2x128xf32>
    %43 = vector.extract_strided_slice %31 {offsets = [0, 256], sizes = [2, 128], strides = [1, 1]} : vector<2x384xf32> to vector<2x128xf32>
    %44 = arith.addf %43, %26 : vector<2x128xf32>
    %45 = arith.mulf %40, %44 : vector<2x128xf32>
    %46 = arith.addf %42, %45 : vector<2x128xf32>
    %47 = math.tanh %46 : vector<2x128xf32>
    %cst_36 = arith.constant 1.000000e+00 : f32
    %48 = vector.broadcast %cst_36 : f32 to vector<2x128xf32>
    %49 = arith.subf %48, %41 : vector<2x128xf32>
    %50 = arith.mulf %49, %47 : vector<2x128xf32>
    %51 = arith.mulf %41, %27 : vector<2x128xf32>
    %52 = arith.addf %50, %51 : vector<2x128xf32>
    %c0_37 = arith.constant 0 : index
    %c0_38 = arith.constant 0 : index
    %c0_39 = arith.constant 0 : index
    %53 = vector.load %arg20[%c0_37, %c0_38, %c0_39] : memref<8x2x128xf32, #tpu.memory_space<vmem>>, vector<1x2x128xf32>
    %54 = vector.shape_cast %53 : vector<1x2x128xf32> to vector<2x128xf32>
    %55 = vector.shape_cast %52 : vector<2x128xf32> to vector<1x2x128xf32>
    tpu.vector_store %arg20[%c0_37, %c0_38, %c0_39], %55 {strides = array<i32>} : memref<8x2x128xf32, #tpu.memory_space<vmem>>, vector<1x2x128xf32>,
    %c1 = arith.constant 1 : index
    %c0_40 = arith.constant 0 : index
    %c0_41 = arith.constant 0 : index
    %56 = vector.load %arg19[%c1, %c0_40, %c0_41] : memref<8x2x384xf32, #tpu.memory_space<vmem>>, vector<1x2x384xf32>
    %57 = vector.shape_cast %56 : vector<1x2x384xf32> to vector<2x384xf32>
    %c0_42 = arith.constant 0 : index
    %c0_43 = arith.constant 0 : index
    %58 = vector.load %arg2[%c0_42, %c0_43] : memref<128x384xf32, #tpu.memory_space<vmem>>, vector<128x384xf32>
    %cst_44 = arith.constant dense<0.000000e+00> : vector<2x384xf32>
    %59 = tpu.matmul %52, %58, %cst_44 {dimension_numbers = #tpu.dot_dimension_numbers<[1], [0], [0], [1], [0, 0, 1, 1], [], []>} : vector<2x128xf32>, vector<128x384xf32>, vector<2x384xf32> -> vector<2x384xf32>
    %60 = vector.extract_strided_slice %57 {offsets = [0, 0], sizes = [2, 256], strides = [1, 1]} : vector<2x384xf32> to vector<2x256xf32>
    %61 = vector.extract_strided_slice %59 {offsets = [0, 0], sizes = [2, 256], strides = [1, 1]} : vector<2x384xf32> to vector<2x256xf32>
    %62 = arith.addf %60, %61 : vector<2x256xf32>
    %63 = arith.negf %62 : vector<2x256xf32>
    %64 = math.exp %63 : vector<2x256xf32>
    %cst_45 = arith.constant 1.000000e+00 : f32
    %65 = vector.broadcast %cst_45 : f32 to vector<2x256xf32>
    %66 = arith.addf %65, %64 : vector<2x256xf32>
    %67 = arith.divf %65, %66 : vector<2x256xf32>
    %68 = vector.extract_strided_slice %67 {offsets = [0, 0], sizes = [2, 128], strides = [1, 1]} : vector<2x256xf32> to vector<2x128xf32>
    %69 = vector.extract_strided_slice %67 {offsets = [0, 128], sizes = [2, 128], strides = [1, 1]} : vector<2x256xf32> to vector<2x128xf32>
    %70 = vector.extract_strided_slice %57 {offsets = [0, 256], sizes = [2, 128], strides = [1, 1]} : vector<2x384xf32> to vector<2x128xf32>
    %71 = vector.extract_strided_slice %59 {offsets = [0, 256], sizes = [2, 128], strides = [1, 1]} : vector<2x384xf32> to vector<2x128xf32>
    %72 = arith.addf %71, %26 : vector<2x128xf32>
    %73 = arith.mulf %68, %72 : vector<2x128xf32>
    %74 = arith.addf %70, %73 : vector<2x128xf32>
    %75 = math.tanh %74 : vector<2x128xf32>
    %cst_46 = arith.constant 1.000000e+00 : f32
    %76 = vector.broadcast %cst_46 : f32 to vector<2x128xf32>
    %77 = arith.subf %76, %69 : vector<2x128xf32>
    %78 = arith.mulf %77, %75 : vector<2x128xf32>
    %79 = arith.mulf %69, %52 : vector<2x128xf32>
    %80 = arith.addf %78, %79 : vector<2x128xf32>
    %c1_47 = arith.constant 1 : index
    %c0_48 = arith.constant 0 : index
    %c0_49 = arith.constant 0 : index
    %81 = vector.load %arg20[%c1_47, %c0_48, %c0_49] : memref<8x2x128xf32, #tpu.memory_space<vmem>>, vector<1x2x128xf32>
    %82 = vector.shape_cast %81 : vector<1x2x128xf32> to vector<2x128xf32>
    %83 = vector.shape_cast %80 : vector<2x128xf32> to vector<1x2x128xf32>
    tpu.vector_store %arg20[%c1_47, %c0_48, %c0_49], %83 {strides = array<i32>} : memref<8x2x128xf32, #tpu.memory_space<vmem>>, vector<1x2x128xf32>,
    %c2 = arith.constant 2 : index
    %c0_50 = arith.constant 0 : index
    %c0_51 = arith.constant 0 : index
    %84 = vector.load %arg19[%c2, %c0_50, %c0_51] : memref<8x2x384xf32, #tpu.memory_space<vmem>>, vector<1x2x384xf32>
    %85 = vector.shape_cast %84 : vector<1x2x384xf32> to vector<2x384xf32>
    %c0_52 = arith.constant 0 : index
    %c0_53 = arith.constant 0 : index
    %86 = vector.load %arg2[%c0_52, %c0_53] : memref<128x384xf32, #tpu.memory_space<vmem>>, vector<128x384xf32>
    %cst_54 = arith.constant dense<0.000000e+00> : vector<2x384xf32>
    %87 = tpu.matmul %80, %86, %cst_54 {dimension_numbers = #tpu.dot_dimension_numbers<[1], [0], [0], [1], [0, 0, 1, 1], [], []>} : vector<2x128xf32>, vector<128x384xf32>, vector<2x384xf32> -> vector<2x384xf32>
    %88 = vector.extract_strided_slice %85 {offsets = [0, 0], sizes = [2, 256], strides = [1, 1]} : vector<2x384xf32> to vector<2x256xf32>
    %89 = vector.extract_strided_slice %87 {offsets = [0, 0], sizes = [2, 256], strides = [1, 1]} : vector<2x384xf32> to vector<2x256xf32>
    %90 = arith.addf %88, %89 : vector<2x256xf32>
    %91 = arith.negf %90 : vector<2x256xf32>
    %92 = math.exp %91 : vector<2x256xf32>
    %cst_55 = arith.constant 1.000000e+00 : f32
    %93 = vector.broadcast %cst_55 : f32 to vector<2x256xf32>
    %94 = arith.addf %93, %92 : vector<2x256xf32>
    %95 = arith.divf %93, %94 : vector<2x256xf32>
    %96 = vector.extract_strided_slice %95 {offsets = [0, 0], sizes = [2, 128], strides = [1, 1]} : vector<2x256xf32> to vector<2x128xf32>
    %97 = vector.extract_strided_slice %95 {offsets = [0, 128], sizes = [2, 128], strides = [1, 1]} : vector<2x256xf32> to vector<2x128xf32>
    %98 = vector.extract_strided_slice %85 {offsets = [0, 256], sizes = [2, 128], strides = [1, 1]} : vector<2x384xf32> to vector<2x128xf32>
    %99 = vector.extract_strided_slice %87 {offsets = [0, 256], sizes = [2, 128], strides = [1, 1]} : vector<2x384xf32> to vector<2x128xf32>
    %100 = arith.addf %99, %26 : vector<2x128xf32>
    %101 = arith.mulf %96, %100 : vector<2x128xf32>
    %102 = arith.addf %98, %101 : vector<2x128xf32>
    %103 = math.tanh %102 : vector<2x128xf32>
    %cst_56 = arith.constant 1.000000e+00 : f32
    %104 = vector.broadcast %cst_56 : f32 to vector<2x128xf32>
    %105 = arith.subf %104, %97 : vector<2x128xf32>
    %106 = arith.mulf %105, %103 : vector<2x128xf32>
    %107 = arith.mulf %97, %80 : vector<2x128xf32>
    %108 = arith.addf %106, %107 : vector<2x128xf32>
    %c2_57 = arith.constant 2 : index
    %c0_58 = arith.constant 0 : index
    %c0_59 = arith.constant 0 : index
    %109 = vector.load %arg20[%c2_57, %c0_58, %c0_59] : memref<8x2x128xf32, #tpu.memory_space<vmem>>, vector<1x2x128xf32>
    %110 = vector.shape_cast %109 : vector<1x2x128xf32> to vector<2x128xf32>
    %111 = vector.shape_cast %108 : vector<2x128xf32> to vector<1x2x128xf32>
    tpu.vector_store %arg20[%c2_57, %c0_58, %c0_59], %111 {strides = array<i32>} : memref<8x2x128xf32, #tpu.memory_space<vmem>>, vector<1x2x128xf32>,
    %c3 = arith.constant 3 : index
    %c0_60 = arith.constant 0 : index
    %c0_61 = arith.constant 0 : index
    %112 = vector.load %arg19[%c3, %c0_60, %c0_61] : memref<8x2x384xf32, #tpu.memory_space<vmem>>, vector<1x2x384xf32>
    %113 = vector.shape_cast %112 : vector<1x2x384xf32> to vector<2x384xf32>
    %c0_62 = arith.constant 0 : index
    %c0_63 = arith.constant 0 : index
    %114 = vector.load %arg2[%c0_62, %c0_63] : memref<128x384xf32, #tpu.memory_space<vmem>>, vector<128x384xf32>
    %cst_64 = arith.constant dense<0.000000e+00> : vector<2x384xf32>
    %115 = tpu.matmul %108, %114, %cst_64 {dimension_numbers = #tpu.dot_dimension_numbers<[1], [0], [0], [1], [0, 0, 1, 1], [], []>} : vector<2x128xf32>, vector<128x384xf32>, vector<2x384xf32> -> vector<2x384xf32>
    %116 = vector.extract_strided_slice %113 {offsets = [0, 0], sizes = [2, 256], strides = [1, 1]} : vector<2x384xf32> to vector<2x256xf32>
    %117 = vector.extract_strided_slice %115 {offsets = [0, 0], sizes = [2, 256], strides = [1, 1]} : vector<2x384xf32> to vector<2x256xf32>
    %118 = arith.addf %116, %117 : vector<2x256xf32>
    %119 = arith.negf %118 : vector<2x256xf32>
    %120 = math.exp %119 : vector<2x256xf32>
    %cst_65 = arith.constant 1.000000e+00 : f32
    %121 = vector.broadcast %cst_65 : f32 to vector<2x256xf32>
    %122 = arith.addf %121, %120 : vector<2x256xf32>
    %123 = arith.divf %121, %122 : vector<2x256xf32>
    %124 = vector.extract_strided_slice %123 {offsets = [0, 0], sizes = [2, 128], strides = [1, 1]} : vector<2x256xf32> to vector<2x128xf32>
    %125 = vector.extract_strided_slice %123 {offsets = [0, 128], sizes = [2, 128], strides = [1, 1]} : vector<2x256xf32> to vector<2x128xf32>
    %126 = vector.extract_strided_slice %113 {offsets = [0, 256], sizes = [2, 128], strides = [1, 1]} : vector<2x384xf32> to vector<2x128xf32>
    %127 = vector.extract_strided_slice %115 {offsets = [0, 256], sizes = [2, 128], strides = [1, 1]} : vector<2x384xf32> to vector<2x128xf32>
    %128 = arith.addf %127, %26 : vector<2x128xf32>
    %129 = arith.mulf %124, %128 : vector<2x128xf32>
    %130 = arith.addf %126, %129 : vector<2x128xf32>
    %131 = math.tanh %130 : vector<2x128xf32>
    %cst_66 = arith.constant 1.000000e+00 : f32
    %132 = vector.broadcast %cst_66 : f32 to vector<2x128xf32>
    %133 = arith.subf %132, %125 : vector<2x128xf32>
    %134 = arith.mulf %133, %131 : vector<2x128xf32>
    %135 = arith.mulf %125, %108 : vector<2x128xf32>
    %136 = arith.addf %134, %135 : vector<2x128xf32>
    %c3_67 = arith.constant 3 : index
    %c0_68 = arith.constant 0 : index
    %c0_69 = arith.constant 0 : index
    %137 = vector.load %arg20[%c3_67, %c0_68, %c0_69] : memref<8x2x128xf32, #tpu.memory_space<vmem>>, vector<1x2x128xf32>
    %138 = vector.shape_cast %137 : vector<1x2x128xf32> to vector<2x128xf32>
    %139 = vector.shape_cast %136 : vector<2x128xf32> to vector<1x2x128xf32>
    tpu.vector_store %arg20[%c3_67, %c0_68, %c0_69], %139 {strides = array<i32>} : memref<8x2x128xf32, #tpu.memory_space<vmem>>, vector<1x2x128xf32>,
    %c4 = arith.constant 4 : index
    %c0_70 = arith.constant 0 : index
    %c0_71 = arith.constant 0 : index
    %140 = vector.load %arg19[%c4, %c0_70, %c0_71] : memref<8x2x384xf32, #tpu.memory_space<vmem>>, vector<1x2x384xf32>
    %141 = vector.shape_cast %140 : vector<1x2x384xf32> to vector<2x384xf32>
    %c0_72 = arith.constant 0 : index
    %c0_73 = arith.constant 0 : index
    %142 = vector.load %arg2[%c0_72, %c0_73] : memref<128x384xf32, #tpu.memory_space<vmem>>, vector<128x384xf32>
    %cst_74 = arith.constant dense<0.000000e+00> : vector<2x384xf32>
    %143 = tpu.matmul %136, %142, %cst_74 {dimension_numbers = #tpu.dot_dimension_numbers<[1], [0], [0], [1], [0, 0, 1, 1], [], []>} : vector<2x128xf32>, vector<128x384xf32>, vector<2x384xf32> -> vector<2x384xf32>
    %144 = vector.extract_strided_slice %141 {offsets = [0, 0], sizes = [2, 256], strides = [1, 1]} : vector<2x384xf32> to vector<2x256xf32>
    %145 = vector.extract_strided_slice %143 {offsets = [0, 0], sizes = [2, 256], strides = [1, 1]} : vector<2x384xf32> to vector<2x256xf32>
    %146 = arith.addf %144, %145 : vector<2x256xf32>
    %147 = arith.negf %146 : vector<2x256xf32>
    %148 = math.exp %147 : vector<2x256xf32>
    %cst_75 = arith.constant 1.000000e+00 : f32
    %149 = vector.broadcast %cst_75 : f32 to vector<2x256xf32>
    %150 = arith.addf %149, %148 : vector<2x256xf32>
    %151 = arith.divf %149, %150 : vector<2x256xf32>
    %152 = vector.extract_strided_slice %151 {offsets = [0, 0], sizes = [2, 128], strides = [1, 1]} : vector<2x256xf32> to vector<2x128xf32>
    %153 = vector.extract_strided_slice %151 {offsets = [0, 128], sizes = [2, 128], strides = [1, 1]} : vector<2x256xf32> to vector<2x128xf32>
    %154 = vector.extract_strided_slice %141 {offsets = [0, 256], sizes = [2, 128], strides = [1, 1]} : vector<2x384xf32> to vector<2x128xf32>
    %155 = vector.extract_strided_slice %143 {offsets = [0, 256], sizes = [2, 128], strides = [1, 1]} : vector<2x384xf32> to vector<2x128xf32>
    %156 = arith.addf %155, %26 : vector<2x128xf32>
    %157 = arith.mulf %152, %156 : vector<2x128xf32>
    %158 = arith.addf %154, %157 : vector<2x128xf32>
    %159 = math.tanh %158 : vector<2x128xf32>
    %cst_76 = arith.constant 1.000000e+00 : f32
    %160 = vector.broadcast %cst_76 : f32 to vector<2x128xf32>
    %161 = arith.subf %160, %153 : vector<2x128xf32>
    %162 = arith.mulf %161, %159 : vector<2x128xf32>
    %163 = arith.mulf %153, %136 : vector<2x128xf32>
    %164 = arith.addf %162, %163 : vector<2x128xf32>
    %c4_77 = arith.constant 4 : index
    %c0_78 = arith.constant 0 : index
    %c0_79 = arith.constant 0 : index
    %165 = vector.load %arg20[%c4_77, %c0_78, %c0_79] : memref<8x2x128xf32, #tpu.memory_space<vmem>>, vector<1x2x128xf32>
    %166 = vector.shape_cast %165 : vector<1x2x128xf32> to vector<2x128xf32>
    %167 = vector.shape_cast %164 : vector<2x128xf32> to vector<1x2x128xf32>
    tpu.vector_store %arg20[%c4_77, %c0_78, %c0_79], %167 {strides = array<i32>} : memref<8x2x128xf32, #tpu.memory_space<vmem>>, vector<1x2x128xf32>,
    %c5 = arith.constant 5 : index
    %c0_80 = arith.constant 0 : index
    %c0_81 = arith.constant 0 : index
    %168 = vector.load %arg19[%c5, %c0_80, %c0_81] : memref<8x2x384xf32, #tpu.memory_space<vmem>>, vector<1x2x384xf32>
    %169 = vector.shape_cast %168 : vector<1x2x384xf32> to vector<2x384xf32>
    %c0_82 = arith.constant 0 : index
    %c0_83 = arith.constant 0 : index
    %170 = vector.load %arg2[%c0_82, %c0_83] : memref<128x384xf32, #tpu.memory_space<vmem>>, vector<128x384xf32>
    %cst_84 = arith.constant dense<0.000000e+00> : vector<2x384xf32>
    %171 = tpu.matmul %164, %170, %cst_84 {dimension_numbers = #tpu.dot_dimension_numbers<[1], [0], [0], [1], [0, 0, 1, 1], [], []>} : vector<2x128xf32>, vector<128x384xf32>, vector<2x384xf32> -> vector<2x384xf32>
    %172 = vector.extract_strided_slice %169 {offsets = [0, 0], sizes = [2, 256], strides = [1, 1]} : vector<2x384xf32> to vector<2x256xf32>
    %173 = vector.extract_strided_slice %171 {offsets = [0, 0], sizes = [2, 256], strides = [1, 1]} : vector<2x384xf32> to vector<2x256xf32>
    %174 = arith.addf %172, %173 : vector<2x256xf32>
    %175 = arith.negf %174 : vector<2x256xf32>
    %176 = math.exp %175 : vector<2x256xf32>
    %cst_85 = arith.constant 1.000000e+00 : f32
    %177 = vector.broadcast %cst_85 : f32 to vector<2x256xf32>
    %178 = arith.addf %177, %176 : vector<2x256xf32>
    %179 = arith.divf %177, %178 : vector<2x256xf32>
    %180 = vector.extract_strided_slice %179 {offsets = [0, 0], sizes = [2, 128], strides = [1, 1]} : vector<2x256xf32> to vector<2x128xf32>
    %181 = vector.extract_strided_slice %179 {offsets = [0, 128], sizes = [2, 128], strides = [1, 1]} : vector<2x256xf32> to vector<2x128xf32>
    %182 = vector.extract_strided_slice %169 {offsets = [0, 256], sizes = [2, 128], strides = [1, 1]} : vector<2x384xf32> to vector<2x128xf32>
    %183 = vector.extract_strided_slice %171 {offsets = [0, 256], sizes = [2, 128], strides = [1, 1]} : vector<2x384xf32> to vector<2x128xf32>
    %184 = arith.addf %183, %26 : vector<2x128xf32>
    %185 = arith.mulf %180, %184 : vector<2x128xf32>
    %186 = arith.addf %182, %185 : vector<2x128xf32>
    %187 = math.tanh %186 : vector<2x128xf32>
    %cst_86 = arith.constant 1.000000e+00 : f32
    %188 = vector.broadcast %cst_86 : f32 to vector<2x128xf32>
    %189 = arith.subf %188, %181 : vector<2x128xf32>
    %190 = arith.mulf %189, %187 : vector<2x128xf32>
    %191 = arith.mulf %181, %164 : vector<2x128xf32>
    %192 = arith.addf %190, %191 : vector<2x128xf32>
    %c5_87 = arith.constant 5 : index
    %c0_88 = arith.constant 0 : index
    %c0_89 = arith.constant 0 : index
    %193 = vector.load %arg20[%c5_87, %c0_88, %c0_89] : memref<8x2x128xf32, #tpu.memory_space<vmem>>, vector<1x2x128xf32>
    %194 = vector.shape_cast %193 : vector<1x2x128xf32> to vector<2x128xf32>
    %195 = vector.shape_cast %192 : vector<2x128xf32> to vector<1x2x128xf32>
    tpu.vector_store %arg20[%c5_87, %c0_88, %c0_89], %195 {strides = array<i32>} : memref<8x2x128xf32, #tpu.memory_space<vmem>>, vector<1x2x128xf32>,
    %c6 = arith.constant 6 : index
    %c0_90 = arith.constant 0 : index
    %c0_91 = arith.constant 0 : index
    %196 = vector.load %arg19[%c6, %c0_90, %c0_91] : memref<8x2x384xf32, #tpu.memory_space<vmem>>, vector<1x2x384xf32>
    %197 = vector.shape_cast %196 : vector<1x2x384xf32> to vector<2x384xf32>
    %c0_92 = arith.constant 0 : index
    %c0_93 = arith.constant 0 : index
    %198 = vector.load %arg2[%c0_92, %c0_93] : memref<128x384xf32, #tpu.memory_space<vmem>>, vector<128x384xf32>
    %cst_94 = arith.constant dense<0.000000e+00> : vector<2x384xf32>
    %199 = tpu.matmul %192, %198, %cst_94 {dimension_numbers = #tpu.dot_dimension_numbers<[1], [0], [0], [1], [0, 0, 1, 1], [], []>} : vector<2x128xf32>, vector<128x384xf32>, vector<2x384xf32> -> vector<2x384xf32>
    %200 = vector.extract_strided_slice %197 {offsets = [0, 0], sizes = [2, 256], strides = [1, 1]} : vector<2x384xf32> to vector<2x256xf32>
    %201 = vector.extract_strided_slice %199 {offsets = [0, 0], sizes = [2, 256], strides = [1, 1]} : vector<2x384xf32> to vector<2x256xf32>
    %202 = arith.addf %200, %201 : vector<2x256xf32>
    %203 = arith.negf %202 : vector<2x256xf32>
    %204 = math.exp %203 : vector<2x256xf32>
    %cst_95 = arith.constant 1.000000e+00 : f32
    %205 = vector.broadcast %cst_95 : f32 to vector<2x256xf32>
    %206 = arith.addf %205, %204 : vector<2x256xf32>
    %207 = arith.divf %205, %206 : vector<2x256xf32>
    %208 = vector.extract_strided_slice %207 {offsets = [0, 0], sizes = [2, 128], strides = [1, 1]} : vector<2x256xf32> to vector<2x128xf32>
    %209 = vector.extract_strided_slice %207 {offsets = [0, 128], sizes = [2, 128], strides = [1, 1]} : vector<2x256xf32> to vector<2x128xf32>
    %210 = vector.extract_strided_slice %197 {offsets = [0, 256], sizes = [2, 128], strides = [1, 1]} : vector<2x384xf32> to vector<2x128xf32>
    %211 = vector.extract_strided_slice %199 {offsets = [0, 256], sizes = [2, 128], strides = [1, 1]} : vector<2x384xf32> to vector<2x128xf32>
    %212 = arith.addf %211, %26 : vector<2x128xf32>
    %213 = arith.mulf %208, %212 : vector<2x128xf32>
    %214 = arith.addf %210, %213 : vector<2x128xf32>
    %215 = math.tanh %214 : vector<2x128xf32>
    %cst_96 = arith.constant 1.000000e+00 : f32
    %216 = vector.broadcast %cst_96 : f32 to vector<2x128xf32>
    %217 = arith.subf %216, %209 : vector<2x128xf32>
    %218 = arith.mulf %217, %215 : vector<2x128xf32>
    %219 = arith.mulf %209, %192 : vector<2x128xf32>
    %220 = arith.addf %218, %219 : vector<2x128xf32>
    %c6_97 = arith.constant 6 : index
    %c0_98 = arith.constant 0 : index
    %c0_99 = arith.constant 0 : index
    %221 = vector.load %arg20[%c6_97, %c0_98, %c0_99] : memref<8x2x128xf32, #tpu.memory_space<vmem>>, vector<1x2x128xf32>
    %222 = vector.shape_cast %221 : vector<1x2x128xf32> to vector<2x128xf32>
    %223 = vector.shape_cast %220 : vector<2x128xf32> to vector<1x2x128xf32>
    tpu.vector_store %arg20[%c6_97, %c0_98, %c0_99], %223 {strides = array<i32>} : memref<8x2x128xf32, #tpu.memory_space<vmem>>, vector<1x2x128xf32>,
    %c7 = arith.constant 7 : index
    %c0_100 = arith.constant 0 : index
    %c0_101 = arith.constant 0 : index
    %224 = vector.load %arg19[%c7, %c0_100, %c0_101] : memref<8x2x384xf32, #tpu.memory_space<vmem>>, vector<1x2x384xf32>
    %225 = vector.shape_cast %224 : vector<1x2x384xf32> to vector<2x384xf32>
    %c0_102 = arith.constant 0 : index
    %c0_103 = arith.constant 0 : index
    %226 = vector.load %arg2[%c0_102, %c0_103] : memref<128x384xf32, #tpu.memory_space<vmem>>, vector<128x384xf32>
    %cst_104 = arith.constant dense<0.000000e+00> : vector<2x384xf32>
    %227 = tpu.matmul %220, %226, %cst_104 {dimension_numbers = #tpu.dot_dimension_numbers<[1], [0], [0], [1], [0, 0, 1, 1], [], []>} : vector<2x128xf32>, vector<128x384xf32>, vector<2x384xf32> -> vector<2x384xf32>
    %228 = vector.extract_strided_slice %225 {offsets = [0, 0], sizes = [2, 256], strides = [1, 1]} : vector<2x384xf32> to vector<2x256xf32>
    %229 = vector.extract_strided_slice %227 {offsets = [0, 0], sizes = [2, 256], strides = [1, 1]} : vector<2x384xf32> to vector<2x256xf32>
    %230 = arith.addf %228, %229 : vector<2x256xf32>
    %231 = arith.negf %230 : vector<2x256xf32>
    %232 = math.exp %231 : vector<2x256xf32>
    %cst_105 = arith.constant 1.000000e+00 : f32
    %233 = vector.broadcast %cst_105 : f32 to vector<2x256xf32>
    %234 = arith.addf %233, %232 : vector<2x256xf32>
    %235 = arith.divf %233, %234 : vector<2x256xf32>
    %236 = vector.extract_strided_slice %235 {offsets = [0, 0], sizes = [2, 128], strides = [1, 1]} : vector<2x256xf32> to vector<2x128xf32>
    %237 = vector.extract_strided_slice %235 {offsets = [0, 128], sizes = [2, 128], strides = [1, 1]} : vector<2x256xf32> to vector<2x128xf32>
    %238 = vector.extract_strided_slice %225 {offsets = [0, 256], sizes = [2, 128], strides = [1, 1]} : vector<2x384xf32> to vector<2x128xf32>
    %239 = vector.extract_strided_slice %227 {offsets = [0, 256], sizes = [2, 128], strides = [1, 1]} : vector<2x384xf32> to vector<2x128xf32>
    %240 = arith.addf %239, %26 : vector<2x128xf32>
    %241 = arith.mulf %236, %240 : vector<2x128xf32>
    %242 = arith.addf %238, %241 : vector<2x128xf32>
    %243 = math.tanh %242 : vector<2x128xf32>
    %cst_106 = arith.constant 1.000000e+00 : f32
    %244 = vector.broadcast %cst_106 : f32 to vector<2x128xf32>
    %245 = arith.subf %244, %237 : vector<2x128xf32>
    %246 = arith.mulf %245, %243 : vector<2x128xf32>
    %247 = arith.mulf %237, %220 : vector<2x128xf32>
    %248 = arith.addf %246, %247 : vector<2x128xf32>
    %c7_107 = arith.constant 7 : index
    %c0_108 = arith.constant 0 : index
    %c0_109 = arith.constant 0 : index
    %249 = vector.load %arg20[%c7_107, %c0_108, %c0_109] : memref<8x2x128xf32, #tpu.memory_space<vmem>>, vector<1x2x128xf32>
    %250 = vector.shape_cast %249 : vector<1x2x128xf32> to vector<2x128xf32>
    %251 = vector.shape_cast %248 : vector<2x128xf32> to vector<1x2x128xf32>
    tpu.vector_store %arg20[%c7_107, %c0_108, %c0_109], %251 {strides = array<i32>} : memref<8x2x128xf32, #tpu.memory_space<vmem>>, vector<1x2x128xf32>,
    %c0_110 = arith.constant 0 : index
    %c0_111 = arith.constant 0 : index
    %c0_112 = arith.constant 0 : index
    %252 = vector.load %arg20[%c0_110, %c0_111, %c0_112] : memref<8x2x128xf32, #tpu.memory_space<vmem>>, vector<8x2x128xf32>
    %253 = vector.shape_cast %252 : vector<8x2x128xf32> to vector<16x128xf32>
    %c0_i32_113 = arith.constant 0 : i32
    %c0_i32_114 = arith.constant 0 : i32
    %c0_i32_115 = arith.constant 0 : i32
    %c0_i32_116 = arith.constant 0 : i32
    %c0_i32_117 = arith.constant 0 : i32
    %254 = tpu.memref_slice %arg16[%c0_i32_113, %c0_i32_116, %c0_i32_117] : memref<2x128x384xf32, #tpu.memory_space<vmem>> -> memref<1x128x384xf32, #tpu.memory_space<vmem>>
    %255 = tpu.memref_squeeze %254 : memref<1x128x384xf32, #tpu.memory_space<vmem>> -> memref<128x384xf32, #tpu.memory_space<vmem>>
    %256 = tpu.memref_slice %arg18[%c0_i32_114, %c0_i32_115] : memref<2x2x!tpu.dma_semaphore, #tpu.memory_space<semaphore_mem>> -> memref<1x1x!tpu.dma_semaphore, #tpu.memory_space<semaphore_mem>>
    %257 = tpu.memref_squeeze %256 : memref<1x1x!tpu.dma_semaphore, #tpu.memory_space<semaphore_mem>> -> memref<!tpu.dma_semaphore, #tpu.memory_space<semaphore_mem>>
    tpu.wait_dma2 semaphore(%257 : memref<!tpu.dma_semaphore, #tpu.memory_space<semaphore_mem>>) src(%arg3 : memref<128x384xf32, #tpu.memory_space<any>>) dst(%255 : memref<128x384xf32, #tpu.memory_space<vmem>>)
    %c0_i32_118 = arith.constant 0 : i32
    %c0_i32_119 = arith.constant 0 : i32
    %c1_i32_120 = arith.constant 1 : i32
    %c0_i32_121 = arith.constant 0 : i32
    %c0_i32_122 = arith.constant 0 : i32
    %258 = tpu.memref_slice %arg17[%c0_i32_118, %c0_i32_121, %c0_i32_122] : memref<2x128x384xf32, #tpu.memory_space<vmem>> -> memref<1x128x384xf32, #tpu.memory_space<vmem>>
    %259 = tpu.memref_squeeze %258 : memref<1x128x384xf32, #tpu.memory_space<vmem>> -> memref<128x384xf32, #tpu.memory_space<vmem>>
    %260 = tpu.memref_slice %arg18[%c0_i32_119, %c1_i32_120] : memref<2x2x!tpu.dma_semaphore, #tpu.memory_space<semaphore_mem>> -> memref<1x1x!tpu.dma_semaphore, #tpu.memory_space<semaphore_mem>>
    %261 = tpu.memref_squeeze %260 : memref<1x1x!tpu.dma_semaphore, #tpu.memory_space<semaphore_mem>> -> memref<!tpu.dma_semaphore, #tpu.memory_space<semaphore_mem>>
    tpu.wait_dma2 semaphore(%261 : memref<!tpu.dma_semaphore, #tpu.memory_space<semaphore_mem>>) src(%arg4 : memref<128x384xf32, #tpu.memory_space<any>>) dst(%259 : memref<128x384xf32, #tpu.memory_space<vmem>>)
    %c0_123 = arith.constant 0 : index
    %c0_124 = arith.constant 0 : index
    %c0_125 = arith.constant 0 : index
    %262 = vector.load %arg16[%c0_123, %c0_124, %c0_125] : memref<2x128x384xf32, #tpu.memory_space<vmem>>, vector<1x128x384xf32>
    %263 = vector.shape_cast %262 : vector<1x128x384xf32> to vector<128x384xf32>
    %cst_126 = arith.constant dense<0.000000e+00> : vector<16x384xf32>
    %264 = tpu.matmul %253, %263, %cst_126 {dimension_numbers = #tpu.dot_dimension_numbers<[1], [0], [0], [1], [0, 0, 1, 1], [], []>} : vector<16x128xf32>, vector<128x384xf32>, vector<16x384xf32> -> vector<16x384xf32>
    %c0_127 = arith.constant 0 : index
    %c0_128 = arith.constant 0 : index
    %265 = vector.load %arg9[%c0_127, %c0_128] : memref<1x384xf32, #tpu.memory_space<vmem>>, vector<1x384xf32>
    %266 = vector.broadcast %265 : vector<1x384xf32> to vector<16x384xf32>
    %267 = arith.addf %264, %266 : vector<16x384xf32>
    %268 = vector.shape_cast %267 : vector<16x384xf32> to vector<8x2x384xf32>
    %c0_129 = arith.constant 0 : index
    %c0_130 = arith.constant 0 : index
    %c0_131 = arith.constant 0 : index
    %269 = vector.load %arg19[%c0_129, %c0_130, %c0_131] : memref<8x2x384xf32, #tpu.memory_space<vmem>>, vector<8x2x384xf32>
    tpu.vector_store %arg19[%c0_129, %c0_130, %c0_131], %268 {strides = array<i32>} : memref<8x2x384xf32, #tpu.memory_space<vmem>>, vector<8x2x384xf32>,
    %c0_132 = arith.constant 0 : index
    %c0_133 = arith.constant 0 : index
    %270 = vector.load %arg10[%c0_132, %c0_133] : memref<1x128xf32, #tpu.memory_space<vmem>>, vector<1x128xf32>
    %271 = vector.shape_cast %270 : vector<1x128xf32> to vector<1x128xf32>
    %272 = vector.broadcast %271 : vector<1x128xf32> to vector<2x128xf32>
    %cst_134 = arith.constant 0.000000e+00 : f32
    %273 = vector.broadcast %cst_134 : f32 to vector<2x128xf32>
    %c0_135 = arith.constant 0 : index
    %c0_136 = arith.constant 0 : index
    %c0_137 = arith.constant 0 : index
    %274 = vector.load %arg19[%c0_135, %c0_136, %c0_137] : memref<8x2x384xf32, #tpu.memory_space<vmem>>, vector<1x2x384xf32>
    %275 = vector.shape_cast %274 : vector<1x2x384xf32> to vector<2x384xf32>
    %c0_138 = arith.constant 0 : index
    %c0_139 = arith.constant 0 : index
    %c0_140 = arith.constant 0 : index
    %276 = vector.load %arg17[%c0_138, %c0_139, %c0_140] : memref<2x128x384xf32, #tpu.memory_space<vmem>>, vector<1x128x384xf32>
    %277 = vector.shape_cast %276 : vector<1x128x384xf32> to vector<128x384xf32>
    %cst_141 = arith.constant dense<0.000000e+00> : vector<2x384xf32>
    %278 = tpu.matmul %273, %277, %cst_141 {dimension_numbers = #tpu.dot_dimension_numbers<[1], [0], [0], [1], [0, 0, 1, 1], [], []>} : vector<2x128xf32>, vector<128x384xf32>, vector<2x384xf32> -> vector<2x384xf32>
    %279 = vector.extract_strided_slice %275 {offsets = [0, 0], sizes = [2, 256], strides = [1, 1]} : vector<2x384xf32> to vector<2x256xf32>
    %280 = vector.extract_strided_slice %278 {offsets = [0, 0], sizes = [2, 256], strides = [1, 1]} : vector<2x384xf32> to vector<2x256xf32>
    %281 = arith.addf %279, %280 : vector<2x256xf32>
    %282 = arith.negf %281 : vector<2x256xf32>
    %283 = math.exp %282 : vector<2x256xf32>
    %cst_142 = arith.constant 1.000000e+00 : f32
    %284 = vector.broadcast %cst_142 : f32 to vector<2x256xf32>
    %285 = arith.addf %284, %283 : vector<2x256xf32>
    %286 = arith.divf %284, %285 : vector<2x256xf32>
    %287 = vector.extract_strided_slice %286 {offsets = [0, 0], sizes = [2, 128], strides = [1, 1]} : vector<2x256xf32> to vector<2x128xf32>
    %288 = vector.extract_strided_slice %286 {offsets = [0, 128], sizes = [2, 128], strides = [1, 1]} : vector<2x256xf32> to vector<2x128xf32>
    %289 = vector.extract_strided_slice %275 {offsets = [0, 256], sizes = [2, 128], strides = [1, 1]} : vector<2x384xf32> to vector<2x128xf32>
    %290 = vector.extract_strided_slice %278 {offsets = [0, 256], sizes = [2, 128], strides = [1, 1]} : vector<2x384xf32> to vector<2x128xf32>
    %291 = arith.addf %290, %272 : vector<2x128xf32>
    %292 = arith.mulf %287, %291 : vector<2x128xf32>
    %293 = arith.addf %289, %292 : vector<2x128xf32>
    %294 = math.tanh %293 : vector<2x128xf32>
    %cst_143 = arith.constant 1.000000e+00 : f32
    %295 = vector.broadcast %cst_143 : f32 to vector<2x128xf32>
    %296 = arith.subf %295, %288 : vector<2x128xf32>
    %297 = arith.mulf %296, %294 : vector<2x128xf32>
    %298 = arith.mulf %288, %273 : vector<2x128xf32>
    %299 = arith.addf %297, %298 : vector<2x128xf32>
    %c0_144 = arith.constant 0 : index
    %c0_145 = arith.constant 0 : index
    %c0_146 = arith.constant 0 : index
    %300 = vector.load %arg20[%c0_144, %c0_145, %c0_146] : memref<8x2x128xf32, #tpu.memory_space<vmem>>, vector<1x2x128xf32>
    %301 = vector.shape_cast %300 : vector<1x2x128xf32> to vector<2x128xf32>
    %302 = vector.shape_cast %299 : vector<2x128xf32> to vector<1x2x128xf32>
    tpu.vector_store %arg20[%c0_144, %c0_145, %c0_146], %302 {strides = array<i32>} : memref<8x2x128xf32, #tpu.memory_space<vmem>>, vector<1x2x128xf32>,
    %c1_147 = arith.constant 1 : index
    %c0_148 = arith.constant 0 : index
    %c0_149 = arith.constant 0 : index
    %303 = vector.load %arg19[%c1_147, %c0_148, %c0_149] : memref<8x2x384xf32, #tpu.memory_space<vmem>>, vector<1x2x384xf32>
    %304 = vector.shape_cast %303 : vector<1x2x384xf32> to vector<2x384xf32>
    %c0_150 = arith.constant 0 : index
    %c0_151 = arith.constant 0 : index
    %c0_152 = arith.constant 0 : index
    %305 = vector.load %arg17[%c0_150, %c0_151, %c0_152] : memref<2x128x384xf32, #tpu.memory_space<vmem>>, vector<1x128x384xf32>
    %306 = vector.shape_cast %305 : vector<1x128x384xf32> to vector<128x384xf32>
    %cst_153 = arith.constant dense<0.000000e+00> : vector<2x384xf32>
    %307 = tpu.matmul %299, %306, %cst_153 {dimension_numbers = #tpu.dot_dimension_numbers<[1], [0], [0], [1], [0, 0, 1, 1], [], []>} : vector<2x128xf32>, vector<128x384xf32>, vector<2x384xf32> -> vector<2x384xf32>
    %308 = vector.extract_strided_slice %304 {offsets = [0, 0], sizes = [2, 256], strides = [1, 1]} : vector<2x384xf32> to vector<2x256xf32>
    %309 = vector.extract_strided_slice %307 {offsets = [0, 0], sizes = [2, 256], strides = [1, 1]} : vector<2x384xf32> to vector<2x256xf32>
    %310 = arith.addf %308, %309 : vector<2x256xf32>
    %311 = arith.negf %310 : vector<2x256xf32>
    %312 = math.exp %311 : vector<2x256xf32>
    %cst_154 = arith.constant 1.000000e+00 : f32
    %313 = vector.broadcast %cst_154 : f32 to vector<2x256xf32>
    %314 = arith.addf %313, %312 : vector<2x256xf32>
    %315 = arith.divf %313, %314 : vector<2x256xf32>
    %316 = vector.extract_strided_slice %315 {offsets = [0, 0], sizes = [2, 128], strides = [1, 1]} : vector<2x256xf32> to vector<2x128xf32>
    %317 = vector.extract_strided_slice %315 {offsets = [0, 128], sizes = [2, 128], strides = [1, 1]} : vector<2x256xf32> to vector<2x128xf32>
    %318 = vector.extract_strided_slice %304 {offsets = [0, 256], sizes = [2, 128], strides = [1, 1]} : vector<2x384xf32> to vector<2x128xf32>
    %319 = vector.extract_strided_slice %307 {offsets = [0, 256], sizes = [2, 128], strides = [1, 1]} : vector<2x384xf32> to vector<2x128xf32>
    %320 = arith.addf %319, %272 : vector<2x128xf32>
    %321 = arith.mulf %316, %320 : vector<2x128xf32>
    %322 = arith.addf %318, %321 : vector<2x128xf32>
    %323 = math.tanh %322 : vector<2x128xf32>
    %cst_155 = arith.constant 1.000000e+00 : f32
    %324 = vector.broadcast %cst_155 : f32 to vector<2x128xf32>
    %325 = arith.subf %324, %317 : vector<2x128xf32>
    %326 = arith.mulf %325, %323 : vector<2x128xf32>
    %327 = arith.mulf %317, %299 : vector<2x128xf32>
    %328 = arith.addf %326, %327 : vector<2x128xf32>
    %c1_156 = arith.constant 1 : index
    %c0_157 = arith.constant 0 : index
    %c0_158 = arith.constant 0 : index
    %329 = vector.load %arg20[%c1_156, %c0_157, %c0_158] : memref<8x2x128xf32, #tpu.memory_space<vmem>>, vector<1x2x128xf32>
    %330 = vector.shape_cast %329 : vector<1x2x128xf32> to vector<2x128xf32>
    %331 = vector.shape_cast %328 : vector<2x128xf32> to vector<1x2x128xf32>
    tpu.vector_store %arg20[%c1_156, %c0_157, %c0_158], %331 {strides = array<i32>} : memref<8x2x128xf32, #tpu.memory_space<vmem>>, vector<1x2x128xf32>,
    %c2_159 = arith.constant 2 : index
    %c0_160 = arith.constant 0 : index
    %c0_161 = arith.constant 0 : index
    %332 = vector.load %arg19[%c2_159, %c0_160, %c0_161] : memref<8x2x384xf32, #tpu.memory_space<vmem>>, vector<1x2x384xf32>
    %333 = vector.shape_cast %332 : vector<1x2x384xf32> to vector<2x384xf32>
    %c0_162 = arith.constant 0 : index
    %c0_163 = arith.constant 0 : index
    %c0_164 = arith.constant 0 : index
    %334 = vector.load %arg17[%c0_162, %c0_163, %c0_164] : memref<2x128x384xf32, #tpu.memory_space<vmem>>, vector<1x128x384xf32>
    %335 = vector.shape_cast %334 : vector<1x128x384xf32> to vector<128x384xf32>
    %cst_165 = arith.constant dense<0.000000e+00> : vector<2x384xf32>
    %336 = tpu.matmul %328, %335, %cst_165 {dimension_numbers = #tpu.dot_dimension_numbers<[1], [0], [0], [1], [0, 0, 1, 1], [], []>} : vector<2x128xf32>, vector<128x384xf32>, vector<2x384xf32> -> vector<2x384xf32>
    %337 = vector.extract_strided_slice %333 {offsets = [0, 0], sizes = [2, 256], strides = [1, 1]} : vector<2x384xf32> to vector<2x256xf32>
    %338 = vector.extract_strided_slice %336 {offsets = [0, 0], sizes = [2, 256], strides = [1, 1]} : vector<2x384xf32> to vector<2x256xf32>
    %339 = arith.addf %337, %338 : vector<2x256xf32>
    %340 = arith.negf %339 : vector<2x256xf32>
    %341 = math.exp %340 : vector<2x256xf32>
    %cst_166 = arith.constant 1.000000e+00 : f32
    %342 = vector.broadcast %cst_166 : f32 to vector<2x256xf32>
    %343 = arith.addf %342, %341 : vector<2x256xf32>
    %344 = arith.divf %342, %343 : vector<2x256xf32>
    %345 = vector.extract_strided_slice %344 {offsets = [0, 0], sizes = [2, 128], strides = [1, 1]} : vector<2x256xf32> to vector<2x128xf32>
    %346 = vector.extract_strided_slice %344 {offsets = [0, 128], sizes = [2, 128], strides = [1, 1]} : vector<2x256xf32> to vector<2x128xf32>
    %347 = vector.extract_strided_slice %333 {offsets = [0, 256], sizes = [2, 128], strides = [1, 1]} : vector<2x384xf32> to vector<2x128xf32>
    %348 = vector.extract_strided_slice %336 {offsets = [0, 256], sizes = [2, 128], strides = [1, 1]} : vector<2x384xf32> to vector<2x128xf32>
    %349 = arith.addf %348, %272 : vector<2x128xf32>
    %350 = arith.mulf %345, %349 : vector<2x128xf32>
    %351 = arith.addf %347, %350 : vector<2x128xf32>
    %352 = math.tanh %351 : vector<2x128xf32>
    %cst_167 = arith.constant 1.000000e+00 : f32
    %353 = vector.broadcast %cst_167 : f32 to vector<2x128xf32>
    %354 = arith.subf %353, %346 : vector<2x128xf32>
    %355 = arith.mulf %354, %352 : vector<2x128xf32>
    %356 = arith.mulf %346, %328 : vector<2x128xf32>
    %357 = arith.addf %355, %356 : vector<2x128xf32>
    %c2_168 = arith.constant 2 : index
    %c0_169 = arith.constant 0 : index
    %c0_170 = arith.constant 0 : index
    %358 = vector.load %arg20[%c2_168, %c0_169, %c0_170] : memref<8x2x128xf32, #tpu.memory_space<vmem>>, vector<1x2x128xf32>
    %359 = vector.shape_cast %358 : vector<1x2x128xf32> to vector<2x128xf32>
    %360 = vector.shape_cast %357 : vector<2x128xf32> to vector<1x2x128xf32>
    tpu.vector_store %arg20[%c2_168, %c0_169, %c0_170], %360 {strides = array<i32>} : memref<8x2x128xf32, #tpu.memory_space<vmem>>, vector<1x2x128xf32>,
    %c3_171 = arith.constant 3 : index
    %c0_172 = arith.constant 0 : index
    %c0_173 = arith.constant 0 : index
    %361 = vector.load %arg19[%c3_171, %c0_172, %c0_173] : memref<8x2x384xf32, #tpu.memory_space<vmem>>, vector<1x2x384xf32>
    %362 = vector.shape_cast %361 : vector<1x2x384xf32> to vector<2x384xf32>
    %c0_174 = arith.constant 0 : index
    %c0_175 = arith.constant 0 : index
    %c0_176 = arith.constant 0 : index
    %363 = vector.load %arg17[%c0_174, %c0_175, %c0_176] : memref<2x128x384xf32, #tpu.memory_space<vmem>>, vector<1x128x384xf32>
    %364 = vector.shape_cast %363 : vector<1x128x384xf32> to vector<128x384xf32>
    %cst_177 = arith.constant dense<0.000000e+00> : vector<2x384xf32>
    %365 = tpu.matmul %357, %364, %cst_177 {dimension_numbers = #tpu.dot_dimension_numbers<[1], [0], [0], [1], [0, 0, 1, 1], [], []>} : vector<2x128xf32>, vector<128x384xf32>, vector<2x384xf32> -> vector<2x384xf32>
    %366 = vector.extract_strided_slice %362 {offsets = [0, 0], sizes = [2, 256], strides = [1, 1]} : vector<2x384xf32> to vector<2x256xf32>
    %367 = vector.extract_strided_slice %365 {offsets = [0, 0], sizes = [2, 256], strides = [1, 1]} : vector<2x384xf32> to vector<2x256xf32>
    %368 = arith.addf %366, %367 : vector<2x256xf32>
    %369 = arith.negf %368 : vector<2x256xf32>
    %370 = math.exp %369 : vector<2x256xf32>
    %cst_178 = arith.constant 1.000000e+00 : f32
    %371 = vector.broadcast %cst_178 : f32 to vector<2x256xf32>
    %372 = arith.addf %371, %370 : vector<2x256xf32>
    %373 = arith.divf %371, %372 : vector<2x256xf32>
    %374 = vector.extract_strided_slice %373 {offsets = [0, 0], sizes = [2, 128], strides = [1, 1]} : vector<2x256xf32> to vector<2x128xf32>
    %375 = vector.extract_strided_slice %373 {offsets = [0, 128], sizes = [2, 128], strides = [1, 1]} : vector<2x256xf32> to vector<2x128xf32>
    %376 = vector.extract_strided_slice %362 {offsets = [0, 256], sizes = [2, 128], strides = [1, 1]} : vector<2x384xf32> to vector<2x128xf32>
    %377 = vector.extract_strided_slice %365 {offsets = [0, 256], sizes = [2, 128], strides = [1, 1]} : vector<2x384xf32> to vector<2x128xf32>
    %378 = arith.addf %377, %272 : vector<2x128xf32>
    %379 = arith.mulf %374, %378 : vector<2x128xf32>
    %380 = arith.addf %376, %379 : vector<2x128xf32>
    %381 = math.tanh %380 : vector<2x128xf32>
    %cst_179 = arith.constant 1.000000e+00 : f32
    %382 = vector.broadcast %cst_179 : f32 to vector<2x128xf32>
    %383 = arith.subf %382, %375 : vector<2x128xf32>
    %384 = arith.mulf %383, %381 : vector<2x128xf32>
    %385 = arith.mulf %375, %357 : vector<2x128xf32>
    %386 = arith.addf %384, %385 : vector<2x128xf32>
    %c3_180 = arith.constant 3 : index
    %c0_181 = arith.constant 0 : index
    %c0_182 = arith.constant 0 : index
    %387 = vector.load %arg20[%c3_180, %c0_181, %c0_182] : memref<8x2x128xf32, #tpu.memory_space<vmem>>, vector<1x2x128xf32>
    %388 = vector.shape_cast %387 : vector<1x2x128xf32> to vector<2x128xf32>
    %389 = vector.shape_cast %386 : vector<2x128xf32> to vector<1x2x128xf32>
    tpu.vector_store %arg20[%c3_180, %c0_181, %c0_182], %389 {strides = array<i32>} : memref<8x2x128xf32, #tpu.memory_space<vmem>>, vector<1x2x128xf32>,
    %c4_183 = arith.constant 4 : index
    %c0_184 = arith.constant 0 : index
    %c0_185 = arith.constant 0 : index
    %390 = vector.load %arg19[%c4_183, %c0_184, %c0_185] : memref<8x2x384xf32, #tpu.memory_space<vmem>>, vector<1x2x384xf32>
    %391 = vector.shape_cast %390 : vector<1x2x384xf32> to vector<2x384xf32>
    %c0_186 = arith.constant 0 : index
    %c0_187 = arith.constant 0 : index
    %c0_188 = arith.constant 0 : index
    %392 = vector.load %arg17[%c0_186, %c0_187, %c0_188] : memref<2x128x384xf32, #tpu.memory_space<vmem>>, vector<1x128x384xf32>
    %393 = vector.shape_cast %392 : vector<1x128x384xf32> to vector<128x384xf32>
    %cst_189 = arith.constant dense<0.000000e+00> : vector<2x384xf32>
    %394 = tpu.matmul %386, %393, %cst_189 {dimension_numbers = #tpu.dot_dimension_numbers<[1], [0], [0], [1], [0, 0, 1, 1], [], []>} : vector<2x128xf32>, vector<128x384xf32>, vector<2x384xf32> -> vector<2x384xf32>
    %395 = vector.extract_strided_slice %391 {offsets = [0, 0], sizes = [2, 256], strides = [1, 1]} : vector<2x384xf32> to vector<2x256xf32>
    %396 = vector.extract_strided_slice %394 {offsets = [0, 0], sizes = [2, 256], strides = [1, 1]} : vector<2x384xf32> to vector<2x256xf32>
    %397 = arith.addf %395, %396 : vector<2x256xf32>
    %398 = arith.negf %397 : vector<2x256xf32>
    %399 = math.exp %398 : vector<2x256xf32>
    %cst_190 = arith.constant 1.000000e+00 : f32
    %400 = vector.broadcast %cst_190 : f32 to vector<2x256xf32>
    %401 = arith.addf %400, %399 : vector<2x256xf32>
    %402 = arith.divf %400, %401 : vector<2x256xf32>
    %403 = vector.extract_strided_slice %402 {offsets = [0, 0], sizes = [2, 128], strides = [1, 1]} : vector<2x256xf32> to vector<2x128xf32>
    %404 = vector.extract_strided_slice %402 {offsets = [0, 128], sizes = [2, 128], strides = [1, 1]} : vector<2x256xf32> to vector<2x128xf32>
    %405 = vector.extract_strided_slice %391 {offsets = [0, 256], sizes = [2, 128], strides = [1, 1]} : vector<2x384xf32> to vector<2x128xf32>
    %406 = vector.extract_strided_slice %394 {offsets = [0, 256], sizes = [2, 128], strides = [1, 1]} : vector<2x384xf32> to vector<2x128xf32>
    %407 = arith.addf %406, %272 : vector<2x128xf32>
    %408 = arith.mulf %403, %407 : vector<2x128xf32>
    %409 = arith.addf %405, %408 : vector<2x128xf32>
    %410 = math.tanh %409 : vector<2x128xf32>
    %cst_191 = arith.constant 1.000000e+00 : f32
    %411 = vector.broadcast %cst_191 : f32 to vector<2x128xf32>
    %412 = arith.subf %411, %404 : vector<2x128xf32>
    %413 = arith.mulf %412, %410 : vector<2x128xf32>
    %414 = arith.mulf %404, %386 : vector<2x128xf32>
    %415 = arith.addf %413, %414 : vector<2x128xf32>
    %c4_192 = arith.constant 4 : index
    %c0_193 = arith.constant 0 : index
    %c0_194 = arith.constant 0 : index
    %416 = vector.load %arg20[%c4_192, %c0_193, %c0_194] : memref<8x2x128xf32, #tpu.memory_space<vmem>>, vector<1x2x128xf32>
    %417 = vector.shape_cast %416 : vector<1x2x128xf32> to vector<2x128xf32>
    %418 = vector.shape_cast %415 : vector<2x128xf32> to vector<1x2x128xf32>
    tpu.vector_store %arg20[%c4_192, %c0_193, %c0_194], %418 {strides = array<i32>} : memref<8x2x128xf32, #tpu.memory_space<vmem>>, vector<1x2x128xf32>,
    %c5_195 = arith.constant 5 : index
    %c0_196 = arith.constant 0 : index
    %c0_197 = arith.constant 0 : index
    %419 = vector.load %arg19[%c5_195, %c0_196, %c0_197] : memref<8x2x384xf32, #tpu.memory_space<vmem>>, vector<1x2x384xf32>
    %420 = vector.shape_cast %419 : vector<1x2x384xf32> to vector<2x384xf32>
    %c0_198 = arith.constant 0 : index
    %c0_199 = arith.constant 0 : index
    %c0_200 = arith.constant 0 : index
    %421 = vector.load %arg17[%c0_198, %c0_199, %c0_200] : memref<2x128x384xf32, #tpu.memory_space<vmem>>, vector<1x128x384xf32>
    %422 = vector.shape_cast %421 : vector<1x128x384xf32> to vector<128x384xf32>
    %cst_201 = arith.constant dense<0.000000e+00> : vector<2x384xf32>
    %423 = tpu.matmul %415, %422, %cst_201 {dimension_numbers = #tpu.dot_dimension_numbers<[1], [0], [0], [1], [0, 0, 1, 1], [], []>} : vector<2x128xf32>, vector<128x384xf32>, vector<2x384xf32> -> vector<2x384xf32>
    %424 = vector.extract_strided_slice %420 {offsets = [0, 0], sizes = [2, 256], strides = [1, 1]} : vector<2x384xf32> to vector<2x256xf32>
    %425 = vector.extract_strided_slice %423 {offsets = [0, 0], sizes = [2, 256], strides = [1, 1]} : vector<2x384xf32> to vector<2x256xf32>
    %426 = arith.addf %424, %425 : vector<2x256xf32>
    %427 = arith.negf %426 : vector<2x256xf32>
    %428 = math.exp %427 : vector<2x256xf32>
    %cst_202 = arith.constant 1.000000e+00 : f32
    %429 = vector.broadcast %cst_202 : f32 to vector<2x256xf32>
    %430 = arith.addf %429, %428 : vector<2x256xf32>
    %431 = arith.divf %429, %430 : vector<2x256xf32>
    %432 = vector.extract_strided_slice %431 {offsets = [0, 0], sizes = [2, 128], strides = [1, 1]} : vector<2x256xf32> to vector<2x128xf32>
    %433 = vector.extract_strided_slice %431 {offsets = [0, 128], sizes = [2, 128], strides = [1, 1]} : vector<2x256xf32> to vector<2x128xf32>
    %434 = vector.extract_strided_slice %420 {offsets = [0, 256], sizes = [2, 128], strides = [1, 1]} : vector<2x384xf32> to vector<2x128xf32>
    %435 = vector.extract_strided_slice %423 {offsets = [0, 256], sizes = [2, 128], strides = [1, 1]} : vector<2x384xf32> to vector<2x128xf32>
    %436 = arith.addf %435, %272 : vector<2x128xf32>
    %437 = arith.mulf %432, %436 : vector<2x128xf32>
    %438 = arith.addf %434, %437 : vector<2x128xf32>
    %439 = math.tanh %438 : vector<2x128xf32>
    %cst_203 = arith.constant 1.000000e+00 : f32
    %440 = vector.broadcast %cst_203 : f32 to vector<2x128xf32>
    %441 = arith.subf %440, %433 : vector<2x128xf32>
    %442 = arith.mulf %441, %439 : vector<2x128xf32>
    %443 = arith.mulf %433, %415 : vector<2x128xf32>
    %444 = arith.addf %442, %443 : vector<2x128xf32>
    %c5_204 = arith.constant 5 : index
    %c0_205 = arith.constant 0 : index
    %c0_206 = arith.constant 0 : index
    %445 = vector.load %arg20[%c5_204, %c0_205, %c0_206] : memref<8x2x128xf32, #tpu.memory_space<vmem>>, vector<1x2x128xf32>
    %446 = vector.shape_cast %445 : vector<1x2x128xf32> to vector<2x128xf32>
    %447 = vector.shape_cast %444 : vector<2x128xf32> to vector<1x2x128xf32>
    tpu.vector_store %arg20[%c5_204, %c0_205, %c0_206], %447 {strides = array<i32>} : memref<8x2x128xf32, #tpu.memory_space<vmem>>, vector<1x2x128xf32>,
    %c6_207 = arith.constant 6 : index
    %c0_208 = arith.constant 0 : index
    %c0_209 = arith.constant 0 : index
    %448 = vector.load %arg19[%c6_207, %c0_208, %c0_209] : memref<8x2x384xf32, #tpu.memory_space<vmem>>, vector<1x2x384xf32>
    %449 = vector.shape_cast %448 : vector<1x2x384xf32> to vector<2x384xf32>
    %c0_210 = arith.constant 0 : index
    %c0_211 = arith.constant 0 : index
    %c0_212 = arith.constant 0 : index
    %450 = vector.load %arg17[%c0_210, %c0_211, %c0_212] : memref<2x128x384xf32, #tpu.memory_space<vmem>>, vector<1x128x384xf32>
    %451 = vector.shape_cast %450 : vector<1x128x384xf32> to vector<128x384xf32>
    %cst_213 = arith.constant dense<0.000000e+00> : vector<2x384xf32>
    %452 = tpu.matmul %444, %451, %cst_213 {dimension_numbers = #tpu.dot_dimension_numbers<[1], [0], [0], [1], [0, 0, 1, 1], [], []>} : vector<2x128xf32>, vector<128x384xf32>, vector<2x384xf32> -> vector<2x384xf32>
    %453 = vector.extract_strided_slice %449 {offsets = [0, 0], sizes = [2, 256], strides = [1, 1]} : vector<2x384xf32> to vector<2x256xf32>
    %454 = vector.extract_strided_slice %452 {offsets = [0, 0], sizes = [2, 256], strides = [1, 1]} : vector<2x384xf32> to vector<2x256xf32>
    %455 = arith.addf %453, %454 : vector<2x256xf32>
    %456 = arith.negf %455 : vector<2x256xf32>
    %457 = math.exp %456 : vector<2x256xf32>
    %cst_214 = arith.constant 1.000000e+00 : f32
    %458 = vector.broadcast %cst_214 : f32 to vector<2x256xf32>
    %459 = arith.addf %458, %457 : vector<2x256xf32>
    %460 = arith.divf %458, %459 : vector<2x256xf32>
    %461 = vector.extract_strided_slice %460 {offsets = [0, 0], sizes = [2, 128], strides = [1, 1]} : vector<2x256xf32> to vector<2x128xf32>
    %462 = vector.extract_strided_slice %460 {offsets = [0, 128], sizes = [2, 128], strides = [1, 1]} : vector<2x256xf32> to vector<2x128xf32>
    %463 = vector.extract_strided_slice %449 {offsets = [0, 256], sizes = [2, 128], strides = [1, 1]} : vector<2x384xf32> to vector<2x128xf32>
    %464 = vector.extract_strided_slice %452 {offsets = [0, 256], sizes = [2, 128], strides = [1, 1]} : vector<2x384xf32> to vector<2x128xf32>
    %465 = arith.addf %464, %272 : vector<2x128xf32>
    %466 = arith.mulf %461, %465 : vector<2x128xf32>
    %467 = arith.addf %463, %466 : vector<2x128xf32>
    %468 = math.tanh %467 : vector<2x128xf32>
    %cst_215 = arith.constant 1.000000e+00 : f32
    %469 = vector.broadcast %cst_215 : f32 to vector<2x128xf32>
    %470 = arith.subf %469, %462 : vector<2x128xf32>
    %471 = arith.mulf %470, %468 : vector<2x128xf32>
    %472 = arith.mulf %462, %444 : vector<2x128xf32>
    %473 = arith.addf %471, %472 : vector<2x128xf32>
    %c6_216 = arith.constant 6 : index
    %c0_217 = arith.constant 0 : index
    %c0_218 = arith.constant 0 : index
    %474 = vector.load %arg20[%c6_216, %c0_217, %c0_218] : memref<8x2x128xf32, #tpu.memory_space<vmem>>, vector<1x2x128xf32>
    %475 = vector.shape_cast %474 : vector<1x2x128xf32> to vector<2x128xf32>
    %476 = vector.shape_cast %473 : vector<2x128xf32> to vector<1x2x128xf32>
    tpu.vector_store %arg20[%c6_216, %c0_217, %c0_218], %476 {strides = array<i32>} : memref<8x2x128xf32, #tpu.memory_space<vmem>>, vector<1x2x128xf32>,
    %c7_219 = arith.constant 7 : index
    %c0_220 = arith.constant 0 : index
    %c0_221 = arith.constant 0 : index
    %477 = vector.load %arg19[%c7_219, %c0_220, %c0_221] : memref<8x2x384xf32, #tpu.memory_space<vmem>>, vector<1x2x384xf32>
    %478 = vector.shape_cast %477 : vector<1x2x384xf32> to vector<2x384xf32>
    %c0_222 = arith.constant 0 : index
    %c0_223 = arith.constant 0 : index
    %c0_224 = arith.constant 0 : index
    %479 = vector.load %arg17[%c0_222, %c0_223, %c0_224] : memref<2x128x384xf32, #tpu.memory_space<vmem>>, vector<1x128x384xf32>
    %480 = vector.shape_cast %479 : vector<1x128x384xf32> to vector<128x384xf32>
    %cst_225 = arith.constant dense<0.000000e+00> : vector<2x384xf32>
    %481 = tpu.matmul %473, %480, %cst_225 {dimension_numbers = #tpu.dot_dimension_numbers<[1], [0], [0], [1], [0, 0, 1, 1], [], []>} : vector<2x128xf32>, vector<128x384xf32>, vector<2x384xf32> -> vector<2x384xf32>
    %482 = vector.extract_strided_slice %478 {offsets = [0, 0], sizes = [2, 256], strides = [1, 1]} : vector<2x384xf32> to vector<2x256xf32>
    %483 = vector.extract_strided_slice %481 {offsets = [0, 0], sizes = [2, 256], strides = [1, 1]} : vector<2x384xf32> to vector<2x256xf32>
    %484 = arith.addf %482, %483 : vector<2x256xf32>
    %485 = arith.negf %484 : vector<2x256xf32>
    %486 = math.exp %485 : vector<2x256xf32>
    %cst_226 = arith.constant 1.000000e+00 : f32
    %487 = vector.broadcast %cst_226 : f32 to vector<2x256xf32>
    %488 = arith.addf %487, %486 : vector<2x256xf32>
    %489 = arith.divf %487, %488 : vector<2x256xf32>
    %490 = vector.extract_strided_slice %489 {offsets = [0, 0], sizes = [2, 128], strides = [1, 1]} : vector<2x256xf32> to vector<2x128xf32>
    %491 = vector.extract_strided_slice %489 {offsets = [0, 128], sizes = [2, 128], strides = [1, 1]} : vector<2x256xf32> to vector<2x128xf32>
    %492 = vector.extract_strided_slice %478 {offsets = [0, 256], sizes = [2, 128], strides = [1, 1]} : vector<2x384xf32> to vector<2x128xf32>
    %493 = vector.extract_strided_slice %481 {offsets = [0, 256], sizes = [2, 128], strides = [1, 1]} : vector<2x384xf32> to vector<2x128xf32>
    %494 = arith.addf %493, %272 : vector<2x128xf32>
    %495 = arith.mulf %490, %494 : vector<2x128xf32>
    %496 = arith.addf %492, %495 : vector<2x128xf32>
    %497 = math.tanh %496 : vector<2x128xf32>
    %cst_227 = arith.constant 1.000000e+00 : f32
    %498 = vector.broadcast %cst_227 : f32 to vector<2x128xf32>
    %499 = arith.subf %498, %491 : vector<2x128xf32>
    %500 = arith.mulf %499, %497 : vector<2x128xf32>
    %501 = arith.mulf %491, %473 : vector<2x128xf32>
    %502 = arith.addf %500, %501 : vector<2x128xf32>
    %c7_228 = arith.constant 7 : index
    %c0_229 = arith.constant 0 : index
    %c0_230 = arith.constant 0 : index
    %503 = vector.load %arg20[%c7_228, %c0_229, %c0_230] : memref<8x2x128xf32, #tpu.memory_space<vmem>>, vector<1x2x128xf32>
    %504 = vector.shape_cast %503 : vector<1x2x128xf32> to vector<2x128xf32>
    %505 = vector.shape_cast %502 : vector<2x128xf32> to vector<1x2x128xf32>
    tpu.vector_store %arg20[%c7_228, %c0_229, %c0_230], %505 {strides = array<i32>} : memref<8x2x128xf32, #tpu.memory_space<vmem>>, vector<1x2x128xf32>,
    %c0_231 = arith.constant 0 : index
    %c0_232 = arith.constant 0 : index
    %c0_233 = arith.constant 0 : index
    %506 = vector.load %arg20[%c0_231, %c0_232, %c0_233] : memref<8x2x128xf32, #tpu.memory_space<vmem>>, vector<8x2x128xf32>
    %507 = vector.shape_cast %506 : vector<8x2x128xf32> to vector<16x128xf32>
    %c1_i32_234 = arith.constant 1 : i32
    %c1_i32_235 = arith.constant 1 : i32
    %c0_i32_236 = arith.constant 0 : i32
    %c0_i32_237 = arith.constant 0 : i32
    %c0_i32_238 = arith.constant 0 : i32
    %508 = tpu.memref_slice %arg16[%c1_i32_234, %c0_i32_237, %c0_i32_238] : memref<2x128x384xf32, #tpu.memory_space<vmem>> -> memref<1x128x384xf32, #tpu.memory_space<vmem>>
    %509 = tpu.memref_squeeze %508 : memref<1x128x384xf32, #tpu.memory_space<vmem>> -> memref<128x384xf32, #tpu.memory_space<vmem>>
    %510 = tpu.memref_slice %arg18[%c1_i32_235, %c0_i32_236] : memref<2x2x!tpu.dma_semaphore, #tpu.memory_space<semaphore_mem>> -> memref<1x1x!tpu.dma_semaphore, #tpu.memory_space<semaphore_mem>>
    %511 = tpu.memref_squeeze %510 : memref<1x1x!tpu.dma_semaphore, #tpu.memory_space<semaphore_mem>> -> memref<!tpu.dma_semaphore, #tpu.memory_space<semaphore_mem>>
    tpu.wait_dma2 semaphore(%511 : memref<!tpu.dma_semaphore, #tpu.memory_space<semaphore_mem>>) src(%arg5 : memref<128x384xf32, #tpu.memory_space<any>>) dst(%509 : memref<128x384xf32, #tpu.memory_space<vmem>>)
    %c1_i32_239 = arith.constant 1 : i32
    %c1_i32_240 = arith.constant 1 : i32
    %c1_i32_241 = arith.constant 1 : i32
    %c0_i32_242 = arith.constant 0 : i32
    %c0_i32_243 = arith.constant 0 : i32
    %512 = tpu.memref_slice %arg17[%c1_i32_239, %c0_i32_242, %c0_i32_243] : memref<2x128x384xf32, #tpu.memory_space<vmem>> -> memref<1x128x384xf32, #tpu.memory_space<vmem>>
    %513 = tpu.memref_squeeze %512 : memref<1x128x384xf32, #tpu.memory_space<vmem>> -> memref<128x384xf32, #tpu.memory_space<vmem>>
    %514 = tpu.memref_slice %arg18[%c1_i32_240, %c1_i32_241] : memref<2x2x!tpu.dma_semaphore, #tpu.memory_space<semaphore_mem>> -> memref<1x1x!tpu.dma_semaphore, #tpu.memory_space<semaphore_mem>>
    %515 = tpu.memref_squeeze %514 : memref<1x1x!tpu.dma_semaphore, #tpu.memory_space<semaphore_mem>> -> memref<!tpu.dma_semaphore, #tpu.memory_space<semaphore_mem>>
    tpu.wait_dma2 semaphore(%515 : memref<!tpu.dma_semaphore, #tpu.memory_space<semaphore_mem>>) src(%arg6 : memref<128x384xf32, #tpu.memory_space<any>>) dst(%513 : memref<128x384xf32, #tpu.memory_space<vmem>>)
    %c1_244 = arith.constant 1 : index
    %c0_245 = arith.constant 0 : index
    %c0_246 = arith.constant 0 : index
    %516 = vector.load %arg16[%c1_244, %c0_245, %c0_246] : memref<2x128x384xf32, #tpu.memory_space<vmem>>, vector<1x128x384xf32>
    %517 = vector.shape_cast %516 : vector<1x128x384xf32> to vector<128x384xf32>
    %cst_247 = arith.constant dense<0.000000e+00> : vector<16x384xf32>
    %518 = tpu.matmul %507, %517, %cst_247 {dimension_numbers = #tpu.dot_dimension_numbers<[1], [0], [0], [1], [0, 0, 1, 1], [], []>} : vector<16x128xf32>, vector<128x384xf32>, vector<16x384xf32> -> vector<16x384xf32>
    %c0_248 = arith.constant 0 : index
    %c0_249 = arith.constant 0 : index
    %519 = vector.load %arg11[%c0_248, %c0_249] : memref<1x384xf32, #tpu.memory_space<vmem>>, vector<1x384xf32>
    %520 = vector.broadcast %519 : vector<1x384xf32> to vector<16x384xf32>
    %521 = arith.addf %518, %520 : vector<16x384xf32>
    %522 = vector.shape_cast %521 : vector<16x384xf32> to vector<8x2x384xf32>
    %c0_250 = arith.constant 0 : index
    %c0_251 = arith.constant 0 : index
    %c0_252 = arith.constant 0 : index
    %523 = vector.load %arg19[%c0_250, %c0_251, %c0_252] : memref<8x2x384xf32, #tpu.memory_space<vmem>>, vector<8x2x384xf32>
    tpu.vector_store %arg19[%c0_250, %c0_251, %c0_252], %522 {strides = array<i32>} : memref<8x2x384xf32, #tpu.memory_space<vmem>>, vector<8x2x384xf32>,
    %c0_253 = arith.constant 0 : index
    %c0_254 = arith.constant 0 : index
    %524 = vector.load %arg12[%c0_253, %c0_254] : memref<1x128xf32, #tpu.memory_space<vmem>>, vector<1x128xf32>
    %525 = vector.shape_cast %524 : vector<1x128xf32> to vector<1x128xf32>
    %526 = vector.broadcast %525 : vector<1x128xf32> to vector<2x128xf32>
    %cst_255 = arith.constant 0.000000e+00 : f32
    %527 = vector.broadcast %cst_255 : f32 to vector<2x128xf32>
    %c0_256 = arith.constant 0 : index
    %c0_257 = arith.constant 0 : index
    %c0_258 = arith.constant 0 : index
    %528 = vector.load %arg19[%c0_256, %c0_257, %c0_258] : memref<8x2x384xf32, #tpu.memory_space<vmem>>, vector<1x2x384xf32>
    %529 = vector.shape_cast %528 : vector<1x2x384xf32> to vector<2x384xf32>
    %c1_259 = arith.constant 1 : index
    %c0_260 = arith.constant 0 : index
    %c0_261 = arith.constant 0 : index
    %530 = vector.load %arg17[%c1_259, %c0_260, %c0_261] : memref<2x128x384xf32, #tpu.memory_space<vmem>>, vector<1x128x384xf32>
    %531 = vector.shape_cast %530 : vector<1x128x384xf32> to vector<128x384xf32>
    %cst_262 = arith.constant dense<0.000000e+00> : vector<2x384xf32>
    %532 = tpu.matmul %527, %531, %cst_262 {dimension_numbers = #tpu.dot_dimension_numbers<[1], [0], [0], [1], [0, 0, 1, 1], [], []>} : vector<2x128xf32>, vector<128x384xf32>, vector<2x384xf32> -> vector<2x384xf32>
    %533 = vector.extract_strided_slice %529 {offsets = [0, 0], sizes = [2, 256], strides = [1, 1]} : vector<2x384xf32> to vector<2x256xf32>
    %534 = vector.extract_strided_slice %532 {offsets = [0, 0], sizes = [2, 256], strides = [1, 1]} : vector<2x384xf32> to vector<2x256xf32>
    %535 = arith.addf %533, %534 : vector<2x256xf32>
    %536 = arith.negf %535 : vector<2x256xf32>
    %537 = math.exp %536 : vector<2x256xf32>
    %cst_263 = arith.constant 1.000000e+00 : f32
    %538 = vector.broadcast %cst_263 : f32 to vector<2x256xf32>
    %539 = arith.addf %538, %537 : vector<2x256xf32>
    %540 = arith.divf %538, %539 : vector<2x256xf32>
    %541 = vector.extract_strided_slice %540 {offsets = [0, 0], sizes = [2, 128], strides = [1, 1]} : vector<2x256xf32> to vector<2x128xf32>
    %542 = vector.extract_strided_slice %540 {offsets = [0, 128], sizes = [2, 128], strides = [1, 1]} : vector<2x256xf32> to vector<2x128xf32>
    %543 = vector.extract_strided_slice %529 {offsets = [0, 256], sizes = [2, 128], strides = [1, 1]} : vector<2x384xf32> to vector<2x128xf32>
    %544 = vector.extract_strided_slice %532 {offsets = [0, 256], sizes = [2, 128], strides = [1, 1]} : vector<2x384xf32> to vector<2x128xf32>
    %545 = arith.addf %544, %526 : vector<2x128xf32>
    %546 = arith.mulf %541, %545 : vector<2x128xf32>
    %547 = arith.addf %543, %546 : vector<2x128xf32>
    %548 = math.tanh %547 : vector<2x128xf32>
    %cst_264 = arith.constant 1.000000e+00 : f32
    %549 = vector.broadcast %cst_264 : f32 to vector<2x128xf32>
    %550 = arith.subf %549, %542 : vector<2x128xf32>
    %551 = arith.mulf %550, %548 : vector<2x128xf32>
    %552 = arith.mulf %542, %527 : vector<2x128xf32>
    %553 = arith.addf %551, %552 : vector<2x128xf32>
    %c1_265 = arith.constant 1 : index
    %c0_266 = arith.constant 0 : index
    %c0_267 = arith.constant 0 : index
    %554 = vector.load %arg19[%c1_265, %c0_266, %c0_267] : memref<8x2x384xf32, #tpu.memory_space<vmem>>, vector<1x2x384xf32>
    %555 = vector.shape_cast %554 : vector<1x2x384xf32> to vector<2x384xf32>
    %c1_268 = arith.constant 1 : index
    %c0_269 = arith.constant 0 : index
    %c0_270 = arith.constant 0 : index
    %556 = vector.load %arg17[%c1_268, %c0_269, %c0_270] : memref<2x128x384xf32, #tpu.memory_space<vmem>>, vector<1x128x384xf32>
    %557 = vector.shape_cast %556 : vector<1x128x384xf32> to vector<128x384xf32>
    %cst_271 = arith.constant dense<0.000000e+00> : vector<2x384xf32>
    %558 = tpu.matmul %553, %557, %cst_271 {dimension_numbers = #tpu.dot_dimension_numbers<[1], [0], [0], [1], [0, 0, 1, 1], [], []>} : vector<2x128xf32>, vector<128x384xf32>, vector<2x384xf32> -> vector<2x384xf32>
    %559 = vector.extract_strided_slice %555 {offsets = [0, 0], sizes = [2, 256], strides = [1, 1]} : vector<2x384xf32> to vector<2x256xf32>
    %560 = vector.extract_strided_slice %558 {offsets = [0, 0], sizes = [2, 256], strides = [1, 1]} : vector<2x384xf32> to vector<2x256xf32>
    %561 = arith.addf %559, %560 : vector<2x256xf32>
    %562 = arith.negf %561 : vector<2x256xf32>
    %563 = math.exp %562 : vector<2x256xf32>
    %cst_272 = arith.constant 1.000000e+00 : f32
    %564 = vector.broadcast %cst_272 : f32 to vector<2x256xf32>
    %565 = arith.addf %564, %563 : vector<2x256xf32>
    %566 = arith.divf %564, %565 : vector<2x256xf32>
    %567 = vector.extract_strided_slice %566 {offsets = [0, 0], sizes = [2, 128], strides = [1, 1]} : vector<2x256xf32> to vector<2x128xf32>
    %568 = vector.extract_strided_slice %566 {offsets = [0, 128], sizes = [2, 128], strides = [1, 1]} : vector<2x256xf32> to vector<2x128xf32>
    %569 = vector.extract_strided_slice %555 {offsets = [0, 256], sizes = [2, 128], strides = [1, 1]} : vector<2x384xf32> to vector<2x128xf32>
    %570 = vector.extract_strided_slice %558 {offsets = [0, 256], sizes = [2, 128], strides = [1, 1]} : vector<2x384xf32> to vector<2x128xf32>
    %571 = arith.addf %570, %526 : vector<2x128xf32>
    %572 = arith.mulf %567, %571 : vector<2x128xf32>
    %573 = arith.addf %569, %572 : vector<2x128xf32>
    %574 = math.tanh %573 : vector<2x128xf32>
    %cst_273 = arith.constant 1.000000e+00 : f32
    %575 = vector.broadcast %cst_273 : f32 to vector<2x128xf32>
    %576 = arith.subf %575, %568 : vector<2x128xf32>
    %577 = arith.mulf %576, %574 : vector<2x128xf32>
    %578 = arith.mulf %568, %553 : vector<2x128xf32>
    %579 = arith.addf %577, %578 : vector<2x128xf32>
    %c2_274 = arith.constant 2 : index
    %c0_275 = arith.constant 0 : index
    %c0_276 = arith.constant 0 : index
    %580 = vector.load %arg19[%c2_274, %c0_275, %c0_276] : memref<8x2x384xf32, #tpu.memory_space<vmem>>, vector<1x2x384xf32>
    %581 = vector.shape_cast %580 : vector<1x2x384xf32> to vector<2x384xf32>
    %c1_277 = arith.constant 1 : index
    %c0_278 = arith.constant 0 : index
    %c0_279 = arith.constant 0 : index
    %582 = vector.load %arg17[%c1_277, %c0_278, %c0_279] : memref<2x128x384xf32, #tpu.memory_space<vmem>>, vector<1x128x384xf32>
    %583 = vector.shape_cast %582 : vector<1x128x384xf32> to vector<128x384xf32>
    %cst_280 = arith.constant dense<0.000000e+00> : vector<2x384xf32>
    %584 = tpu.matmul %579, %583, %cst_280 {dimension_numbers = #tpu.dot_dimension_numbers<[1], [0], [0], [1], [0, 0, 1, 1], [], []>} : vector<2x128xf32>, vector<128x384xf32>, vector<2x384xf32> -> vector<2x384xf32>
    %585 = vector.extract_strided_slice %581 {offsets = [0, 0], sizes = [2, 256], strides = [1, 1]} : vector<2x384xf32> to vector<2x256xf32>
    %586 = vector.extract_strided_slice %584 {offsets = [0, 0], sizes = [2, 256], strides = [1, 1]} : vector<2x384xf32> to vector<2x256xf32>
    %587 = arith.addf %585, %586 : vector<2x256xf32>
    %588 = arith.negf %587 : vector<2x256xf32>
    %589 = math.exp %588 : vector<2x256xf32>
    %cst_281 = arith.constant 1.000000e+00 : f32
    %590 = vector.broadcast %cst_281 : f32 to vector<2x256xf32>
    %591 = arith.addf %590, %589 : vector<2x256xf32>
    %592 = arith.divf %590, %591 : vector<2x256xf32>
    %593 = vector.extract_strided_slice %592 {offsets = [0, 0], sizes = [2, 128], strides = [1, 1]} : vector<2x256xf32> to vector<2x128xf32>
    %594 = vector.extract_strided_slice %592 {offsets = [0, 128], sizes = [2, 128], strides = [1, 1]} : vector<2x256xf32> to vector<2x128xf32>
    %595 = vector.extract_strided_slice %581 {offsets = [0, 256], sizes = [2, 128], strides = [1, 1]} : vector<2x384xf32> to vector<2x128xf32>
    %596 = vector.extract_strided_slice %584 {offsets = [0, 256], sizes = [2, 128], strides = [1, 1]} : vector<2x384xf32> to vector<2x128xf32>
    %597 = arith.addf %596, %526 : vector<2x128xf32>
    %598 = arith.mulf %593, %597 : vector<2x128xf32>
    %599 = arith.addf %595, %598 : vector<2x128xf32>
    %600 = math.tanh %599 : vector<2x128xf32>
    %cst_282 = arith.constant 1.000000e+00 : f32
    %601 = vector.broadcast %cst_282 : f32 to vector<2x128xf32>
    %602 = arith.subf %601, %594 : vector<2x128xf32>
    %603 = arith.mulf %602, %600 : vector<2x128xf32>
    %604 = arith.mulf %594, %579 : vector<2x128xf32>
    %605 = arith.addf %603, %604 : vector<2x128xf32>
    %c3_283 = arith.constant 3 : index
    %c0_284 = arith.constant 0 : index
    %c0_285 = arith.constant 0 : index
    %606 = vector.load %arg19[%c3_283, %c0_284, %c0_285] : memref<8x2x384xf32, #tpu.memory_space<vmem>>, vector<1x2x384xf32>
    %607 = vector.shape_cast %606 : vector<1x2x384xf32> to vector<2x384xf32>
    %c1_286 = arith.constant 1 : index
    %c0_287 = arith.constant 0 : index
    %c0_288 = arith.constant 0 : index
    %608 = vector.load %arg17[%c1_286, %c0_287, %c0_288] : memref<2x128x384xf32, #tpu.memory_space<vmem>>, vector<1x128x384xf32>
    %609 = vector.shape_cast %608 : vector<1x128x384xf32> to vector<128x384xf32>
    %cst_289 = arith.constant dense<0.000000e+00> : vector<2x384xf32>
    %610 = tpu.matmul %605, %609, %cst_289 {dimension_numbers = #tpu.dot_dimension_numbers<[1], [0], [0], [1], [0, 0, 1, 1], [], []>} : vector<2x128xf32>, vector<128x384xf32>, vector<2x384xf32> -> vector<2x384xf32>
    %611 = vector.extract_strided_slice %607 {offsets = [0, 0], sizes = [2, 256], strides = [1, 1]} : vector<2x384xf32> to vector<2x256xf32>
    %612 = vector.extract_strided_slice %610 {offsets = [0, 0], sizes = [2, 256], strides = [1, 1]} : vector<2x384xf32> to vector<2x256xf32>
    %613 = arith.addf %611, %612 : vector<2x256xf32>
    %614 = arith.negf %613 : vector<2x256xf32>
    %615 = math.exp %614 : vector<2x256xf32>
    %cst_290 = arith.constant 1.000000e+00 : f32
    %616 = vector.broadcast %cst_290 : f32 to vector<2x256xf32>
    %617 = arith.addf %616, %615 : vector<2x256xf32>
    %618 = arith.divf %616, %617 : vector<2x256xf32>
    %619 = vector.extract_strided_slice %618 {offsets = [0, 0], sizes = [2, 128], strides = [1, 1]} : vector<2x256xf32> to vector<2x128xf32>
    %620 = vector.extract_strided_slice %618 {offsets = [0, 128], sizes = [2, 128], strides = [1, 1]} : vector<2x256xf32> to vector<2x128xf32>
    %621 = vector.extract_strided_slice %607 {offsets = [0, 256], sizes = [2, 128], strides = [1, 1]} : vector<2x384xf32> to vector<2x128xf32>
    %622 = vector.extract_strided_slice %610 {offsets = [0, 256], sizes = [2, 128], strides = [1, 1]} : vector<2x384xf32> to vector<2x128xf32>
    %623 = arith.addf %622, %526 : vector<2x128xf32>
    %624 = arith.mulf %619, %623 : vector<2x128xf32>
    %625 = arith.addf %621, %624 : vector<2x128xf32>
    %626 = math.tanh %625 : vector<2x128xf32>
    %cst_291 = arith.constant 1.000000e+00 : f32
    %627 = vector.broadcast %cst_291 : f32 to vector<2x128xf32>
    %628 = arith.subf %627, %620 : vector<2x128xf32>
    %629 = arith.mulf %628, %626 : vector<2x128xf32>
    %630 = arith.mulf %620, %605 : vector<2x128xf32>
    %631 = arith.addf %629, %630 : vector<2x128xf32>
    %c4_292 = arith.constant 4 : index
    %c0_293 = arith.constant 0 : index
    %c0_294 = arith.constant 0 : index
    %632 = vector.load %arg19[%c4_292, %c0_293, %c0_294] : memref<8x2x384xf32, #tpu.memory_space<vmem>>, vector<1x2x384xf32>
    %633 = vector.shape_cast %632 : vector<1x2x384xf32> to vector<2x384xf32>
    %c1_295 = arith.constant 1 : index
    %c0_296 = arith.constant 0 : index
    %c0_297 = arith.constant 0 : index
    %634 = vector.load %arg17[%c1_295, %c0_296, %c0_297] : memref<2x128x384xf32, #tpu.memory_space<vmem>>, vector<1x128x384xf32>
    %635 = vector.shape_cast %634 : vector<1x128x384xf32> to vector<128x384xf32>
    %cst_298 = arith.constant dense<0.000000e+00> : vector<2x384xf32>
    %636 = tpu.matmul %631, %635, %cst_298 {dimension_numbers = #tpu.dot_dimension_numbers<[1], [0], [0], [1], [0, 0, 1, 1], [], []>} : vector<2x128xf32>, vector<128x384xf32>, vector<2x384xf32> -> vector<2x384xf32>
    %637 = vector.extract_strided_slice %633 {offsets = [0, 0], sizes = [2, 256], strides = [1, 1]} : vector<2x384xf32> to vector<2x256xf32>
    %638 = vector.extract_strided_slice %636 {offsets = [0, 0], sizes = [2, 256], strides = [1, 1]} : vector<2x384xf32> to vector<2x256xf32>
    %639 = arith.addf %637, %638 : vector<2x256xf32>
    %640 = arith.negf %639 : vector<2x256xf32>
    %641 = math.exp %640 : vector<2x256xf32>
    %cst_299 = arith.constant 1.000000e+00 : f32
    %642 = vector.broadcast %cst_299 : f32 to vector<2x256xf32>
    %643 = arith.addf %642, %641 : vector<2x256xf32>
    %644 = arith.divf %642, %643 : vector<2x256xf32>
    %645 = vector.extract_strided_slice %644 {offsets = [0, 0], sizes = [2, 128], strides = [1, 1]} : vector<2x256xf32> to vector<2x128xf32>
    %646 = vector.extract_strided_slice %644 {offsets = [0, 128], sizes = [2, 128], strides = [1, 1]} : vector<2x256xf32> to vector<2x128xf32>
    %647 = vector.extract_strided_slice %633 {offsets = [0, 256], sizes = [2, 128], strides = [1, 1]} : vector<2x384xf32> to vector<2x128xf32>
    %648 = vector.extract_strided_slice %636 {offsets = [0, 256], sizes = [2, 128], strides = [1, 1]} : vector<2x384xf32> to vector<2x128xf32>
    %649 = arith.addf %648, %526 : vector<2x128xf32>
    %650 = arith.mulf %645, %649 : vector<2x128xf32>
    %651 = arith.addf %647, %650 : vector<2x128xf32>
    %652 = math.tanh %651 : vector<2x128xf32>
    %cst_300 = arith.constant 1.000000e+00 : f32
    %653 = vector.broadcast %cst_300 : f32 to vector<2x128xf32>
    %654 = arith.subf %653, %646 : vector<2x128xf32>
    %655 = arith.mulf %654, %652 : vector<2x128xf32>
    %656 = arith.mulf %646, %631 : vector<2x128xf32>
    %657 = arith.addf %655, %656 : vector<2x128xf32>
    %c5_301 = arith.constant 5 : index
    %c0_302 = arith.constant 0 : index
    %c0_303 = arith.constant 0 : index
    %658 = vector.load %arg19[%c5_301, %c0_302, %c0_303] : memref<8x2x384xf32, #tpu.memory_space<vmem>>, vector<1x2x384xf32>
    %659 = vector.shape_cast %658 : vector<1x2x384xf32> to vector<2x384xf32>
    %c1_304 = arith.constant 1 : index
    %c0_305 = arith.constant 0 : index
    %c0_306 = arith.constant 0 : index
    %660 = vector.load %arg17[%c1_304, %c0_305, %c0_306] : memref<2x128x384xf32, #tpu.memory_space<vmem>>, vector<1x128x384xf32>
    %661 = vector.shape_cast %660 : vector<1x128x384xf32> to vector<128x384xf32>
    %cst_307 = arith.constant dense<0.000000e+00> : vector<2x384xf32>
    %662 = tpu.matmul %657, %661, %cst_307 {dimension_numbers = #tpu.dot_dimension_numbers<[1], [0], [0], [1], [0, 0, 1, 1], [], []>} : vector<2x128xf32>, vector<128x384xf32>, vector<2x384xf32> -> vector<2x384xf32>
    %663 = vector.extract_strided_slice %659 {offsets = [0, 0], sizes = [2, 256], strides = [1, 1]} : vector<2x384xf32> to vector<2x256xf32>
    %664 = vector.extract_strided_slice %662 {offsets = [0, 0], sizes = [2, 256], strides = [1, 1]} : vector<2x384xf32> to vector<2x256xf32>
    %665 = arith.addf %663, %664 : vector<2x256xf32>
    %666 = arith.negf %665 : vector<2x256xf32>
    %667 = math.exp %666 : vector<2x256xf32>
    %cst_308 = arith.constant 1.000000e+00 : f32
    %668 = vector.broadcast %cst_308 : f32 to vector<2x256xf32>
    %669 = arith.addf %668, %667 : vector<2x256xf32>
    %670 = arith.divf %668, %669 : vector<2x256xf32>
    %671 = vector.extract_strided_slice %670 {offsets = [0, 0], sizes = [2, 128], strides = [1, 1]} : vector<2x256xf32> to vector<2x128xf32>
    %672 = vector.extract_strided_slice %670 {offsets = [0, 128], sizes = [2, 128], strides = [1, 1]} : vector<2x256xf32> to vector<2x128xf32>
    %673 = vector.extract_strided_slice %659 {offsets = [0, 256], sizes = [2, 128], strides = [1, 1]} : vector<2x384xf32> to vector<2x128xf32>
    %674 = vector.extract_strided_slice %662 {offsets = [0, 256], sizes = [2, 128], strides = [1, 1]} : vector<2x384xf32> to vector<2x128xf32>
    %675 = arith.addf %674, %526 : vector<2x128xf32>
    %676 = arith.mulf %671, %675 : vector<2x128xf32>
    %677 = arith.addf %673, %676 : vector<2x128xf32>
    %678 = math.tanh %677 : vector<2x128xf32>
    %cst_309 = arith.constant 1.000000e+00 : f32
    %679 = vector.broadcast %cst_309 : f32 to vector<2x128xf32>
    %680 = arith.subf %679, %672 : vector<2x128xf32>
    %681 = arith.mulf %680, %678 : vector<2x128xf32>
    %682 = arith.mulf %672, %657 : vector<2x128xf32>
    %683 = arith.addf %681, %682 : vector<2x128xf32>
    %c6_310 = arith.constant 6 : index
    %c0_311 = arith.constant 0 : index
    %c0_312 = arith.constant 0 : index
    %684 = vector.load %arg19[%c6_310, %c0_311, %c0_312] : memref<8x2x384xf32, #tpu.memory_space<vmem>>, vector<1x2x384xf32>
    %685 = vector.shape_cast %684 : vector<1x2x384xf32> to vector<2x384xf32>
    %c1_313 = arith.constant 1 : index
    %c0_314 = arith.constant 0 : index
    %c0_315 = arith.constant 0 : index
    %686 = vector.load %arg17[%c1_313, %c0_314, %c0_315] : memref<2x128x384xf32, #tpu.memory_space<vmem>>, vector<1x128x384xf32>
    %687 = vector.shape_cast %686 : vector<1x128x384xf32> to vector<128x384xf32>
    %cst_316 = arith.constant dense<0.000000e+00> : vector<2x384xf32>
    %688 = tpu.matmul %683, %687, %cst_316 {dimension_numbers = #tpu.dot_dimension_numbers<[1], [0], [0], [1], [0, 0, 1, 1], [], []>} : vector<2x128xf32>, vector<128x384xf32>, vector<2x384xf32> -> vector<2x384xf32>
    %689 = vector.extract_strided_slice %685 {offsets = [0, 0], sizes = [2, 256], strides = [1, 1]} : vector<2x384xf32> to vector<2x256xf32>
    %690 = vector.extract_strided_slice %688 {offsets = [0, 0], sizes = [2, 256], strides = [1, 1]} : vector<2x384xf32> to vector<2x256xf32>
    %691 = arith.addf %689, %690 : vector<2x256xf32>
    %692 = arith.negf %691 : vector<2x256xf32>
    %693 = math.exp %692 : vector<2x256xf32>
    %cst_317 = arith.constant 1.000000e+00 : f32
    %694 = vector.broadcast %cst_317 : f32 to vector<2x256xf32>
    %695 = arith.addf %694, %693 : vector<2x256xf32>
    %696 = arith.divf %694, %695 : vector<2x256xf32>
    %697 = vector.extract_strided_slice %696 {offsets = [0, 0], sizes = [2, 128], strides = [1, 1]} : vector<2x256xf32> to vector<2x128xf32>
    %698 = vector.extract_strided_slice %696 {offsets = [0, 128], sizes = [2, 128], strides = [1, 1]} : vector<2x256xf32> to vector<2x128xf32>
    %699 = vector.extract_strided_slice %685 {offsets = [0, 256], sizes = [2, 128], strides = [1, 1]} : vector<2x384xf32> to vector<2x128xf32>
    %700 = vector.extract_strided_slice %688 {offsets = [0, 256], sizes = [2, 128], strides = [1, 1]} : vector<2x384xf32> to vector<2x128xf32>
    %701 = arith.addf %700, %526 : vector<2x128xf32>
    %702 = arith.mulf %697, %701 : vector<2x128xf32>
    %703 = arith.addf %699, %702 : vector<2x128xf32>
    %704 = math.tanh %703 : vector<2x128xf32>
    %cst_318 = arith.constant 1.000000e+00 : f32
    %705 = vector.broadcast %cst_318 : f32 to vector<2x128xf32>
    %706 = arith.subf %705, %698 : vector<2x128xf32>
    %707 = arith.mulf %706, %704 : vector<2x128xf32>
    %708 = arith.mulf %698, %683 : vector<2x128xf32>
    %709 = arith.addf %707, %708 : vector<2x128xf32>
    %c7_319 = arith.constant 7 : index
    %c0_320 = arith.constant 0 : index
    %c0_321 = arith.constant 0 : index
    %710 = vector.load %arg19[%c7_319, %c0_320, %c0_321] : memref<8x2x384xf32, #tpu.memory_space<vmem>>, vector<1x2x384xf32>
    %711 = vector.shape_cast %710 : vector<1x2x384xf32> to vector<2x384xf32>
    %c1_322 = arith.constant 1 : index
    %c0_323 = arith.constant 0 : index
    %c0_324 = arith.constant 0 : index
    %712 = vector.load %arg17[%c1_322, %c0_323, %c0_324] : memref<2x128x384xf32, #tpu.memory_space<vmem>>, vector<1x128x384xf32>
    %713 = vector.shape_cast %712 : vector<1x128x384xf32> to vector<128x384xf32>
    %cst_325 = arith.constant dense<0.000000e+00> : vector<2x384xf32>
    %714 = tpu.matmul %709, %713, %cst_325 {dimension_numbers = #tpu.dot_dimension_numbers<[1], [0], [0], [1], [0, 0, 1, 1], [], []>} : vector<2x128xf32>, vector<128x384xf32>, vector<2x384xf32> -> vector<2x384xf32>
    %715 = vector.extract_strided_slice %711 {offsets = [0, 0], sizes = [2, 256], strides = [1, 1]} : vector<2x384xf32> to vector<2x256xf32>
    %716 = vector.extract_strided_slice %714 {offsets = [0, 0], sizes = [2, 256], strides = [1, 1]} : vector<2x384xf32> to vector<2x256xf32>
    %717 = arith.addf %715, %716 : vector<2x256xf32>
    %718 = arith.negf %717 : vector<2x256xf32>
    %719 = math.exp %718 : vector<2x256xf32>
    %cst_326 = arith.constant 1.000000e+00 : f32
    %720 = vector.broadcast %cst_326 : f32 to vector<2x256xf32>
    %721 = arith.addf %720, %719 : vector<2x256xf32>
    %722 = arith.divf %720, %721 : vector<2x256xf32>
    %723 = vector.extract_strided_slice %722 {offsets = [0, 0], sizes = [2, 128], strides = [1, 1]} : vector<2x256xf32> to vector<2x128xf32>
    %724 = vector.extract_strided_slice %722 {offsets = [0, 128], sizes = [2, 128], strides = [1, 1]} : vector<2x256xf32> to vector<2x128xf32>
    %725 = vector.extract_strided_slice %711 {offsets = [0, 256], sizes = [2, 128], strides = [1, 1]} : vector<2x384xf32> to vector<2x128xf32>
    %726 = vector.extract_strided_slice %714 {offsets = [0, 256], sizes = [2, 128], strides = [1, 1]} : vector<2x384xf32> to vector<2x128xf32>
    %727 = arith.addf %726, %526 : vector<2x128xf32>
    %728 = arith.mulf %723, %727 : vector<2x128xf32>
    %729 = arith.addf %725, %728 : vector<2x128xf32>
    %730 = math.tanh %729 : vector<2x128xf32>
    %cst_327 = arith.constant 1.000000e+00 : f32
    %731 = vector.broadcast %cst_327 : f32 to vector<2x128xf32>
    %732 = arith.subf %731, %724 : vector<2x128xf32>
    %733 = arith.mulf %732, %730 : vector<2x128xf32>
    %734 = arith.mulf %724, %709 : vector<2x128xf32>
    %735 = arith.addf %733, %734 : vector<2x128xf32>
    %c0_328 = arith.constant 0 : index
    %c0_329 = arith.constant 0 : index
    %736 = vector.load %arg13[%c0_328, %c0_329] : memref<128x1xf32, #tpu.memory_space<vmem>>, vector<128x1xf32>
    %cst_330 = arith.constant dense<0.000000e+00> : vector<2x1xf32>
    %737 = tpu.matmul %735, %736, %cst_330 {dimension_numbers = #tpu.dot_dimension_numbers<[1], [0], [0], [1], [0, 0, 1, 1], [], []>} : vector<2x128xf32>, vector<128x1xf32>, vector<2x1xf32> -> vector<2x1xf32>
    %c0_331 = arith.constant 0 : index
    %c0_332 = arith.constant 0 : index
    %738 = vector.load %arg14[%c0_331, %c0_332] : memref<1x1xf32, #tpu.memory_space<vmem>>, vector<1x1xf32>
    %739 = vector.broadcast %738 : vector<1x1xf32> to vector<2x1xf32>
    %740 = arith.addf %737, %739 : vector<2x1xf32>
    %c0_333 = arith.constant 0 : index
    %c0_334 = arith.constant 0 : index
    %741 = vector.load %arg15[%c0_333, %c0_334] : memref<2x1xf32, #tpu.memory_space<vmem>>, vector<2x1xf32>
    tpu.vector_store %arg15[%c0_333, %c0_334], %740 {strides = array<i32>} : memref<2x1xf32, #tpu.memory_space<vmem>>, vector<2x1xf32>,
    return
  }
}

</mosaic_0001>

<llo_original>
// kernel: radar_gru_forward.1
$region0: #{radar_gru_forward.1}
  #allocation0 [shape = 'u32[]', space=smem, size = 0x4, offset = 0x4, fixed_abs, tag = 'smem constant byte address 0x4 - core index']
  #allocation1 [shape = 'u32[144,128]{1,0:T(1,128)}', space=vmem, size = 0x12000, scoped, tag = 'internal scratch']
  #allocation2 [shape = 'f32[2,128,384]{2,1,0:T(8,128)}', space=vmem, size = 0x60000, scoped, tag = 'scratch operand']
  #allocation3 [shape = 'f32[2,128,384]{2,1,0:T(8,128)}', space=vmem, size = 0x60000, scoped, tag = 'scratch operand']
  #allocation4 [shape = 's32[4]{0}', space=sflag, size = 0x10, scoped, tag = 'scratch operand']
  #allocation5 [shape = 'f32[8,2,384]{2,1,0:T(2,128)}', space=vmem, size = 0x6000, scoped, tag = 'scratch operand']
  #allocation6 [shape = 'f32[8,2,128]{2,1,0:T(2,128)}', space=vmem, size = 0x2000, scoped, tag = 'scratch operand']
  #allocation7 [shape = 'f32[1,1]{1,0:T(1,128)S(1)}', space=vmem, size = 0x200, scoped, tag = 'scoped memory for radar_gru_forward.1']
  #allocation10 [shape = 's32[]', space=sflag, size = 0x4, offset = 0, fixed_abs, tag = 'sflag constant byte address 0x0 - dummy sync flag']
  #allocation11 [shape = 's32[]', space=sflag, size = 0x4, offset = 0, fixed_abs, tag = 'sflag constant byte address 0x0 - dummy sync flag']
  #allocation12 [shape = 'u32[]', space=smem, size = 0x4, offset = 0x44, fixed_abs, tag = 'smem constant byte address 0x44 - assertion arg 0']
  #allocation13 [shape = 'u32[]', space=smem, size = 0x4, offset = 0x48, fixed_abs, tag = 'smem constant byte address 0x48 - assertion arg 1']
  #allocation14 [shape = 's32[]', space=sflag, size = 0x4, offset = 0, fixed_abs, tag = 'sflag constant byte address 0x0 - dummy sync flag']
  #allocation15 [shape = 's32[]', space=sflag, size = 0x4, offset = 0, fixed_abs, tag = 'sflag constant byte address 0x0 - dummy sync flag']
  #allocation16 [shape = 's32[]', space=sflag, size = 0x4, offset = 0, fixed_abs, tag = 'sflag constant byte address 0x0 - dummy sync flag']
  #allocation17 [shape = 's32[]', space=sflag, size = 0x4, offset = 0, fixed_abs, tag = 'sflag constant byte address 0x0 - dummy sync flag']
  #allocation18 [shape = 's32[]', space=sflag, size = 0x4, offset = 0, fixed_abs, tag = 'sflag constant byte address 0x0 - dummy sync flag']
  #allocation19 [shape = 's32[]', space=sflag, size = 0x4, offset = 0, fixed_abs, tag = 'sflag constant byte address 0x0 - dummy sync flag']
  %s0 = inlined_call_operand.vmem [shape: f32[16,16], index: 0, kind: input, shape index: {}]
  %s1 = inlined_call_operand.vmem [shape: f32[16,384], index: 1, kind: input, shape index: {}]
  %s2 = inlined_call_operand.hbm [shape: f32[128,384], index: 2, kind: input, shape index: {}]
  %s3 = inlined_call_operand.hbm [shape: f32[128,384], index: 3, kind: input, shape index: {}]
  %s4 = inlined_call_operand.hbm [shape: f32[128,384], index: 4, kind: input, shape index: {}]
  %s5 = inlined_call_operand.hbm [shape: f32[128,384], index: 5, kind: input, shape index: {}]
  %s6 = inlined_call_operand.hbm [shape: f32[128,384], index: 6, kind: input, shape index: {}]
  %s7 = inlined_call_operand.vmem [shape: f32[1,384], index: 7, kind: input, shape index: {}]
  %s8 = inlined_call_operand.vmem [shape: f32[1,128], index: 8, kind: input, shape index: {}]
  %s9 = inlined_call_operand.vmem [shape: f32[1,384], index: 9, kind: input, shape index: {}]
  %s10 = inlined_call_operand.vmem [shape: f32[1,128], index: 10, kind: input, shape index: {}]
  %s11 = inlined_call_operand.vmem [shape: f32[1,384], index: 11, kind: input, shape index: {}]
  %s12 = inlined_call_operand.vmem [shape: f32[1,128], index: 12, kind: input, shape index: {}]
  %s13 = inlined_call_operand.vmem [shape: f32[128,1], index: 13, kind: input, shape index: {}]
  %s14 = inlined_call_operand.<no memory space> [shape: f32[1,1], index: 14, kind: input, shape index: {}]
  %s15 = inlined_call_operand.vmem [shape: f32[2,1], index: 15, kind: output, shape index: {}]
  %s16 = sld [smem:[#allocation0]]
  $region74: #{radar_gru_forward.1} parent=0
    _
  %s18 = ssub.s32 1, %s16
  %s19 = scalar_select 0, %s18, %s16
  %v20 = vstv %s14
  %21 = vst [vmem:[#allocation7] sm:$0x1] %v20
  $region1: #{radar_gru_forward.1} parent=0
    #allocation8 [shape = 'u8[196608]{0}', space=vmem, size = 0x30000, scoped, tag = 'input window, operand 2, single buffered']
    #allocation9 [shape = 's32[1]{0}', space=sflag, size = 0x4, scoped, tag = 'scoped memory for radar_gru_forward.1']
    %22 = vsyncpa [#allocation9], 0
    // Predicated region
    $region2: #{radar_gru_forward.1} parent=1 // pred_check
      _
    $region3: #{radar_gru_forward.1} parent=1 // pred_check_branch
      %24 = sbr.rel (0) target = $region5
    $region4: #{radar_gru_forward.1} parent=1 // pred_region
      _
    $region5: #{radar_gru_forward.1} parent=1 // pred_fallthru
      _
    // Predicated region
    $region6: #{radar_gru_forward.1} parent=1 // pred_check
      _
    $region7: #{radar_gru_forward.1} parent=1 // pred_check_branch
      %26 = sbr.rel (0) target = $region9
    $region8: #{radar_gru_forward.1} parent=1 // pred_region
      _
    $region9: #{radar_gru_forward.1} parent=1 // pred_fallthru
      _
    // Predicated region
    $region10: #{radar_gru_forward.1} parent=1 // pred_check
      _
    $region11: #{radar_gru_forward.1} parent=1 // pred_check_branch
      %28 = sbr.rel (0) target = $region13
    $region12: #{radar_gru_forward.1} parent=1 // pred_region
      %s30 = ssub.s32 6144, 6144
      %31 = vsyncadd [#allocation9], %s30
      %s32 = sshll.u32 [#allocation8], 4
      %s33 = int_to_ptr.vmem [resolvable:$true] %s32
      %38 = dma.hbm_to_vmem [thread:$0]  %s2, 6144, %s33, [#allocation9], 384, 384, 24
    $region13: #{radar_gru_forward.1} parent=1 // pred_fallthru
      _
    // Predicated region
    $region14: #{radar_gru_forward.1} parent=1 // pred_check
      _
    $region15: #{radar_gru_forward.1} parent=1 // pred_check_branch
      %40 = sbr.rel (0) target = $region17
    $region16: #{radar_gru_forward.1} parent=1 // pred_region
      _
    $region17: #{radar_gru_forward.1} parent=1 // pred_fallthru
      _
    // Predicated region
    $region18: #{radar_gru_forward.1} parent=1 // pred_check
      _
    $region19: #{radar_gru_forward.1} parent=1 // pred_check_branch
      %42 = sbr.rel (0) target = $region21
    $region20: #{radar_gru_forward.1} parent=1 // pred_region
      _
    $region21: #{radar_gru_forward.1} parent=1 // pred_fallthru
      _
    // Predicated region
    $region22: #{radar_gru_forward.1} parent=1 // pred_check
      _
    $region23: #{radar_gru_forward.1} parent=1 // pred_check_branch
      %44 = sbr.rel (0) target = $region25
    $region24: #{radar_gru_forward.1} parent=1 // pred_region
      _
    $region25: #{radar_gru_forward.1} parent=1 // pred_fallthru
      _
    // Predicated region
    $region26: #{radar_gru_forward.1} parent=1 // pred_check
      _
    $region27: #{radar_gru_forward.1} parent=1 // pred_check_branch
      %46 = sbr.rel (0) target = $region29
    $region28: #{radar_gru_forward.1} parent=1 // pred_region
      _
    $region29: #{radar_gru_forward.1} parent=1 // pred_fallthru
      _
    // Predicated region
    $region30: #{radar_gru_forward.1} parent=1 // pred_check
      _
    $region31: #{radar_gru_forward.1} parent=1 // pred_check_branch
      %48 = sbr.rel (0) target = $region33
    $region32: #{radar_gru_forward.1} parent=1 // pred_region
      _
    $region33: #{radar_gru_forward.1} parent=1 // pred_fallthru
      _
    // Predicated region
    $region34: #{radar_gru_forward.1} parent=1 // pred_check
      _
    $region35: #{radar_gru_forward.1} parent=1 // pred_check_branch
      %50 = sbr.rel (0) target = $region37
    $region36: #{radar_gru_forward.1} parent=1 // pred_region
      _
    $region37: #{radar_gru_forward.1} parent=1 // pred_fallthru
      _
    // Predicated region
    $region38: #{radar_gru_forward.1} parent=1 // pred_check
      _
    $region39: #{radar_gru_forward.1} parent=1 // pred_check_branch
      %52 = sbr.rel (0) target = $region41
    $region40: #{radar_gru_forward.1} parent=1 // pred_region
      _
    $region41: #{radar_gru_forward.1} parent=1 // pred_fallthru
      _
    // Predicated region
    $region42: #{radar_gru_forward.1} parent=1 // pred_check
      _
    $region43: #{radar_gru_forward.1} parent=1 // pred_check_branch
      %54 = sbr.rel (0) target = $region45
    $region44: #{radar_gru_forward.1} parent=1 // pred_region
      _
    $region45: #{radar_gru_forward.1} parent=1 // pred_fallthru
      _
    // Predicated region
    $region46: #{radar_gru_forward.1} parent=1 // pred_check
      _
    $region47: #{radar_gru_forward.1} parent=1 // pred_check_branch
      %56 = sbr.rel (0) target = $region49
    $region48: #{radar_gru_forward.1} parent=1 // pred_region
      %57 = dma.done [#allocation9], 6144
    $region49: #{radar_gru_forward.1} parent=1 // pred_fallthru
      _
    // Predicated region
    $region50: #{radar_gru_forward.1} parent=1 // pred_check
      _
    $region51: #{radar_gru_forward.1} parent=1 // pred_check_branch
      %59 = sbr.rel target = $region53
    $region52: #{radar_gru_forward.1} parent=1 // pred_region
      %60 = sst [smem:[#allocation12]] [#allocation11]
      %61 = sst [smem:[#allocation13]] [#allocation10]
    $region53: #{radar_gru_forward.1} parent=1 // pred_fallthru
      _
    %63 = shalt.err (0)
    %s65 = sshll.u32 [#allocation2], 4
    %s66 = int_to_ptr.vmem [resolvable:$true] %s65
    %68 = dma.hbm_to_vmem [thread:$0]  %s3, 6144, %s66, [#allocation4]
    %s69 = scalar_lea.sflag [#allocation4], 1
    // Predicated region
    $region54: #{radar_gru_forward.1} parent=1 // pred_check
      _
    $region55: #{radar_gru_forward.1} parent=1 // pred_check_branch
      %71 = sbr.rel target = $region57
    $region56: #{radar_gru_forward.1} parent=1 // pred_region
      %72 = sst [smem:[#allocation12]] [#allocation15]
      %73 = sst [smem:[#allocation13]] [#allocation14]
    $region57: #{radar_gru_forward.1} parent=1 // pred_fallthru
      _
    %75 = shalt.err (0)
    %s77 = sshll.u32 [#allocation3], 4
    %s78 = int_to_ptr.vmem [resolvable:$true] %s77
    %80 = dma.hbm_to_vmem [thread:$0]  %s4, 6144, %s78, %s69
    %s81 = scalar_lea.vmem [#allocation2], 384
    %s82 = scalar_lea.sflag [#allocation4], 2
    // Predicated region
    $region58: #{radar_gru_forward.1} parent=1 // pred_check
      _
    $region59: #{radar_gru_forward.1} parent=1 // pred_check_branch
      %84 = sbr.rel target = $region61
    $region60: #{radar_gru_forward.1} parent=1 // pred_region
      %85 = sst [smem:[#allocation12]] [#allocation17]
      %86 = sst [smem:[#allocation13]] [#allocation16]
    $region61: #{radar_gru_forward.1} parent=1 // pred_fallthru
      _
    %88 = shalt.err (0)
    %s90 = sshll.u32 %s81, 4
    %s91 = int_to_ptr.vmem [resolvable:$true] %s90
    %93 = dma.hbm_to_vmem [thread:$0]  %s5, 6144, %s91, %s82
    %s94 = scalar_lea.vmem [#allocation3], 384
    %s95 = scalar_lea.sflag [#allocation4], 3
    // Predicated region
    $region62: #{radar_gru_forward.1} parent=1 // pred_check
      _
    $region63: #{radar_gru_forward.1} parent=1 // pred_check_branch
      %97 = sbr.rel target = $region65
    $region64: #{radar_gru_forward.1} parent=1 // pred_region
      %98 = sst [smem:[#allocation12]] [#allocation19]
      %99 = sst [smem:[#allocation13]] [#allocation18]
    $region65: #{radar_gru_forward.1} parent=1 // pred_fallthru
      _
    %101 = shalt.err (0)
    %s103 = sshll.u32 %s94, 4
    %s104 = int_to_ptr.vmem [resolvable:$true] %s103
    %106 = dma.hbm_to_vmem [thread:$0]  %s6, 6144, %s104, %s95
    %v107 = vld [vmem:[%s0] sm:$0xff]
    %v108 = vld [vmem:[%s0 + $0x8] sm:$0xff]
    %v109 = vld [vmem:[%s1] sm:$0xff]
    %v110 = vld [vmem:[%s1 + $0x8] sm:$0xff]
    %v111 = vld [vmem:[%s1 + $0x10] sm:$0xff]
    %v112 = vld [vmem:[%s1 + $0x18] sm:$0xff]
    %v113 = vld [vmem:[%s1 + $0x20] sm:$0xff]
    %v114 = vld [vmem:[%s1 + $0x28] sm:$0xff]
    %v115 = vld [vmem:[%s7] sm:$0x7]
    %v117 = vlaneseq
    %v118 = vshrl.u32 %v117, 7
    %v119 = vsub.s32 0, %v118
    %v120 = vrot.slane %v115, %v119
    %v121 = vlaneseq
    %v122 = vshrl.u32 %v121, 7
    %v123 = vsub.s32 1, %v122
    %v124 = vrot.slane %v115, %v123
    %v125 = vlaneseq
    %v126 = vshrl.u32 %v125, 7
    %v127 = vsub.s32 2, %v126
    %v128 = vrot.slane %v115, %v127
    %vm132 = vcmask 130048
    %v134 = vsel %vm132, %v107, 0
    %v137 = vsel %vm132, %v108, 0
    %139 = vmatprep.subr.mxu0 %v110
    %140 = vmatpush1.msra.mxu0 %v109
    %141 = vmatprep.subr.mxu0 %v113
    %142 = vmatpush1.msra.mxu0 %v112
    %143 = vmatprep.subr.mxu0 0.0
    %144 = vmatpush1.msra.mxu0 0.0
    %145 = vmatprep.subr.mxu0 0.0
    %146 = vmatpush1.msra.mxu0 0.0
    %147 = vmatprep.subr.mxu0 0.0
    %148 = vmatpush1.msra.mxu0 0.0
    %149 = vmatprep.subr.mxu0 0.0
    %150 = vmatpush1.msra.mxu0 0.0
    %151 = vmatprep.subr.mxu0 0.0
    %152 = vmatpush1.msra.mxu0 0.0
    %153 = vmatprep.subr.mxu0 0.0
    %154 = vmatpush1.msra.mxu0 0.0
    %155 = vmatprep.subr.mxu0 0.0
    %156 = vmatpush1.msra.mxu0 0.0
    %157 = vmatprep.subr.mxu0 0.0
    %158 = vmatpush1.msra.mxu0 0.0
    %159 = vmatprep.subr.mxu0 0.0
    %160 = vmatpush1.msra.mxu0 0.0
    %161 = vmatprep.subr.mxu0 0.0
    %162 = vmatpush1.msra.mxu0 0.0
    %163 = vmatprep.subr.mxu0 0.0
    %164 = vmatpush1.msra.mxu0 0.0
    %165 = vmatprep.subr.mxu0 0.0
    %166 = vmatpush1.msra.mxu0 0.0
    %167 = vmatprep.subr.mxu0 0.0
    %168 = vmatpush1.msra.mxu0 0.0
    %169 = vmatprep.subr.mxu0 0.0
    %170 = vmatpush1.msra.mxu0 0.0
    %171 = vmatprep.subr.mxu0 0.0
    %172 = vmatpush1.msra.mxu0 0.0
    %173 = vmatprep.subr.mxu0 0.0
    %174 = vmatpush1.msra.mxu0 0.0
    %175 = vmatprep.subr.mxu0 0.0
    %176 = vmatpush1.msra.mxu0 0.0
    %177 = vmatprep.subr.mxu0 0.0
    %178 = vmatpush1.msra.mxu0 0.0
    %179 = vmatprep.subr.mxu0 0.0
    %180 = vmatpush1.msra.mxu0 0.0
    %181 = vmatprep.subr.mxu0 0.0
    %182 = vmatpush1.msra.mxu0 0.0
    %183 = vmatprep.subr.mxu0 0.0
    %184 = vmatpush1.msra.mxu0 0.0
    %185 = vmatprep.subr.mxu0 0.0
    %186 = vmatpush1.msra.mxu0 0.0
    %187 = vmatprep.subr.mxu0 0.0
    %188 = vmatpush1.msra.mxu0 0.0
    %189 = vmatprep.subr.mxu0 0.0
    %190 = vmatpush1.msra.mxu0 0.0
    %191 = vmatprep.subr.mxu0 0.0
    %192 = vmatpush1.msra.mxu0 0.0
    %193 = vmatprep.subr.mxu0 0.0
    %194 = vmatpush1.msra.mxu0 0.0
    %195 = vmatprep.subr.mxu0 0.0
    %196 = vmatpush1.msra.mxu0 0.0
    %197 = vmatprep.subr.mxu0 0.0
    %198 = vmatpush1.msra.mxu0 0.0
    %199 = vmatprep.subr.mxu0 0.0
    %200 = vmatpush1.msra.mxu0 0.0
    %201 = vmatprep.subr.mxu0 0.0
    %202 = vmatpush1.msra.mxu0 0.0
    %203 = vmatprep.mubr.f32.mxu0 0.0
    %204 = vmatmul.mubr.f32.gmra.mrb[0].mxu0 %v134
    %v205 = vpop.f32.mrb[0].mxu0
    %v206 = vadd.f32 %v120, %v205
    %v207 = vpop.f32.mrb[0].mxu0
    %v208 = vadd.f32 %v124, %v207
    %209 = vmatprep.mubr.f32.mxu0 0.0
    %210 = vmatmul.mubr.f32.gmra.mrb[0].mxu0 %v137
    %v211 = vpop.f32.mrb[0].mxu0
    %v212 = vadd.f32 %v120, %v211
    %v213 = vpop.f32.mrb[0].mxu0
    %v214 = vadd.f32 %v124, %v213
    %215 = vdwg.mxu0
    %216 = vmatprep.subr.mxu0 0.0
    %217 = vmatpush1.msra.mxu0 %v111
    %218 = vmatprep.subr.mxu0 0.0
    %219 = vmatpush1.msra.mxu0 %v114
    %220 = vmatprep.subr.mxu0 0.0
    %221 = vmatpush1.msra.mxu0 0.0
    %222 = vmatprep.subr.mxu0 0.0
    %223 = vmatpush1.msra.mxu0 0.0
    %224 = vmatprep.subr.mxu0 0.0
    %225 = vmatpush1.msra.mxu0 0.0
    %226 = vmatprep.subr.mxu0 0.0
    %227 = vmatpush1.msra.mxu0 0.0
    %228 = vmatprep.subr.mxu0 0.0
    %229 = vmatpush1.msra.mxu0 0.0
    %230 = vmatprep.subr.mxu0 0.0
    %231 = vmatpush1.msra.mxu0 0.0
    %232 = vmatprep.subr.mxu0 0.0
    %233 = vmatpush1.msra.mxu0 0.0
    %234 = vmatprep.subr.mxu0 0.0
    %235 = vmatpush1.msra.mxu0 0.0
    %236 = vmatprep.subr.mxu0 0.0
    %237 = vmatpush1.msra.mxu0 0.0
    %238 = vmatprep.subr.mxu0 0.0
    %239 = vmatpush1.msra.mxu0 0.0
    %240 = vmatprep.subr.mxu0 0.0
    %241 = vmatpush1.msra.mxu0 0.0
    %242 = vmatprep.subr.mxu0 0.0
    %243 = vmatpush1.msra.mxu0 0.0
    %244 = vmatprep.subr.mxu0 0.0
    %245 = vmatpush1.msra.mxu0 0.0
    %246 = vmatprep.subr.mxu0 0.0
    %247 = vmatpush1.msra.mxu0 0.0
    %248 = vmatprep.subr.mxu0 0.0
    %249 = vmatpush1.msra.mxu0 0.0
    %250 = vmatprep.subr.mxu0 0.0
    %251 = vmatpush1.msra.mxu0 0.0
    %252 = vmatprep.subr.mxu0 0.0
    %253 = vmatpush1.msra.mxu0 0.0
    %254 = vmatprep.subr.mxu0 0.0
    %255 = vmatpush1.msra.mxu0 0.0
    %256 = vmatprep.subr.mxu0 0.0
    %257 = vmatpush1.msra.mxu0 0.0
    %258 = vmatprep.subr.mxu0 0.0
    %259 = vmatpush1.msra.mxu0 0.0
    %260 = vmatprep.subr.mxu0 0.0
    %261 = vmatpush1.msra.mxu0 0.0
    %262 = vmatprep.subr.mxu0 0.0
    %263 = vmatpush1.msra.mxu0 0.0
    %264 = vmatprep.subr.mxu0 0.0
    %265 = vmatpush1.msra.mxu0 0.0
    %266 = vmatprep.subr.mxu0 0.0
    %267 = vmatpush1.msra.mxu0 0.0
    %268 = vmatprep.subr.mxu0 0.0
    %269 = vmatpush1.msra.mxu0 0.0
    %270 = vmatprep.subr.mxu0 0.0
    %271 = vmatpush1.msra.mxu0 0.0
    %272 = vmatprep.subr.mxu0 0.0
    %273 = vmatpush1.msra.mxu0 0.0
    %274 = vmatprep.subr.mxu0 0.0
    %275 = vmatpush1.msra.mxu0 0.0
    %276 = vmatprep.subr.mxu0 0.0
    %277 = vmatpush1.msra.mxu0 0.0
    %278 = vmatprep.subr.mxu0 0.0
    %279 = vmatpush1.msra.mxu0 0.0
    %280 = vmatprep.mubr.f32.mxu0 0.0
    %281 = vmatmul.mubr.f32.gmra.mrb[0].mxu0 %v134
    %v282 = vpop.f32.mrb[0].mxu0
    %v283 = vadd.f32 %v128, %v282
    %v284 = vpop.f32.mrb[0].mxu0
    %285 = vmatprep.mubr.f32.mxu0 0.0
    %286 = vmatmul.mubr.f32.gmra.mrb[0].mxu0 %v137
    %v287 = vpop.f32.mrb[0].mxu0
    %v288 = vadd.f32 %v128, %v287
    %v289 = vpop.f32.mrb[0].mxu0
    %290 = vdwg.mxu0
    %v297 = vcombine.low %v206, %v208
    %v298 = vcombine.high %v206, %v208
    %v299 = vcombine.high %v283, %v283
    %v301 = vunpack.c.l.s4 1983009808
    %v302 = vunpack.c.0.s8 %v301
    %v303 = vlaneseq
    %v304 = vshrl.u32 %v303, 7
    %v305 = vsub.s32 %v302, %v304
    %v306 = vrot.slane %v297, %v305
    %v308 = vunpack.c.l.s4 1983009808
    %v309 = vunpack.c.0.s8 %v308
    %v310 = vlaneseq
    %v311 = vshrl.u32 %v310, 7
    %v312 = vsub.s32 %v309, %v311
    %v313 = vrot.slane %v298, %v312
    %v315 = vunpack.c.l.s4 1983009808
    %v316 = vunpack.c.0.s8 %v315
    %v317 = vlaneseq
    %v318 = vshrl.u32 %v317, 7
    %v319 = vsub.s32 %v316, %v318
    %v320 = vrot.slane %v283, %v319
    %v322 = vunpack.c.l.s4 1983009808
    %v323 = vunpack.c.0.s8 %v322
    %v324 = vlaneseq
    %v325 = vshrl.u32 %v324, 7
    %v326 = vsub.s32 %v323, %v325
    %v327 = vrot.slane %v299, %v326
    %v328 = vcombine.low %v306, %v320
    %v329 = vcombine.high %v306, %v320
    %v330 = vcombine.low %v313, %v327
    %v331 = vcombine.high %v313, %v327
    %v332 = vcombine.low %v212, %v214
    %v333 = vcombine.high %v212, %v214
    %v334 = vcombine.high %v288, %v288
    %v336 = vunpack.c.l.s4 1983009808
    %v337 = vunpack.c.0.s8 %v336
    %v338 = vlaneseq
    %v339 = vshrl.u32 %v338, 7
    %v340 = vsub.s32 %v337, %v339
    %v341 = vrot.slane %v332, %v340
    %v343 = vunpack.c.l.s4 1983009808
    %v344 = vunpack.c.0.s8 %v343
    %v345 = vlaneseq
    %v346 = vshrl.u32 %v345, 7
    %v347 = vsub.s32 %v344, %v346
    %v348 = vrot.slane %v333, %v347
    %v350 = vunpack.c.l.s4 1983009808
    %v351 = vunpack.c.0.s8 %v350
    %v352 = vlaneseq
    %v353 = vshrl.u32 %v352, 7
    %v354 = vsub.s32 %v351, %v353
    %v355 = vrot.slane %v288, %v354
    %v357 = vunpack.c.l.s4 1983009808
    %v358 = vunpack.c.0.s8 %v357
    %v359 = vlaneseq
    %v360 = vshrl.u32 %v359, 7
    %v361 = vsub.s32 %v358, %v360
    %v362 = vrot.slane %v334, %v361
    %v363 = vcombine.low %v341, %v355
    %v364 = vcombine.high %v341, %v355
    %v365 = vcombine.low %v348, %v362
    %v366 = vcombine.high %v348, %v362
    %375 = vst [vmem:[#allocation5] sm:$0x3f] %v328
    %376 = vst [vmem:[#allocation5 + $0x6] sm:$0x3f] %v329
    %377 = vst [vmem:[#allocation5 + $0xc] sm:$0x3f] %v330
    %378 = vst [vmem:[#allocation5 + $0x12] sm:$0x3f] %v331
    %379 = vst [vmem:[#allocation5 + $0x18] sm:$0x3f] %v363
    %380 = vst [vmem:[#allocation5 + $0x1e] sm:$0x3f] %v364
    %381 = vst [vmem:[#allocation5 + $0x24] sm:$0x3f] %v365
    %382 = vst [vmem:[#allocation5 + $0x2a] sm:$0x3f] %v366
    %v383 = vld [vmem:[%s8] sm:$0x1]
    %v385 = vlaneseq
    %v386 = vshrl.u32 %v385, 7
    %v387 = vsub.s32 0, %v386
    %v388 = vrot.slane %v383, %v387
    %v390 = vld [vmem:[#allocation5] sm:$0x3f]
    %v391 = vld [vmem:[#allocation8] sm:$0xff]
    %v392 = vld [vmem:[#allocation8 + $0x8] sm:$0xff]
    %v393 = vld [vmem:[#allocation8 + $0x10] sm:$0xff]
    %v394 = vld [vmem:[#allocation8 + $0x18] sm:$0xff]
    %v395 = vld [vmem:[#allocation8 + $0x20] sm:$0xff]
    %v396 = vld [vmem:[#allocation8 + $0x28] sm:$0xff]
    %v397 = vld [vmem:[#allocation8 + $0x30] sm:$0xff]
    %v398 = vld [vmem:[#allocation8 + $0x38] sm:$0xff]
    %v399 = vld [vmem:[#allocation8 + $0x40] sm:$0xff]
    %v400 = vld [vmem:[#allocation8 + $0x48] sm:$0xff]
    %v401 = vld [vmem:[#allocation8 + $0x50] sm:$0xff]
    %v402 = vld [vmem:[#allocation8 + $0x58] sm:$0xff]
    %v403 = vld [vmem:[#allocation8 + $0x60] sm:$0xff]
    %v404 = vld [vmem:[#allocation8 + $0x68] sm:$0xff]
    %v405 = vld [vmem:[#allocation8 + $0x70] sm:$0xff]
    %v406 = vld [vmem:[#allocation8 + $0x78] sm:$0xff]
    %v407 = vld [vmem:[#allocation8 + $0x80] sm:$0xff]
    %v408 = vld [vmem:[#allocation8 + $0x88] sm:$0xff]
    %v409 = vld [vmem:[#allocation8 + $0x90] sm:$0xff]
    %v410 = vld [vmem:[#allocation8 + $0x98] sm:$0xff]
    %v411 = vld [vmem:[#allocation8 + $0xa0] sm:$0xff]
    %v412 = vld [vmem:[#allocation8 + $0xa8] sm:$0xff]
    %v413 = vld [vmem:[#allocation8 + $0xb0] sm:$0xff]
    %v414 = vld [vmem:[#allocation8 + $0xb8] sm:$0xff]
    %v415 = vld [vmem:[#allocation8 + $0xc0] sm:$0xff]
    %v416 = vld [vmem:[#allocation8 + $0xc8] sm:$0xff]
    %v417 = vld [vmem:[#allocation8 + $0xd0] sm:$0xff]
    %v418 = vld [vmem:[#allocation8 + $0xd8] sm:$0xff]
    %v419 = vld [vmem:[#allocation8 + $0xe0] sm:$0xff]
    %v420 = vld [vmem:[#allocation8 + $0xe8] sm:$0xff]
    %v421 = vld [vmem:[#allocation8 + $0xf0] sm:$0xff]
    %v422 = vld [vmem:[#allocation8 + $0xf8] sm:$0xff]
    %v423 = vld [vmem:[#allocation8 + $0x100] sm:$0xff]
    %v424 = vld [vmem:[#allocation8 + $0x108] sm:$0xff]
    %v425 = vld [vmem:[#allocation8 + $0x110] sm:$0xff]
    %v426 = vld [vmem:[#allocation8 + $0x118] sm:$0xff]
    %v427 = vld [vmem:[#allocation8 + $0x120] sm:$0xff]
    %v428 = vld [vmem:[#allocation8 + $0x128] sm:$0xff]
    %v429 = vld [vmem:[#allocation8 + $0x130] sm:$0xff]
    %v430 = vld [vmem:[#allocation8 + $0x138] sm:$0xff]
    %v431 = vld [vmem:[#allocation8 + $0x140] sm:$0xff]
    %v432 = vld [vmem:[#allocation8 + $0x148] sm:$0xff]
    %v433 = vld [vmem:[#allocation8 + $0x150] sm:$0xff]
    %v434 = vld [vmem:[#allocation8 + $0x158] sm:$0xff]
    %v435 = vld [vmem:[#allocation8 + $0x160] sm:$0xff]
    %v436 = vld [vmem:[#allocation8 + $0x168] sm:$0xff]
    %v437 = vld [vmem:[#allocation8 + $0x170] sm:$0xff]
    %v438 = vld [vmem:[#allocation8 + $0x178] sm:$0xff]
    %439 = vmatprep.subr.mxu0 %v392
    %440 = vmatpush1.msra.mxu0 %v391
    %441 = vmatprep.subr.mxu0 %v395
    %442 = vmatpush1.msra.mxu0 %v394
    %443 = vmatprep.subr.mxu0 %v398
    %444 = vmatpush1.msra.mxu0 %v397
    %445 = vmatprep.subr.mxu0 %v401
    %446 = vmatpush1.msra.mxu0 %v400
    %447 = vmatprep.subr.mxu0 %v404
    %448 = vmatpush1.msra.mxu0 %v403
    %449 = vmatprep.subr.mxu0 %v407
    %450 = vmatpush1.msra.mxu0 %v406
    %451 = vmatprep.subr.mxu0 %v410
    %452 = vmatpush1.msra.mxu0 %v409
    %453 = vmatprep.subr.mxu0 %v413
    %454 = vmatpush1.msra.mxu0 %v412
    %455 = vmatprep.subr.mxu0 %v416
    %456 = vmatpush1.msra.mxu0 %v415
    %457 = vmatprep.subr.mxu0 %v419
    %458 = vmatpush1.msra.mxu0 %v418
    %459 = vmatprep.subr.mxu0 %v422
    %460 = vmatpush1.msra.mxu0 %v421
    %461 = vmatprep.subr.mxu0 %v425
    %462 = vmatpush1.msra.mxu0 %v424
    %463 = vmatprep.subr.mxu0 %v428
    %464 = vmatpush1.msra.mxu0 %v427
    %465 = vmatprep.subr.mxu0 %v431
    %466 = vmatpush1.msra.mxu0 %v430
    %467 = vmatprep.subr.mxu0 %v434
    %468 = vmatpush1.msra.mxu0 %v433
    %469 = vmatprep.subr.mxu0 %v437
    %470 = vmatpush1.msra.mxu0 %v436
    %471 = vmatprep.subr.mxu0 0.0
    %472 = vmatpush1.msra.mxu0 0.0
    %473 = vmatprep.subr.mxu0 0.0
    %474 = vmatpush1.msra.mxu0 0.0
    %475 = vmatprep.subr.mxu0 0.0
    %476 = vmatpush1.msra.mxu0 0.0
    %477 = vmatprep.subr.mxu0 0.0
    %478 = vmatpush1.msra.mxu0 0.0
    %479 = vmatprep.subr.mxu0 0.0
    %480 = vmatpush1.msra.mxu0 0.0
    %481 = vmatprep.subr.mxu0 0.0
    %482 = vmatpush1.msra.mxu0 0.0
    %483 = vmatprep.subr.mxu0 0.0
    %484 = vmatpush1.msra.mxu0 0.0
    %485 = vmatprep.subr.mxu0 0.0
    %486 = vmatpush1.msra.mxu0 0.0
    %487 = vmatprep.subr.mxu0 0.0
    %488 = vmatpush1.msra.mxu0 0.0
    %489 = vmatprep.subr.mxu0 0.0
    %490 = vmatpush1.msra.mxu0 0.0
    %491 = vmatprep.subr.mxu0 0.0
    %492 = vmatpush1.msra.mxu0 0.0
    %493 = vmatprep.subr.mxu0 0.0
    %494 = vmatpush1.msra.mxu0 0.0
    %495 = vmatprep.subr.mxu0 0.0
    %496 = vmatpush1.msra.mxu0 0.0
    %497 = vmatprep.subr.mxu0 0.0
    %498 = vmatpush1.msra.mxu0 0.0
    %499 = vmatprep.subr.mxu0 0.0
    %500 = vmatpush1.msra.mxu0 0.0
    %501 = vmatprep.subr.mxu0 0.0
    %502 = vmatpush1.msra.mxu0 0.0
    %503 = vmatprep.mubr.f32.mxu0 0.0
    %504 = vmatmul.mubr.f32.gmra.mrb[0].mxu0 0.0
    %v505 = vpop.f32.mrb[0].mxu0
    %v506 = vadd.f32 0.0, %v505
    %v507 = vpop.f32.mrb[0].mxu0
    %v508 = vadd.f32 0.0, %v507
    %509 = vdwg.mxu0
    %510 = vmatprep.subr.mxu0 0.0
    %511 = vmatpush1.msra.mxu0 %v393
    %512 = vmatprep.subr.mxu0 0.0
    %513 = vmatpush1.msra.mxu0 %v396
    %514 = vmatprep.subr.mxu0 0.0
    %515 = vmatpush1.msra.mxu0 %v399
    %516 = vmatprep.subr.mxu0 0.0
    %517 = vmatpush1.msra.mxu0 %v402
    %518 = vmatprep.subr.mxu0 0.0
    %519 = vmatpush1.msra.mxu0 %v405
    %520 = vmatprep.subr.mxu0 0.0
    %521 = vmatpush1.msra.mxu0 %v408
    %522 = vmatprep.subr.mxu0 0.0
    %523 = vmatpush1.msra.mxu0 %v411
    %524 = vmatprep.subr.mxu0 0.0
    %525 = vmatpush1.msra.mxu0 %v414
    %526 = vmatprep.subr.mxu0 0.0
    %527 = vmatpush1.msra.mxu0 %v417
    %528 = vmatprep.subr.mxu0 0.0
    %529 = vmatpush1.msra.mxu0 %v420
    %530 = vmatprep.subr.mxu0 0.0
    %531 = vmatpush1.msra.mxu0 %v423
    %532 = vmatprep.subr.mxu0 0.0
    %533 = vmatpush1.msra.mxu0 %v426
    %534 = vmatprep.subr.mxu0 0.0
    %535 = vmatpush1.msra.mxu0 %v429
    %536 = vmatprep.subr.mxu0 0.0
    %537 = vmatpush1.msra.mxu0 %v432
    %538 = vmatprep.subr.mxu0 0.0
    %539 = vmatpush1.msra.mxu0 %v435
    %540 = vmatprep.subr.mxu0 0.0
    %541 = vmatpush1.msra.mxu0 %v438
    %542 = vmatprep.subr.mxu0 0.0
    %543 = vmatpush1.msra.mxu0 0.0
    %544 = vmatprep.subr.mxu0 0.0
    %545 = vmatpush1.msra.mxu0 0.0
    %546 = vmatprep.subr.mxu0 0.0
    %547 = vmatpush1.msra.mxu0 0.0
    %548 = vmatprep.subr.mxu0 0.0
    %549 = vmatpush1.msra.mxu0 0.0
    %550 = vmatprep.subr.mxu0 0.0
    %551 = vmatpush1.msra.mxu0 0.0
    %552 = vmatprep.subr.mxu0 0.0
    %553 = vmatpush1.msra.mxu0 0.0
    %554 = vmatprep.subr.mxu0 0.0
    %555 = vmatpush1.msra.mxu0 0.0
    %556 = vmatprep.subr.mxu0 0.0
    %557 = vmatpush1.msra.mxu0 0.0
    %558 = vmatprep.subr.mxu0 0.0
    %559 = vmatpush1.msra.mxu0 0.0
    %560 = vmatprep.subr.mxu0 0.0
    %561 = vmatpush1.msra.mxu0 0.0
    %562 = vmatprep.subr.mxu0 0.0
    %563 = vmatpush1.msra.mxu0 0.0
    %564 = vmatprep.subr.mxu0 0.0
    %565 = vmatpush1.msra.mxu0 0.0
    %566 = vmatprep.subr.mxu0 0.0
    %567 = vmatpush1.msra.mxu0 0.0
    %568 = vmatprep.subr.mxu0 0.0
    %569 = vmatpush1.msra.mxu0 0.0
    %570 = vmatprep.subr.mxu0 0.0
    %571 = vmatpush1.msra.mxu0 0.0
    %572 = vmatprep.subr.mxu0 0.0
    %573 = vmatpush1.msra.mxu0 0.0
    %574 = vmatprep.mubr.f32.mxu0 0.0
    %575 = vmatmul.mubr.f32.gmra.mrb[0].mxu0 0.0
    %v576 = vpop.f32.mrb[0].mxu0
    %v577 = vadd.f32 0.0, %v576
    %v578 = vpop.f32.mrb[0].mxu0
    %579 = vdwg.mxu0
    %v582 = vcombine.low %v506, %v508
    %v584 = vunpack.c.l.s4 1983009808
    %v585 = vunpack.c.0.s8 %v584
    %v586 = vlaneseq
    %v587 = vshrl.u32 %v586, 7
    %v588 = vsub.s32 %v585, %v587
    %v589 = vrot.slane %v582, %v588
    %v591 = vadd.f32 %v390, %v589
    %v592 = vxor.u32 %v591, 2147483648
    %v593 = vmul.f32 %v592, 1.442695
    %v594 = vpow.pop %v593
    %v595 = vadd.f32 %v594, 1.0
    %v596 = vrcp.pop %v595
    %v597 = vmul.f32 1.0, %v596
    %v598 = vadd.f32 %v577, %v388
    %v599 = vmul.f32 %v597, %v598
    %v601 = vrot.slane %v390, 4
    %v603 = vadd.f32 %v601, %v599
    %v604 = vtanh.pop %v603
    %v606 = vrot.slane %v597, 2
    %v608 = vsub.f32 1.0, %v606
    %v609 = vmul.f32 %v608, %v604
    %v610 = vmul.f32 %v606, 0.0
    %v611 = vadd.f32 %v609, %v610
    %612 = vst [vmem:[#allocation6] sm:$0x3] %v611
    %s613 = scalar_lea.vmem [#allocation5], 6
    %v614 = vld [vmem:[%s613] sm:$0x3f]
    %v615 = vld [vmem:[#allocation8] sm:$0xff]
    %v616 = vld [vmem:[#allocation8 + $0x8] sm:$0xff]
    %v617 = vld [vmem:[#allocation8 + $0x10] sm:$0xff]
    %v618 = vld [vmem:[#allocation8 + $0x18] sm:$0xff]
    %v619 = vld [vmem:[#allocation8 + $0x20] sm:$0xff]
    %v620 = vld [vmem:[#allocation8 + $0x28] sm:$0xff]
    %v621 = vld [vmem:[#allocation8 + $0x30] sm:$0xff]
    %v622 = vld [vmem:[#allocation8 + $0x38] sm:$0xff]
    %v623 = vld [vmem:[#allocation8 + $0x40] sm:$0xff]
    %v624 = vld [vmem:[#allocation8 + $0x48] sm:$0xff]
    %v625 = vld [vmem:[#allocation8 + $0x50] sm:$0xff]
    %v626 = vld [vmem:[#allocation8 + $0x58] sm:$0xff]
    %v627 = vld [vmem:[#allocation8 + $0x60] sm:$0xff]
    %v628 = vld [vmem:[#allocation8 + $0x68] sm:$0xff]
    %v629 = vld [vmem:[#allocation8 + $0x70] sm:$0xff]
    %v630 = vld [vmem:[#allocation8 + $0x78] sm:$0xff]
    %v631 = vld [vmem:[#allocation8 + $0x80] sm:$0xff]
    %v632 = vld [vmem:[#allocation8 + $0x88] sm:$0xff]
    %v633 = vld [vmem:[#allocation8 + $0x90] sm:$0xff]
    %v634 = vld [vmem:[#allocation8 + $0x98] sm:$0xff]
    %v635 = vld [vmem:[#allocation8 + $0xa0] sm:$0xff]
    %v636 = vld [vmem:[#allocation8 + $0xa8] sm:$0xff]
    %v637 = vld [vmem:[#allocation8 + $0xb0] sm:$0xff]
    %v638 = vld [vmem:[#allocation8 + $0xb8] sm:$0xff]
    %v639 = vld [vmem:[#allocation8 + $0xc0] sm:$0xff]
    %v640 = vld [vmem:[#allocation8 + $0xc8] sm:$0xff]
    %v641 = vld [vmem:[#allocation8 + $0xd0] sm:$0xff]
    %v642 = vld [vmem:[#allocation8 + $0xd8] sm:$0xff]
    %v643 = vld [vmem:[#allocation8 + $0xe0] sm:$0xff]
    %v644 = vld [vmem:[#allocation8 + $0xe8] sm:$0xff]
    %v645 = vld [vmem:[#allocation8 + $0xf0] sm:$0xff]
    %v646 = vld [vmem:[#allocation8 + $0xf8] sm:$0xff]
    %v647 = vld [vmem:[#allocation8 + $0x100] sm:$0xff]
    %v648 = vld [vmem:[#allocation8 + $0x108] sm:$0xff]
    %v649 = vld [vmem:[#allocation8 + $0x110] sm:$0xff]
    %v650 = vld [vmem:[#allocation8 + $0x118] sm:$0xff]
    %v651 = vld [vmem:[#allocation8 + $0x120] sm:$0xff]
    %v652 = vld [vmem:[#allocation8 + $0x128] sm:$0xff]
    %v653 = vld [vmem:[#allocation8 + $0x130] sm:$0xff]
    %v654 = vld [vmem:[#allocation8 + $0x138] sm:$0xff]
    %v655 = vld [vmem:[#allocation8 + $0x140] sm:$0xff]
    %v656 = vld [vmem:[#allocation8 + $0x148] sm:$0xff]
    %v657 = vld [vmem:[#allocation8 + $0x150] sm:$0xff]
    %v658 = vld [vmem:[#allocation8 + $0x158] sm:$0xff]
    %v659 = vld [vmem:[#allocation8 + $0x160] sm:$0xff]
    %v660 = vld [vmem:[#allocation8 + $0x168] sm:$0xff]
    %v661 = vld [vmem:[#allocation8 + $0x170] sm:$0xff]
    %v662 = vld [vmem:[#allocation8 + $0x178] sm:$0xff]
    %663 = vmatprep.subr.mxu0 %v616
    %664 = vmatpush1.msra.mxu0 %v615
    %665 = vmatprep.subr.mxu0 %v619
    %666 = vmatpush1.msra.mxu0 %v618
    %667 = vmatprep.subr.mxu0 %v622
    %668 = vmatpush1.msra.mxu0 %v621
    %669 = vmatprep.subr.mxu0 %v625
    %670 = vmatpush1.msra.mxu0 %v624
    %671 = vmatprep.subr.mxu0 %v628
    %672 = vmatpush1.msra.mxu0 %v627
    %673 = vmatprep.subr.mxu0 %v631
    %674 = vmatpush1.msra.mxu0 %v630
    %675 = vmatprep.subr.mxu0 %v634
    %676 = vmatpush1.msra.mxu0 %v633
    %677 = vmatprep.subr.mxu0 %v637
    %678 = vmatpush1.msra.mxu0 %v636
    %679 = vmatprep.subr.mxu0 %v640
    %680 = vmatpush1.msra.mxu0 %v639
    %681 = vmatprep.subr.mxu0 %v643
    %682 = vmatpush1.msra.mxu0 %v642
    %683 = vmatprep.subr.mxu0 %v646
    %684 = vmatpush1.msra.mxu0 %v645
    %685 = vmatprep.subr.mxu0 %v649
    %686 = vmatpush1.msra.mxu0 %v648
    %687 = vmatprep.subr.mxu0 %v652
    %688 = vmatpush1.msra.mxu0 %v651
    %689 = vmatprep.subr.mxu0 %v655
    %690 = vmatpush1.msra.mxu0 %v654
    %691 = vmatprep.subr.mxu0 %v658
    %692 = vmatpush1.msra.mxu0 %v657
    %693 = vmatprep.subr.mxu0 %v661
    %694 = vmatpush1.msra.mxu0 %v660
    %695 = vmatprep.subr.mxu0 0.0
    %696 = vmatpush1.msra.mxu0 0.0
    %697 = vmatprep.subr.mxu0 0.0
    %698 = vmatpush1.msra.mxu0 0.0
    %699 = vmatprep.subr.mxu0 0.0
    %700 = vmatpush1.msra.mxu0 0.0
    %701 = vmatprep.subr.mxu0 0.0
    %702 = vmatpush1.msra.mxu0 0.0
    %703 = vmatprep.subr.mxu0 0.0
    %704 = vmatpush1.msra.mxu0 0.0
    %705 = vmatprep.subr.mxu0 0.0
    %706 = vmatpush1.msra.mxu0 0.0
    %707 = vmatprep.subr.mxu0 0.0
    %708 = vmatpush1.msra.mxu0 0.0
    %709 = vmatprep.subr.mxu0 0.0
    %710 = vmatpush1.msra.mxu0 0.0
    %711 = vmatprep.subr.mxu0 0.0
    %712 = vmatpush1.msra.mxu0 0.0
    %713 = vmatprep.subr.mxu0 0.0
    %714 = vmatpush1.msra.mxu0 0.0
    %715 = vmatprep.subr.mxu0 0.0
    %716 = vmatpush1.msra.mxu0 0.0
    %717 = vmatprep.subr.mxu0 0.0
    %718 = vmatpush1.msra.mxu0 0.0
    %719 = vmatprep.subr.mxu0 0.0
    %720 = vmatpush1.msra.mxu0 0.0
    %721 = vmatprep.subr.mxu0 0.0
    %722 = vmatpush1.msra.mxu0 0.0
    %723 = vmatprep.subr.mxu0 0.0
    %724 = vmatpush1.msra.mxu0 0.0
    %725 = vmatprep.subr.mxu0 0.0
    %726 = vmatpush1.msra.mxu0 0.0
    %727 = vmatprep.mubr.f32.mxu0 0.0
    %728 = vmatmul.mubr.f32.gmra.mrb[0].mxu0 %v611
    %v729 = vpop.f32.mrb[0].mxu0
    %v730 = vadd.f32 0.0, %v729
    %v731 = vpop.f32.mrb[0].mxu0
    %v732 = vadd.f32 0.0, %v731
    %733 = vdwg.mxu0
    %734 = vmatprep.subr.mxu0 0.0
    %735 = vmatpush1.msra.mxu0 %v617
    %736 = vmatprep.subr.mxu0 0.0
    %737 = vmatpush1.msra.mxu0 %v620
    %738 = vmatprep.subr.mxu0 0.0
    %739 = vmatpush1.msra.mxu0 %v623
    %740 = vmatprep.subr.mxu0 0.0
    %741 = vmatpush1.msra.mxu0 %v626
    %742 = vmatprep.subr.mxu0 0.0
    %743 = vmatpush1.msra.mxu0 %v629
    %744 = vmatprep.subr.mxu0 0.0
    %745 = vmatpush1.msra.mxu0 %v632
    %746 = vmatprep.subr.mxu0 0.0
    %747 = vmatpush1.msra.mxu0 %v635
    %748 = vmatprep.subr.mxu0 0.0
    %749 = vmatpush1.msra.mxu0 %v638
    %750 = vmatprep.subr.mxu0 0.0
    %751 = vmatpush1.msra.mxu0 %v641
    %752 = vmatprep.subr.mxu0 0.0
    %753 = vmatpush1.msra.mxu0 %v644
    %754 = vmatprep.subr.mxu0 0.0
    %755 = vmatpush1.msra.mxu0 %v647
    %756 = vmatprep.subr.mxu0 0.0
    %757 = vmatpush1.msra.mxu0 %v650
    %758 = vmatprep.subr.mxu0 0.0
    %759 = vmatpush1.msra.mxu0 %v653
    %760 = vmatprep.subr.mxu0 0.0
    %761 = vmatpush1.msra.mxu0 %v656
    %762 = vmatprep.subr.mxu0 0.0
    %763 = vmatpush1.msra.mxu0 %v659
    %764 = vmatprep.subr.mxu0 0.0
    %765 = vmatpush1.msra.mxu0 %v662
    %766 = vmatprep.subr.mxu0 0.0
    %767 = vmatpush1.msra.mxu0 0.0
    %768 = vmatprep.subr.mxu0 0.0
    %769 = vmatpush1.msra.mxu0 0.0
    %770 = vmatprep.subr.mxu0 0.0
    %771 = vmatpush1.msra.mxu0 0.0
    %772 = vmatprep.subr.mxu0 0.0
    %773 = vmatpush1.msra.mxu0 0.0
    %774 = vmatprep.subr.mxu0 0.0
    %775 = vmatpush1.msra.mxu0 0.0
    %776 = vmatprep.subr.mxu0 0.0
    %777 = vmatpush1.msra.mxu0 0.0
    %778 = vmatprep.subr.mxu0 0.0
    %779 = vmatpush1.msra.mxu0 0.0
    %780 = vmatprep.subr.mxu0 0.0
    %781 = vmatpush1.msra.mxu0 0.0
    %782 = vmatprep.subr.mxu0 0.0
    %783 = vmatpush1.msra.mxu0 0.0
    %784 = vmatprep.subr.mxu0 0.0
    %785 = vmatpush1.msra.mxu0 0.0
    %786 = vmatprep.subr.mxu0 0.0
    %787 = vmatpush1.msra.mxu0 0.0
    %788 = vmatprep.subr.mxu0 0.0
    %789 = vmatpush1.msra.mxu0 0.0
    %790 = vmatprep.subr.mxu0 0.0
    %791 = vmatpush1.msra.mxu0 0.0
    %792 = vmatprep.subr.mxu0 0.0
    %793 = vmatpush1.msra.mxu0 0.0
    %794 = vmatprep.subr.mxu0 0.0
    %795 = vmatpush1.msra.mxu0 0.0
    %796 = vmatprep.subr.mxu0 0.0
    %797 = vmatpush1.msra.mxu0 0.0
    %798 = vmatprep.mubr.f32.mxu0 0.0
    %799 = vmatmul.mubr.f32.gmra.mrb[0].mxu0 %v611
    %v800 = vpop.f32.mrb[0].mxu0
    %v801 = vadd.f32 0.0, %v800
    %v802 = vpop.f32.mrb[0].mxu0
    %803 = vdwg.mxu0
    %v806 = vcombine.low %v730, %v732
    %v808 = vunpack.c.l.s4 1983009808
    %v809 = vunpack.c.0.s8 %v808
    %v810 = vlaneseq
    %v811 = vshrl.u32 %v810, 7
    %v812 = vsub.s32 %v809, %v811
    %v813 = vrot.slane %v806, %v812
    %v815 = vadd.f32 %v614, %v813
    %v816 = vxor.u32 %v815, 2147483648
    %v817 = vmul.f32 %v816, 1.442695
    %v818 = vpow.pop %v817
    %v819 = vadd.f32 %v818, 1.0
    %v820 = vrcp.pop %v819
    %v821 = vmul.f32 1.0, %v820
    %v822 = vadd.f32 %v801, %v388
    %v823 = vmul.f32 %v821, %v822
    %v825 = vrot.slane %v614, 4
    %v827 = vadd.f32 %v825, %v823
    %v828 = vtanh.pop %v827
    %v830 = vrot.slane %v821, 2
    %v832 = vsub.f32 1.0, %v830
    %v833 = vmul.f32 %v832, %v828
    %v834 = vmul.f32 %v830, %v611
    %v835 = vadd.f32 %v833, %v834
    %s836 = scalar_lea.vmem [#allocation6], 2
    %837 = vst [vmem:[%s836] sm:$0x3] %v835
    %s838 = scalar_lea.vmem [#allocation5], 12
    %v839 = vld [vmem:[%s838] sm:$0x3f]
    %v840 = vld [vmem:[#allocation8] sm:$0xff]
    %v841 = vld [vmem:[#allocation8 + $0x8] sm:$0xff]
    %v842 = vld [vmem:[#allocation8 + $0x10] sm:$0xff]
    %v843 = vld [vmem:[#allocation8 + $0x18] sm:$0xff]
    %v844 = vld [vmem:[#allocation8 + $0x20] sm:$0xff]
    %v845 = vld [vmem:[#allocation8 + $0x28] sm:$0xff]
    %v846 = vld [vmem:[#allocation8 + $0x30] sm:$0xff]
    %v847 = vld [vmem:[#allocation8 + $0x38] sm:$0xff]
    %v848 = vld [vmem:[#allocation8 + $0x40] sm:$0xff]
    %v849 = vld [vmem:[#allocation8 + $0x48] sm:$0xff]
    %v850 = vld [vmem:[#allocation8 + $0x50] sm:$0xff]
    %v851 = vld [vmem:[#allocation8 + $0x58] sm:$0xff]
    %v852 = vld [vmem:[#allocation8 + $0x60] sm:$0xff]
    %v853 = vld [vmem:[#allocation8 + $0x68] sm:$0xff]
    %v854 = vld [vmem:[#allocation8 + $0x70] sm:$0xff]
    %v855 = vld [vmem:[#allocation8 + $0x78] sm:$0xff]
    %v856 = vld [vmem:[#allocation8 + $0x80] sm:$0xff]
    %v857 = vld [vmem:[#allocation8 + $0x88] sm:$0xff]
    %v858 = vld [vmem:[#allocation8 + $0x90] sm:$0xff]
    %v859 = vld [vmem:[#allocation8 + $0x98] sm:$0xff]
    %v860 = vld [vmem:[#allocation8 + $0xa0] sm:$0xff]
    %v861 = vld [vmem:[#allocation8 + $0xa8] sm:$0xff]
    %v862 = vld [vmem:[#allocation8 + $0xb0] sm:$0xff]
    %v863 = vld [vmem:[#allocation8 + $0xb8] sm:$0xff]
    %v864 = vld [vmem:[#allocation8 + $0xc0] sm:$0xff]
    %v865 = vld [vmem:[#allocation8 + $0xc8] sm:$0xff]
    %v866 = vld [vmem:[#allocation8 + $0xd0] sm:$0xff]
    %v867 = vld [vmem:[#allocation8 + $0xd8] sm:$0xff]
    %v868 = vld [vmem:[#allocation8 + $0xe0] sm:$0xff]
    %v869 = vld [vmem:[#allocation8 + $0xe8] sm:$0xff]
    %v870 = vld [vmem:[#allocation8 + $0xf0] sm:$0xff]
    %v871 = vld [vmem:[#allocation8 + $0xf8] sm:$0xff]
    %v872 = vld [vmem:[#allocation8 + $0x100] sm:$0xff]
    %v873 = vld [vmem:[#allocation8 + $0x108] sm:$0xff]
    %v874 = vld [vmem:[#allocation8 + $0x110] sm:$0xff]
    %v875 = vld [vmem:[#allocation8 + $0x118] sm:$0xff]
    %v876 = vld [vmem:[#allocation8 + $0x120] sm:$0xff]
    %v877 = vld [vmem:[#allocation8 + $0x128] sm:$0xff]
    %v878 = vld [vmem:[#allocation8 + $0x130] sm:$0xff]
    %v879 = vld [vmem:[#allocation8 + $0x138] sm:$0xff]
    %v880 = vld [vmem:[#allocation8 + $0x140] sm:$0xff]
    %v881 = vld [vmem:[#allocation8 + $0x148] sm:$0xff]
    %v882 = vld [vmem:[#allocation8 + $0x150] sm:$0xff]
    %v883 = vld [vmem:[#allocation8 + $0x158] sm:$0xff]
    %v884 = vld [vmem:[#allocation8 + $0x160] sm:$0xff]
    %v885 = vld [vmem:[#allocation8 + $0x168] sm:$0xff]
    %v886 = vld [vmem:[#allocation8 + $0x170] sm:$0xff]
    %v887 = vld [vmem:[#allocation8 + $0x178] sm:$0xff]
    %888 = vmatprep.subr.mxu0 %v841
    %889 = vmatpush1.msra.mxu0 %v840
    %890 = vmatprep.subr.mxu0 %v844
    %891 = vmatpush1.msra.mxu0 %v843
    %892 = vmatprep.subr.mxu0 %v847
    %893 = vmatpush1.msra.mxu0 %v846
    %894 = vmatprep.subr.mxu0 %v850
    %895 = vmatpush1.msra.mxu0 %v849
    %896 = vmatprep.subr.mxu0 %v853
    %897 = vmatpush1.msra.mxu0 %v852
    %898 = vmatprep.subr.mxu0 %v856
    %899 = vmatpush1.msra.mxu0 %v855
    %900 = vmatprep.subr.mxu0 %v859
    %901 = vmatpush1.msra.mxu0 %v858
    %902 = vmatprep.subr.mxu0 %v862
    %903 = vmatpush1.msra.mxu0 %v861
    %904 = vmatprep.subr.mxu0 %v865
    %905 = vmatpush1.msra.mxu0 %v864
    %906 = vmatprep.subr.mxu0 %v868
    %907 = vmatpush1.msra.mxu0 %v867
    %908 = vmatprep.subr.mxu0 %v871
    %909 = vmatpush1.msra.mxu0 %v870
    %910 = vmatprep.subr.mxu0 %v874
    %911 = vmatpush1.msra.mxu0 %v873
    %912 = vmatprep.subr.mxu0 %v877
    %913 = vmatpush1.msra.mxu0 %v876
    %914 = vmatprep.subr.mxu0 %v880
    %915 = vmatpush1.msra.mxu0 %v879
    %916 = vmatprep.subr.mxu0 %v883
    %917 = vmatpush1.msra.mxu0 %v882
    %918 = vmatprep.subr.mxu0 %v886
    %919 = vmatpush1.msra.mxu0 %v885
    %920 = vmatprep.subr.mxu0 0.0
    %921 = vmatpush1.msra.mxu0 0.0
    %922 = vmatprep.subr.mxu0 0.0
    %923 = vmatpush1.msra.mxu0 0.0
    %924 = vmatprep.subr.mxu0 0.0
    %925 = vmatpush1.msra.mxu0 0.0
    %926 = vmatprep.subr.mxu0 0.0
    %927 = vmatpush1.msra.mxu0 0.0
    %928 = vmatprep.subr.mxu0 0.0
    %929 = vmatpush1.msra.mxu0 0.0
    %930 = vmatprep.subr.mxu0 0.0
    %931 = vmatpush1.msra.mxu0 0.0
    %932 = vmatprep.subr.mxu0 0.0
    %933 = vmatpush1.msra.mxu0 0.0
    %934 = vmatprep.subr.mxu0 0.0
    %935 = vmatpush1.msra.mxu0 0.0
    %936 = vmatprep.subr.mxu0 0.0
    %937 = vmatpush1.msra.mxu0 0.0
    %938 = vmatprep.subr.mxu0 0.0
    %939 = vmatpush1.msra.mxu0 0.0
    %940 = vmatprep.subr.mxu0 0.0
    %941 = vmatpush1.msra.mxu0 0.0
    %942 = vmatprep.subr.mxu0 0.0
    %943 = vmatpush1.msra.mxu0 0.0
    %944 = vmatprep.subr.mxu0 0.0
    %945 = vmatpush1.msra.mxu0 0.0
    %946 = vmatprep.subr.mxu0 0.0
    %947 = vmatpush1.msra.mxu0 0.0
    %948 = vmatprep.subr.mxu0 0.0
    %949 = vmatpush1.msra.mxu0 0.0
    %950 = vmatprep.subr.mxu0 0.0
    %951 = vmatpush1.msra.mxu0 0.0
    %952 = vmatprep.mubr.f32.mxu0 0.0
    %953 = vmatmul.mubr.f32.gmra.mrb[0].mxu0 %v835
    %v954 = vpop.f32.mrb[0].mxu0
    %v955 = vadd.f32 0.0, %v954
    %v956 = vpop.f32.mrb[0].mxu0
    %v957 = vadd.f32 0.0, %v956
    %958 = vdwg.mxu0
    %959 = vmatprep.subr.mxu0 0.0
    %960 = vmatpush1.msra.mxu0 %v842
    %961 = vmatprep.subr.mxu0 0.0
    %962 = vmatpush1.msra.mxu0 %v845
    %963 = vmatprep.subr.mxu0 0.0
    %964 = vmatpush1.msra.mxu0 %v848
    %965 = vmatprep.subr.mxu0 0.0
    %966 = vmatpush1.msra.mxu0 %v851
    %967 = vmatprep.subr.mxu0 0.0
    %968 = vmatpush1.msra.mxu0 %v854
    %969 = vmatprep.subr.mxu0 0.0
    %970 = vmatpush1.msra.mxu0 %v857
    %971 = vmatprep.subr.mxu0 0.0
    %972 = vmatpush1.msra.mxu0 %v860
    %973 = vmatprep.subr.mxu0 0.0
    %974 = vmatpush1.msra.mxu0 %v863
    %975 = vmatprep.subr.mxu0 0.0
    %976 = vmatpush1.msra.mxu0 %v866
    %977 = vmatprep.subr.mxu0 0.0
    %978 = vmatpush1.msra.mxu0 %v869
    %979 = vmatprep.subr.mxu0 0.0
    %980 = vmatpush1.msra.mxu0 %v872
    %981 = vmatprep.subr.mxu0 0.0
    %982 = vmatpush1.msra.mxu0 %v875
    %983 = vmatprep.subr.mxu0 0.0
    %984 = vmatpush1.msra.mxu0 %v878
    %985 = vmatprep.subr.mxu0 0.0
    %986 = vmatpush1.msra.mxu0 %v881
    %987 = vmatprep.subr.mxu0 0.0
    %988 = vmatpush1.msra.mxu0 %v884
    %989 = vmatprep.subr.mxu0 0.0
    %990 = vmatpush1.msra.mxu0 %v887
    %991 = vmatprep.subr.mxu0 0.0
    %992 = vmatpush1.msra.mxu0 0.0
    %993 = vmatprep.subr.mxu0 0.0
    %994 = vmatpush1.msra.mxu0 0.0
    %995 = vmatprep.subr.mxu0 0.0
    %996 = vmatpush1.msra.mxu0 0.0
    %997 = vmatprep.subr.mxu0 0.0
    %998 = vmatpush1.msra.mxu0 0.0
    %999 = vmatprep.subr.mxu0 0.0
    %1000 = vmatpush1.msra.mxu0 0.0
    %1001 = vmatprep.subr.mxu0 0.0
    %1002 = vmatpush1.msra.mxu0 0.0
    %1003 = vmatprep.subr.mxu0 0.0
    %1004 = vmatpush1.msra.mxu0 0.0
    %1005 = vmatprep.subr.mxu0 0.0
    %1006 = vmatpush1.msra.mxu0 0.0
    %1007 = vmatprep.subr.mxu0 0.0
    %1008 = vmatpush1.msra.mxu0 0.0
    %1009 = vmatprep.subr.mxu0 0.0
    %1010 = vmatpush1.msra.mxu0 0.0
    %1011 = vmatprep.subr.mxu0 0.0
    %1012 = vmatpush1.msra.mxu0 0.0
    %1013 = vmatprep.subr.mxu0 0.0
    %1014 = vmatpush1.msra.mxu0 0.0
    %1015 = vmatprep.subr.mxu0 0.0
    %1016 = vmatpush1.msra.mxu0 0.0
    %1017 = vmatprep.subr.mxu0 0.0
    %1018 = vmatpush1.msra.mxu0 0.0
    %1019 = vmatprep.subr.mxu0 0.0
    %1020 = vmatpush1.msra.mxu0 0.0
    %1021 = vmatprep.subr.mxu0 0.0
    %1022 = vmatpush1.msra.mxu0 0.0
    %1023 = vmatprep.mubr.f32.mxu0 0.0
    %1024 = vmatmul.mubr.f32.gmra.mrb[0].mxu0 %v835
    %v1025 = vpop.f32.mrb[0].mxu0
    %v1026 = vadd.f32 0.0, %v1025
    %v1027 = vpop.f32.mrb[0].mxu0
    %1028 = vdwg.mxu0
    %v1031 = vcombine.low %v955, %v957
    %v1033 = vunpack.c.l.s4 1983009808
    %v1034 = vunpack.c.0.s8 %v1033
    %v1035 = vlaneseq
    %v1036 = vshrl.u32 %v1035, 7
    %v1037 = vsub.s32 %v1034, %v1036
    %v1038 = vrot.slane %v1031, %v1037
    %v1040 = vadd.f32 %v839, %v1038
    %v1041 = vxor.u32 %v1040, 2147483648
    %v1042 = vmul.f32 %v1041, 1.442695
    %v1043 = vpow.pop %v1042
    %v1044 = vadd.f32 %v1043, 1.0
    %v1045 = vrcp.pop %v1044
    %v1046 = vmul.f32 1.0, %v1045
    %v1047 = vadd.f32 %v1026, %v388
    %v1048 = vmul.f32 %v1046, %v1047
    %v1050 = vrot.slane %v839, 4
    %v1052 = vadd.f32 %v1050, %v1048
    %v1053 = vtanh.pop %v1052
    %v1055 = vrot.slane %v1046, 2
    %v1057 = vsub.f32 1.0, %v1055
    %v1058 = vmul.f32 %v1057, %v1053
    %v1059 = vmul.f32 %v1055, %v835
    %v1060 = vadd.f32 %v1058, %v1059
    %s1061 = scalar_lea.vmem [#allocation6], 4
    %1062 = vst [vmem:[%s1061] sm:$0x3] %v1060
    %s1063 = scalar_lea.vmem [#allocation5], 18
    %v1064 = vld [vmem:[%s1063] sm:$0x3f]
    %v1065 = vld [vmem:[#allocation8] sm:$0xff]
    %v1066 = vld [vmem:[#allocation8 + $0x8] sm:$0xff]
    %v1067 = vld [vmem:[#allocation8 + $0x10] sm:$0xff]
    %v1068 = vld [vmem:[#allocation8 + $0x18] sm:$0xff]
    %v1069 = vld [vmem:[#allocation8 + $0x20] sm:$0xff]
    %v1070 = vld [vmem:[#allocation8 + $0x28] sm:$0xff]
    %v1071 = vld [vmem:[#allocation8 + $0x30] sm:$0xff]
    %v1072 = vld [vmem:[#allocation8 + $0x38] sm:$0xff]
    %v1073 = vld [vmem:[#allocation8 + $0x40] sm:$0xff]
    %v1074 = vld [vmem:[#allocation8 + $0x48] sm:$0xff]
    %v1075 = vld [vmem:[#allocation8 + $0x50] sm:$0xff]
    %v1076 = vld [vmem:[#allocation8 + $0x58] sm:$0xff]
    %v1077 = vld [vmem:[#allocation8 + $0x60] sm:$0xff]
    %v1078 = vld [vmem:[#allocation8 + $0x68] sm:$0xff]
    %v1079 = vld [vmem:[#allocation8 + $0x70] sm:$0xff]
    %v1080 = vld [vmem:[#allocation8 + $0x78] sm:$0xff]
    %v1081 = vld [vmem:[#allocation8 + $0x80] sm:$0xff]
    %v1082 = vld [vmem:[#allocation8 + $0x88] sm:$0xff]
    %v1083 = vld [vmem:[#allocation8 + $0x90] sm:$0xff]
    %v1084 = vld [vmem:[#allocation8 + $0x98] sm:$0xff]
    %v1085 = vld [vmem:[#allocation8 + $0xa0] sm:$0xff]
    %v1086 = vld [vmem:[#allocation8 + $0xa8] sm:$0xff]
    %v1087 = vld [vmem:[#allocation8 + $0xb0] sm:$0xff]
    %v1088 = vld [vmem:[#allocation8 + $0xb8] sm:$0xff]
    %v1089 = vld [vmem:[#allocation8 + $0xc0] sm:$0xff]
    %v1090 = vld [vmem:[#allocation8 + $0xc8] sm:$0xff]
    %v1091 = vld [vmem:[#allocation8 + $0xd0] sm:$0xff]
    %v1092 = vld [vmem:[#allocation8 + $0xd8] sm:$0xff]
    %v1093 = vld [vmem:[#allocation8 + $0xe0] sm:$0xff]
    %v1094 = vld [vmem:[#allocation8 + $0xe8] sm:$0xff]
    %v1095 = vld [vmem:[#allocation8 + $0xf0] sm:$0xff]
    %v1096 = vld [vmem:[#allocation8 + $0xf8] sm:$0xff]
    %v1097 = vld [vmem:[#allocation8 + $0x100] sm:$0xff]
    %v1098 = vld [vmem:[#allocation8 + $0x108] sm:$0xff]
    %v1099 = vld [vmem:[#allocation8 + $0x110] sm:$0xff]
    %v1100 = vld [vmem:[#allocation8 + $0x118] sm:$0xff]
    %v1101 = vld [vmem:[#allocation8 + $0x120] sm:$0xff]
    %v1102 = vld [vmem:[#allocation8 + $0x128] sm:$0xff]
    %v1103 = vld [vmem:[#allocation8 + $0x130] sm:$0xff]
    %v1104 = vld [vmem:[#allocation8 + $0x138] sm:$0xff]
    %v1105 = vld [vmem:[#allocation8 + $0x140] sm:$0xff]
    %v1106 = vld [vmem:[#allocation8 + $0x148] sm:$0xff]
    %v1107 = vld [vmem:[#allocation8 + $0x150] sm:$0xff]
    %v1108 = vld [vmem:[#allocation8 + $0x158] sm:$0xff]
    %v1109 = vld [vmem:[#allocation8 + $0x160] sm:$0xff]
    %v1110 = vld [vmem:[#allocation8 + $0x168] sm:$0xff]
    %v1111 = vld [vmem:[#allocation8 + $0x170] sm:$0xff]
    %v1112 = vld [vmem:[#allocation8 + $0x178] sm:$0xff]
    %1113 = vmatprep.subr.mxu0 %v1066
    %1114 = vmatpush1.msra.mxu0 %v1065
    %1115 = vmatprep.subr.mxu0 %v1069
    %1116 = vmatpush1.msra.mxu0 %v1068
    %1117 = vmatprep.subr.mxu0 %v1072
    %1118 = vmatpush1.msra.mxu0 %v1071
    %1119 = vmatprep.subr.mxu0 %v1075
    %1120 = vmatpush1.msra.mxu0 %v1074
    %1121 = vmatprep.subr.mxu0 %v1078
    %1122 = vmatpush1.msra.mxu0 %v1077
    %1123 = vmatprep.subr.mxu0 %v1081
    %1124 = vmatpush1.msra.mxu0 %v1080
    %1125 = vmatprep.subr.mxu0 %v1084
    %1126 = vmatpush1.msra.mxu0 %v1083
    %1127 = vmatprep.subr.mxu0 %v1087
    %1128 = vmatpush1.msra.mxu0 %v1086
    %1129 = vmatprep.subr.mxu0 %v1090
    %1130 = vmatpush1.msra.mxu0 %v1089
    %1131 = vmatprep.subr.mxu0 %v1093
    %1132 = vmatpush1.msra.mxu0 %v1092
    %1133 = vmatprep.subr.mxu0 %v1096
    %1134 = vmatpush1.msra.mxu0 %v1095
    %1135 = vmatprep.subr.mxu0 %v1099
    %1136 = vmatpush1.msra.mxu0 %v1098
    %1137 = vmatprep.subr.mxu0 %v1102
    %1138 = vmatpush1.msra.mxu0 %v1101
    %1139 = vmatprep.subr.mxu0 %v1105
    %1140 = vmatpush1.msra.mxu0 %v1104
    %1141 = vmatprep.subr.mxu0 %v1108
    %1142 = vmatpush1.msra.mxu0 %v1107
    %1143 = vmatprep.subr.mxu0 %v1111
    %1144 = vmatpush1.msra.mxu0 %v1110
    %1145 = vmatprep.subr.mxu0 0.0
    %1146 = vmatpush1.msra.mxu0 0.0
    %1147 = vmatprep.subr.mxu0 0.0
    %1148 = vmatpush1.msra.mxu0 0.0
    %1149 = vmatprep.subr.mxu0 0.0
    %1150 = vmatpush1.msra.mxu0 0.0
    %1151 = vmatprep.subr.mxu0 0.0
    %1152 = vmatpush1.msra.mxu0 0.0
    %1153 = vmatprep.subr.mxu0 0.0
    %1154 = vmatpush1.msra.mxu0 0.0
    %1155 = vmatprep.subr.mxu0 0.0
    %1156 = vmatpush1.msra.mxu0 0.0
    %1157 = vmatprep.subr.mxu0 0.0
    %1158 = vmatpush1.msra.mxu0 0.0
    %1159 = vmatprep.subr.mxu0 0.0
    %1160 = vmatpush1.msra.mxu0 0.0
    %1161 = vmatprep.subr.mxu0 0.0
    %1162 = vmatpush1.msra.mxu0 0.0
    %1163 = vmatprep.subr.mxu0 0.0
    %1164 = vmatpush1.msra.mxu0 0.0
    %1165 = vmatprep.subr.mxu0 0.0
    %1166 = vmatpush1.msra.mxu0 0.0
    %1167 = vmatprep.subr.mxu0 0.0
    %1168 = vmatpush1.msra.mxu0 0.0
    %1169 = vmatprep.subr.mxu0 0.0
    %1170 = vmatpush1.msra.mxu0 0.0
    %1171 = vmatprep.subr.mxu0 0.0
    %1172 = vmatpush1.msra.mxu0 0.0
    %1173 = vmatprep.subr.mxu0 0.0
    %1174 = vmatpush1.msra.mxu0 0.0
    %1175 = vmatprep.subr.mxu0 0.0
    %1176 = vmatpush1.msra.mxu0 0.0
    %1177 = vmatprep.mubr.f32.mxu0 0.0
    %1178 = vmatmul.mubr.f32.gmra.mrb[0].mxu0 %v1060
    %v1179 = vpop.f32.mrb[0].mxu0
    %v1180 = vadd.f32 0.0, %v1179
    %v1181 = vpop.f32.mrb[0].mxu0
    %v1182 = vadd.f32 0.0, %v1181
    %1183 = vdwg.mxu0
    %1184 = vmatprep.subr.mxu0 0.0
    %1185 = vmatpush1.msra.mxu0 %v1067
    %1186 = vmatprep.subr.mxu0 0.0
    %1187 = vmatpush1.msra.mxu0 %v1070
    %1188 = vmatprep.subr.mxu0 0.0
    %1189 = vmatpush1.msra.mxu0 %v1073
    %1190 = vmatprep.subr.mxu0 0.0
    %1191 = vmatpush1.msra.mxu0 %v1076
    %1192 = vmatprep.subr.mxu0 0.0
    %1193 = vmatpush1.msra.mxu0 %v1079
    %1194 = vmatprep.subr.mxu0 0.0
    %1195 = vmatpush1.msra.mxu0 %v1082
    %1196 = vmatprep.subr.mxu0 0.0
    %1197 = vmatpush1.msra.mxu0 %v1085
    %1198 = vmatprep.subr.mxu0 0.0
    %1199 = vmatpush1.msra.mxu0 %v1088
    %1200 = vmatprep.subr.mxu0 0.0
    %1201 = vmatpush1.msra.mxu0 %v1091
    %1202 = vmatprep.subr.mxu0 0.0
    %1203 = vmatpush1.msra.mxu0 %v1094
    %1204 = vmatprep.subr.mxu0 0.0
    %1205 = vmatpush1.msra.mxu0 %v1097
    %1206 = vmatprep.subr.mxu0 0.0
    %1207 = vmatpush1.msra.mxu0 %v1100
    %1208 = vmatprep.subr.mxu0 0.0
    %1209 = vmatpush1.msra.mxu0 %v1103
    %1210 = vmatprep.subr.mxu0 0.0
    %1211 = vmatpush1.msra.mxu0 %v1106
    %1212 = vmatprep.subr.mxu0 0.0
    %1213 = vmatpush1.msra.mxu0 %v1109
    %1214 = vmatprep.subr.mxu0 0.0
    %1215 = vmatpush1.msra.mxu0 %v1112
    %1216 = vmatprep.subr.mxu0 0.0
    %1217 = vmatpush1.msra.mxu0 0.0
    %1218 = vmatprep.subr.mxu0 0.0
    %1219 = vmatpush1.msra.mxu0 0.0
    %1220 = vmatprep.subr.mxu0 0.0
    %1221 = vmatpush1.msra.mxu0 0.0
    %1222 = vmatprep.subr.mxu0 0.0
    %1223 = vmatpush1.msra.mxu0 0.0
    %1224 = vmatprep.subr.mxu0 0.0
    %1225 = vmatpush1.msra.mxu0 0.0
    %1226 = vmatprep.subr.mxu0 0.0
    %1227 = vmatpush1.msra.mxu0 0.0
    %1228 = vmatprep.subr.mxu0 0.0
    %1229 = vmatpush1.msra.mxu0 0.0
    %1230 = vmatprep.subr.mxu0 0.0
    %1231 = vmatpush1.msra.mxu0 0.0
    %1232 = vmatprep.subr.mxu0 0.0
    %1233 = vmatpush1.msra.mxu0 0.0
    %1234 = vmatprep.subr.mxu0 0.0
    %1235 = vmatpush1.msra.mxu0 0.0
    %1236 = vmatprep.subr.mxu0 0.0
    %1237 = vmatpush1.msra.mxu0 0.0
    %1238 = vmatprep.subr.mxu0 0.0
    %1239 = vmatpush1.msra.mxu0 0.0
    %1240 = vmatprep.subr.mxu0 0.0
    %1241 = vmatpush1.msra.mxu0 0.0
    %1242 = vmatprep.subr.mxu0 0.0
    %1243 = vmatpush1.msra.mxu0 0.0
    %1244 = vmatprep.subr.mxu0 0.0
    %1245 = vmatpush1.msra.mxu0 0.0
    %1246 = vmatprep.subr.mxu0 0.0
    %1247 = vmatpush1.msra.mxu0 0.0
    %1248 = vmatprep.mubr.f32.mxu0 0.0
    %1249 = vmatmul.mubr.f32.gmra.mrb[0].mxu0 %v1060
    %v1250 = vpop.f32.mrb[0].mxu0
    %v1251 = vadd.f32 0.0, %v1250
    %v1252 = vpop.f32.mrb[0].mxu0
    %1253 = vdwg.mxu0
    %v1256 = vcombine.low %v1180, %v1182
    %v1258 = vunpack.c.l.s4 1983009808
    %v1259 = vunpack.c.0.s8 %v1258
    %v1260 = vlaneseq
    %v1261 = vshrl.u32 %v1260, 7
    %v1262 = vsub.s32 %v1259, %v1261
    %v1263 = vrot.slane %v1256, %v1262
    %v1265 = vadd.f32 %v1064, %v1263
    %v1266 = vxor.u32 %v1265, 2147483648
    %v1267 = vmul.f32 %v1266, 1.442695
    %v1268 = vpow.pop %v1267
    %v1269 = vadd.f32 %v1268, 1.0
    %v1270 = vrcp.pop %v1269
    %v1271 = vmul.f32 1.0, %v1270
    %v1272 = vadd.f32 %v1251, %v388
    %v1273 = vmul.f32 %v1271, %v1272
    %v1275 = vrot.slane %v1064, 4
    %v1277 = vadd.f32 %v1275, %v1273
    %v1278 = vtanh.pop %v1277
    %v1280 = vrot.slane %v1271, 2
    %v1282 = vsub.f32 1.0, %v1280
    %v1283 = vmul.f32 %v1282, %v1278
    %v1284 = vmul.f32 %v1280, %v1060
    %v1285 = vadd.f32 %v1283, %v1284
    %s1286 = scalar_lea.vmem [#allocation6], 6
    %1287 = vst [vmem:[%s1286] sm:$0x3] %v1285
    %s1288 = scalar_lea.vmem [#allocation5], 24
    %v1289 = vld [vmem:[%s1288] sm:$0x3f]
    %v1290 = vld [vmem:[#allocation8] sm:$0xff]
    %v1291 = vld [vmem:[#allocation8 + $0x8] sm:$0xff]
    %v1292 = vld [vmem:[#allocation8 + $0x10] sm:$0xff]
    %v1293 = vld [vmem:[#allocation8 + $0x18] sm:$0xff]
    %v1294 = vld [vmem:[#allocation8 + $0x20] sm:$0xff]
    %v1295 = vld [vmem:[#allocation8 + $0x28] sm:$0xff]
    %v1296 = vld [vmem:[#allocation8 + $0x30] sm:$0xff]
    %v1297 = vld [vmem:[#allocation8 + $0x38] sm:$0xff]
    %v1298 = vld [vmem:[#allocation8 + $0x40] sm:$0xff]
    %v1299 = vld [vmem:[#allocation8 + $0x48] sm:$0xff]
    %v1300 = vld [vmem:[#allocation8 + $0x50] sm:$0xff]
    %v1301 = vld [vmem:[#allocation8 + $0x58] sm:$0xff]
    %v1302 = vld [vmem:[#allocation8 + $0x60] sm:$0xff]
    %v1303 = vld [vmem:[#allocation8 + $0x68] sm:$0xff]
    %v1304 = vld [vmem:[#allocation8 + $0x70] sm:$0xff]
    %v1305 = vld [vmem:[#allocation8 + $0x78] sm:$0xff]
    %v1306 = vld [vmem:[#allocation8 + $0x80] sm:$0xff]
    %v1307 = vld [vmem:[#allocation8 + $0x88] sm:$0xff]
    %v1308 = vld [vmem:[#allocation8 + $0x90] sm:$0xff]
    %v1309 = vld [vmem:[#allocation8 + $0x98] sm:$0xff]
    %v1310 = vld [vmem:[#allocation8 + $0xa0] sm:$0xff]
    %v1311 = vld [vmem:[#allocation8 + $0xa8] sm:$0xff]
    %v1312 = vld [vmem:[#allocation8 + $0xb0] sm:$0xff]
    %v1313 = vld [vmem:[#allocation8 + $0xb8] sm:$0xff]
    %v1314 = vld [vmem:[#allocation8 + $0xc0] sm:$0xff]
    %v1315 = vld [vmem:[#allocation8 + $0xc8] sm:$0xff]
    %v1316 = vld [vmem:[#allocation8 + $0xd0] sm:$0xff]
    %v1317 = vld [vmem:[#allocation8 + $0xd8] sm:$0xff]
    %v1318 = vld [vmem:[#allocation8 + $0xe0] sm:$0xff]
    %v1319 = vld [vmem:[#allocation8 + $0xe8] sm:$0xff]
    %v1320 = vld [vmem:[#allocation8 + $0xf0] sm:$0xff]
    %v1321 = vld [vmem:[#allocation8 + $0xf8] sm:$0xff]
    %v1322 = vld [vmem:[#allocation8 + $0x100] sm:$0xff]
    %v1323 = vld [vmem:[#allocation8 + $0x108] sm:$0xff]
    %v1324 = vld [vmem:[#allocation8 + $0x110] sm:$0xff]
    %v1325 = vld [vmem:[#allocation8 + $0x118] sm:$0xff]
    %v1326 = vld [vmem:[#allocation8 + $0x120] sm:$0xff]
    %v1327 = vld [vmem:[#allocation8 + $0x128] sm:$0xff]
    %v1328 = vld [vmem:[#allocation8 + $0x130] sm:$0xff]
    %v1329 = vld [vmem:[#allocation8 + $0x138] sm:$0xff]
    %v1330 = vld [vmem:[#allocation8 + $0x140] sm:$0xff]
    %v1331 = vld [vmem:[#allocation8 + $0x148] sm:$0xff]
    %v1332 = vld [vmem:[#allocation8 + $0x150] sm:$0xff]
    %v1333 = vld [vmem:[#allocation8 + $0x158] sm:$0xff]
    %v1334 = vld [vmem:[#allocation8 + $0x160] sm:$0xff]
    %v1335 = vld [vmem:[#allocation8 + $0x168] sm:$0xff]
    %v1336 = vld [vmem:[#allocation8 + $0x170] sm:$0xff]
    %v1337 = vld [vmem:[#allocation8 + $0x178] sm:$0xff]
    %1338 = vmatprep.subr.mxu0 %v1291
    %1339 = vmatpush1.msra.mxu0 %v1290
    %1340 = vmatprep.subr.mxu0 %v1294
    %1341 = vmatpush1.msra.mxu0 %v1293
    %1342 = vmatprep.subr.mxu0 %v1297
    %1343 = vmatpush1.msra.mxu0 %v1296
    %1344 = vmatprep.subr.mxu0 %v1300
    %1345 = vmatpush1.msra.mxu0 %v1299
    %1346 = vmatprep.subr.mxu0 %v1303
    %1347 = vmatpush1.msra.mxu0 %v1302
    %1348 = vmatprep.subr.mxu0 %v1306
    %1349 = vmatpush1.msra.mxu0 %v1305
    %1350 = vmatprep.subr.mxu0 %v1309
    %1351 = vmatpush1.msra.mxu0 %v1308
    %1352 = vmatprep.subr.mxu0 %v1312
    %1353 = vmatpush1.msra.mxu0 %v1311
    %1354 = vmatprep.subr.mxu0 %v1315
    %1355 = vmatpush1.msra.mxu0 %v1314
    %1356 = vmatprep.subr.mxu0 %v1318
    %1357 = vmatpush1.msra.mxu0 %v1317
    %1358 = vmatprep.subr.mxu0 %v1321
    %1359 = vmatpush1.msra.mxu0 %v1320
    %1360 = vmatprep.subr.mxu0 %v1324
    %1361 = vmatpush1.msra.mxu0 %v1323
    %1362 = vmatprep.subr.mxu0 %v1327
    %1363 = vmatpush1.msra.mxu0 %v1326
    %1364 = vmatprep.subr.mxu0 %v1330
    %1365 = vmatpush1.msra.mxu0 %v1329
    %1366 = vmatprep.subr.mxu0 %v1333
    %1367 = vmatpush1.msra.mxu0 %v1332
    %1368 = vmatprep.subr.mxu0 %v1336
    %1369 = vmatpush1.msra.mxu0 %v1335
    %1370 = vmatprep.subr.mxu0 0.0
    %1371 = vmatpush1.msra.mxu0 0.0
    %1372 = vmatprep.subr.mxu0 0.0
    %1373 = vmatpush1.msra.mxu0 0.0
    %1374 = vmatprep.subr.mxu0 0.0
    %1375 = vmatpush1.msra.mxu0 0.0
    %1376 = vmatprep.subr.mxu0 0.0
    %1377 = vmatpush1.msra.mxu0 0.0
    %1378 = vmatprep.subr.mxu0 0.0
    %1379 = vmatpush1.msra.mxu0 0.0
    %1380 = vmatprep.subr.mxu0 0.0
    %1381 = vmatpush1.msra.mxu0 0.0
    %1382 = vmatprep.subr.mxu0 0.0
    %1383 = vmatpush1.msra.mxu0 0.0
    %1384 = vmatprep.subr.mxu0 0.0
    %1385 = vmatpush1.msra.mxu0 0.0
    %1386 = vmatprep.subr.mxu0 0.0
    %1387 = vmatpush1.msra.mxu0 0.0
    %1388 = vmatprep.subr.mxu0 0.0
    %1389 = vmatpush1.msra.mxu0 0.0
    %1390 = vmatprep.subr.mxu0 0.0
    %1391 = vmatpush1.msra.mxu0 0.0
    %1392 = vmatprep.subr.mxu0 0.0
    %1393 = vmatpush1.msra.mxu0 0.0
    %1394 = vmatprep.subr.mxu0 0.0
    %1395 = vmatpush1.msra.mxu0 0.0
    %1396 = vmatprep.subr.mxu0 0.0
    %1397 = vmatpush1.msra.mxu0 0.0
    %1398 = vmatprep.subr.mxu0 0.0
    %1399 = vmatpush1.msra.mxu0 0.0
    %1400 = vmatprep.subr.mxu0 0.0
    %1401 = vmatpush1.msra.mxu0 0.0
    %1402 = vmatprep.mubr.f32.mxu0 0.0
    %1403 = vmatmul.mubr.f32.gmra.mrb[0].mxu0 %v1285
    %v1404 = vpop.f32.mrb[0].mxu0
    %v1405 = vadd.f32 0.0, %v1404
    %v1406 = vpop.f32.mrb[0].mxu0
    %v1407 = vadd.f32 0.0, %v1406
    %1408 = vdwg.mxu0
    %1409 = vmatprep.subr.mxu0 0.0
    %1410 = vmatpush1.msra.mxu0 %v1292
    %1411 = vmatprep.subr.mxu0 0.0
    %1412 = vmatpush1.msra.mxu0 %v1295
    %1413 = vmatprep.subr.mxu0 0.0
    %1414 = vmatpush1.msra.mxu0 %v1298
    %1415 = vmatprep.subr.mxu0 0.0
    %1416 = vmatpush1.msra.mxu0 %v1301
    %1417 = vmatprep.subr.mxu0 0.0
    %1418 = vmatpush1.msra.mxu0 %v1304
    %1419 = vmatprep.subr.mxu0 0.0
    %1420 = vmatpush1.msra.mxu0 %v1307
    %1421 = vmatprep.subr.mxu0 0.0
    %1422 = vmatpush1.msra.mxu0 %v1310
    %1423 = vmatprep.subr.mxu0 0.0
    %1424 = vmatpush1.msra.mxu0 %v1313
    %1425 = vmatprep.subr.mxu0 0.0
    %1426 = vmatpush1.msra.mxu0 %v1316
    %1427 = vmatprep.subr.mxu0 0.0
    %1428 = vmatpush1.msra.mxu0 %v1319
    %1429 = vmatprep.subr.mxu0 0.0
    %1430 = vmatpush1.msra.mxu0 %v1322
    %1431 = vmatprep.subr.mxu0 0.0
    %1432 = vmatpush1.msra.mxu0 %v1325
    %1433 = vmatprep.subr.mxu0 0.0
    %1434 = vmatpush1.msra.mxu0 %v1328
    %1435 = vmatprep.subr.mxu0 0.0
    %1436 = vmatpush1.msra.mxu0 %v1331
    %1437 = vmatprep.subr.mxu0 0.0
    %1438 = vmatpush1.msra.mxu0 %v1334
    %1439 = vmatprep.subr.mxu0 0.0
    %1440 = vmatpush1.msra.mxu0 %v1337
    %1441 = vmatprep.subr.mxu0 0.0
    %1442 = vmatpush1.msra.mxu0 0.0
    %1443 = vmatprep.subr.mxu0 0.0
    %1444 = vmatpush1.msra.mxu0 0.0
    %1445 = vmatprep.subr.mxu0 0.0
    %1446 = vmatpush1.msra.mxu0 0.0
    %1447 = vmatprep.subr.mxu0 0.0
    %1448 = vmatpush1.msra.mxu0 0.0
    %1449 = vmatprep.subr.mxu0 0.0
    %1450 = vmatpush1.msra.mxu0 0.0
    %1451 = vmatprep.subr.mxu0 0.0
    %1452 = vmatpush1.msra.mxu0 0.0
    %1453 = vmatprep.subr.mxu0 0.0
    %1454 = vmatpush1.msra.mxu0 0.0
    %1455 = vmatprep.subr.mxu0 0.0
    %1456 = vmatpush1.msra.mxu0 0.0
    %1457 = vmatprep.subr.mxu0 0.0
    %1458 = vmatpush1.msra.mxu0 0.0
    %1459 = vmatprep.subr.mxu0 0.0
    %1460 = vmatpush1.msra.mxu0 0.0
    %1461 = vmatprep.subr.mxu0 0.0
    %1462 = vmatpush1.msra.mxu0 0.0
    %1463 = vmatprep.subr.mxu0 0.0
    %1464 = vmatpush1.msra.mxu0 0.0
    %1465 = vmatprep.subr.mxu0 0.0
    %1466 = vmatpush1.msra.mxu0 0.0
    %1467 = vmatprep.subr.mxu0 0.0
    %1468 = vmatpush1.msra.mxu0 0.0
    %1469 = vmatprep.subr.mxu0 0.0
    %1470 = vmatpush1.msra.mxu0 0.0
    %1471 = vmatprep.subr.mxu0 0.0
    %1472 = vmatpush1.msra.mxu0 0.0
    %1473 = vmatprep.mubr.f32.mxu0 0.0
    %1474 = vmatmul.mubr.f32.gmra.mrb[0].mxu0 %v1285
    %v1475 = vpop.f32.mrb[0].mxu0
    %v1476 = vadd.f32 0.0, %v1475
    %v1477 = vpop.f32.mrb[0].mxu0
    %1478 = vdwg.mxu0
    %v1481 = vcombine.low %v1405, %v1407
    %v1483 = vunpack.c.l.s4 1983009808
    %v1484 = vunpack.c.0.s8 %v1483
    %v1485 = vlaneseq
    %v1486 = vshrl.u32 %v1485, 7
    %v1487 = vsub.s32 %v1484, %v1486
    %v1488 = vrot.slane %v1481, %v1487
    %v1490 = vadd.f32 %v1289, %v1488
    %v1491 = vxor.u32 %v1490, 2147483648
    %v1492 = vmul.f32 %v1491, 1.442695
    %v1493 = vpow.pop %v1492
    %v1494 = vadd.f32 %v1493, 1.0
    %v1495 = vrcp.pop %v1494
    %v1496 = vmul.f32 1.0, %v1495
    %v1497 = vadd.f32 %v1476, %v388
    %v1498 = vmul.f32 %v1496, %v1497
    %v1500 = vrot.slane %v1289, 4
    %v1502 = vadd.f32 %v1500, %v1498
    %v1503 = vtanh.pop %v1502
    %v1505 = vrot.slane %v1496, 2
    %v1507 = vsub.f32 1.0, %v1505
    %v1508 = vmul.f32 %v1507, %v1503
    %v1509 = vmul.f32 %v1505, %v1285
    %v1510 = vadd.f32 %v1508, %v1509
    %s1511 = scalar_lea.vmem [#allocation6], 8
    %1512 = vst [vmem:[%s1511] sm:$0x3] %v1510
    %s1513 = scalar_lea.vmem [#allocation5], 30
    %v1514 = vld [vmem:[%s1513] sm:$0x3f]
    %v1515 = vld [vmem:[#allocation8] sm:$0xff]
    %v1516 = vld [vmem:[#allocation8 + $0x8] sm:$0xff]
    %v1517 = vld [vmem:[#allocation8 + $0x10] sm:$0xff]
    %v1518 = vld [vmem:[#allocation8 + $0x18] sm:$0xff]
    %v1519 = vld [vmem:[#allocation8 + $0x20] sm:$0xff]
    %v1520 = vld [vmem:[#allocation8 + $0x28] sm:$0xff]
    %v1521 = vld [vmem:[#allocation8 + $0x30] sm:$0xff]
    %v1522 = vld [vmem:[#allocation8 + $0x38] sm:$0xff]
    %v1523 = vld [vmem:[#allocation8 + $0x40] sm:$0xff]
    %v1524 = vld [vmem:[#allocation8 + $0x48] sm:$0xff]
    %v1525 = vld [vmem:[#allocation8 + $0x50] sm:$0xff]
    %v1526 = vld [vmem:[#allocation8 + $0x58] sm:$0xff]
    %v1527 = vld [vmem:[#allocation8 + $0x60] sm:$0xff]
    %v1528 = vld [vmem:[#allocation8 + $0x68] sm:$0xff]
    %v1529 = vld [vmem:[#allocation8 + $0x70] sm:$0xff]
    %v1530 = vld [vmem:[#allocation8 + $0x78] sm:$0xff]
    %v1531 = vld [vmem:[#allocation8 + $0x80] sm:$0xff]
    %v1532 = vld [vmem:[#allocation8 + $0x88] sm:$0xff]
    %v1533 = vld [vmem:[#allocation8 + $0x90] sm:$0xff]
    %v1534 = vld [vmem:[#allocation8 + $0x98] sm:$0xff]
    %v1535 = vld [vmem:[#allocation8 + $0xa0] sm:$0xff]
    %v1536 = vld [vmem:[#allocation8 + $0xa8] sm:$0xff]
    %v1537 = vld [vmem:[#allocation8 + $0xb0] sm:$0xff]
    %v1538 = vld [vmem:[#allocation8 + $0xb8] sm:$0xff]
    %v1539 = vld [vmem:[#allocation8 + $0xc0] sm:$0xff]
    %v1540 = vld [vmem:[#allocation8 + $0xc8] sm:$0xff]
    %v1541 = vld [vmem:[#allocation8 + $0xd0] sm:$0xff]
    %v1542 = vld [vmem:[#allocation8 + $0xd8] sm:$0xff]
    %v1543 = vld [vmem:[#allocation8 + $0xe0] sm:$0xff]
    %v1544 = vld [vmem:[#allocation8 + $0xe8] sm:$0xff]
    %v1545 = vld [vmem:[#allocation8 + $0xf0] sm:$0xff]
    %v1546 = vld [vmem:[#allocation8 + $0xf8] sm:$0xff]
    %v1547 = vld [vmem:[#allocation8 + $0x100] sm:$0xff]
    %v1548 = vld [vmem:[#allocation8 + $0x108] sm:$0xff]
    %v1549 = vld [vmem:[#allocation8 + $0x110] sm:$0xff]
    %v1550 = vld [vmem:[#allocation8 + $0x118] sm:$0xff]
    %v1551 = vld [vmem:[#allocation8 + $0x120] sm:$0xff]
    %v1552 = vld [vmem:[#allocation8 + $0x128] sm:$0xff]
    %v1553 = vld [vmem:[#allocation8 + $0x130] sm:$0xff]
    %v1554 = vld [vmem:[#allocation8 + $0x138] sm:$0xff]
    %v1555 = vld [vmem:[#allocation8 + $0x140] sm:$0xff]
    %v1556 = vld [vmem:[#allocation8 + $0x148] sm:$0xff]
    %v1557 = vld [vmem:[#allocation8 + $0x150] sm:$0xff]
    %v1558 = vld [vmem:[#allocation8 + $0x158] sm:$0xff]
    %v1559 = vld [vmem:[#allocation8 + $0x160] sm:$0xff]
    %v1560 = vld [vmem:[#allocation8 + $0x168] sm:$0xff]
    %v1561 = vld [vmem:[#allocation8 + $0x170] sm:$0xff]
    %v1562 = vld [vmem:[#allocation8 + $0x178] sm:$0xff]
    %1563 = vmatprep.subr.mxu0 %v1516
    %1564 = vmatpush1.msra.mxu0 %v1515
    %1565 = vmatprep.subr.mxu0 %v1519
    %1566 = vmatpush1.msra.mxu0 %v1518
    %1567 = vmatprep.subr.mxu0 %v1522
    %1568 = vmatpush1.msra.mxu0 %v1521
    %1569 = vmatprep.subr.mxu0 %v1525
    %1570 = vmatpush1.msra.mxu0 %v1524
    %1571 = vmatprep.subr.mxu0 %v1528
    %1572 = vmatpush1.msra.mxu0 %v1527
    %1573 = vmatprep.subr.mxu0 %v1531
    %1574 = vmatpush1.msra.mxu0 %v1530
    %1575 = vmatprep.subr.mxu0 %v1534
    %1576 = vmatpush1.msra.mxu0 %v1533
    %1577 = vmatprep.subr.mxu0 %v1537
    %1578 = vmatpush1.msra.mxu0 %v1536
    %1579 = vmatprep.subr.mxu0 %v1540
    %1580 = vmatpush1.msra.mxu0 %v1539
    %1581 = vmatprep.subr.mxu0 %v1543
    %1582 = vmatpush1.msra.mxu0 %v1542
    %1583 = vmatprep.subr.mxu0 %v1546
    %1584 = vmatpush1.msra.mxu0 %v1545
    %1585 = vmatprep.subr.mxu0 %v1549
    %1586 = vmatpush1.msra.mxu0 %v1548
    %1587 = vmatprep.subr.mxu0 %v1552
    %1588 = vmatpush1.msra.mxu0 %v1551
    %1589 = vmatprep.subr.mxu0 %v1555
    %1590 = vmatpush1.msra.mxu0 %v1554
    %1591 = vmatprep.subr.mxu0 %v1558
    %1592 = vmatpush1.msra.mxu0 %v1557
    %1593 = vmatprep.subr.mxu0 %v1561
    %1594 = vmatpush1.msra.mxu0 %v1560
    %1595 = vmatprep.subr.mxu0 0.0
    %1596 = vmatpush1.msra.mxu0 0.0
    %1597 = vmatprep.subr.mxu0 0.0
    %1598 = vmatpush1.msra.mxu0 0.0
    %1599 = vmatprep.subr.mxu0 0.0
    %1600 = vmatpush1.msra.mxu0 0.0
    %1601 = vmatprep.subr.mxu0 0.0
    %1602 = vmatpush1.msra.mxu0 0.0
    %1603 = vmatprep.subr.mxu0 0.0
    %1604 = vmatpush1.msra.mxu0 0.0
    %1605 = vmatprep.subr.mxu0 0.0
    %1606 = vmatpush1.msra.mxu0 0.0
    %1607 = vmatprep.subr.mxu0 0.0
    %1608 = vmatpush1.msra.mxu0 0.0
    %1609 = vmatprep.subr.mxu0 0.0
    %1610 = vmatpush1.msra.mxu0 0.0
    %1611 = vmatprep.subr.mxu0 0.0
    %1612 = vmatpush1.msra.mxu0 0.0
    %1613 = vmatprep.subr.mxu0 0.0
    %1614 = vmatpush1.msra.mxu0 0.0
    %1615 = vmatprep.subr.mxu0 0.0
    %1616 = vmatpush1.msra.mxu0 0.0
    %1617 = vmatprep.subr.mxu0 0.0
    %1618 = vmatpush1.msra.mxu0 0.0
    %1619 = vmatprep.subr.mxu0 0.0
    %1620 = vmatpush1.msra.mxu0 0.0
    %1621 = vmatprep.subr.mxu0 0.0
    %1622 = vmatpush1.msra.mxu0 0.0
    %1623 = vmatprep.subr.mxu0 0.0
    %1624 = vmatpush1.msra.mxu0 0.0
    %1625 = vmatprep.subr.mxu0 0.0
    %1626 = vmatpush1.msra.mxu0 0.0
    %1627 = vmatprep.mubr.f32.mxu0 0.0
    %1628 = vmatmul.mubr.f32.gmra.mrb[0].mxu0 %v1510
    %v1629 = vpop.f32.mrb[0].mxu0
    %v1630 = vadd.f32 0.0, %v1629
    %v1631 = vpop.f32.mrb[0].mxu0
    %v1632 = vadd.f32 0.0, %v1631
    %1633 = vdwg.mxu0
    %1634 = vmatprep.subr.mxu0 0.0
    %1635 = vmatpush1.msra.mxu0 %v1517
    %1636 = vmatprep.subr.mxu0 0.0
    %1637 = vmatpush1.msra.mxu0 %v1520
    %1638 = vmatprep.subr.mxu0 0.0
    %1639 = vmatpush1.msra.mxu0 %v1523
    %1640 = vmatprep.subr.mxu0 0.0
    %1641 = vmatpush1.msra.mxu0 %v1526
    %1642 = vmatprep.subr.mxu0 0.0
    %1643 = vmatpush1.msra.mxu0 %v1529
    %1644 = vmatprep.subr.mxu0 0.0
    %1645 = vmatpush1.msra.mxu0 %v1532
    %1646 = vmatprep.subr.mxu0 0.0
    %1647 = vmatpush1.msra.mxu0 %v1535
    %1648 = vmatprep.subr.mxu0 0.0
    %1649 = vmatpush1.msra.mxu0 %v1538
    %1650 = vmatprep.subr.mxu0 0.0
    %1651 = vmatpush1.msra.mxu0 %v1541
    %1652 = vmatprep.subr.mxu0 0.0
    %1653 = vmatpush1.msra.mxu0 %v1544
    %1654 = vmatprep.subr.mxu0 0.0
    %1655 = vmatpush1.msra.mxu0 %v1547
    %1656 = vmatprep.subr.mxu0 0.0
    %1657 = vmatpush1.msra.mxu0 %v1550
    %1658 = vmatprep.subr.mxu0 0.0
    %1659 = vmatpush1.msra.mxu0 %v1553
    %1660 = vmatprep.subr.mxu0 0.0
    %1661 = vmatpush1.msra.mxu0 %v1556
    %1662 = vmatprep.subr.mxu0 0.0
    %1663 = vmatpush1.msra.mxu0 %v1559
    %1664 = vmatprep.subr.mxu0 0.0
    %1665 = vmatpush1.msra.mxu0 %v1562
    %1666 = vmatprep.subr.mxu0 0.0
    %1667 = vmatpush1.msra.mxu0 0.0
    %1668 = vmatprep.subr.mxu0 0.0
    %1669 = vmatpush1.msra.mxu0 0.0
    %1670 = vmatprep.subr.mxu0 0.0
    %1671 = vmatpush1.msra.mxu0 0.0
    %1672 = vmatprep.subr.mxu0 0.0
    %1673 = vmatpush1.msra.mxu0 0.0
    %1674 = vmatprep.subr.mxu0 0.0
    %1675 = vmatpush1.msra.mxu0 0.0
    %1676 = vmatprep.subr.mxu0 0.0
    %1677 = vmatpush1.msra.mxu0 0.0
    %1678 = vmatprep.subr.mxu0 0.0
    %1679 = vmatpush1.msra.mxu0 0.0
    %1680 = vmatprep.subr.mxu0 0.0
    %1681 = vmatpush1.msra.mxu0 0.0
    %1682 = vmatprep.subr.mxu0 0.0
    %1683 = vmatpush1.msra.mxu0 0.0
    %1684 = vmatprep.subr.mxu0 0.0
    %1685 = vmatpush1.msra.mxu0 0.0
    %1686 = vmatprep.subr.mxu0 0.0
    %1687 = vmatpush1.msra.mxu0 0.0
    %1688 = vmatprep.subr.mxu0 0.0
    %1689 = vmatpush1.msra.mxu0 0.0
    %1690 = vmatprep.subr.mxu0 0.0
    %1691 = vmatpush1.msra.mxu0 0.0
    %1692 = vmatprep.subr.mxu0 0.0
    %1693 = vmatpush1.msra.mxu0 0.0
    %1694 = vmatprep.subr.mxu0 0.0
    %1695 = vmatpush1.msra.mxu0 0.0
    %1696 = vmatprep.subr.mxu0 0.0
    %1697 = vmatpush1.msra.mxu0 0.0
    %1698 = vmatprep.mubr.f32.mxu0 0.0
    %1699 = vmatmul.mubr.f32.gmra.mrb[0].mxu0 %v1510
    %v1700 = vpop.f32.mrb[0].mxu0
    %v1701 = vadd.f32 0.0, %v1700
    %v1702 = vpop.f32.mrb[0].mxu0
    %1703 = vdwg.mxu0
    %v1706 = vcombine.low %v1630, %v1632
    %v1708 = vunpack.c.l.s4 1983009808
    %v1709 = vunpack.c.0.s8 %v1708
    %v1710 = vlaneseq
    %v1711 = vshrl.u32 %v1710, 7
    %v1712 = vsub.s32 %v1709, %v1711
    %v1713 = vrot.slane %v1706, %v1712
    %v1715 = vadd.f32 %v1514, %v1713
    %v1716 = vxor.u32 %v1715, 2147483648
    %v1717 = vmul.f32 %v1716, 1.442695
    %v1718 = vpow.pop %v1717
    %v1719 = vadd.f32 %v1718, 1.0
    %v1720 = vrcp.pop %v1719
    %v1721 = vmul.f32 1.0, %v1720
    %v1722 = vadd.f32 %v1701, %v388
    %v1723 = vmul.f32 %v1721, %v1722
    %v1725 = vrot.slane %v1514, 4
    %v1727 = vadd.f32 %v1725, %v1723
    %v1728 = vtanh.pop %v1727
    %v1730 = vrot.slane %v1721, 2
    %v1732 = vsub.f32 1.0, %v1730
    %v1733 = vmul.f32 %v1732, %v1728
    %v1734 = vmul.f32 %v1730, %v1510
    %v1735 = vadd.f32 %v1733, %v1734
    %s1736 = scalar_lea.vmem [#allocation6], 10
    %1737 = vst [vmem:[%s1736] sm:$0x3] %v1735
    %s1738 = scalar_lea.vmem [#allocation5], 36
    %v1739 = vld [vmem:[%s1738] sm:$0x3f]
    %v1740 = vld [vmem:[#allocation8] sm:$0xff]
    %v1741 = vld [vmem:[#allocation8 + $0x8] sm:$0xff]
    %v1742 = vld [vmem:[#allocation8 + $0x10] sm:$0xff]
    %v1743 = vld [vmem:[#allocation8 + $0x18] sm:$0xff]
    %v1744 = vld [vmem:[#allocation8 + $0x20] sm:$0xff]
    %v1745 = vld [vmem:[#allocation8 + $0x28] sm:$0xff]
    %v1746 = vld [vmem:[#allocation8 + $0x30] sm:$0xff]
    %v1747 = vld [vmem:[#allocation8 + $0x38] sm:$0xff]
    %v1748 = vld [vmem:[#allocation8 + $0x40] sm:$0xff]
    %v1749 = vld [vmem:[#allocation8 + $0x48] sm:$0xff]
    %v1750 = vld [vmem:[#allocation8 + $0x50] sm:$0xff]
    %v1751 = vld [vmem:[#allocation8 + $0x58] sm:$0xff]
    %v1752 = vld [vmem:[#allocation8 + $0x60] sm:$0xff]
    %v1753 = vld [vmem:[#allocation8 + $0x68] sm:$0xff]
    %v1754 = vld [vmem:[#allocation8 + $0x70] sm:$0xff]
    %v1755 = vld [vmem:[#allocation8 + $0x78] sm:$0xff]
    %v1756 = vld [vmem:[#allocation8 + $0x80] sm:$0xff]
    %v1757 = vld [vmem:[#allocation8 + $0x88] sm:$0xff]
    %v1758 = vld [vmem:[#allocation8 + $0x90] sm:$0xff]
    %v1759 = vld [vmem:[#allocation8 + $0x98] sm:$0xff]
    %v1760 = vld [vmem:[#allocation8 + $0xa0] sm:$0xff]
    %v1761 = vld [vmem:[#allocation8 + $0xa8] sm:$0xff]
    %v1762 = vld [vmem:[#allocation8 + $0xb0] sm:$0xff]
    %v1763 = vld [vmem:[#allocation8 + $0xb8] sm:$0xff]
    %v1764 = vld [vmem:[#allocation8 + $0xc0] sm:$0xff]
    %v1765 = vld [vmem:[#allocation8 + $0xc8] sm:$0xff]
    %v1766 = vld [vmem:[#allocation8 + $0xd0] sm:$0xff]
    %v1767 = vld [vmem:[#allocation8 + $0xd8] sm:$0xff]
    %v1768 = vld [vmem:[#allocation8 + $0xe0] sm:$0xff]
    %v1769 = vld [vmem:[#allocation8 + $0xe8] sm:$0xff]
    %v1770 = vld [vmem:[#allocation8 + $0xf0] sm:$0xff]
    %v1771 = vld [vmem:[#allocation8 + $0xf8] sm:$0xff]
    %v1772 = vld [vmem:[#allocation8 + $0x100] sm:$0xff]
    %v1773 = vld [vmem:[#allocation8 + $0x108] sm:$0xff]
    %v1774 = vld [vmem:[#allocation8 + $0x110] sm:$0xff]
    %v1775 = vld [vmem:[#allocation8 + $0x118] sm:$0xff]
    %v1776 = vld [vmem:[#allocation8 + $0x120] sm:$0xff]
    %v1777 = vld [vmem:[#allocation8 + $0x128] sm:$0xff]
    %v1778 = vld [vmem:[#allocation8 + $0x130] sm:$0xff]
    %v1779 = vld [vmem:[#allocation8 + $0x138] sm:$0xff]
    %v1780 = vld [vmem:[#allocation8 + $0x140] sm:$0xff]
    %v1781 = vld [vmem:[#allocation8 + $0x148] sm:$0xff]
    %v1782 = vld [vmem:[#allocation8 + $0x150] sm:$0xff]
    %v1783 = vld [vmem:[#allocation8 + $0x158] sm:$0xff]
    %v1784 = vld [vmem:[#allocation8 + $0x160] sm:$0xff]
    %v1785 = vld [vmem:[#allocation8 + $0x168] sm:$0xff]
    %v1786 = vld [vmem:[#allocation8 + $0x170] sm:$0xff]
    %v1787 = vld [vmem:[#allocation8 + $0x178] sm:$0xff]
    %1788 = vmatprep.subr.mxu0 %v1741
    %1789 = vmatpush1.msra.mxu0 %v1740
    %1790 = vmatprep.subr.mxu0 %v1744
    %1791 = vmatpush1.msra.mxu0 %v1743
    %1792 = vmatprep.subr.mxu0 %v1747
    %1793 = vmatpush1.msra.mxu0 %v1746
    %1794 = vmatprep.subr.mxu0 %v1750
    %1795 = vmatpush1.msra.mxu0 %v1749
    %1796 = vmatprep.subr.mxu0 %v1753
    %1797 = vmatpush1.msra.mxu0 %v1752
    %1798 = vmatprep.subr.mxu0 %v1756
    %1799 = vmatpush1.msra.mxu0 %v1755
    %1800 = vmatprep.subr.mxu0 %v1759
    %1801 = vmatpush1.msra.mxu0 %v1758
    %1802 = vmatprep.subr.mxu0 %v1762
    %1803 = vmatpush1.msra.mxu0 %v1761
    %1804 = vmatprep.subr.mxu0 %v1765
    %1805 = vmatpush1.msra.mxu0 %v1764
    %1806 = vmatprep.subr.mxu0 %v1768
    %1807 = vmatpush1.msra.mxu0 %v1767
    %1808 = vmatprep.subr.mxu0 %v1771
    %1809 = vmatpush1.msra.mxu0 %v1770
    %1810 = vmatprep.subr.mxu0 %v1774
    %1811 = vmatpush1.msra.mxu0 %v1773
    %1812 = vmatprep.subr.mxu0 %v1777
    %1813 = vmatpush1.msra.mxu0 %v1776
    %1814 = vmatprep.subr.mxu0 %v1780
    %1815 = vmatpush1.msra.mxu0 %v1779
    %1816 = vmatprep.subr.mxu0 %v1783
    %1817 = vmatpush1.msra.mxu0 %v1782
    %1818 = vmatprep.subr.mxu0 %v1786
    %1819 = vmatpush1.msra.mxu0 %v1785
    %1820 = vmatprep.subr.mxu0 0.0
    %1821 = vmatpush1.msra.mxu0 0.0
    %1822 = vmatprep.subr.mxu0 0.0
    %1823 = vmatpush1.msra.mxu0 0.0
    %1824 = vmatprep.subr.mxu0 0.0
    %1825 = vmatpush1.msra.mxu0 0.0
    %1826 = vmatprep.subr.mxu0 0.0
    %1827 = vmatpush1.msra.mxu0 0.0
    %1828 = vmatprep.subr.mxu0 0.0
    %1829 = vmatpush1.msra.mxu0 0.0
    %1830 = vmatprep.subr.mxu0 0.0
    %1831 = vmatpush1.msra.mxu0 0.0
    %1832 = vmatprep.subr.mxu0 0.0
    %1833 = vmatpush1.msra.mxu0 0.0
    %1834 = vmatprep.subr.mxu0 0.0
    %1835 = vmatpush1.msra.mxu0 0.0
    %1836 = vmatprep.subr.mxu0 0.0
    %1837 = vmatpush1.msra.mxu0 0.0
    %1838 = vmatprep.subr.mxu0 0.0
    %1839 = vmatpush1.msra.mxu0 0.0
    %1840 = vmatprep.subr.mxu0 0.0
    %1841 = vmatpush1.msra.mxu0 0.0
    %1842 = vmatprep.subr.mxu0 0.0
    %1843 = vmatpush1.msra.mxu0 0.0
    %1844 = vmatprep.subr.mxu0 0.0
    %1845 = vmatpush1.msra.mxu0 0.0
    %1846 = vmatprep.subr.mxu0 0.0
    %1847 = vmatpush1.msra.mxu0 0.0
    %1848 = vmatprep.subr.mxu0 0.0
    %1849 = vmatpush1.msra.mxu0 0.0
    %1850 = vmatprep.subr.mxu0 0.0
    %1851 = vmatpush1.msra.mxu0 0.0
    %1852 = vmatprep.mubr.f32.mxu0 0.0
    %1853 = vmatmul.mubr.f32.gmra.mrb[0].mxu0 %v1735
    %v1854 = vpop.f32.mrb[0].mxu0
    %v1855 = vadd.f32 0.0, %v1854
    %v1856 = vpop.f32.mrb[0].mxu0
    %v1857 = vadd.f32 0.0, %v1856
    %1858 = vdwg.mxu0
    %1859 = vmatprep.subr.mxu0 0.0
    %1860 = vmatpush1.msra.mxu0 %v1742
    %1861 = vmatprep.subr.mxu0 0.0
    %1862 = vmatpush1.msra.mxu0 %v1745
    %1863 = vmatprep.subr.mxu0 0.0
    %1864 = vmatpush1.msra.mxu0 %v1748
    %1865 = vmatprep.subr.mxu0 0.0
    %1866 = vmatpush1.msra.mxu0 %v1751
    %1867 = vmatprep.subr.mxu0 0.0
    %1868 = vmatpush1.msra.mxu0 %v1754
    %1869 = vmatprep.subr.mxu0 0.0
    %1870 = vmatpush1.msra.mxu0 %v1757
    %1871 = vmatprep.subr.mxu0 0.0
    %1872 = vmatpush1.msra.mxu0 %v1760
    %1873 = vmatprep.subr.mxu0 0.0
    %1874 = vmatpush1.msra.mxu0 %v1763
    %1875 = vmatprep.subr.mxu0 0.0
    %1876 = vmatpush1.msra.mxu0 %v1766
    %1877 = vmatprep.subr.mxu0 0.0
    %1878 = vmatpush1.msra.mxu0 %v1769
    %1879 = vmatprep.subr.mxu0 0.0
    %1880 = vmatpush1.msra.mxu0 %v1772
    %1881 = vmatprep.subr.mxu0 0.0
    %1882 = vmatpush1.msra.mxu0 %v1775
    %1883 = vmatprep.subr.mxu0 0.0
    %1884 = vmatpush1.msra.mxu0 %v1778
    %1885 = vmatprep.subr.mxu0 0.0
    %1886 = vmatpush1.msra.mxu0 %v1781
    %1887 = vmatprep.subr.mxu0 0.0
    %1888 = vmatpush1.msra.mxu0 %v1784
    %1889 = vmatprep.subr.mxu0 0.0
    %1890 = vmatpush1.msra.mxu0 %v1787
    %1891 = vmatprep.subr.mxu0 0.0
    %1892 = vmatpush1.msra.mxu0 0.0
    %1893 = vmatprep.subr.mxu0 0.0
    %1894 = vmatpush1.msra.mxu0 0.0
    %1895 = vmatprep.subr.mxu0 0.0
    %1896 = vmatpush1.msra.mxu0 0.0
    %1897 = vmatprep.subr.mxu0 0.0
    %1898 = vmatpush1.msra.mxu0 0.0
    %1899 = vmatprep.subr.mxu0 0.0
    %1900 = vmatpush1.msra.mxu0 0.0
    %1901 = vmatprep.subr.mxu0 0.0
    %1902 = vmatpush1.msra.mxu0 0.0
    %1903 = vmatprep.subr.mxu0 0.0
    %1904 = vmatpush1.msra.mxu0 0.0
    %1905 = vmatprep.subr.mxu0 0.0
    %1906 = vmatpush1.msra.mxu0 0.0
    %1907 = vmatprep.subr.mxu0 0.0
    %1908 = vmatpush1.msra.mxu0 0.0
    %1909 = vmatprep.subr.mxu0 0.0
    %1910 = vmatpush1.msra.mxu0 0.0
    %1911 = vmatprep.subr.mxu0 0.0
    %1912 = vmatpush1.msra.mxu0 0.0
    %1913 = vmatprep.subr.mxu0 0.0
    %1914 = vmatpush1.msra.mxu0 0.0
    %1915 = vmatprep.subr.mxu0 0.0
    %1916 = vmatpush1.msra.mxu0 0.0
    %1917 = vmatprep.subr.mxu0 0.0
    %1918 = vmatpush1.msra.mxu0 0.0
    %1919 = vmatprep.subr.mxu0 0.0
    %1920 = vmatpush1.msra.mxu0 0.0
    %1921 = vmatprep.subr.mxu0 0.0
    %1922 = vmatpush1.msra.mxu0 0.0
    %1923 = vmatprep.mubr.f32.mxu0 0.0
    %1924 = vmatmul.mubr.f32.gmra.mrb[0].mxu0 %v1735
    %v1925 = vpop.f32.mrb[0].mxu0
    %v1926 = vadd.f32 0.0, %v1925
    %v1927 = vpop.f32.mrb[0].mxu0
    %1928 = vdwg.mxu0
    %v1931 = vcombine.low %v1855, %v1857
    %v1933 = vunpack.c.l.s4 1983009808
    %v1934 = vunpack.c.0.s8 %v1933
    %v1935 = vlaneseq
    %v1936 = vshrl.u32 %v1935, 7
    %v1937 = vsub.s32 %v1934, %v1936
    %v1938 = vrot.slane %v1931, %v1937
    %v1940 = vadd.f32 %v1739, %v1938
    %v1941 = vxor.u32 %v1940, 2147483648
    %v1942 = vmul.f32 %v1941, 1.442695
    %v1943 = vpow.pop %v1942
    %v1944 = vadd.f32 %v1943, 1.0
    %v1945 = vrcp.pop %v1944
    %v1946 = vmul.f32 1.0, %v1945
    %v1947 = vadd.f32 %v1926, %v388
    %v1948 = vmul.f32 %v1946, %v1947
    %v1950 = vrot.slane %v1739, 4
    %v1952 = vadd.f32 %v1950, %v1948
    %v1953 = vtanh.pop %v1952
    %v1955 = vrot.slane %v1946, 2
    %v1957 = vsub.f32 1.0, %v1955
    %v1958 = vmul.f32 %v1957, %v1953
    %v1959 = vmul.f32 %v1955, %v1735
    %v1960 = vadd.f32 %v1958, %v1959
    %s1961 = scalar_lea.vmem [#allocation6], 12
    %1962 = vst [vmem:[%s1961] sm:$0x3] %v1960
    %s1963 = scalar_lea.vmem [#allocation5], 42
    %v1964 = vld [vmem:[%s1963] sm:$0x3f]
    %v1965 = vld [vmem:[#allocation8] sm:$0xff]
    %v1966 = vld [vmem:[#allocation8 + $0x8] sm:$0xff]
    %v1967 = vld [vmem:[#allocation8 + $0x10] sm:$0xff]
    %v1968 = vld [vmem:[#allocation8 + $0x18] sm:$0xff]
    %v1969 = vld [vmem:[#allocation8 + $0x20] sm:$0xff]
    %v1970 = vld [vmem:[#allocation8 + $0x28] sm:$0xff]
    %v1971 = vld [vmem:[#allocation8 + $0x30] sm:$0xff]
    %v1972 = vld [vmem:[#allocation8 + $0x38] sm:$0xff]
    %v1973 = vld [vmem:[#allocation8 + $0x40] sm:$0xff]
    %v1974 = vld [vmem:[#allocation8 + $0x48] sm:$0xff]
    %v1975 = vld [vmem:[#allocation8 + $0x50] sm:$0xff]
    %v1976 = vld [vmem:[#allocation8 + $0x58] sm:$0xff]
    %v1977 = vld [vmem:[#allocation8 + $0x60] sm:$0xff]
    %v1978 = vld [vmem:[#allocation8 + $0x68] sm:$0xff]
    %v1979 = vld [vmem:[#allocation8 + $0x70] sm:$0xff]
    %v1980 = vld [vmem:[#allocation8 + $0x78] sm:$0xff]
    %v1981 = vld [vmem:[#allocation8 + $0x80] sm:$0xff]
    %v1982 = vld [vmem:[#allocation8 + $0x88] sm:$0xff]
    %v1983 = vld [vmem:[#allocation8 + $0x90] sm:$0xff]
    %v1984 = vld [vmem:[#allocation8 + $0x98] sm:$0xff]
    %v1985 = vld [vmem:[#allocation8 + $0xa0] sm:$0xff]
    %v1986 = vld [vmem:[#allocation8 + $0xa8] sm:$0xff]
    %v1987 = vld [vmem:[#allocation8 + $0xb0] sm:$0xff]
    %v1988 = vld [vmem:[#allocation8 + $0xb8] sm:$0xff]
    %v1989 = vld [vmem:[#allocation8 + $0xc0] sm:$0xff]
    %v1990 = vld [vmem:[#allocation8 + $0xc8] sm:$0xff]
    %v1991 = vld [vmem:[#allocation8 + $0xd0] sm:$0xff]
    %v1992 = vld [vmem:[#allocation8 + $0xd8] sm:$0xff]
    %v1993 = vld [vmem:[#allocation8 + $0xe0] sm:$0xff]
    %v1994 = vld [vmem:[#allocation8 + $0xe8] sm:$0xff]
    %v1995 = vld [vmem:[#allocation8 + $0xf0] sm:$0xff]
    %v1996 = vld [vmem:[#allocation8 + $0xf8] sm:$0xff]
    %v1997 = vld [vmem:[#allocation8 + $0x100] sm:$0xff]
    %v1998 = vld [vmem:[#allocation8 + $0x108] sm:$0xff]
    %v1999 = vld [vmem:[#allocation8 + $0x110] sm:$0xff]
    %v2000 = vld [vmem:[#allocation8 + $0x118] sm:$0xff]
    %v2001 = vld [vmem:[#allocation8 + $0x120] sm:$0xff]
    %v2002 = vld [vmem:[#allocation8 + $0x128] sm:$0xff]
    %v2003 = vld [vmem:[#allocation8 + $0x130] sm:$0xff]
    %v2004 = vld [vmem:[#allocation8 + $0x138] sm:$0xff]
    %v2005 = vld [vmem:[#allocation8 + $0x140] sm:$0xff]
    %v2006 = vld [vmem:[#allocation8 + $0x148] sm:$0xff]
    %v2007 = vld [vmem:[#allocation8 + $0x150] sm:$0xff]
    %v2008 = vld [vmem:[#allocation8 + $0x158] sm:$0xff]
    %v2009 = vld [vmem:[#allocation8 + $0x160] sm:$0xff]
    %v2010 = vld [vmem:[#allocation8 + $0x168] sm:$0xff]
    %v2011 = vld [vmem:[#allocation8 + $0x170] sm:$0xff]
    %v2012 = vld [vmem:[#allocation8 + $0x178] sm:$0xff]
    %2013 = vmatprep.subr.mxu0 %v1966
    %2014 = vmatpush1.msra.mxu0 %v1965
    %2015 = vmatprep.subr.mxu0 %v1969
    %2016 = vmatpush1.msra.mxu0 %v1968
    %2017 = vmatprep.subr.mxu0 %v1972
    %2018 = vmatpush1.msra.mxu0 %v1971
    %2019 = vmatprep.subr.mxu0 %v1975
    %2020 = vmatpush1.msra.mxu0 %v1974
    %2021 = vmatprep.subr.mxu0 %v1978
    %2022 = vmatpush1.msra.mxu0 %v1977
    %2023 = vmatprep.subr.mxu0 %v1981
    %2024 = vmatpush1.msra.mxu0 %v1980
    %2025 = vmatprep.subr.mxu0 %v1984
    %2026 = vmatpush1.msra.mxu0 %v1983
    %2027 = vmatprep.subr.mxu0 %v1987
    %2028 = vmatpush1.msra.mxu0 %v1986
    %2029 = vmatprep.subr.mxu0 %v1990
    %2030 = vmatpush1.msra.mxu0 %v1989
    %2031 = vmatprep.subr.mxu0 %v1993
    %2032 = vmatpush1.msra.mxu0 %v1992
    %2033 = vmatprep.subr.mxu0 %v1996
    %2034 = vmatpush1.msra.mxu0 %v1995
    %2035 = vmatprep.subr.mxu0 %v1999
    %2036 = vmatpush1.msra.mxu0 %v1998
    %2037 = vmatprep.subr.mxu0 %v2002
    %2038 = vmatpush1.msra.mxu0 %v2001
    %2039 = vmatprep.subr.mxu0 %v2005
    %2040 = vmatpush1.msra.mxu0 %v2004
    %2041 = vmatprep.subr.mxu0 %v2008
    %2042 = vmatpush1.msra.mxu0 %v2007
    %2043 = vmatprep.subr.mxu0 %v2011
    %2044 = vmatpush1.msra.mxu0 %v2010
    %2045 = vmatprep.subr.mxu0 0.0
    %2046 = vmatpush1.msra.mxu0 0.0
    %2047 = vmatprep.subr.mxu0 0.0
    %2048 = vmatpush1.msra.mxu0 0.0
    %2049 = vmatprep.subr.mxu0 0.0
    %2050 = vmatpush1.msra.mxu0 0.0
    %2051 = vmatprep.subr.mxu0 0.0
    %2052 = vmatpush1.msra.mxu0 0.0
    %2053 = vmatprep.subr.mxu0 0.0
    %2054 = vmatpush1.msra.mxu0 0.0
    %2055 = vmatprep.subr.mxu0 0.0
    %2056 = vmatpush1.msra.mxu0 0.0
    %2057 = vmatprep.subr.mxu0 0.0
    %2058 = vmatpush1.msra.mxu0 0.0
    %2059 = vmatprep.subr.mxu0 0.0
    %2060 = vmatpush1.msra.mxu0 0.0
    %2061 = vmatprep.subr.mxu0 0.0
    %2062 = vmatpush1.msra.mxu0 0.0
    %2063 = vmatprep.subr.mxu0 0.0
    %2064 = vmatpush1.msra.mxu0 0.0
    %2065 = vmatprep.subr.mxu0 0.0
    %2066 = vmatpush1.msra.mxu0 0.0
    %2067 = vmatprep.subr.mxu0 0.0
    %2068 = vmatpush1.msra.mxu0 0.0
    %2069 = vmatprep.subr.mxu0 0.0
    %2070 = vmatpush1.msra.mxu0 0.0
    %2071 = vmatprep.subr.mxu0 0.0
    %2072 = vmatpush1.msra.mxu0 0.0
    %2073 = vmatprep.subr.mxu0 0.0
    %2074 = vmatpush1.msra.mxu0 0.0
    %2075 = vmatprep.subr.mxu0 0.0
    %2076 = vmatpush1.msra.mxu0 0.0
    %2077 = vmatprep.mubr.f32.mxu0 0.0
    %2078 = vmatmul.mubr.f32.gmra.mrb[0].mxu0 %v1960
    %v2079 = vpop.f32.mrb[0].mxu0
    %v2080 = vadd.f32 0.0, %v2079
    %v2081 = vpop.f32.mrb[0].mxu0
    %v2082 = vadd.f32 0.0, %v2081
    %2083 = vdwg.mxu0
    %2084 = vmatprep.subr.mxu0 0.0
    %2085 = vmatpush1.msra.mxu0 %v1967
    %2086 = vmatprep.subr.mxu0 0.0
    %2087 = vmatpush1.msra.mxu0 %v1970
    %2088 = vmatprep.subr.mxu0 0.0
    %2089 = vmatpush1.msra.mxu0 %v1973
    %2090 = vmatprep.subr.mxu0 0.0
    %2091 = vmatpush1.msra.mxu0 %v1976
    %2092 = vmatprep.subr.mxu0 0.0
    %2093 = vmatpush1.msra.mxu0 %v1979
    %2094 = vmatprep.subr.mxu0 0.0
    %2095 = vmatpush1.msra.mxu0 %v1982
    %2096 = vmatprep.subr.mxu0 0.0
    %2097 = vmatpush1.msra.mxu0 %v1985
    %2098 = vmatprep.subr.mxu0 0.0
    %2099 = vmatpush1.msra.mxu0 %v1988
    %2100 = vmatprep.subr.mxu0 0.0
    %2101 = vmatpush1.msra.mxu0 %v1991
    %2102 = vmatprep.subr.mxu0 0.0
    %2103 = vmatpush1.msra.mxu0 %v1994
    %2104 = vmatprep.subr.mxu0 0.0
    %2105 = vmatpush1.msra.mxu0 %v1997
    %2106 = vmatprep.subr.mxu0 0.0
    %2107 = vmatpush1.msra.mxu0 %v2000
    %2108 = vmatprep.subr.mxu0 0.0
    %2109 = vmatpush1.msra.mxu0 %v2003
    %2110 = vmatprep.subr.mxu0 0.0
    %2111 = vmatpush1.msra.mxu0 %v2006
    %2112 = vmatprep.subr.mxu0 0.0
    %2113 = vmatpush1.msra.mxu0 %v2009
    %2114 = vmatprep.subr.mxu0 0.0
    %2115 = vmatpush1.msra.mxu0 %v2012
    %2116 = vmatprep.subr.mxu0 0.0
    %2117 = vmatpush1.msra.mxu0 0.0
    %2118 = vmatprep.subr.mxu0 0.0
    %2119 = vmatpush1.msra.mxu0 0.0
    %2120 = vmatprep.subr.mxu0 0.0
    %2121 = vmatpush1.msra.mxu0 0.0
    %2122 = vmatprep.subr.mxu0 0.0
    %2123 = vmatpush1.msra.mxu0 0.0
    %2124 = vmatprep.subr.mxu0 0.0
    %2125 = vmatpush1.msra.mxu0 0.0
    %2126 = vmatprep.subr.mxu0 0.0
    %2127 = vmatpush1.msra.mxu0 0.0
    %2128 = vmatprep.subr.mxu0 0.0
    %2129 = vmatpush1.msra.mxu0 0.0
    %2130 = vmatprep.subr.mxu0 0.0
    %2131 = vmatpush1.msra.mxu0 0.0
    %2132 = vmatprep.subr.mxu0 0.0
    %2133 = vmatpush1.msra.mxu0 0.0
    %2134 = vmatprep.subr.mxu0 0.0
    %2135 = vmatpush1.msra.mxu0 0.0
    %2136 = vmatprep.subr.mxu0 0.0
    %2137 = vmatpush1.msra.mxu0 0.0
    %2138 = vmatprep.subr.mxu0 0.0
    %2139 = vmatpush1.msra.mxu0 0.0
    %2140 = vmatprep.subr.mxu0 0.0
    %2141 = vmatpush1.msra.mxu0 0.0
    %2142 = vmatprep.subr.mxu0 0.0
    %2143 = vmatpush1.msra.mxu0 0.0
    %2144 = vmatprep.subr.mxu0 0.0
    %2145 = vmatpush1.msra.mxu0 0.0
    %2146 = vmatprep.subr.mxu0 0.0
    %2147 = vmatpush1.msra.mxu0 0.0
    %2148 = vmatprep.mubr.f32.mxu0 0.0
    %2149 = vmatmul.mubr.f32.gmra.mrb[0].mxu0 %v1960
    %v2150 = vpop.f32.mrb[0].mxu0
    %v2151 = vadd.f32 0.0, %v2150
    %v2152 = vpop.f32.mrb[0].mxu0
    %2153 = vdwg.mxu0
    %v2156 = vcombine.low %v2080, %v2082
    %v2158 = vunpack.c.l.s4 1983009808
    %v2159 = vunpack.c.0.s8 %v2158
    %v2160 = vlaneseq
    %v2161 = vshrl.u32 %v2160, 7
    %v2162 = vsub.s32 %v2159, %v2161
    %v2163 = vrot.slane %v2156, %v2162
    %v2165 = vadd.f32 %v1964, %v2163
    %v2166 = vxor.u32 %v2165, 2147483648
    %v2167 = vmul.f32 %v2166, 1.442695
    %v2168 = vpow.pop %v2167
    %v2169 = vadd.f32 %v2168, 1.0
    %v2170 = vrcp.pop %v2169
    %v2171 = vmul.f32 1.0, %v2170
    %v2172 = vadd.f32 %v2151, %v388
    %v2173 = vmul.f32 %v2171, %v2172
    %v2175 = vrot.slane %v1964, 4
    %v2177 = vadd.f32 %v2175, %v2173
    %v2178 = vtanh.pop %v2177
    %v2180 = vrot.slane %v2171, 2
    %v2182 = vsub.f32 1.0, %v2180
    %v2183 = vmul.f32 %v2182, %v2178
    %v2184 = vmul.f32 %v2180, %v1960
    %v2185 = vadd.f32 %v2183, %v2184
    %s2186 = scalar_lea.vmem [#allocation6], 14
    %2187 = vst [vmem:[%s2186] sm:$0x3] %v2185
    %v2188 = vld [vmem:[#allocation6] sm:$0x3]
    %v2189 = vld [vmem:[#allocation6 + $0x2] sm:$0x3]
    %v2190 = vld [vmem:[#allocation6 + $0x4] sm:$0x3]
    %v2191 = vld [vmem:[#allocation6 + $0x6] sm:$0x3]
    %v2192 = vld [vmem:[#allocation6 + $0x8] sm:$0x3]
    %v2193 = vld [vmem:[#allocation6 + $0xa] sm:$0x3]
    %v2194 = vld [vmem:[#allocation6 + $0xc] sm:$0x3]
    %v2195 = vld [vmem:[#allocation6 + $0xe] sm:$0x3]
    %s2196 = smul.u32 8, 16
    %s2197 = smul.u32 %s2196, 3
    %s2198 = sshll.u32 %s2197, 4
    %2199 = dma.done [#allocation4], %s2198
    %s2200 = sshll.u32 %s2197, 4
    %2201 = dma.done %s69, %s2200
    %v2202 = vld [vmem:[#allocation2] sm:$0xff]
    %v2203 = vld [vmem:[#allocation2 + $0x8] sm:$0xff]
    %v2204 = vld [vmem:[#allocation2 + $0x10] sm:$0xff]
    %v2205 = vld [vmem:[#allocation2 + $0x18] sm:$0xff]
    %v2206 = vld [vmem:[#allocation2 + $0x20] sm:$0xff]
    %v2207 = vld [vmem:[#allocation2 + $0x28] sm:$0xff]
    %v2208 = vld [vmem:[#allocation2 + $0x30] sm:$0xff]
    %v2209 = vld [vmem:[#allocation2 + $0x38] sm:$0xff]
    %v2210 = vld [vmem:[#allocation2 + $0x40] sm:$0xff]
    %v2211 = vld [vmem:[#allocation2 + $0x48] sm:$0xff]
    %v2212 = vld [vmem:[#allocation2 + $0x50] sm:$0xff]
    %v2213 = vld [vmem:[#allocation2 + $0x58] sm:$0xff]
    %v2214 = vld [vmem:[#allocation2 + $0x60] sm:$0xff]
    %v2215 = vld [vmem:[#allocation2 + $0x68] sm:$0xff]
    %v2216 = vld [vmem:[#allocation2 + $0x70] sm:$0xff]
    %v2217 = vld [vmem:[#allocation2 + $0x78] sm:$0xff]
    %v2218 = vld [vmem:[#allocation2 + $0x80] sm:$0xff]
    %v2219 = vld [vmem:[#allocation2 + $0x88] sm:$0xff]
    %v2220 = vld [vmem:[#allocation2 + $0x90] sm:$0xff]
    %v2221 = vld [vmem:[#allocation2 + $0x98] sm:$0xff]
    %v2222 = vld [vmem:[#allocation2 + $0xa0] sm:$0xff]
    %v2223 = vld [vmem:[#allocation2 + $0xa8] sm:$0xff]
    %v2224 = vld [vmem:[#allocation2 + $0xb0] sm:$0xff]
    %v2225 = vld [vmem:[#allocation2 + $0xb8] sm:$0xff]
    %v2226 = vld [vmem:[#allocation2 + $0xc0] sm:$0xff]
    %v2227 = vld [vmem:[#allocation2 + $0xc8] sm:$0xff]
    %v2228 = vld [vmem:[#allocation2 + $0xd0] sm:$0xff]
    %v2229 = vld [vmem:[#allocation2 + $0xd8] sm:$0xff]
    %v2230 = vld [vmem:[#allocation2 + $0xe0] sm:$0xff]
    %v2231 = vld [vmem:[#allocation2 + $0xe8] sm:$0xff]
    %v2232 = vld [vmem:[#allocation2 + $0xf0] sm:$0xff]
    %v2233 = vld [vmem:[#allocation2 + $0xf8] sm:$0xff]
    %v2234 = vld [vmem:[#allocation2 + $0x100] sm:$0xff]
    %v2235 = vld [vmem:[#allocation2 + $0x108] sm:$0xff]
    %v2236 = vld [vmem:[#allocation2 + $0x110] sm:$0xff]
    %v2237 = vld [vmem:[#allocation2 + $0x118] sm:$0xff]
    %v2238 = vld [vmem:[#allocation2 + $0x120] sm:$0xff]
    %v2239 = vld [vmem:[#allocation2 + $0x128] sm:$0xff]
    %v2240 = vld [vmem:[#allocation2 + $0x130] sm:$0xff]
    %v2241 = vld [vmem:[#allocation2 + $0x138] sm:$0xff]
    %v2242 = vld [vmem:[#allocation2 + $0x140] sm:$0xff]
    %v2243 = vld [vmem:[#allocation2 + $0x148] sm:$0xff]
    %v2244 = vld [vmem:[#allocation2 + $0x150] sm:$0xff]
    %v2245 = vld [vmem:[#allocation2 + $0x158] sm:$0xff]
    %v2246 = vld [vmem:[#allocation2 + $0x160] sm:$0xff]
    %v2247 = vld [vmem:[#allocation2 + $0x168] sm:$0xff]
    %v2248 = vld [vmem:[#allocation2 + $0x170] sm:$0xff]
    %v2249 = vld [vmem:[#allocation2 + $0x178] sm:$0xff]
    %v2250 = vld [vmem:[%s9] sm:$0x7]
    %v2252 = vlaneseq
    %v2253 = vshrl.u32 %v2252, 7
    %v2254 = vsub.s32 0, %v2253
    %v2255 = vrot.slane %v2250, %v2254
    %v2256 = vlaneseq
    %v2257 = vshrl.u32 %v2256, 7
    %v2258 = vsub.s32 1, %v2257
    %v2259 = vrot.slane %v2250, %v2258
    %v2260 = vlaneseq
    %v2261 = vshrl.u32 %v2260, 7
    %v2262 = vsub.s32 2, %v2261
    %v2263 = vrot.slane %v2250, %v2262
    %v2275 = vcombine.low %v2188, %v2189
    %v2276 = vcombine.low %v2190, %v2191
    %v2278 = vunpack.c.l.s4 1983009808
    %v2279 = vunpack.c.0.s8 %v2278
    %v2280 = vlaneseq
    %v2281 = vshrl.u32 %v2280, 7
    %v2282 = vsub.s32 %v2279, %v2281
    %v2283 = vrot.slane %v2275, %v2282
    %v2285 = vunpack.c.l.s4 1983009808
    %v2286 = vunpack.c.0.s8 %v2285
    %v2287 = vlaneseq
    %v2288 = vshrl.u32 %v2287, 7
    %v2289 = vsub.s32 %v2286, %v2288
    %v2290 = vrot.slane %v2276, %v2289
    %v2291 = vcombine.low %v2283, %v2290
    %v2292 = vcombine.low %v2192, %v2193
    %v2293 = vcombine.low %v2194, %v2195
    %v2295 = vunpack.c.l.s4 1983009808
    %v2296 = vunpack.c.0.s8 %v2295
    %v2297 = vlaneseq
    %v2298 = vshrl.u32 %v2297, 7
    %v2299 = vsub.s32 %v2296, %v2298
    %v2300 = vrot.slane %v2292, %v2299
    %v2302 = vunpack.c.l.s4 1983009808
    %v2303 = vunpack.c.0.s8 %v2302
    %v2304 = vlaneseq
    %v2305 = vshrl.u32 %v2304, 7
    %v2306 = vsub.s32 %v2303, %v2305
    %v2307 = vrot.slane %v2293, %v2306
    %v2308 = vcombine.low %v2300, %v2307
    %2311 = vmatprep.subr.mxu0 %v2203
    %2312 = vmatpush1.msra.mxu0 %v2202
    %2313 = vmatprep.subr.mxu0 %v2206
    %2314 = vmatpush1.msra.mxu0 %v2205
    %2315 = vmatprep.subr.mxu0 %v2209
    %2316 = vmatpush1.msra.mxu0 %v2208
    %2317 = vmatprep.subr.mxu0 %v2212
    %2318 = vmatpush1.msra.mxu0 %v2211
    %2319 = vmatprep.subr.mxu0 %v2215
    %2320 = vmatpush1.msra.mxu0 %v2214
    %2321 = vmatprep.subr.mxu0 %v2218
    %2322 = vmatpush1.msra.mxu0 %v2217
    %2323 = vmatprep.subr.mxu0 %v2221
    %2324 = vmatpush1.msra.mxu0 %v2220
    %2325 = vmatprep.subr.mxu0 %v2224
    %2326 = vmatpush1.msra.mxu0 %v2223
    %2327 = vmatprep.subr.mxu0 %v2227
    %2328 = vmatpush1.msra.mxu0 %v2226
    %2329 = vmatprep.subr.mxu0 %v2230
    %2330 = vmatpush1.msra.mxu0 %v2229
    %2331 = vmatprep.subr.mxu0 %v2233
    %2332 = vmatpush1.msra.mxu0 %v2232
    %2333 = vmatprep.subr.mxu0 %v2236
    %2334 = vmatpush1.msra.mxu0 %v2235
    %2335 = vmatprep.subr.mxu0 %v2239
    %2336 = vmatpush1.msra.mxu0 %v2238
    %2337 = vmatprep.subr.mxu0 %v2242
    %2338 = vmatpush1.msra.mxu0 %v2241
    %2339 = vmatprep.subr.mxu0 %v2245
    %2340 = vmatpush1.msra.mxu0 %v2244
    %2341 = vmatprep.subr.mxu0 %v2248
    %2342 = vmatpush1.msra.mxu0 %v2247
    %2343 = vmatprep.subr.mxu0 0.0
    %2344 = vmatpush1.msra.mxu0 0.0
    %2345 = vmatprep.subr.mxu0 0.0
    %2346 = vmatpush1.msra.mxu0 0.0
    %2347 = vmatprep.subr.mxu0 0.0
    %2348 = vmatpush1.msra.mxu0 0.0
    %2349 = vmatprep.subr.mxu0 0.0
    %2350 = vmatpush1.msra.mxu0 0.0
    %2351 = vmatprep.subr.mxu0 0.0
    %2352 = vmatpush1.msra.mxu0 0.0
    %2353 = vmatprep.subr.mxu0 0.0
    %2354 = vmatpush1.msra.mxu0 0.0
    %2355 = vmatprep.subr.mxu0 0.0
    %2356 = vmatpush1.msra.mxu0 0.0
    %2357 = vmatprep.subr.mxu0 0.0
    %2358 = vmatpush1.msra.mxu0 0.0
    %2359 = vmatprep.subr.mxu0 0.0
    %2360 = vmatpush1.msra.mxu0 0.0
    %2361 = vmatprep.subr.mxu0 0.0
    %2362 = vmatpush1.msra.mxu0 0.0
    %2363 = vmatprep.subr.mxu0 0.0
    %2364 = vmatpush1.msra.mxu0 0.0
    %2365 = vmatprep.subr.mxu0 0.0
    %2366 = vmatpush1.msra.mxu0 0.0
    %2367 = vmatprep.subr.mxu0 0.0
    %2368 = vmatpush1.msra.mxu0 0.0
    %2369 = vmatprep.subr.mxu0 0.0
    %2370 = vmatpush1.msra.mxu0 0.0
    %2371 = vmatprep.subr.mxu0 0.0
    %2372 = vmatpush1.msra.mxu0 0.0
    %2373 = vmatprep.subr.mxu0 0.0
    %2374 = vmatpush1.msra.mxu0 0.0
    %2375 = vmatprep.mubr.f32.mxu0 0.0
    %2376 = vmatmul.mubr.f32.gmra.mrb[0].mxu0 %v2291
    %v2377 = vpop.f32.mrb[0].mxu0
    %v2378 = vadd.f32 %v2255, %v2377
    %v2379 = vpop.f32.mrb[0].mxu0
    %v2380 = vadd.f32 %v2259, %v2379
    %2381 = vmatprep.mubr.f32.mxu0 0.0
    %2382 = vmatmul.mubr.f32.gmra.mrb[0].mxu0 %v2308
    %v2383 = vpop.f32.mrb[0].mxu0
    %v2384 = vadd.f32 %v2255, %v2383
    %v2385 = vpop.f32.mrb[0].mxu0
    %v2386 = vadd.f32 %v2259, %v2385
    %2387 = vdwg.mxu0
    %2388 = vmatprep.subr.mxu0 0.0
    %2389 = vmatpush1.msra.mxu0 %v2204
    %2390 = vmatprep.subr.mxu0 0.0
    %2391 = vmatpush1.msra.mxu0 %v2207
    %2392 = vmatprep.subr.mxu0 0.0
    %2393 = vmatpush1.msra.mxu0 %v2210
    %2394 = vmatprep.subr.mxu0 0.0
    %2395 = vmatpush1.msra.mxu0 %v2213
    %2396 = vmatprep.subr.mxu0 0.0
    %2397 = vmatpush1.msra.mxu0 %v2216
    %2398 = vmatprep.subr.mxu0 0.0
    %2399 = vmatpush1.msra.mxu0 %v2219
    %2400 = vmatprep.subr.mxu0 0.0
    %2401 = vmatpush1.msra.mxu0 %v2222
    %2402 = vmatprep.subr.mxu0 0.0
    %2403 = vmatpush1.msra.mxu0 %v2225
    %2404 = vmatprep.subr.mxu0 0.0
    %2405 = vmatpush1.msra.mxu0 %v2228
    %2406 = vmatprep.subr.mxu0 0.0
    %2407 = vmatpush1.msra.mxu0 %v2231
    %2408 = vmatprep.subr.mxu0 0.0
    %2409 = vmatpush1.msra.mxu0 %v2234
    %2410 = vmatprep.subr.mxu0 0.0
    %2411 = vmatpush1.msra.mxu0 %v2237
    %2412 = vmatprep.subr.mxu0 0.0
    %2413 = vmatpush1.msra.mxu0 %v2240
    %2414 = vmatprep.subr.mxu0 0.0
    %2415 = vmatpush1.msra.mxu0 %v2243
    %2416 = vmatprep.subr.mxu0 0.0
    %2417 = vmatpush1.msra.mxu0 %v2246
    %2418 = vmatprep.subr.mxu0 0.0
    %2419 = vmatpush1.msra.mxu0 %v2249
    %2420 = vmatprep.subr.mxu0 0.0
    %2421 = vmatpush1.msra.mxu0 0.0
    %2422 = vmatprep.subr.mxu0 0.0
    %2423 = vmatpush1.msra.mxu0 0.0
    %2424 = vmatprep.subr.mxu0 0.0
    %2425 = vmatpush1.msra.mxu0 0.0
    %2426 = vmatprep.subr.mxu0 0.0
    %2427 = vmatpush1.msra.mxu0 0.0
    %2428 = vmatprep.subr.mxu0 0.0
    %2429 = vmatpush1.msra.mxu0 0.0
    %2430 = vmatprep.subr.mxu0 0.0
    %2431 = vmatpush1.msra.mxu0 0.0
    %2432 = vmatprep.subr.mxu0 0.0
    %2433 = vmatpush1.msra.mxu0 0.0
    %2434 = vmatprep.subr.mxu0 0.0
    %2435 = vmatpush1.msra.mxu0 0.0
    %2436 = vmatprep.subr.mxu0 0.0
    %2437 = vmatpush1.msra.mxu0 0.0
    %2438 = vmatprep.subr.mxu0 0.0
    %2439 = vmatpush1.msra.mxu0 0.0
    %2440 = vmatprep.subr.mxu0 0.0
    %2441 = vmatpush1.msra.mxu0 0.0
    %2442 = vmatprep.subr.mxu0 0.0
    %2443 = vmatpush1.msra.mxu0 0.0
    %2444 = vmatprep.subr.mxu0 0.0
    %2445 = vmatpush1.msra.mxu0 0.0
    %2446 = vmatprep.subr.mxu0 0.0
    %2447 = vmatpush1.msra.mxu0 0.0
    %2448 = vmatprep.subr.mxu0 0.0
    %2449 = vmatpush1.msra.mxu0 0.0
    %2450 = vmatprep.subr.mxu0 0.0
    %2451 = vmatpush1.msra.mxu0 0.0
    %2452 = vmatprep.mubr.f32.mxu0 0.0
    %2453 = vmatmul.mubr.f32.gmra.mrb[0].mxu0 %v2291
    %v2454 = vpop.f32.mrb[0].mxu0
    %v2455 = vadd.f32 %v2263, %v2454
    %v2456 = vpop.f32.mrb[0].mxu0
    %2457 = vmatprep.mubr.f32.mxu0 0.0
    %2458 = vmatmul.mubr.f32.gmra.mrb[0].mxu0 %v2308
    %v2459 = vpop.f32.mrb[0].mxu0
    %v2460 = vadd.f32 %v2263, %v2459
    %v2461 = vpop.f32.mrb[0].mxu0
    %2462 = vdwg.mxu0
    %v2469 = vcombine.low %v2378, %v2380
    %v2470 = vcombine.high %v2378, %v2380
    %v2471 = vcombine.high %v2455, %v2455
    %v2473 = vunpack.c.l.s4 1983009808
    %v2474 = vunpack.c.0.s8 %v2473
    %v2475 = vlaneseq
    %v2476 = vshrl.u32 %v2475, 7
    %v2477 = vsub.s32 %v2474, %v2476
    %v2478 = vrot.slane %v2469, %v2477
    %v2480 = vunpack.c.l.s4 1983009808
    %v2481 = vunpack.c.0.s8 %v2480
    %v2482 = vlaneseq
    %v2483 = vshrl.u32 %v2482, 7
    %v2484 = vsub.s32 %v2481, %v2483
    %v2485 = vrot.slane %v2470, %v2484
    %v2487 = vunpack.c.l.s4 1983009808
    %v2488 = vunpack.c.0.s8 %v2487
    %v2489 = vlaneseq
    %v2490 = vshrl.u32 %v2489, 7
    %v2491 = vsub.s32 %v2488, %v2490
    %v2492 = vrot.slane %v2455, %v2491
    %v2494 = vunpack.c.l.s4 1983009808
    %v2495 = vunpack.c.0.s8 %v2494
    %v2496 = vlaneseq
    %v2497 = vshrl.u32 %v2496, 7
    %v2498 = vsub.s32 %v2495, %v2497
    %v2499 = vrot.slane %v2471, %v2498
    %v2500 = vcombine.low %v2478, %v2492
    %v2501 = vcombine.high %v2478, %v2492
    %v2502 = vcombine.low %v2485, %v2499
    %v2503 = vcombine.high %v2485, %v2499
    %v2504 = vcombine.low %v2384, %v2386
    %v2505 = vcombine.high %v2384, %v2386
    %v2506 = vcombine.high %v2460, %v2460
    %v2508 = vunpack.c.l.s4 1983009808
    %v2509 = vunpack.c.0.s8 %v2508
    %v2510 = vlaneseq
    %v2511 = vshrl.u32 %v2510, 7
    %v2512 = vsub.s32 %v2509, %v2511
    %v2513 = vrot.slane %v2504, %v2512
    %v2515 = vunpack.c.l.s4 1983009808
    %v2516 = vunpack.c.0.s8 %v2515
    %v2517 = vlaneseq
    %v2518 = vshrl.u32 %v2517, 7
    %v2519 = vsub.s32 %v2516, %v2518
    %v2520 = vrot.slane %v2505, %v2519
    %v2522 = vunpack.c.l.s4 1983009808
    %v2523 = vunpack.c.0.s8 %v2522
    %v2524 = vlaneseq
    %v2525 = vshrl.u32 %v2524, 7
    %v2526 = vsub.s32 %v2523, %v2525
    %v2527 = vrot.slane %v2460, %v2526
    %v2529 = vunpack.c.l.s4 1983009808
    %v2530 = vunpack.c.0.s8 %v2529
    %v2531 = vlaneseq
    %v2532 = vshrl.u32 %v2531, 7
    %v2533 = vsub.s32 %v2530, %v2532
    %v2534 = vrot.slane %v2506, %v2533
    %v2535 = vcombine.low %v2513, %v2527
    %v2536 = vcombine.high %v2513, %v2527
    %v2537 = vcombine.low %v2520, %v2534
    %v2538 = vcombine.high %v2520, %v2534
    %2547 = vst [vmem:[#allocation5] sm:$0x3f] %v2500
    %2548 = vst [vmem:[#allocation5 + $0x6] sm:$0x3f] %v2501
    %2549 = vst [vmem:[#allocation5 + $0xc] sm:$0x3f] %v2502
    %2550 = vst [vmem:[#allocation5 + $0x12] sm:$0x3f] %v2503
    %2551 = vst [vmem:[#allocation5 + $0x18] sm:$0x3f] %v2535
    %2552 = vst [vmem:[#allocation5 + $0x1e] sm:$0x3f] %v2536
    %2553 = vst [vmem:[#allocation5 + $0x24] sm:$0x3f] %v2537
    %2554 = vst [vmem:[#allocation5 + $0x2a] sm:$0x3f] %v2538
    %v2555 = vld [vmem:[%s10] sm:$0x1]
    %v2557 = vlaneseq
    %v2558 = vshrl.u32 %v2557, 7
    %v2559 = vsub.s32 0, %v2558
    %v2560 = vrot.slane %v2555, %v2559
    %v2562 = vld [vmem:[#allocation5] sm:$0x3f]
    %v2563 = vld [vmem:[#allocation3] sm:$0xff]
    %v2564 = vld [vmem:[#allocation3 + $0x8] sm:$0xff]
    %v2565 = vld [vmem:[#allocation3 + $0x10] sm:$0xff]
    %v2566 = vld [vmem:[#allocation3 + $0x18] sm:$0xff]
    %v2567 = vld [vmem:[#allocation3 + $0x20] sm:$0xff]
    %v2568 = vld [vmem:[#allocation3 + $0x28] sm:$0xff]
    %v2569 = vld [vmem:[#allocation3 + $0x30] sm:$0xff]
    %v2570 = vld [vmem:[#allocation3 + $0x38] sm:$0xff]
    %v2571 = vld [vmem:[#allocation3 + $0x40] sm:$0xff]
    %v2572 = vld [vmem:[#allocation3 + $0x48] sm:$0xff]
    %v2573 = vld [vmem:[#allocation3 + $0x50] sm:$0xff]
    %v2574 = vld [vmem:[#allocation3 + $0x58] sm:$0xff]
    %v2575 = vld [vmem:[#allocation3 + $0x60] sm:$0xff]
    %v2576 = vld [vmem:[#allocation3 + $0x68] sm:$0xff]
    %v2577 = vld [vmem:[#allocation3 + $0x70] sm:$0xff]
    %v2578 = vld [vmem:[#allocation3 + $0x78] sm:$0xff]
    %v2579 = vld [vmem:[#allocation3 + $0x80] sm:$0xff]
    %v2580 = vld [vmem:[#allocation3 + $0x88] sm:$0xff]
    %v2581 = vld [vmem:[#allocation3 + $0x90] sm:$0xff]
    %v2582 = vld [vmem:[#allocation3 + $0x98] sm:$0xff]
    %v2583 = vld [vmem:[#allocation3 + $0xa0] sm:$0xff]
    %v2584 = vld [vmem:[#allocation3 + $0xa8] sm:$0xff]
    %v2585 = vld [vmem:[#allocation3 + $0xb0] sm:$0xff]
    %v2586 = vld [vmem:[#allocation3 + $0xb8] sm:$0xff]
    %v2587 = vld [vmem:[#allocation3 + $0xc0] sm:$0xff]
    %v2588 = vld [vmem:[#allocation3 + $0xc8] sm:$0xff]
    %v2589 = vld [vmem:[#allocation3 + $0xd0] sm:$0xff]
    %v2590 = vld [vmem:[#allocation3 + $0xd8] sm:$0xff]
    %v2591 = vld [vmem:[#allocation3 + $0xe0] sm:$0xff]
    %v2592 = vld [vmem:[#allocation3 + $0xe8] sm:$0xff]
    %v2593 = vld [vmem:[#allocation3 + $0xf0] sm:$0xff]
    %v2594 = vld [vmem:[#allocation3 + $0xf8] sm:$0xff]
    %v2595 = vld [vmem:[#allocation3 + $0x100] sm:$0xff]
    %v2596 = vld [vmem:[#allocation3 + $0x108] sm:$0xff]
    %v2597 = vld [vmem:[#allocation3 + $0x110] sm:$0xff]
    %v2598 = vld [vmem:[#allocation3 + $0x118] sm:$0xff]
    %v2599 = vld [vmem:[#allocation3 + $0x120] sm:$0xff]
    %v2600 = vld [vmem:[#allocation3 + $0x128] sm:$0xff]
    %v2601 = vld [vmem:[#allocation3 + $0x130] sm:$0xff]
    %v2602 = vld [vmem:[#allocation3 + $0x138] sm:$0xff]
    %v2603 = vld [vmem:[#allocation3 + $0x140] sm:$0xff]
    %v2604 = vld [vmem:[#allocation3 + $0x148] sm:$0xff]
    %v2605 = vld [vmem:[#allocation3 + $0x150] sm:$0xff]
    %v2606 = vld [vmem:[#allocation3 + $0x158] sm:$0xff]
    %v2607 = vld [vmem:[#allocation3 + $0x160] sm:$0xff]
    %v2608 = vld [vmem:[#allocation3 + $0x168] sm:$0xff]
    %v2609 = vld [vmem:[#allocation3 + $0x170] sm:$0xff]
    %v2610 = vld [vmem:[#allocation3 + $0x178] sm:$0xff]
    %2611 = vmatprep.subr.mxu0 %v2564
    %2612 = vmatpush1.msra.mxu0 %v2563
    %2613 = vmatprep.subr.mxu0 %v2567
    %2614 = vmatpush1.msra.mxu0 %v2566
    %2615 = vmatprep.subr.mxu0 %v2570
    %2616 = vmatpush1.msra.mxu0 %v2569
    %2617 = vmatprep.subr.mxu0 %v2573
    %2618 = vmatpush1.msra.mxu0 %v2572
    %2619 = vmatprep.subr.mxu0 %v2576
    %2620 = vmatpush1.msra.mxu0 %v2575
    %2621 = vmatprep.subr.mxu0 %v2579
    %2622 = vmatpush1.msra.mxu0 %v2578
    %2623 = vmatprep.subr.mxu0 %v2582
    %2624 = vmatpush1.msra.mxu0 %v2581
    %2625 = vmatprep.subr.mxu0 %v2585
    %2626 = vmatpush1.msra.mxu0 %v2584
    %2627 = vmatprep.subr.mxu0 %v2588
    %2628 = vmatpush1.msra.mxu0 %v2587
    %2629 = vmatprep.subr.mxu0 %v2591
    %2630 = vmatpush1.msra.mxu0 %v2590
    %2631 = vmatprep.subr.mxu0 %v2594
    %2632 = vmatpush1.msra.mxu0 %v2593
    %2633 = vmatprep.subr.mxu0 %v2597
    %2634 = vmatpush1.msra.mxu0 %v2596
    %2635 = vmatprep.subr.mxu0 %v2600
    %2636 = vmatpush1.msra.mxu0 %v2599
    %2637 = vmatprep.subr.mxu0 %v2603
    %2638 = vmatpush1.msra.mxu0 %v2602
    %2639 = vmatprep.subr.mxu0 %v2606
    %2640 = vmatpush1.msra.mxu0 %v2605
    %2641 = vmatprep.subr.mxu0 %v2609
    %2642 = vmatpush1.msra.mxu0 %v2608
    %2643 = vmatprep.subr.mxu0 0.0
    %2644 = vmatpush1.msra.mxu0 0.0
    %2645 = vmatprep.subr.mxu0 0.0
    %2646 = vmatpush1.msra.mxu0 0.0
    %2647 = vmatprep.subr.mxu0 0.0
    %2648 = vmatpush1.msra.mxu0 0.0
    %2649 = vmatprep.subr.mxu0 0.0
    %2650 = vmatpush1.msra.mxu0 0.0
    %2651 = vmatprep.subr.mxu0 0.0
    %2652 = vmatpush1.msra.mxu0 0.0
    %2653 = vmatprep.subr.mxu0 0.0
    %2654 = vmatpush1.msra.mxu0 0.0
    %2655 = vmatprep.subr.mxu0 0.0
    %2656 = vmatpush1.msra.mxu0 0.0
    %2657 = vmatprep.subr.mxu0 0.0
    %2658 = vmatpush1.msra.mxu0 0.0
    %2659 = vmatprep.subr.mxu0 0.0
    %2660 = vmatpush1.msra.mxu0 0.0
    %2661 = vmatprep.subr.mxu0 0.0
    %2662 = vmatpush1.msra.mxu0 0.0
    %2663 = vmatprep.subr.mxu0 0.0
    %2664 = vmatpush1.msra.mxu0 0.0
    %2665 = vmatprep.subr.mxu0 0.0
    %2666 = vmatpush1.msra.mxu0 0.0
    %2667 = vmatprep.subr.mxu0 0.0
    %2668 = vmatpush1.msra.mxu0 0.0
    %2669 = vmatprep.subr.mxu0 0.0
    %2670 = vmatpush1.msra.mxu0 0.0
    %2671 = vmatprep.subr.mxu0 0.0
    %2672 = vmatpush1.msra.mxu0 0.0
    %2673 = vmatprep.subr.mxu0 0.0
    %2674 = vmatpush1.msra.mxu0 0.0
    %2675 = vmatprep.mubr.f32.mxu0 0.0
    %2676 = vmatmul.mubr.f32.gmra.mrb[0].mxu0 0.0
    %v2677 = vpop.f32.mrb[0].mxu0
    %v2678 = vadd.f32 0.0, %v2677
    %v2679 = vpop.f32.mrb[0].mxu0
    %v2680 = vadd.f32 0.0, %v2679
    %2681 = vdwg.mxu0
    %2682 = vmatprep.subr.mxu0 0.0
    %2683 = vmatpush1.msra.mxu0 %v2565
    %2684 = vmatprep.subr.mxu0 0.0
    %2685 = vmatpush1.msra.mxu0 %v2568
    %2686 = vmatprep.subr.mxu0 0.0
    %2687 = vmatpush1.msra.mxu0 %v2571
    %2688 = vmatprep.subr.mxu0 0.0
    %2689 = vmatpush1.msra.mxu0 %v2574
    %2690 = vmatprep.subr.mxu0 0.0
    %2691 = vmatpush1.msra.mxu0 %v2577
    %2692 = vmatprep.subr.mxu0 0.0
    %2693 = vmatpush1.msra.mxu0 %v2580
    %2694 = vmatprep.subr.mxu0 0.0
    %2695 = vmatpush1.msra.mxu0 %v2583
    %2696 = vmatprep.subr.mxu0 0.0
    %2697 = vmatpush1.msra.mxu0 %v2586
    %2698 = vmatprep.subr.mxu0 0.0
    %2699 = vmatpush1.msra.mxu0 %v2589
    %2700 = vmatprep.subr.mxu0 0.0
    %2701 = vmatpush1.msra.mxu0 %v2592
    %2702 = vmatprep.subr.mxu0 0.0
    %2703 = vmatpush1.msra.mxu0 %v2595
    %2704 = vmatprep.subr.mxu0 0.0
    %2705 = vmatpush1.msra.mxu0 %v2598
    %2706 = vmatprep.subr.mxu0 0.0
    %2707 = vmatpush1.msra.mxu0 %v2601
    %2708 = vmatprep.subr.mxu0 0.0
    %2709 = vmatpush1.msra.mxu0 %v2604
    %2710 = vmatprep.subr.mxu0 0.0
    %2711 = vmatpush1.msra.mxu0 %v2607
    %2712 = vmatprep.subr.mxu0 0.0
    %2713 = vmatpush1.msra.mxu0 %v2610
    %2714 = vmatprep.subr.mxu0 0.0
    %2715 = vmatpush1.msra.mxu0 0.0
    %2716 = vmatprep.subr.mxu0 0.0
    %2717 = vmatpush1.msra.mxu0 0.0
    %2718 = vmatprep.subr.mxu0 0.0
    %2719 = vmatpush1.msra.mxu0 0.0
    %2720 = vmatprep.subr.mxu0 0.0
    %2721 = vmatpush1.msra.mxu0 0.0
    %2722 = vmatprep.subr.mxu0 0.0
    %2723 = vmatpush1.msra.mxu0 0.0
    %2724 = vmatprep.subr.mxu0 0.0
    %2725 = vmatpush1.msra.mxu0 0.0
    %2726 = vmatprep.subr.mxu0 0.0
    %2727 = vmatpush1.msra.mxu0 0.0
    %2728 = vmatprep.subr.mxu0 0.0
    %2729 = vmatpush1.msra.mxu0 0.0
    %2730 = vmatprep.subr.mxu0 0.0
    %2731 = vmatpush1.msra.mxu0 0.0
    %2732 = vmatprep.subr.mxu0 0.0
    %2733 = vmatpush1.msra.mxu0 0.0
    %2734 = vmatprep.subr.mxu0 0.0
    %2735 = vmatpush1.msra.mxu0 0.0
    %2736 = vmatprep.subr.mxu0 0.0
    %2737 = vmatpush1.msra.mxu0 0.0
    %2738 = vmatprep.subr.mxu0 0.0
    %2739 = vmatpush1.msra.mxu0 0.0
    %2740 = vmatprep.subr.mxu0 0.0
    %2741 = vmatpush1.msra.mxu0 0.0
    %2742 = vmatprep.subr.mxu0 0.0
    %2743 = vmatpush1.msra.mxu0 0.0
    %2744 = vmatprep.subr.mxu0 0.0
    %2745 = vmatpush1.msra.mxu0 0.0
    %2746 = vmatprep.mubr.f32.mxu0 0.0
    %2747 = vmatmul.mubr.f32.gmra.mrb[0].mxu0 0.0
    %v2748 = vpop.f32.mrb[0].mxu0
    %v2749 = vadd.f32 0.0, %v2748
    %v2750 = vpop.f32.mrb[0].mxu0
    %2751 = vdwg.mxu0
    %v2754 = vcombine.low %v2678, %v2680
    %v2756 = vunpack.c.l.s4 1983009808
    %v2757 = vunpack.c.0.s8 %v2756
    %v2758 = vlaneseq
    %v2759 = vshrl.u32 %v2758, 7
    %v2760 = vsub.s32 %v2757, %v2759
    %v2761 = vrot.slane %v2754, %v2760
    %v2763 = vadd.f32 %v2562, %v2761
    %v2764 = vxor.u32 %v2763, 2147483648
    %v2765 = vmul.f32 %v2764, 1.442695
    %v2766 = vpow.pop %v2765
    %v2767 = vadd.f32 %v2766, 1.0
    %v2768 = vrcp.pop %v2767
    %v2769 = vmul.f32 1.0, %v2768
    %v2770 = vadd.f32 %v2749, %v2560
    %v2771 = vmul.f32 %v2769, %v2770
    %v2773 = vrot.slane %v2562, 4
    %v2775 = vadd.f32 %v2773, %v2771
    %v2776 = vtanh.pop %v2775
    %v2778 = vrot.slane %v2769, 2
    %v2780 = vsub.f32 1.0, %v2778
    %v2781 = vmul.f32 %v2780, %v2776
    %v2782 = vmul.f32 %v2778, 0.0
    %v2783 = vadd.f32 %v2781, %v2782
    %2784 = vst [vmem:[#allocation6] sm:$0x3] %v2783
    %v2785 = vld [vmem:[%s613] sm:$0x3f]
    %v2786 = vld [vmem:[#allocation3] sm:$0xff]
    %v2787 = vld [vmem:[#allocation3 + $0x8] sm:$0xff]
    %v2788 = vld [vmem:[#allocation3 + $0x10] sm:$0xff]
    %v2789 = vld [vmem:[#allocation3 + $0x18] sm:$0xff]
    %v2790 = vld [vmem:[#allocation3 + $0x20] sm:$0xff]
    %v2791 = vld [vmem:[#allocation3 + $0x28] sm:$0xff]
    %v2792 = vld [vmem:[#allocation3 + $0x30] sm:$0xff]
    %v2793 = vld [vmem:[#allocation3 + $0x38] sm:$0xff]
    %v2794 = vld [vmem:[#allocation3 + $0x40] sm:$0xff]
    %v2795 = vld [vmem:[#allocation3 + $0x48] sm:$0xff]
    %v2796 = vld [vmem:[#allocation3 + $0x50] sm:$0xff]
    %v2797 = vld [vmem:[#allocation3 + $0x58] sm:$0xff]
    %v2798 = vld [vmem:[#allocation3 + $0x60] sm:$0xff]
    %v2799 = vld [vmem:[#allocation3 + $0x68] sm:$0xff]
    %v2800 = vld [vmem:[#allocation3 + $0x70] sm:$0xff]
    %v2801 = vld [vmem:[#allocation3 + $0x78] sm:$0xff]
    %v2802 = vld [vmem:[#allocation3 + $0x80] sm:$0xff]
    %v2803 = vld [vmem:[#allocation3 + $0x88] sm:$0xff]
    %v2804 = vld [vmem:[#allocation3 + $0x90] sm:$0xff]
    %v2805 = vld [vmem:[#allocation3 + $0x98] sm:$0xff]
    %v2806 = vld [vmem:[#allocation3 + $0xa0] sm:$0xff]
    %v2807 = vld [vmem:[#allocation3 + $0xa8] sm:$0xff]
    %v2808 = vld [vmem:[#allocation3 + $0xb0] sm:$0xff]
    %v2809 = vld [vmem:[#allocation3 + $0xb8] sm:$0xff]
    %v2810 = vld [vmem:[#allocation3 + $0xc0] sm:$0xff]
    %v2811 = vld [vmem:[#allocation3 + $0xc8] sm:$0xff]
    %v2812 = vld [vmem:[#allocation3 + $0xd0] sm:$0xff]
    %v2813 = vld [vmem:[#allocation3 + $0xd8] sm:$0xff]
    %v2814 = vld [vmem:[#allocation3 + $0xe0] sm:$0xff]
    %v2815 = vld [vmem:[#allocation3 + $0xe8] sm:$0xff]
    %v2816 = vld [vmem:[#allocation3 + $0xf0] sm:$0xff]
    %v2817 = vld [vmem:[#allocation3 + $0xf8] sm:$0xff]
    %v2818 = vld [vmem:[#allocation3 + $0x100] sm:$0xff]
    %v2819 = vld [vmem:[#allocation3 + $0x108] sm:$0xff]
    %v2820 = vld [vmem:[#allocation3 + $0x110] sm:$0xff]
    %v2821 = vld [vmem:[#allocation3 + $0x118] sm:$0xff]
    %v2822 = vld [vmem:[#allocation3 + $0x120] sm:$0xff]
    %v2823 = vld [vmem:[#allocation3 + $0x128] sm:$0xff]
    %v2824 = vld [vmem:[#allocation3 + $0x130] sm:$0xff]
    %v2825 = vld [vmem:[#allocation3 + $0x138] sm:$0xff]
    %v2826 = vld [vmem:[#allocation3 + $0x140] sm:$0xff]
    %v2827 = vld [vmem:[#allocation3 + $0x148] sm:$0xff]
    %v2828 = vld [vmem:[#allocation3 + $0x150] sm:$0xff]
    %v2829 = vld [vmem:[#allocation3 + $0x158] sm:$0xff]
    %v2830 = vld [vmem:[#allocation3 + $0x160] sm:$0xff]
    %v2831 = vld [vmem:[#allocation3 + $0x168] sm:$0xff]
    %v2832 = vld [vmem:[#allocation3 + $0x170] sm:$0xff]
    %v2833 = vld [vmem:[#allocation3 + $0x178] sm:$0xff]
    %2834 = vmatprep.subr.mxu0 %v2787
    %2835 = vmatpush1.msra.mxu0 %v2786
    %2836 = vmatprep.subr.mxu0 %v2790
    %2837 = vmatpush1.msra.mxu0 %v2789
    %2838 = vmatprep.subr.mxu0 %v2793
    %2839 = vmatpush1.msra.mxu0 %v2792
    %2840 = vmatprep.subr.mxu0 %v2796
    %2841 = vmatpush1.msra.mxu0 %v2795
    %2842 = vmatprep.subr.mxu0 %v2799
    %2843 = vmatpush1.msra.mxu0 %v2798
    %2844 = vmatprep.subr.mxu0 %v2802
    %2845 = vmatpush1.msra.mxu0 %v2801
    %2846 = vmatprep.subr.mxu0 %v2805
    %2847 = vmatpush1.msra.mxu0 %v2804
    %2848 = vmatprep.subr.mxu0 %v2808
    %2849 = vmatpush1.msra.mxu0 %v2807
    %2850 = vmatprep.subr.mxu0 %v2811
    %2851 = vmatpush1.msra.mxu0 %v2810
    %2852 = vmatprep.subr.mxu0 %v2814
    %2853 = vmatpush1.msra.mxu0 %v2813
    %2854 = vmatprep.subr.mxu0 %v2817
    %2855 = vmatpush1.msra.mxu0 %v2816
    %2856 = vmatprep.subr.mxu0 %v2820
    %2857 = vmatpush1.msra.mxu0 %v2819
    %2858 = vmatprep.subr.mxu0 %v2823
    %2859 = vmatpush1.msra.mxu0 %v2822
    %2860 = vmatprep.subr.mxu0 %v2826
    %2861 = vmatpush1.msra.mxu0 %v2825
    %2862 = vmatprep.subr.mxu0 %v2829
    %2863 = vmatpush1.msra.mxu0 %v2828
    %2864 = vmatprep.subr.mxu0 %v2832
    %2865 = vmatpush1.msra.mxu0 %v2831
    %2866 = vmatprep.subr.mxu0 0.0
    %2867 = vmatpush1.msra.mxu0 0.0
    %2868 = vmatprep.subr.mxu0 0.0
    %2869 = vmatpush1.msra.mxu0 0.0
    %2870 = vmatprep.subr.mxu0 0.0
    %2871 = vmatpush1.msra.mxu0 0.0
    %2872 = vmatprep.subr.mxu0 0.0
    %2873 = vmatpush1.msra.mxu0 0.0
    %2874 = vmatprep.subr.mxu0 0.0
    %2875 = vmatpush1.msra.mxu0 0.0
    %2876 = vmatprep.subr.mxu0 0.0
    %2877 = vmatpush1.msra.mxu0 0.0
    %2878 = vmatprep.subr.mxu0 0.0
    %2879 = vmatpush1.msra.mxu0 0.0
    %2880 = vmatprep.subr.mxu0 0.0
    %2881 = vmatpush1.msra.mxu0 0.0
    %2882 = vmatprep.subr.mxu0 0.0
    %2883 = vmatpush1.msra.mxu0 0.0
    %2884 = vmatprep.subr.mxu0 0.0
    %2885 = vmatpush1.msra.mxu0 0.0
    %2886 = vmatprep.subr.mxu0 0.0
    %2887 = vmatpush1.msra.mxu0 0.0
    %2888 = vmatprep.subr.mxu0 0.0
    %2889 = vmatpush1.msra.mxu0 0.0
    %2890 = vmatprep.subr.mxu0 0.0
    %2891 = vmatpush1.msra.mxu0 0.0
    %2892 = vmatprep.subr.mxu0 0.0
    %2893 = vmatpush1.msra.mxu0 0.0
    %2894 = vmatprep.subr.mxu0 0.0
    %2895 = vmatpush1.msra.mxu0 0.0
    %2896 = vmatprep.subr.mxu0 0.0
    %2897 = vmatpush1.msra.mxu0 0.0
    %2898 = vmatprep.mubr.f32.mxu0 0.0
    %2899 = vmatmul.mubr.f32.gmra.mrb[0].mxu0 %v2783
    %v2900 = vpop.f32.mrb[0].mxu0
    %v2901 = vadd.f32 0.0, %v2900
    %v2902 = vpop.f32.mrb[0].mxu0
    %v2903 = vadd.f32 0.0, %v2902
    %2904 = vdwg.mxu0
    %2905 = vmatprep.subr.mxu0 0.0
    %2906 = vmatpush1.msra.mxu0 %v2788
    %2907 = vmatprep.subr.mxu0 0.0
    %2908 = vmatpush1.msra.mxu0 %v2791
    %2909 = vmatprep.subr.mxu0 0.0
    %2910 = vmatpush1.msra.mxu0 %v2794
    %2911 = vmatprep.subr.mxu0 0.0
    %2912 = vmatpush1.msra.mxu0 %v2797
    %2913 = vmatprep.subr.mxu0 0.0
    %2914 = vmatpush1.msra.mxu0 %v2800
    %2915 = vmatprep.subr.mxu0 0.0
    %2916 = vmatpush1.msra.mxu0 %v2803
    %2917 = vmatprep.subr.mxu0 0.0
    %2918 = vmatpush1.msra.mxu0 %v2806
    %2919 = vmatprep.subr.mxu0 0.0
    %2920 = vmatpush1.msra.mxu0 %v2809
    %2921 = vmatprep.subr.mxu0 0.0
    %2922 = vmatpush1.msra.mxu0 %v2812
    %2923 = vmatprep.subr.mxu0 0.0
    %2924 = vmatpush1.msra.mxu0 %v2815
    %2925 = vmatprep.subr.mxu0 0.0
    %2926 = vmatpush1.msra.mxu0 %v2818
    %2927 = vmatprep.subr.mxu0 0.0
    %2928 = vmatpush1.msra.mxu0 %v2821
    %2929 = vmatprep.subr.mxu0 0.0
    %2930 = vmatpush1.msra.mxu0 %v2824
    %2931 = vmatprep.subr.mxu0 0.0
    %2932 = vmatpush1.msra.mxu0 %v2827
    %2933 = vmatprep.subr.mxu0 0.0
    %2934 = vmatpush1.msra.mxu0 %v2830
    %2935 = vmatprep.subr.mxu0 0.0
    %2936 = vmatpush1.msra.mxu0 %v2833
    %2937 = vmatprep.subr.mxu0 0.0
    %2938 = vmatpush1.msra.mxu0 0.0
    %2939 = vmatprep.subr.mxu0 0.0
    %2940 = vmatpush1.msra.mxu0 0.0
    %2941 = vmatprep.subr.mxu0 0.0
    %2942 = vmatpush1.msra.mxu0 0.0
    %2943 = vmatprep.subr.mxu0 0.0
    %2944 = vmatpush1.msra.mxu0 0.0
    %2945 = vmatprep.subr.mxu0 0.0
    %2946 = vmatpush1.msra.mxu0 0.0
    %2947 = vmatprep.subr.mxu0 0.0
    %2948 = vmatpush1.msra.mxu0 0.0
    %2949 = vmatprep.subr.mxu0 0.0
    %2950 = vmatpush1.msra.mxu0 0.0
    %2951 = vmatprep.subr.mxu0 0.0
    %2952 = vmatpush1.msra.mxu0 0.0
    %2953 = vmatprep.subr.mxu0 0.0
    %2954 = vmatpush1.msra.mxu0 0.0
    %2955 = vmatprep.subr.mxu0 0.0
    %2956 = vmatpush1.msra.mxu0 0.0
    %2957 = vmatprep.subr.mxu0 0.0
    %2958 = vmatpush1.msra.mxu0 0.0
    %2959 = vmatprep.subr.mxu0 0.0
    %2960 = vmatpush1.msra.mxu0 0.0
    %2961 = vmatprep.subr.mxu0 0.0
    %2962 = vmatpush1.msra.mxu0 0.0
    %2963 = vmatprep.subr.mxu0 0.0
    %2964 = vmatpush1.msra.mxu0 0.0
    %2965 = vmatprep.subr.mxu0 0.0
    %2966 = vmatpush1.msra.mxu0 0.0
    %2967 = vmatprep.subr.mxu0 0.0
    %2968 = vmatpush1.msra.mxu0 0.0
    %2969 = vmatprep.mubr.f32.mxu0 0.0
    %2970 = vmatmul.mubr.f32.gmra.mrb[0].mxu0 %v2783
    %v2971 = vpop.f32.mrb[0].mxu0
    %v2972 = vadd.f32 0.0, %v2971
    %v2973 = vpop.f32.mrb[0].mxu0
    %2974 = vdwg.mxu0
    %v2977 = vcombine.low %v2901, %v2903
    %v2979 = vunpack.c.l.s4 1983009808
    %v2980 = vunpack.c.0.s8 %v2979
    %v2981 = vlaneseq
    %v2982 = vshrl.u32 %v2981, 7
    %v2983 = vsub.s32 %v2980, %v2982
    %v2984 = vrot.slane %v2977, %v2983
    %v2986 = vadd.f32 %v2785, %v2984
    %v2987 = vxor.u32 %v2986, 2147483648
    %v2988 = vmul.f32 %v2987, 1.442695
    %v2989 = vpow.pop %v2988
    %v2990 = vadd.f32 %v2989, 1.0
    %v2991 = vrcp.pop %v2990
    %v2992 = vmul.f32 1.0, %v2991
    %v2993 = vadd.f32 %v2972, %v2560
    %v2994 = vmul.f32 %v2992, %v2993
    %v2996 = vrot.slane %v2785, 4
    %v2998 = vadd.f32 %v2996, %v2994
    %v2999 = vtanh.pop %v2998
    %v3001 = vrot.slane %v2992, 2
    %v3003 = vsub.f32 1.0, %v3001
    %v3004 = vmul.f32 %v3003, %v2999
    %v3005 = vmul.f32 %v3001, %v2783
    %v3006 = vadd.f32 %v3004, %v3005
    %3007 = vst [vmem:[%s836] sm:$0x3] %v3006
    %v3008 = vld [vmem:[%s838] sm:$0x3f]
    %v3009 = vld [vmem:[#allocation3] sm:$0xff]
    %v3010 = vld [vmem:[#allocation3 + $0x8] sm:$0xff]
    %v3011 = vld [vmem:[#allocation3 + $0x10] sm:$0xff]
    %v3012 = vld [vmem:[#allocation3 + $0x18] sm:$0xff]
    %v3013 = vld [vmem:[#allocation3 + $0x20] sm:$0xff]
    %v3014 = vld [vmem:[#allocation3 + $0x28] sm:$0xff]
    %v3015 = vld [vmem:[#allocation3 + $0x30] sm:$0xff]
    %v3016 = vld [vmem:[#allocation3 + $0x38] sm:$0xff]
    %v3017 = vld [vmem:[#allocation3 + $0x40] sm:$0xff]
    %v3018 = vld [vmem:[#allocation3 + $0x48] sm:$0xff]
    %v3019 = vld [vmem:[#allocation3 + $0x50] sm:$0xff]
    %v3020 = vld [vmem:[#allocation3 + $0x58] sm:$0xff]
    %v3021 = vld [vmem:[#allocation3 + $0x60] sm:$0xff]
    %v3022 = vld [vmem:[#allocation3 + $0x68] sm:$0xff]
    %v3023 = vld [vmem:[#allocation3 + $0x70] sm:$0xff]
    %v3024 = vld [vmem:[#allocation3 + $0x78] sm:$0xff]
    %v3025 = vld [vmem:[#allocation3 + $0x80] sm:$0xff]
    %v3026 = vld [vmem:[#allocation3 + $0x88] sm:$0xff]
    %v3027 = vld [vmem:[#allocation3 + $0x90] sm:$0xff]
    %v3028 = vld [vmem:[#allocation3 + $0x98] sm:$0xff]
    %v3029 = vld [vmem:[#allocation3 + $0xa0] sm:$0xff]
    %v3030 = vld [vmem:[#allocation3 + $0xa8] sm:$0xff]
    %v3031 = vld [vmem:[#allocation3 + $0xb0] sm:$0xff]
    %v3032 = vld [vmem:[#allocation3 + $0xb8] sm:$0xff]
    %v3033 = vld [vmem:[#allocation3 + $0xc0] sm:$0xff]
    %v3034 = vld [vmem:[#allocation3 + $0xc8] sm:$0xff]
    %v3035 = vld [vmem:[#allocation3 + $0xd0] sm:$0xff]
    %v3036 = vld [vmem:[#allocation3 + $0xd8] sm:$0xff]
    %v3037 = vld [vmem:[#allocation3 + $0xe0] sm:$0xff]
    %v3038 = vld [vmem:[#allocation3 + $0xe8] sm:$0xff]
    %v3039 = vld [vmem:[#allocation3 + $0xf0] sm:$0xff]
    %v3040 = vld [vmem:[#allocation3 + $0xf8] sm:$0xff]
    %v3041 = vld [vmem:[#allocation3 + $0x100] sm:$0xff]
    %v3042 = vld [vmem:[#allocation3 + $0x108] sm:$0xff]
    %v3043 = vld [vmem:[#allocation3 + $0x110] sm:$0xff]
    %v3044 = vld [vmem:[#allocation3 + $0x118] sm:$0xff]
    %v3045 = vld [vmem:[#allocation3 + $0x120] sm:$0xff]
    %v3046 = vld [vmem:[#allocation3 + $0x128] sm:$0xff]
    %v3047 = vld [vmem:[#allocation3 + $0x130] sm:$0xff]
    %v3048 = vld [vmem:[#allocation3 + $0x138] sm:$0xff]
    %v3049 = vld [vmem:[#allocation3 + $0x140] sm:$0xff]
    %v3050 = vld [vmem:[#allocation3 + $0x148] sm:$0xff]
    %v3051 = vld [vmem:[#allocation3 + $0x150] sm:$0xff]
    %v3052 = vld [vmem:[#allocation3 + $0x158] sm:$0xff]
    %v3053 = vld [vmem:[#allocation3 + $0x160] sm:$0xff]
    %v3054 = vld [vmem:[#allocation3 + $0x168] sm:$0xff]
    %v3055 = vld [vmem:[#allocation3 + $0x170] sm:$0xff]
    %v3056 = vld [vmem:[#allocation3 + $0x178] sm:$0xff]
    %3057 = vmatprep.subr.mxu0 %v3010
    %3058 = vmatpush1.msra.mxu0 %v3009
    %3059 = vmatprep.subr.mxu0 %v3013
    %3060 = vmatpush1.msra.mxu0 %v3012
    %3061 = vmatprep.subr.mxu0 %v3016
    %3062 = vmatpush1.msra.mxu0 %v3015
    %3063 = vmatprep.subr.mxu0 %v3019
    %3064 = vmatpush1.msra.mxu0 %v3018
    %3065 = vmatprep.subr.mxu0 %v3022
    %3066 = vmatpush1.msra.mxu0 %v3021
    %3067 = vmatprep.subr.mxu0 %v3025
    %3068 = vmatpush1.msra.mxu0 %v3024
    %3069 = vmatprep.subr.mxu0 %v3028
    %3070 = vmatpush1.msra.mxu0 %v3027
    %3071 = vmatprep.subr.mxu0 %v3031
    %3072 = vmatpush1.msra.mxu0 %v3030
    %3073 = vmatprep.subr.mxu0 %v3034
    %3074 = vmatpush1.msra.mxu0 %v3033
    %3075 = vmatprep.subr.mxu0 %v3037
    %3076 = vmatpush1.msra.mxu0 %v3036
    %3077 = vmatprep.subr.mxu0 %v3040
    %3078 = vmatpush1.msra.mxu0 %v3039
    %3079 = vmatprep.subr.mxu0 %v3043
    %3080 = vmatpush1.msra.mxu0 %v3042
    %3081 = vmatprep.subr.mxu0 %v3046
    %3082 = vmatpush1.msra.mxu0 %v3045
    %3083 = vmatprep.subr.mxu0 %v3049
    %3084 = vmatpush1.msra.mxu0 %v3048
    %3085 = vmatprep.subr.mxu0 %v3052
    %3086 = vmatpush1.msra.mxu0 %v3051
    %3087 = vmatprep.subr.mxu0 %v3055
    %3088 = vmatpush1.msra.mxu0 %v3054
    %3089 = vmatprep.subr.mxu0 0.0
    %3090 = vmatpush1.msra.mxu0 0.0
    %3091 = vmatprep.subr.mxu0 0.0
    %3092 = vmatpush1.msra.mxu0 0.0
    %3093 = vmatprep.subr.mxu0 0.0
    %3094 = vmatpush1.msra.mxu0 0.0
    %3095 = vmatprep.subr.mxu0 0.0
    %3096 = vmatpush1.msra.mxu0 0.0
    %3097 = vmatprep.subr.mxu0 0.0
    %3098 = vmatpush1.msra.mxu0 0.0
    %3099 = vmatprep.subr.mxu0 0.0
    %3100 = vmatpush1.msra.mxu0 0.0
    %3101 = vmatprep.subr.mxu0 0.0
    %3102 = vmatpush1.msra.mxu0 0.0
    %3103 = vmatprep.subr.mxu0 0.0
    %3104 = vmatpush1.msra.mxu0 0.0
    %3105 = vmatprep.subr.mxu0 0.0
    %3106 = vmatpush1.msra.mxu0 0.0
    %3107 = vmatprep.subr.mxu0 0.0
    %3108 = vmatpush1.msra.mxu0 0.0
    %3109 = vmatprep.subr.mxu0 0.0
    %3110 = vmatpush1.msra.mxu0 0.0
    %3111 = vmatprep.subr.mxu0 0.0
    %3112 = vmatpush1.msra.mxu0 0.0
    %3113 = vmatprep.subr.mxu0 0.0
    %3114 = vmatpush1.msra.mxu0 0.0
    %3115 = vmatprep.subr.mxu0 0.0
    %3116 = vmatpush1.msra.mxu0 0.0
    %3117 = vmatprep.subr.mxu0 0.0
    %3118 = vmatpush1.msra.mxu0 0.0
    %3119 = vmatprep.subr.mxu0 0.0
    %3120 = vmatpush1.msra.mxu0 0.0
    %3121 = vmatprep.mubr.f32.mxu0 0.0
    %3122 = vmatmul.mubr.f32.gmra.mrb[0].mxu0 %v3006
    %v3123 = vpop.f32.mrb[0].mxu0
    %v3124 = vadd.f32 0.0, %v3123
    %v3125 = vpop.f32.mrb[0].mxu0
    %v3126 = vadd.f32 0.0, %v3125
    %3127 = vdwg.mxu0
    %3128 = vmatprep.subr.mxu0 0.0
    %3129 = vmatpush1.msra.mxu0 %v3011
    %3130 = vmatprep.subr.mxu0 0.0
    %3131 = vmatpush1.msra.mxu0 %v3014
    %3132 = vmatprep.subr.mxu0 0.0
    %3133 = vmatpush1.msra.mxu0 %v3017
    %3134 = vmatprep.subr.mxu0 0.0
    %3135 = vmatpush1.msra.mxu0 %v3020
    %3136 = vmatprep.subr.mxu0 0.0
    %3137 = vmatpush1.msra.mxu0 %v3023
    %3138 = vmatprep.subr.mxu0 0.0
    %3139 = vmatpush1.msra.mxu0 %v3026
    %3140 = vmatprep.subr.mxu0 0.0
    %3141 = vmatpush1.msra.mxu0 %v3029
    %3142 = vmatprep.subr.mxu0 0.0
    %3143 = vmatpush1.msra.mxu0 %v3032
    %3144 = vmatprep.subr.mxu0 0.0
    %3145 = vmatpush1.msra.mxu0 %v3035
    %3146 = vmatprep.subr.mxu0 0.0
    %3147 = vmatpush1.msra.mxu0 %v3038
    %3148 = vmatprep.subr.mxu0 0.0
    %3149 = vmatpush1.msra.mxu0 %v3041
    %3150 = vmatprep.subr.mxu0 0.0
    %3151 = vmatpush1.msra.mxu0 %v3044
    %3152 = vmatprep.subr.mxu0 0.0
    %3153 = vmatpush1.msra.mxu0 %v3047
    %3154 = vmatprep.subr.mxu0 0.0
    %3155 = vmatpush1.msra.mxu0 %v3050
    %3156 = vmatprep.subr.mxu0 0.0
    %3157 = vmatpush1.msra.mxu0 %v3053
    %3158 = vmatprep.subr.mxu0 0.0
    %3159 = vmatpush1.msra.mxu0 %v3056
    %3160 = vmatprep.subr.mxu0 0.0
    %3161 = vmatpush1.msra.mxu0 0.0
    %3162 = vmatprep.subr.mxu0 0.0
    %3163 = vmatpush1.msra.mxu0 0.0
    %3164 = vmatprep.subr.mxu0 0.0
    %3165 = vmatpush1.msra.mxu0 0.0
    %3166 = vmatprep.subr.mxu0 0.0
    %3167 = vmatpush1.msra.mxu0 0.0
    %3168 = vmatprep.subr.mxu0 0.0
    %3169 = vmatpush1.msra.mxu0 0.0
    %3170 = vmatprep.subr.mxu0 0.0
    %3171 = vmatpush1.msra.mxu0 0.0
    %3172 = vmatprep.subr.mxu0 0.0
    %3173 = vmatpush1.msra.mxu0 0.0
    %3174 = vmatprep.subr.mxu0 0.0
    %3175 = vmatpush1.msra.mxu0 0.0
    %3176 = vmatprep.subr.mxu0 0.0
    %3177 = vmatpush1.msra.mxu0 0.0
    %3178 = vmatprep.subr.mxu0 0.0
    %3179 = vmatpush1.msra.mxu0 0.0
    %3180 = vmatprep.subr.mxu0 0.0
    %3181 = vmatpush1.msra.mxu0 0.0
    %3182 = vmatprep.subr.mxu0 0.0
    %3183 = vmatpush1.msra.mxu0 0.0
    %3184 = vmatprep.subr.mxu0 0.0
    %3185 = vmatpush1.msra.mxu0 0.0
    %3186 = vmatprep.subr.mxu0 0.0
    %3187 = vmatpush1.msra.mxu0 0.0
    %3188 = vmatprep.subr.mxu0 0.0
    %3189 = vmatpush1.msra.mxu0 0.0
    %3190 = vmatprep.subr.mxu0 0.0
    %3191 = vmatpush1.msra.mxu0 0.0
    %3192 = vmatprep.mubr.f32.mxu0 0.0
    %3193 = vmatmul.mubr.f32.gmra.mrb[0].mxu0 %v3006
    %v3194 = vpop.f32.mrb[0].mxu0
    %v3195 = vadd.f32 0.0, %v3194
    %v3196 = vpop.f32.mrb[0].mxu0
    %3197 = vdwg.mxu0
    %v3200 = vcombine.low %v3124, %v3126
    %v3202 = vunpack.c.l.s4 1983009808
    %v3203 = vunpack.c.0.s8 %v3202
    %v3204 = vlaneseq
    %v3205 = vshrl.u32 %v3204, 7
    %v3206 = vsub.s32 %v3203, %v3205
    %v3207 = vrot.slane %v3200, %v3206
    %v3209 = vadd.f32 %v3008, %v3207
    %v3210 = vxor.u32 %v3209, 2147483648
    %v3211 = vmul.f32 %v3210, 1.442695
    %v3212 = vpow.pop %v3211
    %v3213 = vadd.f32 %v3212, 1.0
    %v3214 = vrcp.pop %v3213
    %v3215 = vmul.f32 1.0, %v3214
    %v3216 = vadd.f32 %v3195, %v2560
    %v3217 = vmul.f32 %v3215, %v3216
    %v3219 = vrot.slane %v3008, 4
    %v3221 = vadd.f32 %v3219, %v3217
    %v3222 = vtanh.pop %v3221
    %v3224 = vrot.slane %v3215, 2
    %v3226 = vsub.f32 1.0, %v3224
    %v3227 = vmul.f32 %v3226, %v3222
    %v3228 = vmul.f32 %v3224, %v3006
    %v3229 = vadd.f32 %v3227, %v3228
    %3230 = vst [vmem:[%s1061] sm:$0x3] %v3229
    %v3231 = vld [vmem:[%s1063] sm:$0x3f]
    %v3232 = vld [vmem:[#allocation3] sm:$0xff]
    %v3233 = vld [vmem:[#allocation3 + $0x8] sm:$0xff]
    %v3234 = vld [vmem:[#allocation3 + $0x10] sm:$0xff]
    %v3235 = vld [vmem:[#allocation3 + $0x18] sm:$0xff]
    %v3236 = vld [vmem:[#allocation3 + $0x20] sm:$0xff]
    %v3237 = vld [vmem:[#allocation3 + $0x28] sm:$0xff]
    %v3238 = vld [vmem:[#allocation3 + $0x30] sm:$0xff]
    %v3239 = vld [vmem:[#allocation3 + $0x38] sm:$0xff]
    %v3240 = vld [vmem:[#allocation3 + $0x40] sm:$0xff]
    %v3241 = vld [vmem:[#allocation3 + $0x48] sm:$0xff]
    %v3242 = vld [vmem:[#allocation3 + $0x50] sm:$0xff]
    %v3243 = vld [vmem:[#allocation3 + $0x58] sm:$0xff]
    %v3244 = vld [vmem:[#allocation3 + $0x60] sm:$0xff]
    %v3245 = vld [vmem:[#allocation3 + $0x68] sm:$0xff]
    %v3246 = vld [vmem:[#allocation3 + $0x70] sm:$0xff]
    %v3247 = vld [vmem:[#allocation3 + $0x78] sm:$0xff]
    %v3248 = vld [vmem:[#allocation3 + $0x80] sm:$0xff]
    %v3249 = vld [vmem:[#allocation3 + $0x88] sm:$0xff]
    %v3250 = vld [vmem:[#allocation3 + $0x90] sm:$0xff]
    %v3251 = vld [vmem:[#allocation3 + $0x98] sm:$0xff]
    %v3252 = vld [vmem:[#allocation3 + $0xa0] sm:$0xff]
    %v3253 = vld [vmem:[#allocation3 + $0xa8] sm:$0xff]
    %v3254 = vld [vmem:[#allocation3 + $0xb0] sm:$0xff]
    %v3255 = vld [vmem:[#allocation3 + $0xb8] sm:$0xff]
    %v3256 = vld [vmem:[#allocation3 + $0xc0] sm:$0xff]
    %v3257 = vld [vmem:[#allocation3 + $0xc8] sm:$0xff]
    %v3258 = vld [vmem:[#allocation3 + $0xd0] sm:$0xff]
    %v3259 = vld [vmem:[#allocation3 + $0xd8] sm:$0xff]
    %v3260 = vld [vmem:[#allocation3 + $0xe0] sm:$0xff]
    %v3261 = vld [vmem:[#allocation3 + $0xe8] sm:$0xff]
    %v3262 = vld [vmem:[#allocation3 + $0xf0] sm:$0xff]
    %v3263 = vld [vmem:[#allocation3 + $0xf8] sm:$0xff]
    %v3264 = vld [vmem:[#allocation3 + $0x100] sm:$0xff]
    %v3265 = vld [vmem:[#allocation3 + $0x108] sm:$0xff]
    %v3266 = vld [vmem:[#allocation3 + $0x110] sm:$0xff]
    %v3267 = vld [vmem:[#allocation3 + $0x118] sm:$0xff]
    %v3268 = vld [vmem:[#allocation3 + $0x120] sm:$0xff]
    %v3269 = vld [vmem:[#allocation3 + $0x128] sm:$0xff]
    %v3270 = vld [vmem:[#allocation3 + $0x130] sm:$0xff]
    %v3271 = vld [vmem:[#allocation3 + $0x138] sm:$0xff]
    %v3272 = vld [vmem:[#allocation3 + $0x140] sm:$0xff]
    %v3273 = vld [vmem:[#allocation3 + $0x148] sm:$0xff]
    %v3274 = vld [vmem:[#allocation3 + $0x150] sm:$0xff]
    %v3275 = vld [vmem:[#allocation3 + $0x158] sm:$0xff]
    %v3276 = vld [vmem:[#allocation3 + $0x160] sm:$0xff]
    %v3277 = vld [vmem:[#allocation3 + $0x168] sm:$0xff]
    %v3278 = vld [vmem:[#allocation3 + $0x170] sm:$0xff]
    %v3279 = vld [vmem:[#allocation3 + $0x178] sm:$0xff]
    %3280 = vmatprep.subr.mxu0 %v3233
    %3281 = vmatpush1.msra.mxu0 %v3232
    %3282 = vmatprep.subr.mxu0 %v3236
    %3283 = vmatpush1.msra.mxu0 %v3235
    %3284 = vmatprep.subr.mxu0 %v3239
    %3285 = vmatpush1.msra.mxu0 %v3238
    %3286 = vmatprep.subr.mxu0 %v3242
    %3287 = vmatpush1.msra.mxu0 %v3241
    %3288 = vmatprep.subr.mxu0 %v3245
    %3289 = vmatpush1.msra.mxu0 %v3244
    %3290 = vmatprep.subr.mxu0 %v3248
    %3291 = vmatpush1.msra.mxu0 %v3247
    %3292 = vmatprep.subr.mxu0 %v3251
    %3293 = vmatpush1.msra.mxu0 %v3250
    %3294 = vmatprep.subr.mxu0 %v3254
    %3295 = vmatpush1.msra.mxu0 %v3253
    %3296 = vmatprep.subr.mxu0 %v3257
    %3297 = vmatpush1.msra.mxu0 %v3256
    %3298 = vmatprep.subr.mxu0 %v3260
    %3299 = vmatpush1.msra.mxu0 %v3259
    %3300 = vmatprep.subr.mxu0 %v3263
    %3301 = vmatpush1.msra.mxu0 %v3262
    %3302 = vmatprep.subr.mxu0 %v3266
    %3303 = vmatpush1.msra.mxu0 %v3265
    %3304 = vmatprep.subr.mxu0 %v3269
    %3305 = vmatpush1.msra.mxu0 %v3268
    %3306 = vmatprep.subr.mxu0 %v3272
    %3307 = vmatpush1.msra.mxu0 %v3271
    %3308 = vmatprep.subr.mxu0 %v3275
    %3309 = vmatpush1.msra.mxu0 %v3274
    %3310 = vmatprep.subr.mxu0 %v3278
    %3311 = vmatpush1.msra.mxu0 %v3277
    %3312 = vmatprep.subr.mxu0 0.0
    %3313 = vmatpush1.msra.mxu0 0.0
    %3314 = vmatprep.subr.mxu0 0.0
    %3315 = vmatpush1.msra.mxu0 0.0
    %3316 = vmatprep.subr.mxu0 0.0
    %3317 = vmatpush1.msra.mxu0 0.0
    %3318 = vmatprep.subr.mxu0 0.0
    %3319 = vmatpush1.msra.mxu0 0.0
    %3320 = vmatprep.subr.mxu0 0.0
    %3321 = vmatpush1.msra.mxu0 0.0
    %3322 = vmatprep.subr.mxu0 0.0
    %3323 = vmatpush1.msra.mxu0 0.0
    %3324 = vmatprep.subr.mxu0 0.0
    %3325 = vmatpush1.msra.mxu0 0.0
    %3326 = vmatprep.subr.mxu0 0.0
    %3327 = vmatpush1.msra.mxu0 0.0
    %3328 = vmatprep.subr.mxu0 0.0
    %3329 = vmatpush1.msra.mxu0 0.0
    %3330 = vmatprep.subr.mxu0 0.0
    %3331 = vmatpush1.msra.mxu0 0.0
    %3332 = vmatprep.subr.mxu0 0.0
    %3333 = vmatpush1.msra.mxu0 0.0
    %3334 = vmatprep.subr.mxu0 0.0
    %3335 = vmatpush1.msra.mxu0 0.0
    %3336 = vmatprep.subr.mxu0 0.0
    %3337 = vmatpush1.msra.mxu0 0.0
    %3338 = vmatprep.subr.mxu0 0.0
    %3339 = vmatpush1.msra.mxu0 0.0
    %3340 = vmatprep.subr.mxu0 0.0
    %3341 = vmatpush1.msra.mxu0 0.0
    %3342 = vmatprep.subr.mxu0 0.0
    %3343 = vmatpush1.msra.mxu0 0.0
    %3344 = vmatprep.mubr.f32.mxu0 0.0
    %3345 = vmatmul.mubr.f32.gmra.mrb[0].mxu0 %v3229
    %v3346 = vpop.f32.mrb[0].mxu0
    %v3347 = vadd.f32 0.0, %v3346
    %v3348 = vpop.f32.mrb[0].mxu0
    %v3349 = vadd.f32 0.0, %v3348
    %3350 = vdwg.mxu0
    %3351 = vmatprep.subr.mxu0 0.0
    %3352 = vmatpush1.msra.mxu0 %v3234
    %3353 = vmatprep.subr.mxu0 0.0
    %3354 = vmatpush1.msra.mxu0 %v3237
    %3355 = vmatprep.subr.mxu0 0.0
    %3356 = vmatpush1.msra.mxu0 %v3240
    %3357 = vmatprep.subr.mxu0 0.0
    %3358 = vmatpush1.msra.mxu0 %v3243
    %3359 = vmatprep.subr.mxu0 0.0
    %3360 = vmatpush1.msra.mxu0 %v3246
    %3361 = vmatprep.subr.mxu0 0.0
    %3362 = vmatpush1.msra.mxu0 %v3249
    %3363 = vmatprep.subr.mxu0 0.0
    %3364 = vmatpush1.msra.mxu0 %v3252
    %3365 = vmatprep.subr.mxu0 0.0
    %3366 = vmatpush1.msra.mxu0 %v3255
    %3367 = vmatprep.subr.mxu0 0.0
    %3368 = vmatpush1.msra.mxu0 %v3258
    %3369 = vmatprep.subr.mxu0 0.0
    %3370 = vmatpush1.msra.mxu0 %v3261
    %3371 = vmatprep.subr.mxu0 0.0
    %3372 = vmatpush1.msra.mxu0 %v3264
    %3373 = vmatprep.subr.mxu0 0.0
    %3374 = vmatpush1.msra.mxu0 %v3267
    %3375 = vmatprep.subr.mxu0 0.0
    %3376 = vmatpush1.msra.mxu0 %v3270
    %3377 = vmatprep.subr.mxu0 0.0
    %3378 = vmatpush1.msra.mxu0 %v3273
    %3379 = vmatprep.subr.mxu0 0.0
    %3380 = vmatpush1.msra.mxu0 %v3276
    %3381 = vmatprep.subr.mxu0 0.0
    %3382 = vmatpush1.msra.mxu0 %v3279
    %3383 = vmatprep.subr.mxu0 0.0
    %3384 = vmatpush1.msra.mxu0 0.0
    %3385 = vmatprep.subr.mxu0 0.0
    %3386 = vmatpush1.msra.mxu0 0.0
    %3387 = vmatprep.subr.mxu0 0.0
    %3388 = vmatpush1.msra.mxu0 0.0
    %3389 = vmatprep.subr.mxu0 0.0
    %3390 = vmatpush1.msra.mxu0 0.0
    %3391 = vmatprep.subr.mxu0 0.0
    %3392 = vmatpush1.msra.mxu0 0.0
    %3393 = vmatprep.subr.mxu0 0.0
    %3394 = vmatpush1.msra.mxu0 0.0
    %3395 = vmatprep.subr.mxu0 0.0
    %3396 = vmatpush1.msra.mxu0 0.0
    %3397 = vmatprep.subr.mxu0 0.0
    %3398 = vmatpush1.msra.mxu0 0.0
    %3399 = vmatprep.subr.mxu0 0.0
    %3400 = vmatpush1.msra.mxu0 0.0
    %3401 = vmatprep.subr.mxu0 0.0
    %3402 = vmatpush1.msra.mxu0 0.0
    %3403 = vmatprep.subr.mxu0 0.0
    %3404 = vmatpush1.msra.mxu0 0.0
    %3405 = vmatprep.subr.mxu0 0.0
    %3406 = vmatpush1.msra.mxu0 0.0
    %3407 = vmatprep.subr.mxu0 0.0
    %3408 = vmatpush1.msra.mxu0 0.0
    %3409 = vmatprep.subr.mxu0 0.0
    %3410 = vmatpush1.msra.mxu0 0.0
    %3411 = vmatprep.subr.mxu0 0.0
    %3412 = vmatpush1.msra.mxu0 0.0
    %3413 = vmatprep.subr.mxu0 0.0
    %3414 = vmatpush1.msra.mxu0 0.0
    %3415 = vmatprep.mubr.f32.mxu0 0.0
    %3416 = vmatmul.mubr.f32.gmra.mrb[0].mxu0 %v3229
    %v3417 = vpop.f32.mrb[0].mxu0
    %v3418 = vadd.f32 0.0, %v3417
    %v3419 = vpop.f32.mrb[0].mxu0
    %3420 = vdwg.mxu0
    %v3423 = vcombine.low %v3347, %v3349
    %v3425 = vunpack.c.l.s4 1983009808
    %v3426 = vunpack.c.0.s8 %v3425
    %v3427 = vlaneseq
    %v3428 = vshrl.u32 %v3427, 7
    %v3429 = vsub.s32 %v3426, %v3428
    %v3430 = vrot.slane %v3423, %v3429
    %v3432 = vadd.f32 %v3231, %v3430
    %v3433 = vxor.u32 %v3432, 2147483648
    %v3434 = vmul.f32 %v3433, 1.442695
    %v3435 = vpow.pop %v3434
    %v3436 = vadd.f32 %v3435, 1.0
    %v3437 = vrcp.pop %v3436
    %v3438 = vmul.f32 1.0, %v3437
    %v3439 = vadd.f32 %v3418, %v2560
    %v3440 = vmul.f32 %v3438, %v3439
    %v3442 = vrot.slane %v3231, 4
    %v3444 = vadd.f32 %v3442, %v3440
    %v3445 = vtanh.pop %v3444
    %v3447 = vrot.slane %v3438, 2
    %v3449 = vsub.f32 1.0, %v3447
    %v3450 = vmul.f32 %v3449, %v3445
    %v3451 = vmul.f32 %v3447, %v3229
    %v3452 = vadd.f32 %v3450, %v3451
    %3453 = vst [vmem:[%s1286] sm:$0x3] %v3452
    %v3454 = vld [vmem:[%s1288] sm:$0x3f]
    %v3455 = vld [vmem:[#allocation3] sm:$0xff]
    %v3456 = vld [vmem:[#allocation3 + $0x8] sm:$0xff]
    %v3457 = vld [vmem:[#allocation3 + $0x10] sm:$0xff]
    %v3458 = vld [vmem:[#allocation3 + $0x18] sm:$0xff]
    %v3459 = vld [vmem:[#allocation3 + $0x20] sm:$0xff]
    %v3460 = vld [vmem:[#allocation3 + $0x28] sm:$0xff]
    %v3461 = vld [vmem:[#allocation3 + $0x30] sm:$0xff]
    %v3462 = vld [vmem:[#allocation3 + $0x38] sm:$0xff]
    %v3463 = vld [vmem:[#allocation3 + $0x40] sm:$0xff]
    %v3464 = vld [vmem:[#allocation3 + $0x48] sm:$0xff]
    %v3465 = vld [vmem:[#allocation3 + $0x50] sm:$0xff]
    %v3466 = vld [vmem:[#allocation3 + $0x58] sm:$0xff]
    %v3467 = vld [vmem:[#allocation3 + $0x60] sm:$0xff]
    %v3468 = vld [vmem:[#allocation3 + $0x68] sm:$0xff]
    %v3469 = vld [vmem:[#allocation3 + $0x70] sm:$0xff]
    %v3470 = vld [vmem:[#allocation3 + $0x78] sm:$0xff]
    %v3471 = vld [vmem:[#allocation3 + $0x80] sm:$0xff]
    %v3472 = vld [vmem:[#allocation3 + $0x88] sm:$0xff]
    %v3473 = vld [vmem:[#allocation3 + $0x90] sm:$0xff]
    %v3474 = vld [vmem:[#allocation3 + $0x98] sm:$0xff]
    %v3475 = vld [vmem:[#allocation3 + $0xa0] sm:$0xff]
    %v3476 = vld [vmem:[#allocation3 + $0xa8] sm:$0xff]
    %v3477 = vld [vmem:[#allocation3 + $0xb0] sm:$0xff]
    %v3478 = vld [vmem:[#allocation3 + $0xb8] sm:$0xff]
    %v3479 = vld [vmem:[#allocation3 + $0xc0] sm:$0xff]
    %v3480 = vld [vmem:[#allocation3 + $0xc8] sm:$0xff]
    %v3481 = vld [vmem:[#allocation3 + $0xd0] sm:$0xff]
    %v3482 = vld [vmem:[#allocation3 + $0xd8] sm:$0xff]
    %v3483 = vld [vmem:[#allocation3 + $0xe0] sm:$0xff]
    %v3484 = vld [vmem:[#allocation3 + $0xe8] sm:$0xff]
    %v3485 = vld [vmem:[#allocation3 + $0xf0] sm:$0xff]
    %v3486 = vld [vmem:[#allocation3 + $0xf8] sm:$0xff]
    %v3487 = vld [vmem:[#allocation3 + $0x100] sm:$0xff]
    %v3488 = vld [vmem:[#allocation3 + $0x108] sm:$0xff]
    %v3489 = vld [vmem:[#allocation3 + $0x110] sm:$0xff]
    %v3490 = vld [vmem:[#allocation3 + $0x118] sm:$0xff]
    %v3491 = vld [vmem:[#allocation3 + $0x120] sm:$0xff]
    %v3492 = vld [vmem:[#allocation3 + $0x128] sm:$0xff]
    %v3493 = vld [vmem:[#allocation3 + $0x130] sm:$0xff]
    %v3494 = vld [vmem:[#allocation3 + $0x138] sm:$0xff]
    %v3495 = vld [vmem:[#allocation3 + $0x140] sm:$0xff]
    %v3496 = vld [vmem:[#allocation3 + $0x148] sm:$0xff]
    %v3497 = vld [vmem:[#allocation3 + $0x150] sm:$0xff]
    %v3498 = vld [vmem:[#allocation3 + $0x158] sm:$0xff]
    %v3499 = vld [vmem:[#allocation3 + $0x160] sm:$0xff]
    %v3500 = vld [vmem:[#allocation3 + $0x168] sm:$0xff]
    %v3501 = vld [vmem:[#allocation3 + $0x170] sm:$0xff]
    %v3502 = vld [vmem:[#allocation3 + $0x178] sm:$0xff]
    %3503 = vmatprep.subr.mxu0 %v3456
    %3504 = vmatpush1.msra.mxu0 %v3455
    %3505 = vmatprep.subr.mxu0 %v3459
    %3506 = vmatpush1.msra.mxu0 %v3458
    %3507 = vmatprep.subr.mxu0 %v3462
    %3508 = vmatpush1.msra.mxu0 %v3461
    %3509 = vmatprep.subr.mxu0 %v3465
    %3510 = vmatpush1.msra.mxu0 %v3464
    %3511 = vmatprep.subr.mxu0 %v3468
    %3512 = vmatpush1.msra.mxu0 %v3467
    %3513 = vmatprep.subr.mxu0 %v3471
    %3514 = vmatpush1.msra.mxu0 %v3470
    %3515 = vmatprep.subr.mxu0 %v3474
    %3516 = vmatpush1.msra.mxu0 %v3473
    %3517 = vmatprep.subr.mxu0 %v3477
    %3518 = vmatpush1.msra.mxu0 %v3476
    %3519 = vmatprep.subr.mxu0 %v3480
    %3520 = vmatpush1.msra.mxu0 %v3479
    %3521 = vmatprep.subr.mxu0 %v3483
    %3522 = vmatpush1.msra.mxu0 %v3482
    %3523 = vmatprep.subr.mxu0 %v3486
    %3524 = vmatpush1.msra.mxu0 %v3485
    %3525 = vmatprep.subr.mxu0 %v3489
    %3526 = vmatpush1.msra.mxu0 %v3488
    %3527 = vmatprep.subr.mxu0 %v3492
    %3528 = vmatpush1.msra.mxu0 %v3491
    %3529 = vmatprep.subr.mxu0 %v3495
    %3530 = vmatpush1.msra.mxu0 %v3494
    %3531 = vmatprep.subr.mxu0 %v3498
    %3532 = vmatpush1.msra.mxu0 %v3497
    %3533 = vmatprep.subr.mxu0 %v3501
    %3534 = vmatpush1.msra.mxu0 %v3500
    %3535 = vmatprep.subr.mxu0 0.0
    %3536 = vmatpush1.msra.mxu0 0.0
    %3537 = vmatprep.subr.mxu0 0.0
    %3538 = vmatpush1.msra.mxu0 0.0
    %3539 = vmatprep.subr.mxu0 0.0
    %3540 = vmatpush1.msra.mxu0 0.0
    %3541 = vmatprep.subr.mxu0 0.0
    %3542 = vmatpush1.msra.mxu0 0.0
    %3543 = vmatprep.subr.mxu0 0.0
    %3544 = vmatpush1.msra.mxu0 0.0
    %3545 = vmatprep.subr.mxu0 0.0
    %3546 = vmatpush1.msra.mxu0 0.0
    %3547 = vmatprep.subr.mxu0 0.0
    %3548 = vmatpush1.msra.mxu0 0.0
    %3549 = vmatprep.subr.mxu0 0.0
    %3550 = vmatpush1.msra.mxu0 0.0
    %3551 = vmatprep.subr.mxu0 0.0
    %3552 = vmatpush1.msra.mxu0 0.0
    %3553 = vmatprep.subr.mxu0 0.0
    %3554 = vmatpush1.msra.mxu0 0.0
    %3555 = vmatprep.subr.mxu0 0.0
    %3556 = vmatpush1.msra.mxu0 0.0
    %3557 = vmatprep.subr.mxu0 0.0
    %3558 = vmatpush1.msra.mxu0 0.0
    %3559 = vmatprep.subr.mxu0 0.0
    %3560 = vmatpush1.msra.mxu0 0.0
    %3561 = vmatprep.subr.mxu0 0.0
    %3562 = vmatpush1.msra.mxu0 0.0
    %3563 = vmatprep.subr.mxu0 0.0
    %3564 = vmatpush1.msra.mxu0 0.0
    %3565 = vmatprep.subr.mxu0 0.0
    %3566 = vmatpush1.msra.mxu0 0.0
    %3567 = vmatprep.mubr.f32.mxu0 0.0
    %3568 = vmatmul.mubr.f32.gmra.mrb[0].mxu0 %v3452
    %v3569 = vpop.f32.mrb[0].mxu0
    %v3570 = vadd.f32 0.0, %v3569
    %v3571 = vpop.f32.mrb[0].mxu0
    %v3572 = vadd.f32 0.0, %v3571
    %3573 = vdwg.mxu0
    %3574 = vmatprep.subr.mxu0 0.0
    %3575 = vmatpush1.msra.mxu0 %v3457
    %3576 = vmatprep.subr.mxu0 0.0
    %3577 = vmatpush1.msra.mxu0 %v3460
    %3578 = vmatprep.subr.mxu0 0.0
    %3579 = vmatpush1.msra.mxu0 %v3463
    %3580 = vmatprep.subr.mxu0 0.0
    %3581 = vmatpush1.msra.mxu0 %v3466
    %3582 = vmatprep.subr.mxu0 0.0
    %3583 = vmatpush1.msra.mxu0 %v3469
    %3584 = vmatprep.subr.mxu0 0.0
    %3585 = vmatpush1.msra.mxu0 %v3472
    %3586 = vmatprep.subr.mxu0 0.0
    %3587 = vmatpush1.msra.mxu0 %v3475
    %3588 = vmatprep.subr.mxu0 0.0
    %3589 = vmatpush1.msra.mxu0 %v3478
    %3590 = vmatprep.subr.mxu0 0.0
    %3591 = vmatpush1.msra.mxu0 %v3481
    %3592 = vmatprep.subr.mxu0 0.0
    %3593 = vmatpush1.msra.mxu0 %v3484
    %3594 = vmatprep.subr.mxu0 0.0
    %3595 = vmatpush1.msra.mxu0 %v3487
    %3596 = vmatprep.subr.mxu0 0.0
    %3597 = vmatpush1.msra.mxu0 %v3490
    %3598 = vmatprep.subr.mxu0 0.0
    %3599 = vmatpush1.msra.mxu0 %v3493
    %3600 = vmatprep.subr.mxu0 0.0
    %3601 = vmatpush1.msra.mxu0 %v3496
    %3602 = vmatprep.subr.mxu0 0.0
    %3603 = vmatpush1.msra.mxu0 %v3499
    %3604 = vmatprep.subr.mxu0 0.0
    %3605 = vmatpush1.msra.mxu0 %v3502
    %3606 = vmatprep.subr.mxu0 0.0
    %3607 = vmatpush1.msra.mxu0 0.0
    %3608 = vmatprep.subr.mxu0 0.0
    %3609 = vmatpush1.msra.mxu0 0.0
    %3610 = vmatprep.subr.mxu0 0.0
    %3611 = vmatpush1.msra.mxu0 0.0
    %3612 = vmatprep.subr.mxu0 0.0
    %3613 = vmatpush1.msra.mxu0 0.0
    %3614 = vmatprep.subr.mxu0 0.0
    %3615 = vmatpush1.msra.mxu0 0.0
    %3616 = vmatprep.subr.mxu0 0.0
    %3617 = vmatpush1.msra.mxu0 0.0
    %3618 = vmatprep.subr.mxu0 0.0
    %3619 = vmatpush1.msra.mxu0 0.0
    %3620 = vmatprep.subr.mxu0 0.0
    %3621 = vmatpush1.msra.mxu0 0.0
    %3622 = vmatprep.subr.mxu0 0.0
    %3623 = vmatpush1.msra.mxu0 0.0
    %3624 = vmatprep.subr.mxu0 0.0
    %3625 = vmatpush1.msra.mxu0 0.0
    %3626 = vmatprep.subr.mxu0 0.0
    %3627 = vmatpush1.msra.mxu0 0.0
    %3628 = vmatprep.subr.mxu0 0.0
    %3629 = vmatpush1.msra.mxu0 0.0
    %3630 = vmatprep.subr.mxu0 0.0
    %3631 = vmatpush1.msra.mxu0 0.0
    %3632 = vmatprep.subr.mxu0 0.0
    %3633 = vmatpush1.msra.mxu0 0.0
    %3634 = vmatprep.subr.mxu0 0.0
    %3635 = vmatpush1.msra.mxu0 0.0
    %3636 = vmatprep.subr.mxu0 0.0
    %3637 = vmatpush1.msra.mxu0 0.0
    %3638 = vmatprep.mubr.f32.mxu0 0.0
    %3639 = vmatmul.mubr.f32.gmra.mrb[0].mxu0 %v3452
    %v3640 = vpop.f32.mrb[0].mxu0
    %v3641 = vadd.f32 0.0, %v3640
    %v3642 = vpop.f32.mrb[0].mxu0
    %3643 = vdwg.mxu0
    %v3646 = vcombine.low %v3570, %v3572
    %v3648 = vunpack.c.l.s4 1983009808
    %v3649 = vunpack.c.0.s8 %v3648
    %v3650 = vlaneseq
    %v3651 = vshrl.u32 %v3650, 7
    %v3652 = vsub.s32 %v3649, %v3651
    %v3653 = vrot.slane %v3646, %v3652
    %v3655 = vadd.f32 %v3454, %v3653
    %v3656 = vxor.u32 %v3655, 2147483648
    %v3657 = vmul.f32 %v3656, 1.442695
    %v3658 = vpow.pop %v3657
    %v3659 = vadd.f32 %v3658, 1.0
    %v3660 = vrcp.pop %v3659
    %v3661 = vmul.f32 1.0, %v3660
    %v3662 = vadd.f32 %v3641, %v2560
    %v3663 = vmul.f32 %v3661, %v3662
    %v3665 = vrot.slane %v3454, 4
    %v3667 = vadd.f32 %v3665, %v3663
    %v3668 = vtanh.pop %v3667
    %v3670 = vrot.slane %v3661, 2
    %v3672 = vsub.f32 1.0, %v3670
    %v3673 = vmul.f32 %v3672, %v3668
    %v3674 = vmul.f32 %v3670, %v3452
    %v3675 = vadd.f32 %v3673, %v3674
    %3676 = vst [vmem:[%s1511] sm:$0x3] %v3675
    %v3677 = vld [vmem:[%s1513] sm:$0x3f]
    %v3678 = vld [vmem:[#allocation3] sm:$0xff]
    %v3679 = vld [vmem:[#allocation3 + $0x8] sm:$0xff]
    %v3680 = vld [vmem:[#allocation3 + $0x10] sm:$0xff]
    %v3681 = vld [vmem:[#allocation3 + $0x18] sm:$0xff]
    %v3682 = vld [vmem:[#allocation3 + $0x20] sm:$0xff]
    %v3683 = vld [vmem:[#allocation3 + $0x28] sm:$0xff]
    %v3684 = vld [vmem:[#allocation3 + $0x30] sm:$0xff]
    %v3685 = vld [vmem:[#allocation3 + $0x38] sm:$0xff]
    %v3686 = vld [vmem:[#allocation3 + $0x40] sm:$0xff]
    %v3687 = vld [vmem:[#allocation3 + $0x48] sm:$0xff]
    %v3688 = vld [vmem:[#allocation3 + $0x50] sm:$0xff]
    %v3689 = vld [vmem:[#allocation3 + $0x58] sm:$0xff]
    %v3690 = vld [vmem:[#allocation3 + $0x60] sm:$0xff]
    %v3691 = vld [vmem:[#allocation3 + $0x68] sm:$0xff]
    %v3692 = vld [vmem:[#allocation3 + $0x70] sm:$0xff]
    %v3693 = vld [vmem:[#allocation3 + $0x78] sm:$0xff]
    %v3694 = vld [vmem:[#allocation3 + $0x80] sm:$0xff]
    %v3695 = vld [vmem:[#allocation3 + $0x88] sm:$0xff]
    %v3696 = vld [vmem:[#allocation3 + $0x90] sm:$0xff]
    %v3697 = vld [vmem:[#allocation3 + $0x98] sm:$0xff]
    %v3698 = vld [vmem:[#allocation3 + $0xa0] sm:$0xff]
    %v3699 = vld [vmem:[#allocation3 + $0xa8] sm:$0xff]
    %v3700 = vld [vmem:[#allocation3 + $0xb0] sm:$0xff]
    %v3701 = vld [vmem:[#allocation3 + $0xb8] sm:$0xff]
    %v3702 = vld [vmem:[#allocation3 + $0xc0] sm:$0xff]
    %v3703 = vld [vmem:[#allocation3 + $0xc8] sm:$0xff]
    %v3704 = vld [vmem:[#allocation3 + $0xd0] sm:$0xff]
    %v3705 = vld [vmem:[#allocation3 + $0xd8] sm:$0xff]
    %v3706 = vld [vmem:[#allocation3 + $0xe0] sm:$0xff]
    %v3707 = vld [vmem:[#allocation3 + $0xe8] sm:$0xff]
    %v3708 = vld [vmem:[#allocation3 + $0xf0] sm:$0xff]
    %v3709 = vld [vmem:[#allocation3 + $0xf8] sm:$0xff]
    %v3710 = vld [vmem:[#allocation3 + $0x100] sm:$0xff]
    %v3711 = vld [vmem:[#allocation3 + $0x108] sm:$0xff]
    %v3712 = vld [vmem:[#allocation3 + $0x110] sm:$0xff]
    %v3713 = vld [vmem:[#allocation3 + $0x118] sm:$0xff]
    %v3714 = vld [vmem:[#allocation3 + $0x120] sm:$0xff]
    %v3715 = vld [vmem:[#allocation3 + $0x128] sm:$0xff]
    %v3716 = vld [vmem:[#allocation3 + $0x130] sm:$0xff]
    %v3717 = vld [vmem:[#allocation3 + $0x138] sm:$0xff]
    %v3718 = vld [vmem:[#allocation3 + $0x140] sm:$0xff]
    %v3719 = vld [vmem:[#allocation3 + $0x148] sm:$0xff]
    %v3720 = vld [vmem:[#allocation3 + $0x150] sm:$0xff]
    %v3721 = vld [vmem:[#allocation3 + $0x158] sm:$0xff]
    %v3722 = vld [vmem:[#allocation3 + $0x160] sm:$0xff]
    %v3723 = vld [vmem:[#allocation3 + $0x168] sm:$0xff]
    %v3724 = vld [vmem:[#allocation3 + $0x170] sm:$0xff]
    %v3725 = vld [vmem:[#allocation3 + $0x178] sm:$0xff]
    %3726 = vmatprep.subr.mxu0 %v3679
    %3727 = vmatpush1.msra.mxu0 %v3678
    %3728 = vmatprep.subr.mxu0 %v3682
    %3729 = vmatpush1.msra.mxu0 %v3681
    %3730 = vmatprep.subr.mxu0 %v3685
    %3731 = vmatpush1.msra.mxu0 %v3684
    %3732 = vmatprep.subr.mxu0 %v3688
    %3733 = vmatpush1.msra.mxu0 %v3687
    %3734 = vmatprep.subr.mxu0 %v3691
    %3735 = vmatpush1.msra.mxu0 %v3690
    %3736 = vmatprep.subr.mxu0 %v3694
    %3737 = vmatpush1.msra.mxu0 %v3693
    %3738 = vmatprep.subr.mxu0 %v3697
    %3739 = vmatpush1.msra.mxu0 %v3696
    %3740 = vmatprep.subr.mxu0 %v3700
    %3741 = vmatpush1.msra.mxu0 %v3699
    %3742 = vmatprep.subr.mxu0 %v3703
    %3743 = vmatpush1.msra.mxu0 %v3702
    %3744 = vmatprep.subr.mxu0 %v3706
    %3745 = vmatpush1.msra.mxu0 %v3705
    %3746 = vmatprep.subr.mxu0 %v3709
    %3747 = vmatpush1.msra.mxu0 %v3708
    %3748 = vmatprep.subr.mxu0 %v3712
    %3749 = vmatpush1.msra.mxu0 %v3711
    %3750 = vmatprep.subr.mxu0 %v3715
    %3751 = vmatpush1.msra.mxu0 %v3714
    %3752 = vmatprep.subr.mxu0 %v3718
    %3753 = vmatpush1.msra.mxu0 %v3717
    %3754 = vmatprep.subr.mxu0 %v3721
    %3755 = vmatpush1.msra.mxu0 %v3720
    %3756 = vmatprep.subr.mxu0 %v3724
    %3757 = vmatpush1.msra.mxu0 %v3723
    %3758 = vmatprep.subr.mxu0 0.0
    %3759 = vmatpush1.msra.mxu0 0.0
    %3760 = vmatprep.subr.mxu0 0.0
    %3761 = vmatpush1.msra.mxu0 0.0
    %3762 = vmatprep.subr.mxu0 0.0
    %3763 = vmatpush1.msra.mxu0 0.0
    %3764 = vmatprep.subr.mxu0 0.0
    %3765 = vmatpush1.msra.mxu0 0.0
    %3766 = vmatprep.subr.mxu0 0.0
    %3767 = vmatpush1.msra.mxu0 0.0
    %3768 = vmatprep.subr.mxu0 0.0
    %3769 = vmatpush1.msra.mxu0 0.0
    %3770 = vmatprep.subr.mxu0 0.0
    %3771 = vmatpush1.msra.mxu0 0.0
    %3772 = vmatprep.subr.mxu0 0.0
    %3773 = vmatpush1.msra.mxu0 0.0
    %3774 = vmatprep.subr.mxu0 0.0
    %3775 = vmatpush1.msra.mxu0 0.0
    %3776 = vmatprep.subr.mxu0 0.0
    %3777 = vmatpush1.msra.mxu0 0.0
    %3778 = vmatprep.subr.mxu0 0.0
    %3779 = vmatpush1.msra.mxu0 0.0
    %3780 = vmatprep.subr.mxu0 0.0
    %3781 = vmatpush1.msra.mxu0 0.0
    %3782 = vmatprep.subr.mxu0 0.0
    %3783 = vmatpush1.msra.mxu0 0.0
    %3784 = vmatprep.subr.mxu0 0.0
    %3785 = vmatpush1.msra.mxu0 0.0
    %3786 = vmatprep.subr.mxu0 0.0
    %3787 = vmatpush1.msra.mxu0 0.0
    %3788 = vmatprep.subr.mxu0 0.0
    %3789 = vmatpush1.msra.mxu0 0.0
    %3790 = vmatprep.mubr.f32.mxu0 0.0
    %3791 = vmatmul.mubr.f32.gmra.mrb[0].mxu0 %v3675
    %v3792 = vpop.f32.mrb[0].mxu0
    %v3793 = vadd.f32 0.0, %v3792
    %v3794 = vpop.f32.mrb[0].mxu0
    %v3795 = vadd.f32 0.0, %v3794
    %3796 = vdwg.mxu0
    %3797 = vmatprep.subr.mxu0 0.0
    %3798 = vmatpush1.msra.mxu0 %v3680
    %3799 = vmatprep.subr.mxu0 0.0
    %3800 = vmatpush1.msra.mxu0 %v3683
    %3801 = vmatprep.subr.mxu0 0.0
    %3802 = vmatpush1.msra.mxu0 %v3686
    %3803 = vmatprep.subr.mxu0 0.0
    %3804 = vmatpush1.msra.mxu0 %v3689
    %3805 = vmatprep.subr.mxu0 0.0
    %3806 = vmatpush1.msra.mxu0 %v3692
    %3807 = vmatprep.subr.mxu0 0.0
    %3808 = vmatpush1.msra.mxu0 %v3695
    %3809 = vmatprep.subr.mxu0 0.0
    %3810 = vmatpush1.msra.mxu0 %v3698
    %3811 = vmatprep.subr.mxu0 0.0
    %3812 = vmatpush1.msra.mxu0 %v3701
    %3813 = vmatprep.subr.mxu0 0.0
    %3814 = vmatpush1.msra.mxu0 %v3704
    %3815 = vmatprep.subr.mxu0 0.0
    %3816 = vmatpush1.msra.mxu0 %v3707
    %3817 = vmatprep.subr.mxu0 0.0
    %3818 = vmatpush1.msra.mxu0 %v3710
    %3819 = vmatprep.subr.mxu0 0.0
    %3820 = vmatpush1.msra.mxu0 %v3713
    %3821 = vmatprep.subr.mxu0 0.0
    %3822 = vmatpush1.msra.mxu0 %v3716
    %3823 = vmatprep.subr.mxu0 0.0
    %3824 = vmatpush1.msra.mxu0 %v3719
    %3825 = vmatprep.subr.mxu0 0.0
    %3826 = vmatpush1.msra.mxu0 %v3722
    %3827 = vmatprep.subr.mxu0 0.0
    %3828 = vmatpush1.msra.mxu0 %v3725
    %3829 = vmatprep.subr.mxu0 0.0
    %3830 = vmatpush1.msra.mxu0 0.0
    %3831 = vmatprep.subr.mxu0 0.0
    %3832 = vmatpush1.msra.mxu0 0.0
    %3833 = vmatprep.subr.mxu0 0.0
    %3834 = vmatpush1.msra.mxu0 0.0
    %3835 = vmatprep.subr.mxu0 0.0
    %3836 = vmatpush1.msra.mxu0 0.0
    %3837 = vmatprep.subr.mxu0 0.0
    %3838 = vmatpush1.msra.mxu0 0.0
    %3839 = vmatprep.subr.mxu0 0.0
    %3840 = vmatpush1.msra.mxu0 0.0
    %3841 = vmatprep.subr.mxu0 0.0
    %3842 = vmatpush1.msra.mxu0 0.0
    %3843 = vmatprep.subr.mxu0 0.0
    %3844 = vmatpush1.msra.mxu0 0.0
    %3845 = vmatprep.subr.mxu0 0.0
    %3846 = vmatpush1.msra.mxu0 0.0
    %3847 = vmatprep.subr.mxu0 0.0
    %3848 = vmatpush1.msra.mxu0 0.0
    %3849 = vmatprep.subr.mxu0 0.0
    %3850 = vmatpush1.msra.mxu0 0.0
    %3851 = vmatprep.subr.mxu0 0.0
    %3852 = vmatpush1.msra.mxu0 0.0
    %3853 = vmatprep.subr.mxu0 0.0
    %3854 = vmatpush1.msra.mxu0 0.0
    %3855 = vmatprep.subr.mxu0 0.0
    %3856 = vmatpush1.msra.mxu0 0.0
    %3857 = vmatprep.subr.mxu0 0.0
    %3858 = vmatpush1.msra.mxu0 0.0
    %3859 = vmatprep.subr.mxu0 0.0
    %3860 = vmatpush1.msra.mxu0 0.0
    %3861 = vmatprep.mubr.f32.mxu0 0.0
    %3862 = vmatmul.mubr.f32.gmra.mrb[0].mxu0 %v3675
    %v3863 = vpop.f32.mrb[0].mxu0
    %v3864 = vadd.f32 0.0, %v3863
    %v3865 = vpop.f32.mrb[0].mxu0
    %3866 = vdwg.mxu0
    %v3869 = vcombine.low %v3793, %v3795
    %v3871 = vunpack.c.l.s4 1983009808
    %v3872 = vunpack.c.0.s8 %v3871
    %v3873 = vlaneseq
    %v3874 = vshrl.u32 %v3873, 7
    %v3875 = vsub.s32 %v3872, %v3874
    %v3876 = vrot.slane %v3869, %v3875
    %v3878 = vadd.f32 %v3677, %v3876
    %v3879 = vxor.u32 %v3878, 2147483648
    %v3880 = vmul.f32 %v3879, 1.442695
    %v3881 = vpow.pop %v3880
    %v3882 = vadd.f32 %v3881, 1.0
    %v3883 = vrcp.pop %v3882
    %v3884 = vmul.f32 1.0, %v3883
    %v3885 = vadd.f32 %v3864, %v2560
    %v3886 = vmul.f32 %v3884, %v3885
    %v3888 = vrot.slane %v3677, 4
    %v3890 = vadd.f32 %v3888, %v3886
    %v3891 = vtanh.pop %v3890
    %v3893 = vrot.slane %v3884, 2
    %v3895 = vsub.f32 1.0, %v3893
    %v3896 = vmul.f32 %v3895, %v3891
    %v3897 = vmul.f32 %v3893, %v3675
    %v3898 = vadd.f32 %v3896, %v3897
    %3899 = vst [vmem:[%s1736] sm:$0x3] %v3898
    %v3900 = vld [vmem:[%s1738] sm:$0x3f]
    %v3901 = vld [vmem:[#allocation3] sm:$0xff]
    %v3902 = vld [vmem:[#allocation3 + $0x8] sm:$0xff]
    %v3903 = vld [vmem:[#allocation3 + $0x10] sm:$0xff]
    %v3904 = vld [vmem:[#allocation3 + $0x18] sm:$0xff]
    %v3905 = vld [vmem:[#allocation3 + $0x20] sm:$0xff]
    %v3906 = vld [vmem:[#allocation3 + $0x28] sm:$0xff]
    %v3907 = vld [vmem:[#allocation3 + $0x30] sm:$0xff]
    %v3908 = vld [vmem:[#allocation3 + $0x38] sm:$0xff]
    %v3909 = vld [vmem:[#allocation3 + $0x40] sm:$0xff]
    %v3910 = vld [vmem:[#allocation3 + $0x48] sm:$0xff]
    %v3911 = vld [vmem:[#allocation3 + $0x50] sm:$0xff]
    %v3912 = vld [vmem:[#allocation3 + $0x58] sm:$0xff]
    %v3913 = vld [vmem:[#allocation3 + $0x60] sm:$0xff]
    %v3914 = vld [vmem:[#allocation3 + $0x68] sm:$0xff]
    %v3915 = vld [vmem:[#allocation3 + $0x70] sm:$0xff]
    %v3916 = vld [vmem:[#allocation3 + $0x78] sm:$0xff]
    %v3917 = vld [vmem:[#allocation3 + $0x80] sm:$0xff]
    %v3918 = vld [vmem:[#allocation3 + $0x88] sm:$0xff]
    %v3919 = vld [vmem:[#allocation3 + $0x90] sm:$0xff]
    %v3920 = vld [vmem:[#allocation3 + $0x98] sm:$0xff]
    %v3921 = vld [vmem:[#allocation3 + $0xa0] sm:$0xff]
    %v3922 = vld [vmem:[#allocation3 + $0xa8] sm:$0xff]
    %v3923 = vld [vmem:[#allocation3 + $0xb0] sm:$0xff]
    %v3924 = vld [vmem:[#allocation3 + $0xb8] sm:$0xff]
    %v3925 = vld [vmem:[#allocation3 + $0xc0] sm:$0xff]
    %v3926 = vld [vmem:[#allocation3 + $0xc8] sm:$0xff]
    %v3927 = vld [vmem:[#allocation3 + $0xd0] sm:$0xff]
    %v3928 = vld [vmem:[#allocation3 + $0xd8] sm:$0xff]
    %v3929 = vld [vmem:[#allocation3 + $0xe0] sm:$0xff]
    %v3930 = vld [vmem:[#allocation3 + $0xe8] sm:$0xff]
    %v3931 = vld [vmem:[#allocation3 + $0xf0] sm:$0xff]
    %v3932 = vld [vmem:[#allocation3 + $0xf8] sm:$0xff]
    %v3933 = vld [vmem:[#allocation3 + $0x100] sm:$0xff]
    %v3934 = vld [vmem:[#allocation3 + $0x108] sm:$0xff]
    %v3935 = vld [vmem:[#allocation3 + $0x110] sm:$0xff]
    %v3936 = vld [vmem:[#allocation3 + $0x118] sm:$0xff]
    %v3937 = vld [vmem:[#allocation3 + $0x120] sm:$0xff]
    %v3938 = vld [vmem:[#allocation3 + $0x128] sm:$0xff]
    %v3939 = vld [vmem:[#allocation3 + $0x130] sm:$0xff]
    %v3940 = vld [vmem:[#allocation3 + $0x138] sm:$0xff]
    %v3941 = vld [vmem:[#allocation3 + $0x140] sm:$0xff]
    %v3942 = vld [vmem:[#allocation3 + $0x148] sm:$0xff]
    %v3943 = vld [vmem:[#allocation3 + $0x150] sm:$0xff]
    %v3944 = vld [vmem:[#allocation3 + $0x158] sm:$0xff]
    %v3945 = vld [vmem:[#allocation3 + $0x160] sm:$0xff]
    %v3946 = vld [vmem:[#allocation3 + $0x168] sm:$0xff]
    %v3947 = vld [vmem:[#allocation3 + $0x170] sm:$0xff]
    %v3948 = vld [vmem:[#allocation3 + $0x178] sm:$0xff]
    %3949 = vmatprep.subr.mxu0 %v3902
    %3950 = vmatpush1.msra.mxu0 %v3901
    %3951 = vmatprep.subr.mxu0 %v3905
    %3952 = vmatpush1.msra.mxu0 %v3904
    %3953 = vmatprep.subr.mxu0 %v3908
    %3954 = vmatpush1.msra.mxu0 %v3907
    %3955 = vmatprep.subr.mxu0 %v3911
    %3956 = vmatpush1.msra.mxu0 %v3910
    %3957 = vmatprep.subr.mxu0 %v3914
    %3958 = vmatpush1.msra.mxu0 %v3913
    %3959 = vmatprep.subr.mxu0 %v3917
    %3960 = vmatpush1.msra.mxu0 %v3916
    %3961 = vmatprep.subr.mxu0 %v3920
    %3962 = vmatpush1.msra.mxu0 %v3919
    %3963 = vmatprep.subr.mxu0 %v3923
    %3964 = vmatpush1.msra.mxu0 %v3922
    %3965 = vmatprep.subr.mxu0 %v3926
    %3966 = vmatpush1.msra.mxu0 %v3925
    %3967 = vmatprep.subr.mxu0 %v3929
    %3968 = vmatpush1.msra.mxu0 %v3928
    %3969 = vmatprep.subr.mxu0 %v3932
    %3970 = vmatpush1.msra.mxu0 %v3931
    %3971 = vmatprep.subr.mxu0 %v3935
    %3972 = vmatpush1.msra.mxu0 %v3934
    %3973 = vmatprep.subr.mxu0 %v3938
    %3974 = vmatpush1.msra.mxu0 %v3937
    %3975 = vmatprep.subr.mxu0 %v3941
    %3976 = vmatpush1.msra.mxu0 %v3940
    %3977 = vmatprep.subr.mxu0 %v3944
    %3978 = vmatpush1.msra.mxu0 %v3943
    %3979 = vmatprep.subr.mxu0 %v3947
    %3980 = vmatpush1.msra.mxu0 %v3946
    %3981 = vmatprep.subr.mxu0 0.0
    %3982 = vmatpush1.msra.mxu0 0.0
    %3983 = vmatprep.subr.mxu0 0.0
    %3984 = vmatpush1.msra.mxu0 0.0
    %3985 = vmatprep.subr.mxu0 0.0
    %3986 = vmatpush1.msra.mxu0 0.0
    %3987 = vmatprep.subr.mxu0 0.0
    %3988 = vmatpush1.msra.mxu0 0.0
    %3989 = vmatprep.subr.mxu0 0.0
    %3990 = vmatpush1.msra.mxu0 0.0
    %3991 = vmatprep.subr.mxu0 0.0
    %3992 = vmatpush1.msra.mxu0 0.0
    %3993 = vmatprep.subr.mxu0 0.0
    %3994 = vmatpush1.msra.mxu0 0.0
    %3995 = vmatprep.subr.mxu0 0.0
    %3996 = vmatpush1.msra.mxu0 0.0
    %3997 = vmatprep.subr.mxu0 0.0
    %3998 = vmatpush1.msra.mxu0 0.0
    %3999 = vmatprep.subr.mxu0 0.0
    %4000 = vmatpush1.msra.mxu0 0.0
    %4001 = vmatprep.subr.mxu0 0.0
    %4002 = vmatpush1.msra.mxu0 0.0
    %4003 = vmatprep.subr.mxu0 0.0
    %4004 = vmatpush1.msra.mxu0 0.0
    %4005 = vmatprep.subr.mxu0 0.0
    %4006 = vmatpush1.msra.mxu0 0.0
    %4007 = vmatprep.subr.mxu0 0.0
    %4008 = vmatpush1.msra.mxu0 0.0
    %4009 = vmatprep.subr.mxu0 0.0
    %4010 = vmatpush1.msra.mxu0 0.0
    %4011 = vmatprep.subr.mxu0 0.0
    %4012 = vmatpush1.msra.mxu0 0.0
    %4013 = vmatprep.mubr.f32.mxu0 0.0
    %4014 = vmatmul.mubr.f32.gmra.mrb[0].mxu0 %v3898
    %v4015 = vpop.f32.mrb[0].mxu0
    %v4016 = vadd.f32 0.0, %v4015
    %v4017 = vpop.f32.mrb[0].mxu0
    %v4018 = vadd.f32 0.0, %v4017
    %4019 = vdwg.mxu0
    %4020 = vmatprep.subr.mxu0 0.0
    %4021 = vmatpush1.msra.mxu0 %v3903
    %4022 = vmatprep.subr.mxu0 0.0
    %4023 = vmatpush1.msra.mxu0 %v3906
    %4024 = vmatprep.subr.mxu0 0.0
    %4025 = vmatpush1.msra.mxu0 %v3909
    %4026 = vmatprep.subr.mxu0 0.0
    %4027 = vmatpush1.msra.mxu0 %v3912
    %4028 = vmatprep.subr.mxu0 0.0
    %4029 = vmatpush1.msra.mxu0 %v3915
    %4030 = vmatprep.subr.mxu0 0.0
    %4031 = vmatpush1.msra.mxu0 %v3918
    %4032 = vmatprep.subr.mxu0 0.0
    %4033 = vmatpush1.msra.mxu0 %v3921
    %4034 = vmatprep.subr.mxu0 0.0
    %4035 = vmatpush1.msra.mxu0 %v3924
    %4036 = vmatprep.subr.mxu0 0.0
    %4037 = vmatpush1.msra.mxu0 %v3927
    %4038 = vmatprep.subr.mxu0 0.0
    %4039 = vmatpush1.msra.mxu0 %v3930
    %4040 = vmatprep.subr.mxu0 0.0
    %4041 = vmatpush1.msra.mxu0 %v3933
    %4042 = vmatprep.subr.mxu0 0.0
    %4043 = vmatpush1.msra.mxu0 %v3936
    %4044 = vmatprep.subr.mxu0 0.0
    %4045 = vmatpush1.msra.mxu0 %v3939
    %4046 = vmatprep.subr.mxu0 0.0
    %4047 = vmatpush1.msra.mxu0 %v3942
    %4048 = vmatprep.subr.mxu0 0.0
    %4049 = vmatpush1.msra.mxu0 %v3945
    %4050 = vmatprep.subr.mxu0 0.0
    %4051 = vmatpush1.msra.mxu0 %v3948
    %4052 = vmatprep.subr.mxu0 0.0
    %4053 = vmatpush1.msra.mxu0 0.0
    %4054 = vmatprep.subr.mxu0 0.0
    %4055 = vmatpush1.msra.mxu0 0.0
    %4056 = vmatprep.subr.mxu0 0.0
    %4057 = vmatpush1.msra.mxu0 0.0
    %4058 = vmatprep.subr.mxu0 0.0
    %4059 = vmatpush1.msra.mxu0 0.0
    %4060 = vmatprep.subr.mxu0 0.0
    %4061 = vmatpush1.msra.mxu0 0.0
    %4062 = vmatprep.subr.mxu0 0.0
    %4063 = vmatpush1.msra.mxu0 0.0
    %4064 = vmatprep.subr.mxu0 0.0
    %4065 = vmatpush1.msra.mxu0 0.0
    %4066 = vmatprep.subr.mxu0 0.0
    %4067 = vmatpush1.msra.mxu0 0.0
    %4068 = vmatprep.subr.mxu0 0.0
    %4069 = vmatpush1.msra.mxu0 0.0
    %4070 = vmatprep.subr.mxu0 0.0
    %4071 = vmatpush1.msra.mxu0 0.0
    %4072 = vmatprep.subr.mxu0 0.0
    %4073 = vmatpush1.msra.mxu0 0.0
    %4074 = vmatprep.subr.mxu0 0.0
    %4075 = vmatpush1.msra.mxu0 0.0
    %4076 = vmatprep.subr.mxu0 0.0
    %4077 = vmatpush1.msra.mxu0 0.0
    %4078 = vmatprep.subr.mxu0 0.0
    %4079 = vmatpush1.msra.mxu0 0.0
    %4080 = vmatprep.subr.mxu0 0.0
    %4081 = vmatpush1.msra.mxu0 0.0
    %4082 = vmatprep.subr.mxu0 0.0
    %4083 = vmatpush1.msra.mxu0 0.0
    %4084 = vmatprep.mubr.f32.mxu0 0.0
    %4085 = vmatmul.mubr.f32.gmra.mrb[0].mxu0 %v3898
    %v4086 = vpop.f32.mrb[0].mxu0
    %v4087 = vadd.f32 0.0, %v4086
    %v4088 = vpop.f32.mrb[0].mxu0
    %4089 = vdwg.mxu0
    %v4092 = vcombine.low %v4016, %v4018
    %v4094 = vunpack.c.l.s4 1983009808
    %v4095 = vunpack.c.0.s8 %v4094
    %v4096 = vlaneseq
    %v4097 = vshrl.u32 %v4096, 7
    %v4098 = vsub.s32 %v4095, %v4097
    %v4099 = vrot.slane %v4092, %v4098
    %v4101 = vadd.f32 %v3900, %v4099
    %v4102 = vxor.u32 %v4101, 2147483648
    %v4103 = vmul.f32 %v4102, 1.442695
    %v4104 = vpow.pop %v4103
    %v4105 = vadd.f32 %v4104, 1.0
    %v4106 = vrcp.pop %v4105
    %v4107 = vmul.f32 1.0, %v4106
    %v4108 = vadd.f32 %v4087, %v2560
    %v4109 = vmul.f32 %v4107, %v4108
    %v4111 = vrot.slane %v3900, 4
    %v4113 = vadd.f32 %v4111, %v4109
    %v4114 = vtanh.pop %v4113
    %v4116 = vrot.slane %v4107, 2
    %v4118 = vsub.f32 1.0, %v4116
    %v4119 = vmul.f32 %v4118, %v4114
    %v4120 = vmul.f32 %v4116, %v3898
    %v4121 = vadd.f32 %v4119, %v4120
    %4122 = vst [vmem:[%s1961] sm:$0x3] %v4121
    %v4123 = vld [vmem:[%s1963] sm:$0x3f]
    %v4124 = vld [vmem:[#allocation3] sm:$0xff]
    %v4125 = vld [vmem:[#allocation3 + $0x8] sm:$0xff]
    %v4126 = vld [vmem:[#allocation3 + $0x10] sm:$0xff]
    %v4127 = vld [vmem:[#allocation3 + $0x18] sm:$0xff]
    %v4128 = vld [vmem:[#allocation3 + $0x20] sm:$0xff]
    %v4129 = vld [vmem:[#allocation3 + $0x28] sm:$0xff]
    %v4130 = vld [vmem:[#allocation3 + $0x30] sm:$0xff]
    %v4131 = vld [vmem:[#allocation3 + $0x38] sm:$0xff]
    %v4132 = vld [vmem:[#allocation3 + $0x40] sm:$0xff]
    %v4133 = vld [vmem:[#allocation3 + $0x48] sm:$0xff]
    %v4134 = vld [vmem:[#allocation3 + $0x50] sm:$0xff]
    %v4135 = vld [vmem:[#allocation3 + $0x58] sm:$0xff]
    %v4136 = vld [vmem:[#allocation3 + $0x60] sm:$0xff]
    %v4137 = vld [vmem:[#allocation3 + $0x68] sm:$0xff]
    %v4138 = vld [vmem:[#allocation3 + $0x70] sm:$0xff]
    %v4139 = vld [vmem:[#allocation3 + $0x78] sm:$0xff]
    %v4140 = vld [vmem:[#allocation3 + $0x80] sm:$0xff]
    %v4141 = vld [vmem:[#allocation3 + $0x88] sm:$0xff]
    %v4142 = vld [vmem:[#allocation3 + $0x90] sm:$0xff]
    %v4143 = vld [vmem:[#allocation3 + $0x98] sm:$0xff]
    %v4144 = vld [vmem:[#allocation3 + $0xa0] sm:$0xff]
    %v4145 = vld [vmem:[#allocation3 + $0xa8] sm:$0xff]
    %v4146 = vld [vmem:[#allocation3 + $0xb0] sm:$0xff]
    %v4147 = vld [vmem:[#allocation3 + $0xb8] sm:$0xff]
    %v4148 = vld [vmem:[#allocation3 + $0xc0] sm:$0xff]
    %v4149 = vld [vmem:[#allocation3 + $0xc8] sm:$0xff]
    %v4150 = vld [vmem:[#allocation3 + $0xd0] sm:$0xff]
    %v4151 = vld [vmem:[#allocation3 + $0xd8] sm:$0xff]
    %v4152 = vld [vmem:[#allocation3 + $0xe0] sm:$0xff]
    %v4153 = vld [vmem:[#allocation3 + $0xe8] sm:$0xff]
    %v4154 = vld [vmem:[#allocation3 + $0xf0] sm:$0xff]
    %v4155 = vld [vmem:[#allocation3 + $0xf8] sm:$0xff]
    %v4156 = vld [vmem:[#allocation3 + $0x100] sm:$0xff]
    %v4157 = vld [vmem:[#allocation3 + $0x108] sm:$0xff]
    %v4158 = vld [vmem:[#allocation3 + $0x110] sm:$0xff]
    %v4159 = vld [vmem:[#allocation3 + $0x118] sm:$0xff]
    %v4160 = vld [vmem:[#allocation3 + $0x120] sm:$0xff]
    %v4161 = vld [vmem:[#allocation3 + $0x128] sm:$0xff]
    %v4162 = vld [vmem:[#allocation3 + $0x130] sm:$0xff]
    %v4163 = vld [vmem:[#allocation3 + $0x138] sm:$0xff]
    %v4164 = vld [vmem:[#allocation3 + $0x140] sm:$0xff]
    %v4165 = vld [vmem:[#allocation3 + $0x148] sm:$0xff]
    %v4166 = vld [vmem:[#allocation3 + $0x150] sm:$0xff]
    %v4167 = vld [vmem:[#allocation3 + $0x158] sm:$0xff]
    %v4168 = vld [vmem:[#allocation3 + $0x160] sm:$0xff]
    %v4169 = vld [vmem:[#allocation3 + $0x168] sm:$0xff]
    %v4170 = vld [vmem:[#allocation3 + $0x170] sm:$0xff]
    %v4171 = vld [vmem:[#allocation3 + $0x178] sm:$0xff]
    %4172 = vmatprep.subr.mxu0 %v4125
    %4173 = vmatpush1.msra.mxu0 %v4124
    %4174 = vmatprep.subr.mxu0 %v4128
    %4175 = vmatpush1.msra.mxu0 %v4127
    %4176 = vmatprep.subr.mxu0 %v4131
    %4177 = vmatpush1.msra.mxu0 %v4130
    %4178 = vmatprep.subr.mxu0 %v4134
    %4179 = vmatpush1.msra.mxu0 %v4133
    %4180 = vmatprep.subr.mxu0 %v4137
    %4181 = vmatpush1.msra.mxu0 %v4136
    %4182 = vmatprep.subr.mxu0 %v4140
    %4183 = vmatpush1.msra.mxu0 %v4139
    %4184 = vmatprep.subr.mxu0 %v4143
    %4185 = vmatpush1.msra.mxu0 %v4142
    %4186 = vmatprep.subr.mxu0 %v4146
    %4187 = vmatpush1.msra.mxu0 %v4145
    %4188 = vmatprep.subr.mxu0 %v4149
    %4189 = vmatpush1.msra.mxu0 %v4148
    %4190 = vmatprep.subr.mxu0 %v4152
    %4191 = vmatpush1.msra.mxu0 %v4151
    %4192 = vmatprep.subr.mxu0 %v4155
    %4193 = vmatpush1.msra.mxu0 %v4154
    %4194 = vmatprep.subr.mxu0 %v4158
    %4195 = vmatpush1.msra.mxu0 %v4157
    %4196 = vmatprep.subr.mxu0 %v4161
    %4197 = vmatpush1.msra.mxu0 %v4160
    %4198 = vmatprep.subr.mxu0 %v4164
    %4199 = vmatpush1.msra.mxu0 %v4163
    %4200 = vmatprep.subr.mxu0 %v4167
    %4201 = vmatpush1.msra.mxu0 %v4166
    %4202 = vmatprep.subr.mxu0 %v4170
    %4203 = vmatpush1.msra.mxu0 %v4169
    %4204 = vmatprep.subr.mxu0 0.0
    %4205 = vmatpush1.msra.mxu0 0.0
    %4206 = vmatprep.subr.mxu0 0.0
    %4207 = vmatpush1.msra.mxu0 0.0
    %4208 = vmatprep.subr.mxu0 0.0
    %4209 = vmatpush1.msra.mxu0 0.0
    %4210 = vmatprep.subr.mxu0 0.0
    %4211 = vmatpush1.msra.mxu0 0.0
    %4212 = vmatprep.subr.mxu0 0.0
    %4213 = vmatpush1.msra.mxu0 0.0
    %4214 = vmatprep.subr.mxu0 0.0
    %4215 = vmatpush1.msra.mxu0 0.0
    %4216 = vmatprep.subr.mxu0 0.0
    %4217 = vmatpush1.msra.mxu0 0.0
    %4218 = vmatprep.subr.mxu0 0.0
    %4219 = vmatpush1.msra.mxu0 0.0
    %4220 = vmatprep.subr.mxu0 0.0
    %4221 = vmatpush1.msra.mxu0 0.0
    %4222 = vmatprep.subr.mxu0 0.0
    %4223 = vmatpush1.msra.mxu0 0.0
    %4224 = vmatprep.subr.mxu0 0.0
    %4225 = vmatpush1.msra.mxu0 0.0
    %4226 = vmatprep.subr.mxu0 0.0
    %4227 = vmatpush1.msra.mxu0 0.0
    %4228 = vmatprep.subr.mxu0 0.0
    %4229 = vmatpush1.msra.mxu0 0.0
    %4230 = vmatprep.subr.mxu0 0.0
    %4231 = vmatpush1.msra.mxu0 0.0
    %4232 = vmatprep.subr.mxu0 0.0
    %4233 = vmatpush1.msra.mxu0 0.0
    %4234 = vmatprep.subr.mxu0 0.0
    %4235 = vmatpush1.msra.mxu0 0.0
    %4236 = vmatprep.mubr.f32.mxu0 0.0
    %4237 = vmatmul.mubr.f32.gmra.mrb[0].mxu0 %v4121
    %v4238 = vpop.f32.mrb[0].mxu0
    %v4239 = vadd.f32 0.0, %v4238
    %v4240 = vpop.f32.mrb[0].mxu0
    %v4241 = vadd.f32 0.0, %v4240
    %4242 = vdwg.mxu0
    %4243 = vmatprep.subr.mxu0 0.0
    %4244 = vmatpush1.msra.mxu0 %v4126
    %4245 = vmatprep.subr.mxu0 0.0
    %4246 = vmatpush1.msra.mxu0 %v4129
    %4247 = vmatprep.subr.mxu0 0.0
    %4248 = vmatpush1.msra.mxu0 %v4132
    %4249 = vmatprep.subr.mxu0 0.0
    %4250 = vmatpush1.msra.mxu0 %v4135
    %4251 = vmatprep.subr.mxu0 0.0
    %4252 = vmatpush1.msra.mxu0 %v4138
    %4253 = vmatprep.subr.mxu0 0.0
    %4254 = vmatpush1.msra.mxu0 %v4141
    %4255 = vmatprep.subr.mxu0 0.0
    %4256 = vmatpush1.msra.mxu0 %v4144
    %4257 = vmatprep.subr.mxu0 0.0
    %4258 = vmatpush1.msra.mxu0 %v4147
    %4259 = vmatprep.subr.mxu0 0.0
    %4260 = vmatpush1.msra.mxu0 %v4150
    %4261 = vmatprep.subr.mxu0 0.0
    %4262 = vmatpush1.msra.mxu0 %v4153
    %4263 = vmatprep.subr.mxu0 0.0
    %4264 = vmatpush1.msra.mxu0 %v4156
    %4265 = vmatprep.subr.mxu0 0.0
    %4266 = vmatpush1.msra.mxu0 %v4159
    %4267 = vmatprep.subr.mxu0 0.0
    %4268 = vmatpush1.msra.mxu0 %v4162
    %4269 = vmatprep.subr.mxu0 0.0
    %4270 = vmatpush1.msra.mxu0 %v4165
    %4271 = vmatprep.subr.mxu0 0.0
    %4272 = vmatpush1.msra.mxu0 %v4168
    %4273 = vmatprep.subr.mxu0 0.0
    %4274 = vmatpush1.msra.mxu0 %v4171
    %4275 = vmatprep.subr.mxu0 0.0
    %4276 = vmatpush1.msra.mxu0 0.0
    %4277 = vmatprep.subr.mxu0 0.0
    %4278 = vmatpush1.msra.mxu0 0.0
    %4279 = vmatprep.subr.mxu0 0.0
    %4280 = vmatpush1.msra.mxu0 0.0
    %4281 = vmatprep.subr.mxu0 0.0
    %4282 = vmatpush1.msra.mxu0 0.0
    %4283 = vmatprep.subr.mxu0 0.0
    %4284 = vmatpush1.msra.mxu0 0.0
    %4285 = vmatprep.subr.mxu0 0.0
    %4286 = vmatpush1.msra.mxu0 0.0
    %4287 = vmatprep.subr.mxu0 0.0
    %4288 = vmatpush1.msra.mxu0 0.0
    %4289 = vmatprep.subr.mxu0 0.0
    %4290 = vmatpush1.msra.mxu0 0.0
    %4291 = vmatprep.subr.mxu0 0.0
    %4292 = vmatpush1.msra.mxu0 0.0
    %4293 = vmatprep.subr.mxu0 0.0
    %4294 = vmatpush1.msra.mxu0 0.0
    %4295 = vmatprep.subr.mxu0 0.0
    %4296 = vmatpush1.msra.mxu0 0.0
    %4297 = vmatprep.subr.mxu0 0.0
    %4298 = vmatpush1.msra.mxu0 0.0
    %4299 = vmatprep.subr.mxu0 0.0
    %4300 = vmatpush1.msra.mxu0 0.0
    %4301 = vmatprep.subr.mxu0 0.0
    %4302 = vmatpush1.msra.mxu0 0.0
    %4303 = vmatprep.subr.mxu0 0.0
    %4304 = vmatpush1.msra.mxu0 0.0
    %4305 = vmatprep.subr.mxu0 0.0
    %4306 = vmatpush1.msra.mxu0 0.0
    %4307 = vmatprep.mubr.f32.mxu0 0.0
    %4308 = vmatmul.mubr.f32.gmra.mrb[0].mxu0 %v4121
    %v4309 = vpop.f32.mrb[0].mxu0
    %v4310 = vadd.f32 0.0, %v4309
    %v4311 = vpop.f32.mrb[0].mxu0
    %4312 = vdwg.mxu0
    %v4315 = vcombine.low %v4239, %v4241
    %v4317 = vunpack.c.l.s4 1983009808
    %v4318 = vunpack.c.0.s8 %v4317
    %v4319 = vlaneseq
    %v4320 = vshrl.u32 %v4319, 7
    %v4321 = vsub.s32 %v4318, %v4320
    %v4322 = vrot.slane %v4315, %v4321
    %v4324 = vadd.f32 %v4123, %v4322
    %v4325 = vxor.u32 %v4324, 2147483648
    %v4326 = vmul.f32 %v4325, 1.442695
    %v4327 = vpow.pop %v4326
    %v4328 = vadd.f32 %v4327, 1.0
    %v4329 = vrcp.pop %v4328
    %v4330 = vmul.f32 1.0, %v4329
    %v4331 = vadd.f32 %v4310, %v2560
    %v4332 = vmul.f32 %v4330, %v4331
    %v4334 = vrot.slane %v4123, 4
    %v4336 = vadd.f32 %v4334, %v4332
    %v4337 = vtanh.pop %v4336
    %v4339 = vrot.slane %v4330, 2
    %v4341 = vsub.f32 1.0, %v4339
    %v4342 = vmul.f32 %v4341, %v4337
    %v4343 = vmul.f32 %v4339, %v4121
    %v4344 = vadd.f32 %v4342, %v4343
    %4345 = vst [vmem:[%s2186] sm:$0x3] %v4344
    %v4346 = vld [vmem:[#allocation6] sm:$0x3]
    %v4347 = vld [vmem:[#allocation6 + $0x2] sm:$0x3]
    %v4348 = vld [vmem:[#allocation6 + $0x4] sm:$0x3]
    %v4349 = vld [vmem:[#allocation6 + $0x6] sm:$0x3]
    %v4350 = vld [vmem:[#allocation6 + $0x8] sm:$0x3]
    %v4351 = vld [vmem:[#allocation6 + $0xa] sm:$0x3]
    %v4352 = vld [vmem:[#allocation6 + $0xc] sm:$0x3]
    %v4353 = vld [vmem:[#allocation6 + $0xe] sm:$0x3]
    %s4354 = sshll.u32 %s2197, 4
    %4355 = dma.done %s82, %s4354
    %s4356 = sshll.u32 %s2197, 4
    %4357 = dma.done %s95, %s4356
    %v4358 = vld [vmem:[%s81] sm:$0xff]
    %v4359 = vld [vmem:[%s81 + $0x8] sm:$0xff]
    %v4360 = vld [vmem:[%s81 + $0x10] sm:$0xff]
    %v4361 = vld [vmem:[%s81 + $0x18] sm:$0xff]
    %v4362 = vld [vmem:[%s81 + $0x20] sm:$0xff]
    %v4363 = vld [vmem:[%s81 + $0x28] sm:$0xff]
    %v4364 = vld [vmem:[%s81 + $0x30] sm:$0xff]
    %v4365 = vld [vmem:[%s81 + $0x38] sm:$0xff]
    %v4366 = vld [vmem:[%s81 + $0x40] sm:$0xff]
    %v4367 = vld [vmem:[%s81 + $0x48] sm:$0xff]
    %v4368 = vld [vmem:[%s81 + $0x50] sm:$0xff]
    %v4369 = vld [vmem:[%s81 + $0x58] sm:$0xff]
    %v4370 = vld [vmem:[%s81 + $0x60] sm:$0xff]
    %v4371 = vld [vmem:[%s81 + $0x68] sm:$0xff]
    %v4372 = vld [vmem:[%s81 + $0x70] sm:$0xff]
    %v4373 = vld [vmem:[%s81 + $0x78] sm:$0xff]
    %v4374 = vld [vmem:[%s81 + $0x80] sm:$0xff]
    %v4375 = vld [vmem:[%s81 + $0x88] sm:$0xff]
    %v4376 = vld [vmem:[%s81 + $0x90] sm:$0xff]
    %v4377 = vld [vmem:[%s81 + $0x98] sm:$0xff]
    %v4378 = vld [vmem:[%s81 + $0xa0] sm:$0xff]
    %v4379 = vld [vmem:[%s81 + $0xa8] sm:$0xff]
    %v4380 = vld [vmem:[%s81 + $0xb0] sm:$0xff]
    %v4381 = vld [vmem:[%s81 + $0xb8] sm:$0xff]
    %v4382 = vld [vmem:[%s81 + $0xc0] sm:$0xff]
    %v4383 = vld [vmem:[%s81 + $0xc8] sm:$0xff]
    %v4384 = vld [vmem:[%s81 + $0xd0] sm:$0xff]
    %v4385 = vld [vmem:[%s81 + $0xd8] sm:$0xff]
    %v4386 = vld [vmem:[%s81 + $0xe0] sm:$0xff]
    %v4387 = vld [vmem:[%s81 + $0xe8] sm:$0xff]
    %v4388 = vld [vmem:[%s81 + $0xf0] sm:$0xff]
    %v4389 = vld [vmem:[%s81 + $0xf8] sm:$0xff]
    %v4390 = vld [vmem:[%s81 + $0x100] sm:$0xff]
    %v4391 = vld [vmem:[%s81 + $0x108] sm:$0xff]
    %v4392 = vld [vmem:[%s81 + $0x110] sm:$0xff]
    %v4393 = vld [vmem:[%s81 + $0x118] sm:$0xff]
    %v4394 = vld [vmem:[%s81 + $0x120] sm:$0xff]
    %v4395 = vld [vmem:[%s81 + $0x128] sm:$0xff]
    %v4396 = vld [vmem:[%s81 + $0x130] sm:$0xff]
    %v4397 = vld [vmem:[%s81 + $0x138] sm:$0xff]
    %v4398 = vld [vmem:[%s81 + $0x140] sm:$0xff]
    %v4399 = vld [vmem:[%s81 + $0x148] sm:$0xff]
    %v4400 = vld [vmem:[%s81 + $0x150] sm:$0xff]
    %v4401 = vld [vmem:[%s81 + $0x158] sm:$0xff]
    %v4402 = vld [vmem:[%s81 + $0x160] sm:$0xff]
    %v4403 = vld [vmem:[%s81 + $0x168] sm:$0xff]
    %v4404 = vld [vmem:[%s81 + $0x170] sm:$0xff]
    %v4405 = vld [vmem:[%s81 + $0x178] sm:$0xff]
    %v4406 = vld [vmem:[%s11] sm:$0x7]
    %v4408 = vlaneseq
    %v4409 = vshrl.u32 %v4408, 7
    %v4410 = vsub.s32 0, %v4409
    %v4411 = vrot.slane %v4406, %v4410
    %v4412 = vlaneseq
    %v4413 = vshrl.u32 %v4412, 7
    %v4414 = vsub.s32 1, %v4413
    %v4415 = vrot.slane %v4406, %v4414
    %v4416 = vlaneseq
    %v4417 = vshrl.u32 %v4416, 7
    %v4418 = vsub.s32 2, %v4417
    %v4419 = vrot.slane %v4406, %v4418
    %v4431 = vcombine.low %v4346, %v4347
    %v4432 = vcombine.low %v4348, %v4349
    %v4434 = vunpack.c.l.s4 1983009808
    %v4435 = vunpack.c.0.s8 %v4434
    %v4436 = vlaneseq
    %v4437 = vshrl.u32 %v4436, 7
    %v4438 = vsub.s32 %v4435, %v4437
    %v4439 = vrot.slane %v4431, %v4438
    %v4441 = vunpack.c.l.s4 1983009808
    %v4442 = vunpack.c.0.s8 %v4441
    %v4443 = vlaneseq
    %v4444 = vshrl.u32 %v4443, 7
    %v4445 = vsub.s32 %v4442, %v4444
    %v4446 = vrot.slane %v4432, %v4445
    %v4447 = vcombine.low %v4439, %v4446
    %v4448 = vcombine.low %v4350, %v4351
    %v4449 = vcombine.low %v4352, %v4353
    %v4451 = vunpack.c.l.s4 1983009808
    %v4452 = vunpack.c.0.s8 %v4451
    %v4453 = vlaneseq
    %v4454 = vshrl.u32 %v4453, 7
    %v4455 = vsub.s32 %v4452, %v4454
    %v4456 = vrot.slane %v4448, %v4455
    %v4458 = vunpack.c.l.s4 1983009808
    %v4459 = vunpack.c.0.s8 %v4458
    %v4460 = vlaneseq
    %v4461 = vshrl.u32 %v4460, 7
    %v4462 = vsub.s32 %v4459, %v4461
    %v4463 = vrot.slane %v4449, %v4462
    %v4464 = vcombine.low %v4456, %v4463
    %4467 = vmatprep.subr.mxu0 %v4359
    %4468 = vmatpush1.msra.mxu0 %v4358
    %4469 = vmatprep.subr.mxu0 %v4362
    %4470 = vmatpush1.msra.mxu0 %v4361
    %4471 = vmatprep.subr.mxu0 %v4365
    %4472 = vmatpush1.msra.mxu0 %v4364
    %4473 = vmatprep.subr.mxu0 %v4368
    %4474 = vmatpush1.msra.mxu0 %v4367
    %4475 = vmatprep.subr.mxu0 %v4371
    %4476 = vmatpush1.msra.mxu0 %v4370
    %4477 = vmatprep.subr.mxu0 %v4374
    %4478 = vmatpush1.msra.mxu0 %v4373
    %4479 = vmatprep.subr.mxu0 %v4377
    %4480 = vmatpush1.msra.mxu0 %v4376
    %4481 = vmatprep.subr.mxu0 %v4380
    %4482 = vmatpush1.msra.mxu0 %v4379
    %4483 = vmatprep.subr.mxu0 %v4383
    %4484 = vmatpush1.msra.mxu0 %v4382
    %4485 = vmatprep.subr.mxu0 %v4386
    %4486 = vmatpush1.msra.mxu0 %v4385
    %4487 = vmatprep.subr.mxu0 %v4389
    %4488 = vmatpush1.msra.mxu0 %v4388
    %4489 = vmatprep.subr.mxu0 %v4392
    %4490 = vmatpush1.msra.mxu0 %v4391
    %4491 = vmatprep.subr.mxu0 %v4395
    %4492 = vmatpush1.msra.mxu0 %v4394
    %4493 = vmatprep.subr.mxu0 %v4398
    %4494 = vmatpush1.msra.mxu0 %v4397
    %4495 = vmatprep.subr.mxu0 %v4401
    %4496 = vmatpush1.msra.mxu0 %v4400
    %4497 = vmatprep.subr.mxu0 %v4404
    %4498 = vmatpush1.msra.mxu0 %v4403
    %4499 = vmatprep.subr.mxu0 0.0
    %4500 = vmatpush1.msra.mxu0 0.0
    %4501 = vmatprep.subr.mxu0 0.0
    %4502 = vmatpush1.msra.mxu0 0.0
    %4503 = vmatprep.subr.mxu0 0.0
    %4504 = vmatpush1.msra.mxu0 0.0
    %4505 = vmatprep.subr.mxu0 0.0
    %4506 = vmatpush1.msra.mxu0 0.0
    %4507 = vmatprep.subr.mxu0 0.0
    %4508 = vmatpush1.msra.mxu0 0.0
    %4509 = vmatprep.subr.mxu0 0.0
    %4510 = vmatpush1.msra.mxu0 0.0
    %4511 = vmatprep.subr.mxu0 0.0
    %4512 = vmatpush1.msra.mxu0 0.0
    %4513 = vmatprep.subr.mxu0 0.0
    %4514 = vmatpush1.msra.mxu0 0.0
    %4515 = vmatprep.subr.mxu0 0.0
    %4516 = vmatpush1.msra.mxu0 0.0
    %4517 = vmatprep.subr.mxu0 0.0
    %4518 = vmatpush1.msra.mxu0 0.0
    %4519 = vmatprep.subr.mxu0 0.0
    %4520 = vmatpush1.msra.mxu0 0.0
    %4521 = vmatprep.subr.mxu0 0.0
    %4522 = vmatpush1.msra.mxu0 0.0
    %4523 = vmatprep.subr.mxu0 0.0
    %4524 = vmatpush1.msra.mxu0 0.0
    %4525 = vmatprep.subr.mxu0 0.0
    %4526 = vmatpush1.msra.mxu0 0.0
    %4527 = vmatprep.subr.mxu0 0.0
    %4528 = vmatpush1.msra.mxu0 0.0
    %4529 = vmatprep.subr.mxu0 0.0
    %4530 = vmatpush1.msra.mxu0 0.0
    %4531 = vmatprep.mubr.f32.mxu0 0.0
    %4532 = vmatmul.mubr.f32.gmra.mrb[0].mxu0 %v4447
    %v4533 = vpop.f32.mrb[0].mxu0
    %v4534 = vadd.f32 %v4411, %v4533
    %v4535 = vpop.f32.mrb[0].mxu0
    %v4536 = vadd.f32 %v4415, %v4535
    %4537 = vmatprep.mubr.f32.mxu0 0.0
    %4538 = vmatmul.mubr.f32.gmra.mrb[0].mxu0 %v4464
    %v4539 = vpop.f32.mrb[0].mxu0
    %v4540 = vadd.f32 %v4411, %v4539
    %v4541 = vpop.f32.mrb[0].mxu0
    %v4542 = vadd.f32 %v4415, %v4541
    %4543 = vdwg.mxu0
    %4544 = vmatprep.subr.mxu0 0.0
    %4545 = vmatpush1.msra.mxu0 %v4360
    %4546 = vmatprep.subr.mxu0 0.0
    %4547 = vmatpush1.msra.mxu0 %v4363
    %4548 = vmatprep.subr.mxu0 0.0
    %4549 = vmatpush1.msra.mxu0 %v4366
    %4550 = vmatprep.subr.mxu0 0.0
    %4551 = vmatpush1.msra.mxu0 %v4369
    %4552 = vmatprep.subr.mxu0 0.0
    %4553 = vmatpush1.msra.mxu0 %v4372
    %4554 = vmatprep.subr.mxu0 0.0
    %4555 = vmatpush1.msra.mxu0 %v4375
    %4556 = vmatprep.subr.mxu0 0.0
    %4557 = vmatpush1.msra.mxu0 %v4378
    %4558 = vmatprep.subr.mxu0 0.0
    %4559 = vmatpush1.msra.mxu0 %v4381
    %4560 = vmatprep.subr.mxu0 0.0
    %4561 = vmatpush1.msra.mxu0 %v4384
    %4562 = vmatprep.subr.mxu0 0.0
    %4563 = vmatpush1.msra.mxu0 %v4387
    %4564 = vmatprep.subr.mxu0 0.0
    %4565 = vmatpush1.msra.mxu0 %v4390
    %4566 = vmatprep.subr.mxu0 0.0
    %4567 = vmatpush1.msra.mxu0 %v4393
    %4568 = vmatprep.subr.mxu0 0.0
    %4569 = vmatpush1.msra.mxu0 %v4396
    %4570 = vmatprep.subr.mxu0 0.0
    %4571 = vmatpush1.msra.mxu0 %v4399
    %4572 = vmatprep.subr.mxu0 0.0
    %4573 = vmatpush1.msra.mxu0 %v4402
    %4574 = vmatprep.subr.mxu0 0.0
    %4575 = vmatpush1.msra.mxu0 %v4405
    %4576 = vmatprep.subr.mxu0 0.0
    %4577 = vmatpush1.msra.mxu0 0.0
    %4578 = vmatprep.subr.mxu0 0.0
    %4579 = vmatpush1.msra.mxu0 0.0
    %4580 = vmatprep.subr.mxu0 0.0
    %4581 = vmatpush1.msra.mxu0 0.0
    %4582 = vmatprep.subr.mxu0 0.0
    %4583 = vmatpush1.msra.mxu0 0.0
    %4584 = vmatprep.subr.mxu0 0.0
    %4585 = vmatpush1.msra.mxu0 0.0
    %4586 = vmatprep.subr.mxu0 0.0
    %4587 = vmatpush1.msra.mxu0 0.0
    %4588 = vmatprep.subr.mxu0 0.0
    %4589 = vmatpush1.msra.mxu0 0.0
    %4590 = vmatprep.subr.mxu0 0.0
    %4591 = vmatpush1.msra.mxu0 0.0
    %4592 = vmatprep.subr.mxu0 0.0
    %4593 = vmatpush1.msra.mxu0 0.0
    %4594 = vmatprep.subr.mxu0 0.0
    %4595 = vmatpush1.msra.mxu0 0.0
    %4596 = vmatprep.subr.mxu0 0.0
    %4597 = vmatpush1.msra.mxu0 0.0
    %4598 = vmatprep.subr.mxu0 0.0
    %4599 = vmatpush1.msra.mxu0 0.0
    %4600 = vmatprep.subr.mxu0 0.0
    %4601 = vmatpush1.msra.mxu0 0.0
    %4602 = vmatprep.subr.mxu0 0.0
    %4603 = vmatpush1.msra.mxu0 0.0
    %4604 = vmatprep.subr.mxu0 0.0
    %4605 = vmatpush1.msra.mxu0 0.0
    %4606 = vmatprep.subr.mxu0 0.0
    %4607 = vmatpush1.msra.mxu0 0.0
    %4608 = vmatprep.mubr.f32.mxu0 0.0
    %4609 = vmatmul.mubr.f32.gmra.mrb[0].mxu0 %v4447
    %v4610 = vpop.f32.mrb[0].mxu0
    %v4611 = vadd.f32 %v4419, %v4610
    %v4612 = vpop.f32.mrb[0].mxu0
    %4613 = vmatprep.mubr.f32.mxu0 0.0
    %4614 = vmatmul.mubr.f32.gmra.mrb[0].mxu0 %v4464
    %v4615 = vpop.f32.mrb[0].mxu0
    %v4616 = vadd.f32 %v4419, %v4615
    %v4617 = vpop.f32.mrb[0].mxu0
    %4618 = vdwg.mxu0
    %v4625 = vcombine.low %v4534, %v4536
    %v4626 = vcombine.high %v4534, %v4536
    %v4627 = vcombine.high %v4611, %v4611
    %v4629 = vunpack.c.l.s4 1983009808
    %v4630 = vunpack.c.0.s8 %v4629
    %v4631 = vlaneseq
    %v4632 = vshrl.u32 %v4631, 7
    %v4633 = vsub.s32 %v4630, %v4632
    %v4634 = vrot.slane %v4625, %v4633
    %v4636 = vunpack.c.l.s4 1983009808
    %v4637 = vunpack.c.0.s8 %v4636
    %v4638 = vlaneseq
    %v4639 = vshrl.u32 %v4638, 7
    %v4640 = vsub.s32 %v4637, %v4639
    %v4641 = vrot.slane %v4626, %v4640
    %v4643 = vunpack.c.l.s4 1983009808
    %v4644 = vunpack.c.0.s8 %v4643
    %v4645 = vlaneseq
    %v4646 = vshrl.u32 %v4645, 7
    %v4647 = vsub.s32 %v4644, %v4646
    %v4648 = vrot.slane %v4611, %v4647
    %v4650 = vunpack.c.l.s4 1983009808
    %v4651 = vunpack.c.0.s8 %v4650
    %v4652 = vlaneseq
    %v4653 = vshrl.u32 %v4652, 7
    %v4654 = vsub.s32 %v4651, %v4653
    %v4655 = vrot.slane %v4627, %v4654
    %v4656 = vcombine.low %v4634, %v4648
    %v4657 = vcombine.high %v4634, %v4648
    %v4658 = vcombine.low %v4641, %v4655
    %v4659 = vcombine.high %v4641, %v4655
    %v4660 = vcombine.low %v4540, %v4542
    %v4661 = vcombine.high %v4540, %v4542
    %v4662 = vcombine.high %v4616, %v4616
    %v4664 = vunpack.c.l.s4 1983009808
    %v4665 = vunpack.c.0.s8 %v4664
    %v4666 = vlaneseq
    %v4667 = vshrl.u32 %v4666, 7
    %v4668 = vsub.s32 %v4665, %v4667
    %v4669 = vrot.slane %v4660, %v4668
    %v4671 = vunpack.c.l.s4 1983009808
    %v4672 = vunpack.c.0.s8 %v4671
    %v4673 = vlaneseq
    %v4674 = vshrl.u32 %v4673, 7
    %v4675 = vsub.s32 %v4672, %v4674
    %v4676 = vrot.slane %v4661, %v4675
    %v4678 = vunpack.c.l.s4 1983009808
    %v4679 = vunpack.c.0.s8 %v4678
    %v4680 = vlaneseq
    %v4681 = vshrl.u32 %v4680, 7
    %v4682 = vsub.s32 %v4679, %v4681
    %v4683 = vrot.slane %v4616, %v4682
    %v4685 = vunpack.c.l.s4 1983009808
    %v4686 = vunpack.c.0.s8 %v4685
    %v4687 = vlaneseq
    %v4688 = vshrl.u32 %v4687, 7
    %v4689 = vsub.s32 %v4686, %v4688
    %v4690 = vrot.slane %v4662, %v4689
    %v4691 = vcombine.low %v4669, %v4683
    %v4692 = vcombine.high %v4669, %v4683
    %v4693 = vcombine.low %v4676, %v4690
    %v4694 = vcombine.high %v4676, %v4690
    %4703 = vst [vmem:[#allocation5] sm:$0x3f] %v4656
    %4704 = vst [vmem:[#allocation5 + $0x6] sm:$0x3f] %v4657
    %4705 = vst [vmem:[#allocation5 + $0xc] sm:$0x3f] %v4658
    %4706 = vst [vmem:[#allocation5 + $0x12] sm:$0x3f] %v4659
    %4707 = vst [vmem:[#allocation5 + $0x18] sm:$0x3f] %v4691
    %4708 = vst [vmem:[#allocation5 + $0x1e] sm:$0x3f] %v4692
    %4709 = vst [vmem:[#allocation5 + $0x24] sm:$0x3f] %v4693
    %4710 = vst [vmem:[#allocation5 + $0x2a] sm:$0x3f] %v4694
    %v4711 = vld [vmem:[%s12] sm:$0x1]
    %v4713 = vlaneseq
    %v4714 = vshrl.u32 %v4713, 7
    %v4715 = vsub.s32 0, %v4714
    %v4716 = vrot.slane %v4711, %v4715
    %v4718 = vld [vmem:[#allocation5] sm:$0x3f]
    %v4719 = vld [vmem:[%s94] sm:$0xff]
    %v4720 = vld [vmem:[%s94 + $0x8] sm:$0xff]
    %v4721 = vld [vmem:[%s94 + $0x10] sm:$0xff]
    %v4722 = vld [vmem:[%s94 + $0x18] sm:$0xff]
    %v4723 = vld [vmem:[%s94 + $0x20] sm:$0xff]
    %v4724 = vld [vmem:[%s94 + $0x28] sm:$0xff]
    %v4725 = vld [vmem:[%s94 + $0x30] sm:$0xff]
    %v4726 = vld [vmem:[%s94 + $0x38] sm:$0xff]
    %v4727 = vld [vmem:[%s94 + $0x40] sm:$0xff]
    %v4728 = vld [vmem:[%s94 + $0x48] sm:$0xff]
    %v4729 = vld [vmem:[%s94 + $0x50] sm:$0xff]
    %v4730 = vld [vmem:[%s94 + $0x58] sm:$0xff]
    %v4731 = vld [vmem:[%s94 + $0x60] sm:$0xff]
    %v4732 = vld [vmem:[%s94 + $0x68] sm:$0xff]
    %v4733 = vld [vmem:[%s94 + $0x70] sm:$0xff]
    %v4734 = vld [vmem:[%s94 + $0x78] sm:$0xff]
    %v4735 = vld [vmem:[%s94 + $0x80] sm:$0xff]
    %v4736 = vld [vmem:[%s94 + $0x88] sm:$0xff]
    %v4737 = vld [vmem:[%s94 + $0x90] sm:$0xff]
    %v4738 = vld [vmem:[%s94 + $0x98] sm:$0xff]
    %v4739 = vld [vmem:[%s94 + $0xa0] sm:$0xff]
    %v4740 = vld [vmem:[%s94 + $0xa8] sm:$0xff]
    %v4741 = vld [vmem:[%s94 + $0xb0] sm:$0xff]
    %v4742 = vld [vmem:[%s94 + $0xb8] sm:$0xff]
    %v4743 = vld [vmem:[%s94 + $0xc0] sm:$0xff]
    %v4744 = vld [vmem:[%s94 + $0xc8] sm:$0xff]
    %v4745 = vld [vmem:[%s94 + $0xd0] sm:$0xff]
    %v4746 = vld [vmem:[%s94 + $0xd8] sm:$0xff]
    %v4747 = vld [vmem:[%s94 + $0xe0] sm:$0xff]
    %v4748 = vld [vmem:[%s94 + $0xe8] sm:$0xff]
    %v4749 = vld [vmem:[%s94 + $0xf0] sm:$0xff]
    %v4750 = vld [vmem:[%s94 + $0xf8] sm:$0xff]
    %v4751 = vld [vmem:[%s94 + $0x100] sm:$0xff]
    %v4752 = vld [vmem:[%s94 + $0x108] sm:$0xff]
    %v4753 = vld [vmem:[%s94 + $0x110] sm:$0xff]
    %v4754 = vld [vmem:[%s94 + $0x118] sm:$0xff]
    %v4755 = vld [vmem:[%s94 + $0x120] sm:$0xff]
    %v4756 = vld [vmem:[%s94 + $0x128] sm:$0xff]
    %v4757 = vld [vmem:[%s94 + $0x130] sm:$0xff]
    %v4758 = vld [vmem:[%s94 + $0x138] sm:$0xff]
    %v4759 = vld [vmem:[%s94 + $0x140] sm:$0xff]
    %v4760 = vld [vmem:[%s94 + $0x148] sm:$0xff]
    %v4761 = vld [vmem:[%s94 + $0x150] sm:$0xff]
    %v4762 = vld [vmem:[%s94 + $0x158] sm:$0xff]
    %v4763 = vld [vmem:[%s94 + $0x160] sm:$0xff]
    %v4764 = vld [vmem:[%s94 + $0x168] sm:$0xff]
    %v4765 = vld [vmem:[%s94 + $0x170] sm:$0xff]
    %v4766 = vld [vmem:[%s94 + $0x178] sm:$0xff]
    %4767 = vmatprep.subr.mxu0 %v4720
    %4768 = vmatpush1.msra.mxu0 %v4719
    %4769 = vmatprep.subr.mxu0 %v4723
    %4770 = vmatpush1.msra.mxu0 %v4722
    %4771 = vmatprep.subr.mxu0 %v4726
    %4772 = vmatpush1.msra.mxu0 %v4725
    %4773 = vmatprep.subr.mxu0 %v4729
    %4774 = vmatpush1.msra.mxu0 %v4728
    %4775 = vmatprep.subr.mxu0 %v4732
    %4776 = vmatpush1.msra.mxu0 %v4731
    %4777 = vmatprep.subr.mxu0 %v4735
    %4778 = vmatpush1.msra.mxu0 %v4734
    %4779 = vmatprep.subr.mxu0 %v4738
    %4780 = vmatpush1.msra.mxu0 %v4737
    %4781 = vmatprep.subr.mxu0 %v4741
    %4782 = vmatpush1.msra.mxu0 %v4740
    %4783 = vmatprep.subr.mxu0 %v4744
    %4784 = vmatpush1.msra.mxu0 %v4743
    %4785 = vmatprep.subr.mxu0 %v4747
    %4786 = vmatpush1.msra.mxu0 %v4746
    %4787 = vmatprep.subr.mxu0 %v4750
    %4788 = vmatpush1.msra.mxu0 %v4749
    %4789 = vmatprep.subr.mxu0 %v4753
    %4790 = vmatpush1.msra.mxu0 %v4752
    %4791 = vmatprep.subr.mxu0 %v4756
    %4792 = vmatpush1.msra.mxu0 %v4755
    %4793 = vmatprep.subr.mxu0 %v4759
    %4794 = vmatpush1.msra.mxu0 %v4758
    %4795 = vmatprep.subr.mxu0 %v4762
    %4796 = vmatpush1.msra.mxu0 %v4761
    %4797 = vmatprep.subr.mxu0 %v4765
    %4798 = vmatpush1.msra.mxu0 %v4764
    %4799 = vmatprep.subr.mxu0 0.0
    %4800 = vmatpush1.msra.mxu0 0.0
    %4801 = vmatprep.subr.mxu0 0.0
    %4802 = vmatpush1.msra.mxu0 0.0
    %4803 = vmatprep.subr.mxu0 0.0
    %4804 = vmatpush1.msra.mxu0 0.0
    %4805 = vmatprep.subr.mxu0 0.0
    %4806 = vmatpush1.msra.mxu0 0.0
    %4807 = vmatprep.subr.mxu0 0.0
    %4808 = vmatpush1.msra.mxu0 0.0
    %4809 = vmatprep.subr.mxu0 0.0
    %4810 = vmatpush1.msra.mxu0 0.0
    %4811 = vmatprep.subr.mxu0 0.0
    %4812 = vmatpush1.msra.mxu0 0.0
    %4813 = vmatprep.subr.mxu0 0.0
    %4814 = vmatpush1.msra.mxu0 0.0
    %4815 = vmatprep.subr.mxu0 0.0
    %4816 = vmatpush1.msra.mxu0 0.0
    %4817 = vmatprep.subr.mxu0 0.0
    %4818 = vmatpush1.msra.mxu0 0.0
    %4819 = vmatprep.subr.mxu0 0.0
    %4820 = vmatpush1.msra.mxu0 0.0
    %4821 = vmatprep.subr.mxu0 0.0
    %4822 = vmatpush1.msra.mxu0 0.0
    %4823 = vmatprep.subr.mxu0 0.0
    %4824 = vmatpush1.msra.mxu0 0.0
    %4825 = vmatprep.subr.mxu0 0.0
    %4826 = vmatpush1.msra.mxu0 0.0
    %4827 = vmatprep.subr.mxu0 0.0
    %4828 = vmatpush1.msra.mxu0 0.0
    %4829 = vmatprep.subr.mxu0 0.0
    %4830 = vmatpush1.msra.mxu0 0.0
    %4831 = vmatprep.mubr.f32.mxu0 0.0
    %4832 = vmatmul.mubr.f32.gmra.mrb[0].mxu0 0.0
    %v4833 = vpop.f32.mrb[0].mxu0
    %v4834 = vadd.f32 0.0, %v4833
    %v4835 = vpop.f32.mrb[0].mxu0
    %v4836 = vadd.f32 0.0, %v4835
    %4837 = vdwg.mxu0
    %4838 = vmatprep.subr.mxu0 0.0
    %4839 = vmatpush1.msra.mxu0 %v4721
    %4840 = vmatprep.subr.mxu0 0.0
    %4841 = vmatpush1.msra.mxu0 %v4724
    %4842 = vmatprep.subr.mxu0 0.0
    %4843 = vmatpush1.msra.mxu0 %v4727
    %4844 = vmatprep.subr.mxu0 0.0
    %4845 = vmatpush1.msra.mxu0 %v4730
    %4846 = vmatprep.subr.mxu0 0.0
    %4847 = vmatpush1.msra.mxu0 %v4733
    %4848 = vmatprep.subr.mxu0 0.0
    %4849 = vmatpush1.msra.mxu0 %v4736
    %4850 = vmatprep.subr.mxu0 0.0
    %4851 = vmatpush1.msra.mxu0 %v4739
    %4852 = vmatprep.subr.mxu0 0.0
    %4853 = vmatpush1.msra.mxu0 %v4742
    %4854 = vmatprep.subr.mxu0 0.0
    %4855 = vmatpush1.msra.mxu0 %v4745
    %4856 = vmatprep.subr.mxu0 0.0
    %4857 = vmatpush1.msra.mxu0 %v4748
    %4858 = vmatprep.subr.mxu0 0.0
    %4859 = vmatpush1.msra.mxu0 %v4751
    %4860 = vmatprep.subr.mxu0 0.0
    %4861 = vmatpush1.msra.mxu0 %v4754
    %4862 = vmatprep.subr.mxu0 0.0
    %4863 = vmatpush1.msra.mxu0 %v4757
    %4864 = vmatprep.subr.mxu0 0.0
    %4865 = vmatpush1.msra.mxu0 %v4760
    %4866 = vmatprep.subr.mxu0 0.0
    %4867 = vmatpush1.msra.mxu0 %v4763
    %4868 = vmatprep.subr.mxu0 0.0
    %4869 = vmatpush1.msra.mxu0 %v4766
    %4870 = vmatprep.subr.mxu0 0.0
    %4871 = vmatpush1.msra.mxu0 0.0
    %4872 = vmatprep.subr.mxu0 0.0
    %4873 = vmatpush1.msra.mxu0 0.0
    %4874 = vmatprep.subr.mxu0 0.0
    %4875 = vmatpush1.msra.mxu0 0.0
    %4876 = vmatprep.subr.mxu0 0.0
    %4877 = vmatpush1.msra.mxu0 0.0
    %4878 = vmatprep.subr.mxu0 0.0
    %4879 = vmatpush1.msra.mxu0 0.0
    %4880 = vmatprep.subr.mxu0 0.0
    %4881 = vmatpush1.msra.mxu0 0.0
    %4882 = vmatprep.subr.mxu0 0.0
    %4883 = vmatpush1.msra.mxu0 0.0
    %4884 = vmatprep.subr.mxu0 0.0
    %4885 = vmatpush1.msra.mxu0 0.0
    %4886 = vmatprep.subr.mxu0 0.0
    %4887 = vmatpush1.msra.mxu0 0.0
    %4888 = vmatprep.subr.mxu0 0.0
    %4889 = vmatpush1.msra.mxu0 0.0
    %4890 = vmatprep.subr.mxu0 0.0
    %4891 = vmatpush1.msra.mxu0 0.0
    %4892 = vmatprep.subr.mxu0 0.0
    %4893 = vmatpush1.msra.mxu0 0.0
    %4894 = vmatprep.subr.mxu0 0.0
    %4895 = vmatpush1.msra.mxu0 0.0
    %4896 = vmatprep.subr.mxu0 0.0
    %4897 = vmatpush1.msra.mxu0 0.0
    %4898 = vmatprep.subr.mxu0 0.0
    %4899 = vmatpush1.msra.mxu0 0.0
    %4900 = vmatprep.subr.mxu0 0.0
    %4901 = vmatpush1.msra.mxu0 0.0
    %4902 = vmatprep.mubr.f32.mxu0 0.0
    %4903 = vmatmul.mubr.f32.gmra.mrb[0].mxu0 0.0
    %v4904 = vpop.f32.mrb[0].mxu0
    %v4905 = vadd.f32 0.0, %v4904
    %v4906 = vpop.f32.mrb[0].mxu0
    %4907 = vdwg.mxu0
    %v4910 = vcombine.low %v4834, %v4836
    %v4912 = vunpack.c.l.s4 1983009808
    %v4913 = vunpack.c.0.s8 %v4912
    %v4914 = vlaneseq
    %v4915 = vshrl.u32 %v4914, 7
    %v4916 = vsub.s32 %v4913, %v4915
    %v4917 = vrot.slane %v4910, %v4916
    %v4919 = vadd.f32 %v4718, %v4917
    %v4920 = vxor.u32 %v4919, 2147483648
    %v4921 = vmul.f32 %v4920, 1.442695
    %v4922 = vpow.pop %v4921
    %v4923 = vadd.f32 %v4922, 1.0
    %v4924 = vrcp.pop %v4923
    %v4925 = vmul.f32 1.0, %v4924
    %v4926 = vadd.f32 %v4905, %v4716
    %v4927 = vmul.f32 %v4925, %v4926
    %v4929 = vrot.slane %v4718, 4
    %v4931 = vadd.f32 %v4929, %v4927
    %v4932 = vtanh.pop %v4931
    %v4934 = vrot.slane %v4925, 2
    %v4936 = vsub.f32 1.0, %v4934
    %v4937 = vmul.f32 %v4936, %v4932
    %v4938 = vmul.f32 %v4934, 0.0
    %v4939 = vadd.f32 %v4937, %v4938
    %v4940 = vld [vmem:[%s613] sm:$0x3f]
    %4941 = vmatprep.subr.mxu0 %v4720
    %4942 = vmatpush1.msra.mxu0 %v4719
    %4943 = vmatprep.subr.mxu0 %v4723
    %4944 = vmatpush1.msra.mxu0 %v4722
    %4945 = vmatprep.subr.mxu0 %v4726
    %4946 = vmatpush1.msra.mxu0 %v4725
    %4947 = vmatprep.subr.mxu0 %v4729
    %4948 = vmatpush1.msra.mxu0 %v4728
    %4949 = vmatprep.subr.mxu0 %v4732
    %4950 = vmatpush1.msra.mxu0 %v4731
    %4951 = vmatprep.subr.mxu0 %v4735
    %4952 = vmatpush1.msra.mxu0 %v4734
    %4953 = vmatprep.subr.mxu0 %v4738
    %4954 = vmatpush1.msra.mxu0 %v4737
    %4955 = vmatprep.subr.mxu0 %v4741
    %4956 = vmatpush1.msra.mxu0 %v4740
    %4957 = vmatprep.subr.mxu0 %v4744
    %4958 = vmatpush1.msra.mxu0 %v4743
    %4959 = vmatprep.subr.mxu0 %v4747
    %4960 = vmatpush1.msra.mxu0 %v4746
    %4961 = vmatprep.subr.mxu0 %v4750
    %4962 = vmatpush1.msra.mxu0 %v4749
    %4963 = vmatprep.subr.mxu0 %v4753
    %4964 = vmatpush1.msra.mxu0 %v4752
    %4965 = vmatprep.subr.mxu0 %v4756
    %4966 = vmatpush1.msra.mxu0 %v4755
    %4967 = vmatprep.subr.mxu0 %v4759
    %4968 = vmatpush1.msra.mxu0 %v4758
    %4969 = vmatprep.subr.mxu0 %v4762
    %4970 = vmatpush1.msra.mxu0 %v4761
    %4971 = vmatprep.subr.mxu0 %v4765
    %4972 = vmatpush1.msra.mxu0 %v4764
    %4973 = vmatprep.subr.mxu0 0.0
    %4974 = vmatpush1.msra.mxu0 0.0
    %4975 = vmatprep.subr.mxu0 0.0
    %4976 = vmatpush1.msra.mxu0 0.0
    %4977 = vmatprep.subr.mxu0 0.0
    %4978 = vmatpush1.msra.mxu0 0.0
    %4979 = vmatprep.subr.mxu0 0.0
    %4980 = vmatpush1.msra.mxu0 0.0
    %4981 = vmatprep.subr.mxu0 0.0
    %4982 = vmatpush1.msra.mxu0 0.0
    %4983 = vmatprep.subr.mxu0 0.0
    %4984 = vmatpush1.msra.mxu0 0.0
    %4985 = vmatprep.subr.mxu0 0.0
    %4986 = vmatpush1.msra.mxu0 0.0
    %4987 = vmatprep.subr.mxu0 0.0
    %4988 = vmatpush1.msra.mxu0 0.0
    %4989 = vmatprep.subr.mxu0 0.0
    %4990 = vmatpush1.msra.mxu0 0.0
    %4991 = vmatprep.subr.mxu0 0.0
    %4992 = vmatpush1.msra.mxu0 0.0
    %4993 = vmatprep.subr.mxu0 0.0
    %4994 = vmatpush1.msra.mxu0 0.0
    %4995 = vmatprep.subr.mxu0 0.0
    %4996 = vmatpush1.msra.mxu0 0.0
    %4997 = vmatprep.subr.mxu0 0.0
    %4998 = vmatpush1.msra.mxu0 0.0
    %4999 = vmatprep.subr.mxu0 0.0
    %5000 = vmatpush1.msra.mxu0 0.0
    %5001 = vmatprep.subr.mxu0 0.0
    %5002 = vmatpush1.msra.mxu0 0.0
    %5003 = vmatprep.subr.mxu0 0.0
    %5004 = vmatpush1.msra.mxu0 0.0
    %5005 = vmatprep.mubr.f32.mxu0 0.0
    %5006 = vmatmul.mubr.f32.gmra.mrb[0].mxu0 %v4939
    %v5007 = vpop.f32.mrb[0].mxu0
    %v5008 = vadd.f32 0.0, %v5007
    %v5009 = vpop.f32.mrb[0].mxu0
    %v5010 = vadd.f32 0.0, %v5009
    %5011 = vdwg.mxu0
    %5012 = vmatprep.subr.mxu0 0.0
    %5013 = vmatpush1.msra.mxu0 %v4721
    %5014 = vmatprep.subr.mxu0 0.0
    %5015 = vmatpush1.msra.mxu0 %v4724
    %5016 = vmatprep.subr.mxu0 0.0
    %5017 = vmatpush1.msra.mxu0 %v4727
    %5018 = vmatprep.subr.mxu0 0.0
    %5019 = vmatpush1.msra.mxu0 %v4730
    %5020 = vmatprep.subr.mxu0 0.0
    %5021 = vmatpush1.msra.mxu0 %v4733
    %5022 = vmatprep.subr.mxu0 0.0
    %5023 = vmatpush1.msra.mxu0 %v4736
    %5024 = vmatprep.subr.mxu0 0.0
    %5025 = vmatpush1.msra.mxu0 %v4739
    %5026 = vmatprep.subr.mxu0 0.0
    %5027 = vmatpush1.msra.mxu0 %v4742
    %5028 = vmatprep.subr.mxu0 0.0
    %5029 = vmatpush1.msra.mxu0 %v4745
    %5030 = vmatprep.subr.mxu0 0.0
    %5031 = vmatpush1.msra.mxu0 %v4748
    %5032 = vmatprep.subr.mxu0 0.0
    %5033 = vmatpush1.msra.mxu0 %v4751
    %5034 = vmatprep.subr.mxu0 0.0
    %5035 = vmatpush1.msra.mxu0 %v4754
    %5036 = vmatprep.subr.mxu0 0.0
    %5037 = vmatpush1.msra.mxu0 %v4757
    %5038 = vmatprep.subr.mxu0 0.0
    %5039 = vmatpush1.msra.mxu0 %v4760
    %5040 = vmatprep.subr.mxu0 0.0
    %5041 = vmatpush1.msra.mxu0 %v4763
    %5042 = vmatprep.subr.mxu0 0.0
    %5043 = vmatpush1.msra.mxu0 %v4766
    %5044 = vmatprep.subr.mxu0 0.0
    %5045 = vmatpush1.msra.mxu0 0.0
    %5046 = vmatprep.subr.mxu0 0.0
    %5047 = vmatpush1.msra.mxu0 0.0
    %5048 = vmatprep.subr.mxu0 0.0
    %5049 = vmatpush1.msra.mxu0 0.0
    %5050 = vmatprep.subr.mxu0 0.0
    %5051 = vmatpush1.msra.mxu0 0.0
    %5052 = vmatprep.subr.mxu0 0.0
    %5053 = vmatpush1.msra.mxu0 0.0
    %5054 = vmatprep.subr.mxu0 0.0
    %5055 = vmatpush1.msra.mxu0 0.0
    %5056 = vmatprep.subr.mxu0 0.0
    %5057 = vmatpush1.msra.mxu0 0.0
    %5058 = vmatprep.subr.mxu0 0.0
    %5059 = vmatpush1.msra.mxu0 0.0
    %5060 = vmatprep.subr.mxu0 0.0
    %5061 = vmatpush1.msra.mxu0 0.0
    %5062 = vmatprep.subr.mxu0 0.0
    %5063 = vmatpush1.msra.mxu0 0.0
    %5064 = vmatprep.subr.mxu0 0.0
    %5065 = vmatpush1.msra.mxu0 0.0
    %5066 = vmatprep.subr.mxu0 0.0
    %5067 = vmatpush1.msra.mxu0 0.0
    %5068 = vmatprep.subr.mxu0 0.0
    %5069 = vmatpush1.msra.mxu0 0.0
    %5070 = vmatprep.subr.mxu0 0.0
    %5071 = vmatpush1.msra.mxu0 0.0
    %5072 = vmatprep.subr.mxu0 0.0
    %5073 = vmatpush1.msra.mxu0 0.0
    %5074 = vmatprep.subr.mxu0 0.0
    %5075 = vmatpush1.msra.mxu0 0.0
    %5076 = vmatprep.mubr.f32.mxu0 0.0
    %5077 = vmatmul.mubr.f32.gmra.mrb[0].mxu0 %v4939
    %v5078 = vpop.f32.mrb[0].mxu0
    %v5079 = vadd.f32 0.0, %v5078
    %v5080 = vpop.f32.mrb[0].mxu0
    %5081 = vdwg.mxu0
    %v5084 = vcombine.low %v5008, %v5010
    %v5086 = vunpack.c.l.s4 1983009808
    %v5087 = vunpack.c.0.s8 %v5086
    %v5088 = vlaneseq
    %v5089 = vshrl.u32 %v5088, 7
    %v5090 = vsub.s32 %v5087, %v5089
    %v5091 = vrot.slane %v5084, %v5090
    %v5093 = vadd.f32 %v4940, %v5091
    %v5094 = vxor.u32 %v5093, 2147483648
    %v5095 = vmul.f32 %v5094, 1.442695
    %v5096 = vpow.pop %v5095
    %v5097 = vadd.f32 %v5096, 1.0
    %v5098 = vrcp.pop %v5097
    %v5099 = vmul.f32 1.0, %v5098
    %v5100 = vadd.f32 %v5079, %v4716
    %v5101 = vmul.f32 %v5099, %v5100
    %v5103 = vrot.slane %v4940, 4
    %v5105 = vadd.f32 %v5103, %v5101
    %v5106 = vtanh.pop %v5105
    %v5108 = vrot.slane %v5099, 2
    %v5110 = vsub.f32 1.0, %v5108
    %v5111 = vmul.f32 %v5110, %v5106
    %v5112 = vmul.f32 %v5108, %v4939
    %v5113 = vadd.f32 %v5111, %v5112
    %v5114 = vld [vmem:[%s838] sm:$0x3f]
    %5115 = vmatprep.subr.mxu0 %v4720
    %5116 = vmatpush1.msra.mxu0 %v4719
    %5117 = vmatprep.subr.mxu0 %v4723
    %5118 = vmatpush1.msra.mxu0 %v4722
    %5119 = vmatprep.subr.mxu0 %v4726
    %5120 = vmatpush1.msra.mxu0 %v4725
    %5121 = vmatprep.subr.mxu0 %v4729
    %5122 = vmatpush1.msra.mxu0 %v4728
    %5123 = vmatprep.subr.mxu0 %v4732
    %5124 = vmatpush1.msra.mxu0 %v4731
    %5125 = vmatprep.subr.mxu0 %v4735
    %5126 = vmatpush1.msra.mxu0 %v4734
    %5127 = vmatprep.subr.mxu0 %v4738
    %5128 = vmatpush1.msra.mxu0 %v4737
    %5129 = vmatprep.subr.mxu0 %v4741
    %5130 = vmatpush1.msra.mxu0 %v4740
    %5131 = vmatprep.subr.mxu0 %v4744
    %5132 = vmatpush1.msra.mxu0 %v4743
    %5133 = vmatprep.subr.mxu0 %v4747
    %5134 = vmatpush1.msra.mxu0 %v4746
    %5135 = vmatprep.subr.mxu0 %v4750
    %5136 = vmatpush1.msra.mxu0 %v4749
    %5137 = vmatprep.subr.mxu0 %v4753
    %5138 = vmatpush1.msra.mxu0 %v4752
    %5139 = vmatprep.subr.mxu0 %v4756
    %5140 = vmatpush1.msra.mxu0 %v4755
    %5141 = vmatprep.subr.mxu0 %v4759
    %5142 = vmatpush1.msra.mxu0 %v4758
    %5143 = vmatprep.subr.mxu0 %v4762
    %5144 = vmatpush1.msra.mxu0 %v4761
    %5145 = vmatprep.subr.mxu0 %v4765
    %5146 = vmatpush1.msra.mxu0 %v4764
    %5147 = vmatprep.subr.mxu0 0.0
    %5148 = vmatpush1.msra.mxu0 0.0
    %5149 = vmatprep.subr.mxu0 0.0
    %5150 = vmatpush1.msra.mxu0 0.0
    %5151 = vmatprep.subr.mxu0 0.0
    %5152 = vmatpush1.msra.mxu0 0.0
    %5153 = vmatprep.subr.mxu0 0.0
    %5154 = vmatpush1.msra.mxu0 0.0
    %5155 = vmatprep.subr.mxu0 0.0
    %5156 = vmatpush1.msra.mxu0 0.0
    %5157 = vmatprep.subr.mxu0 0.0
    %5158 = vmatpush1.msra.mxu0 0.0
    %5159 = vmatprep.subr.mxu0 0.0
    %5160 = vmatpush1.msra.mxu0 0.0
    %5161 = vmatprep.subr.mxu0 0.0
    %5162 = vmatpush1.msra.mxu0 0.0
    %5163 = vmatprep.subr.mxu0 0.0
    %5164 = vmatpush1.msra.mxu0 0.0
    %5165 = vmatprep.subr.mxu0 0.0
    %5166 = vmatpush1.msra.mxu0 0.0
    %5167 = vmatprep.subr.mxu0 0.0
    %5168 = vmatpush1.msra.mxu0 0.0
    %5169 = vmatprep.subr.mxu0 0.0
    %5170 = vmatpush1.msra.mxu0 0.0
    %5171 = vmatprep.subr.mxu0 0.0
    %5172 = vmatpush1.msra.mxu0 0.0
    %5173 = vmatprep.subr.mxu0 0.0
    %5174 = vmatpush1.msra.mxu0 0.0
    %5175 = vmatprep.subr.mxu0 0.0
    %5176 = vmatpush1.msra.mxu0 0.0
    %5177 = vmatprep.subr.mxu0 0.0
    %5178 = vmatpush1.msra.mxu0 0.0
    %5179 = vmatprep.mubr.f32.mxu0 0.0
    %5180 = vmatmul.mubr.f32.gmra.mrb[0].mxu0 %v5113
    %v5181 = vpop.f32.mrb[0].mxu0
    %v5182 = vadd.f32 0.0, %v5181
    %v5183 = vpop.f32.mrb[0].mxu0
    %v5184 = vadd.f32 0.0, %v5183
    %5185 = vdwg.mxu0
    %5186 = vmatprep.subr.mxu0 0.0
    %5187 = vmatpush1.msra.mxu0 %v4721
    %5188 = vmatprep.subr.mxu0 0.0
    %5189 = vmatpush1.msra.mxu0 %v4724
    %5190 = vmatprep.subr.mxu0 0.0
    %5191 = vmatpush1.msra.mxu0 %v4727
    %5192 = vmatprep.subr.mxu0 0.0
    %5193 = vmatpush1.msra.mxu0 %v4730
    %5194 = vmatprep.subr.mxu0 0.0
    %5195 = vmatpush1.msra.mxu0 %v4733
    %5196 = vmatprep.subr.mxu0 0.0
    %5197 = vmatpush1.msra.mxu0 %v4736
    %5198 = vmatprep.subr.mxu0 0.0
    %5199 = vmatpush1.msra.mxu0 %v4739
    %5200 = vmatprep.subr.mxu0 0.0
    %5201 = vmatpush1.msra.mxu0 %v4742
    %5202 = vmatprep.subr.mxu0 0.0
    %5203 = vmatpush1.msra.mxu0 %v4745
    %5204 = vmatprep.subr.mxu0 0.0
    %5205 = vmatpush1.msra.mxu0 %v4748
    %5206 = vmatprep.subr.mxu0 0.0
    %5207 = vmatpush1.msra.mxu0 %v4751
    %5208 = vmatprep.subr.mxu0 0.0
    %5209 = vmatpush1.msra.mxu0 %v4754
    %5210 = vmatprep.subr.mxu0 0.0
    %5211 = vmatpush1.msra.mxu0 %v4757
    %5212 = vmatprep.subr.mxu0 0.0
    %5213 = vmatpush1.msra.mxu0 %v4760
    %5214 = vmatprep.subr.mxu0 0.0
    %5215 = vmatpush1.msra.mxu0 %v4763
    %5216 = vmatprep.subr.mxu0 0.0
    %5217 = vmatpush1.msra.mxu0 %v4766
    %5218 = vmatprep.subr.mxu0 0.0
    %5219 = vmatpush1.msra.mxu0 0.0
    %5220 = vmatprep.subr.mxu0 0.0
    %5221 = vmatpush1.msra.mxu0 0.0
    %5222 = vmatprep.subr.mxu0 0.0
    %5223 = vmatpush1.msra.mxu0 0.0
    %5224 = vmatprep.subr.mxu0 0.0
    %5225 = vmatpush1.msra.mxu0 0.0
    %5226 = vmatprep.subr.mxu0 0.0
    %5227 = vmatpush1.msra.mxu0 0.0
    %5228 = vmatprep.subr.mxu0 0.0
    %5229 = vmatpush1.msra.mxu0 0.0
    %5230 = vmatprep.subr.mxu0 0.0
    %5231 = vmatpush1.msra.mxu0 0.0
    %5232 = vmatprep.subr.mxu0 0.0
    %5233 = vmatpush1.msra.mxu0 0.0
    %5234 = vmatprep.subr.mxu0 0.0
    %5235 = vmatpush1.msra.mxu0 0.0
    %5236 = vmatprep.subr.mxu0 0.0
    %5237 = vmatpush1.msra.mxu0 0.0
    %5238 = vmatprep.subr.mxu0 0.0
    %5239 = vmatpush1.msra.mxu0 0.0
    %5240 = vmatprep.subr.mxu0 0.0
    %5241 = vmatpush1.msra.mxu0 0.0
    %5242 = vmatprep.subr.mxu0 0.0
    %5243 = vmatpush1.msra.mxu0 0.0
    %5244 = vmatprep.subr.mxu0 0.0
    %5245 = vmatpush1.msra.mxu0 0.0
    %5246 = vmatprep.subr.mxu0 0.0
    %5247 = vmatpush1.msra.mxu0 0.0
    %5248 = vmatprep.subr.mxu0 0.0
    %5249 = vmatpush1.msra.mxu0 0.0
    %5250 = vmatprep.mubr.f32.mxu0 0.0
    %5251 = vmatmul.mubr.f32.gmra.mrb[0].mxu0 %v5113
    %v5252 = vpop.f32.mrb[0].mxu0
    %v5253 = vadd.f32 0.0, %v5252
    %v5254 = vpop.f32.mrb[0].mxu0
    %5255 = vdwg.mxu0
    %v5258 = vcombine.low %v5182, %v5184
    %v5260 = vunpack.c.l.s4 1983009808
    %v5261 = vunpack.c.0.s8 %v5260
    %v5262 = vlaneseq
    %v5263 = vshrl.u32 %v5262, 7
    %v5264 = vsub.s32 %v5261, %v5263
    %v5265 = vrot.slane %v5258, %v5264
    %v5267 = vadd.f32 %v5114, %v5265
    %v5268 = vxor.u32 %v5267, 2147483648
    %v5269 = vmul.f32 %v5268, 1.442695
    %v5270 = vpow.pop %v5269
    %v5271 = vadd.f32 %v5270, 1.0
    %v5272 = vrcp.pop %v5271
    %v5273 = vmul.f32 1.0, %v5272
    %v5274 = vadd.f32 %v5253, %v4716
    %v5275 = vmul.f32 %v5273, %v5274
    %v5277 = vrot.slane %v5114, 4
    %v5279 = vadd.f32 %v5277, %v5275
    %v5280 = vtanh.pop %v5279
    %v5282 = vrot.slane %v5273, 2
    %v5284 = vsub.f32 1.0, %v5282
    %v5285 = vmul.f32 %v5284, %v5280
    %v5286 = vmul.f32 %v5282, %v5113
    %v5287 = vadd.f32 %v5285, %v5286
    %v5288 = vld [vmem:[%s1063] sm:$0x3f]
    %5289 = vmatprep.subr.mxu0 %v4720
    %5290 = vmatpush1.msra.mxu0 %v4719
    %5291 = vmatprep.subr.mxu0 %v4723
    %5292 = vmatpush1.msra.mxu0 %v4722
    %5293 = vmatprep.subr.mxu0 %v4726
    %5294 = vmatpush1.msra.mxu0 %v4725
    %5295 = vmatprep.subr.mxu0 %v4729
    %5296 = vmatpush1.msra.mxu0 %v4728
    %5297 = vmatprep.subr.mxu0 %v4732
    %5298 = vmatpush1.msra.mxu0 %v4731
    %5299 = vmatprep.subr.mxu0 %v4735
    %5300 = vmatpush1.msra.mxu0 %v4734
    %5301 = vmatprep.subr.mxu0 %v4738
    %5302 = vmatpush1.msra.mxu0 %v4737
    %5303 = vmatprep.subr.mxu0 %v4741
    %5304 = vmatpush1.msra.mxu0 %v4740
    %5305 = vmatprep.subr.mxu0 %v4744
    %5306 = vmatpush1.msra.mxu0 %v4743
    %5307 = vmatprep.subr.mxu0 %v4747
    %5308 = vmatpush1.msra.mxu0 %v4746
    %5309 = vmatprep.subr.mxu0 %v4750
    %5310 = vmatpush1.msra.mxu0 %v4749
    %5311 = vmatprep.subr.mxu0 %v4753
    %5312 = vmatpush1.msra.mxu0 %v4752
    %5313 = vmatprep.subr.mxu0 %v4756
    %5314 = vmatpush1.msra.mxu0 %v4755
    %5315 = vmatprep.subr.mxu0 %v4759
    %5316 = vmatpush1.msra.mxu0 %v4758
    %5317 = vmatprep.subr.mxu0 %v4762
    %5318 = vmatpush1.msra.mxu0 %v4761
    %5319 = vmatprep.subr.mxu0 %v4765
    %5320 = vmatpush1.msra.mxu0 %v4764
    %5321 = vmatprep.subr.mxu0 0.0
    %5322 = vmatpush1.msra.mxu0 0.0
    %5323 = vmatprep.subr.mxu0 0.0
    %5324 = vmatpush1.msra.mxu0 0.0
    %5325 = vmatprep.subr.mxu0 0.0
    %5326 = vmatpush1.msra.mxu0 0.0
    %5327 = vmatprep.subr.mxu0 0.0
    %5328 = vmatpush1.msra.mxu0 0.0
    %5329 = vmatprep.subr.mxu0 0.0
    %5330 = vmatpush1.msra.mxu0 0.0
    %5331 = vmatprep.subr.mxu0 0.0
    %5332 = vmatpush1.msra.mxu0 0.0
    %5333 = vmatprep.subr.mxu0 0.0
    %5334 = vmatpush1.msra.mxu0 0.0
    %5335 = vmatprep.subr.mxu0 0.0
    %5336 = vmatpush1.msra.mxu0 0.0
    %5337 = vmatprep.subr.mxu0 0.0
    %5338 = vmatpush1.msra.mxu0 0.0
    %5339 = vmatprep.subr.mxu0 0.0
    %5340 = vmatpush1.msra.mxu0 0.0
    %5341 = vmatprep.subr.mxu0 0.0
    %5342 = vmatpush1.msra.mxu0 0.0
    %5343 = vmatprep.subr.mxu0 0.0
    %5344 = vmatpush1.msra.mxu0 0.0
    %5345 = vmatprep.subr.mxu0 0.0
    %5346 = vmatpush1.msra.mxu0 0.0
    %5347 = vmatprep.subr.mxu0 0.0
    %5348 = vmatpush1.msra.mxu0 0.0
    %5349 = vmatprep.subr.mxu0 0.0
    %5350 = vmatpush1.msra.mxu0 0.0
    %5351 = vmatprep.subr.mxu0 0.0
    %5352 = vmatpush1.msra.mxu0 0.0
    %5353 = vmatprep.mubr.f32.mxu0 0.0
    %5354 = vmatmul.mubr.f32.gmra.mrb[0].mxu0 %v5287
    %v5355 = vpop.f32.mrb[0].mxu0
    %v5356 = vadd.f32 0.0, %v5355
    %v5357 = vpop.f32.mrb[0].mxu0
    %v5358 = vadd.f32 0.0, %v5357
    %5359 = vdwg.mxu0
    %5360 = vmatprep.subr.mxu0 0.0
    %5361 = vmatpush1.msra.mxu0 %v4721
    %5362 = vmatprep.subr.mxu0 0.0
    %5363 = vmatpush1.msra.mxu0 %v4724
    %5364 = vmatprep.subr.mxu0 0.0
    %5365 = vmatpush1.msra.mxu0 %v4727
    %5366 = vmatprep.subr.mxu0 0.0
    %5367 = vmatpush1.msra.mxu0 %v4730
    %5368 = vmatprep.subr.mxu0 0.0
    %5369 = vmatpush1.msra.mxu0 %v4733
    %5370 = vmatprep.subr.mxu0 0.0
    %5371 = vmatpush1.msra.mxu0 %v4736
    %5372 = vmatprep.subr.mxu0 0.0
    %5373 = vmatpush1.msra.mxu0 %v4739
    %5374 = vmatprep.subr.mxu0 0.0
    %5375 = vmatpush1.msra.mxu0 %v4742
    %5376 = vmatprep.subr.mxu0 0.0
    %5377 = vmatpush1.msra.mxu0 %v4745
    %5378 = vmatprep.subr.mxu0 0.0
    %5379 = vmatpush1.msra.mxu0 %v4748
    %5380 = vmatprep.subr.mxu0 0.0
    %5381 = vmatpush1.msra.mxu0 %v4751
    %5382 = vmatprep.subr.mxu0 0.0
    %5383 = vmatpush1.msra.mxu0 %v4754
    %5384 = vmatprep.subr.mxu0 0.0
    %5385 = vmatpush1.msra.mxu0 %v4757
    %5386 = vmatprep.subr.mxu0 0.0
    %5387 = vmatpush1.msra.mxu0 %v4760
    %5388 = vmatprep.subr.mxu0 0.0
    %5389 = vmatpush1.msra.mxu0 %v4763
    %5390 = vmatprep.subr.mxu0 0.0
    %5391 = vmatpush1.msra.mxu0 %v4766
    %5392 = vmatprep.subr.mxu0 0.0
    %5393 = vmatpush1.msra.mxu0 0.0
    %5394 = vmatprep.subr.mxu0 0.0
    %5395 = vmatpush1.msra.mxu0 0.0
    %5396 = vmatprep.subr.mxu0 0.0
    %5397 = vmatpush1.msra.mxu0 0.0
    %5398 = vmatprep.subr.mxu0 0.0
    %5399 = vmatpush1.msra.mxu0 0.0
    %5400 = vmatprep.subr.mxu0 0.0
    %5401 = vmatpush1.msra.mxu0 0.0
    %5402 = vmatprep.subr.mxu0 0.0
    %5403 = vmatpush1.msra.mxu0 0.0
    %5404 = vmatprep.subr.mxu0 0.0
    %5405 = vmatpush1.msra.mxu0 0.0
    %5406 = vmatprep.subr.mxu0 0.0
    %5407 = vmatpush1.msra.mxu0 0.0
    %5408 = vmatprep.subr.mxu0 0.0
    %5409 = vmatpush1.msra.mxu0 0.0
    %5410 = vmatprep.subr.mxu0 0.0
    %5411 = vmatpush1.msra.mxu0 0.0
    %5412 = vmatprep.subr.mxu0 0.0
    %5413 = vmatpush1.msra.mxu0 0.0
    %5414 = vmatprep.subr.mxu0 0.0
    %5415 = vmatpush1.msra.mxu0 0.0
    %5416 = vmatprep.subr.mxu0 0.0
    %5417 = vmatpush1.msra.mxu0 0.0
    %5418 = vmatprep.subr.mxu0 0.0
    %5419 = vmatpush1.msra.mxu0 0.0
    %5420 = vmatprep.subr.mxu0 0.0
    %5421 = vmatpush1.msra.mxu0 0.0
    %5422 = vmatprep.subr.mxu0 0.0
    %5423 = vmatpush1.msra.mxu0 0.0
    %5424 = vmatprep.mubr.f32.mxu0 0.0
    %5425 = vmatmul.mubr.f32.gmra.mrb[0].mxu0 %v5287
    %v5426 = vpop.f32.mrb[0].mxu0
    %v5427 = vadd.f32 0.0, %v5426
    %v5428 = vpop.f32.mrb[0].mxu0
    %5429 = vdwg.mxu0
    %v5432 = vcombine.low %v5356, %v5358
    %v5434 = vunpack.c.l.s4 1983009808
    %v5435 = vunpack.c.0.s8 %v5434
    %v5436 = vlaneseq
    %v5437 = vshrl.u32 %v5436, 7
    %v5438 = vsub.s32 %v5435, %v5437
    %v5439 = vrot.slane %v5432, %v5438
    %v5441 = vadd.f32 %v5288, %v5439
    %v5442 = vxor.u32 %v5441, 2147483648
    %v5443 = vmul.f32 %v5442, 1.442695
    %v5444 = vpow.pop %v5443
    %v5445 = vadd.f32 %v5444, 1.0
    %v5446 = vrcp.pop %v5445
    %v5447 = vmul.f32 1.0, %v5446
    %v5448 = vadd.f32 %v5427, %v4716
    %v5449 = vmul.f32 %v5447, %v5448
    %v5451 = vrot.slane %v5288, 4
    %v5453 = vadd.f32 %v5451, %v5449
    %v5454 = vtanh.pop %v5453
    %v5456 = vrot.slane %v5447, 2
    %v5458 = vsub.f32 1.0, %v5456
    %v5459 = vmul.f32 %v5458, %v5454
    %v5460 = vmul.f32 %v5456, %v5287
    %v5461 = vadd.f32 %v5459, %v5460
    %v5462 = vld [vmem:[%s1288] sm:$0x3f]
    %5463 = vmatprep.subr.mxu0 %v4720
    %5464 = vmatpush1.msra.mxu0 %v4719
    %5465 = vmatprep.subr.mxu0 %v4723
    %5466 = vmatpush1.msra.mxu0 %v4722
    %5467 = vmatprep.subr.mxu0 %v4726
    %5468 = vmatpush1.msra.mxu0 %v4725
    %5469 = vmatprep.subr.mxu0 %v4729
    %5470 = vmatpush1.msra.mxu0 %v4728
    %5471 = vmatprep.subr.mxu0 %v4732
    %5472 = vmatpush1.msra.mxu0 %v4731
    %5473 = vmatprep.subr.mxu0 %v4735
    %5474 = vmatpush1.msra.mxu0 %v4734
    %5475 = vmatprep.subr.mxu0 %v4738
    %5476 = vmatpush1.msra.mxu0 %v4737
    %5477 = vmatprep.subr.mxu0 %v4741
    %5478 = vmatpush1.msra.mxu0 %v4740
    %5479 = vmatprep.subr.mxu0 %v4744
    %5480 = vmatpush1.msra.mxu0 %v4743
    %5481 = vmatprep.subr.mxu0 %v4747
    %5482 = vmatpush1.msra.mxu0 %v4746
    %5483 = vmatprep.subr.mxu0 %v4750
    %5484 = vmatpush1.msra.mxu0 %v4749
    %5485 = vmatprep.subr.mxu0 %v4753
    %5486 = vmatpush1.msra.mxu0 %v4752
    %5487 = vmatprep.subr.mxu0 %v4756
    %5488 = vmatpush1.msra.mxu0 %v4755
    %5489 = vmatprep.subr.mxu0 %v4759
    %5490 = vmatpush1.msra.mxu0 %v4758
    %5491 = vmatprep.subr.mxu0 %v4762
    %5492 = vmatpush1.msra.mxu0 %v4761
    %5493 = vmatprep.subr.mxu0 %v4765
    %5494 = vmatpush1.msra.mxu0 %v4764
    %5495 = vmatprep.subr.mxu0 0.0
    %5496 = vmatpush1.msra.mxu0 0.0
    %5497 = vmatprep.subr.mxu0 0.0
    %5498 = vmatpush1.msra.mxu0 0.0
    %5499 = vmatprep.subr.mxu0 0.0
    %5500 = vmatpush1.msra.mxu0 0.0
    %5501 = vmatprep.subr.mxu0 0.0
    %5502 = vmatpush1.msra.mxu0 0.0
    %5503 = vmatprep.subr.mxu0 0.0
    %5504 = vmatpush1.msra.mxu0 0.0
    %5505 = vmatprep.subr.mxu0 0.0
    %5506 = vmatpush1.msra.mxu0 0.0
    %5507 = vmatprep.subr.mxu0 0.0
    %5508 = vmatpush1.msra.mxu0 0.0
    %5509 = vmatprep.subr.mxu0 0.0
    %5510 = vmatpush1.msra.mxu0 0.0
    %5511 = vmatprep.subr.mxu0 0.0
    %5512 = vmatpush1.msra.mxu0 0.0
    %5513 = vmatprep.subr.mxu0 0.0
    %5514 = vmatpush1.msra.mxu0 0.0
    %5515 = vmatprep.subr.mxu0 0.0
    %5516 = vmatpush1.msra.mxu0 0.0
    %5517 = vmatprep.subr.mxu0 0.0
    %5518 = vmatpush1.msra.mxu0 0.0
    %5519 = vmatprep.subr.mxu0 0.0
    %5520 = vmatpush1.msra.mxu0 0.0
    %5521 = vmatprep.subr.mxu0 0.0
    %5522 = vmatpush1.msra.mxu0 0.0
    %5523 = vmatprep.subr.mxu0 0.0
    %5524 = vmatpush1.msra.mxu0 0.0
    %5525 = vmatprep.subr.mxu0 0.0
    %5526 = vmatpush1.msra.mxu0 0.0
    %5527 = vmatprep.mubr.f32.mxu0 0.0
    %5528 = vmatmul.mubr.f32.gmra.mrb[0].mxu0 %v5461
    %v5529 = vpop.f32.mrb[0].mxu0
    %v5530 = vadd.f32 0.0, %v5529
    %v5531 = vpop.f32.mrb[0].mxu0
    %v5532 = vadd.f32 0.0, %v5531
    %5533 = vdwg.mxu0
    %5534 = vmatprep.subr.mxu0 0.0
    %5535 = vmatpush1.msra.mxu0 %v4721
    %5536 = vmatprep.subr.mxu0 0.0
    %5537 = vmatpush1.msra.mxu0 %v4724
    %5538 = vmatprep.subr.mxu0 0.0
    %5539 = vmatpush1.msra.mxu0 %v4727
    %5540 = vmatprep.subr.mxu0 0.0
    %5541 = vmatpush1.msra.mxu0 %v4730
    %5542 = vmatprep.subr.mxu0 0.0
    %5543 = vmatpush1.msra.mxu0 %v4733
    %5544 = vmatprep.subr.mxu0 0.0
    %5545 = vmatpush1.msra.mxu0 %v4736
    %5546 = vmatprep.subr.mxu0 0.0
    %5547 = vmatpush1.msra.mxu0 %v4739
    %5548 = vmatprep.subr.mxu0 0.0
    %5549 = vmatpush1.msra.mxu0 %v4742
    %5550 = vmatprep.subr.mxu0 0.0
    %5551 = vmatpush1.msra.mxu0 %v4745
    %5552 = vmatprep.subr.mxu0 0.0
    %5553 = vmatpush1.msra.mxu0 %v4748
    %5554 = vmatprep.subr.mxu0 0.0
    %5555 = vmatpush1.msra.mxu0 %v4751
    %5556 = vmatprep.subr.mxu0 0.0
    %5557 = vmatpush1.msra.mxu0 %v4754
    %5558 = vmatprep.subr.mxu0 0.0
    %5559 = vmatpush1.msra.mxu0 %v4757
    %5560 = vmatprep.subr.mxu0 0.0
    %5561 = vmatpush1.msra.mxu0 %v4760
    %5562 = vmatprep.subr.mxu0 0.0
    %5563 = vmatpush1.msra.mxu0 %v4763
    %5564 = vmatprep.subr.mxu0 0.0
    %5565 = vmatpush1.msra.mxu0 %v4766
    %5566 = vmatprep.subr.mxu0 0.0
    %5567 = vmatpush1.msra.mxu0 0.0
    %5568 = vmatprep.subr.mxu0 0.0
    %5569 = vmatpush1.msra.mxu0 0.0
    %5570 = vmatprep.subr.mxu0 0.0
    %5571 = vmatpush1.msra.mxu0 0.0
    %5572 = vmatprep.subr.mxu0 0.0
    %5573 = vmatpush1.msra.mxu0 0.0
    %5574 = vmatprep.subr.mxu0 0.0
    %5575 = vmatpush1.msra.mxu0 0.0
    %5576 = vmatprep.subr.mxu0 0.0
    %5577 = vmatpush1.msra.mxu0 0.0
    %5578 = vmatprep.subr.mxu0 0.0
    %5579 = vmatpush1.msra.mxu0 0.0
    %5580 = vmatprep.subr.mxu0 0.0
    %5581 = vmatpush1.msra.mxu0 0.0
    %5582 = vmatprep.subr.mxu0 0.0
    %5583 = vmatpush1.msra.mxu0 0.0
    %5584 = vmatprep.subr.mxu0 0.0
    %5585 = vmatpush1.msra.mxu0 0.0
    %5586 = vmatprep.subr.mxu0 0.0
    %5587 = vmatpush1.msra.mxu0 0.0
    %5588 = vmatprep.subr.mxu0 0.0
    %5589 = vmatpush1.msra.mxu0 0.0
    %5590 = vmatprep.subr.mxu0 0.0
    %5591 = vmatpush1.msra.mxu0 0.0
    %5592 = vmatprep.subr.mxu0 0.0
    %5593 = vmatpush1.msra.mxu0 0.0
    %5594 = vmatprep.subr.mxu0 0.0
    %5595 = vmatpush1.msra.mxu0 0.0
    %5596 = vmatprep.subr.mxu0 0.0
    %5597 = vmatpush1.msra.mxu0 0.0
    %5598 = vmatprep.mubr.f32.mxu0 0.0
    %5599 = vmatmul.mubr.f32.gmra.mrb[0].mxu0 %v5461
    %v5600 = vpop.f32.mrb[0].mxu0
    %v5601 = vadd.f32 0.0, %v5600
    %v5602 = vpop.f32.mrb[0].mxu0
    %5603 = vdwg.mxu0
    %v5606 = vcombine.low %v5530, %v5532
    %v5608 = vunpack.c.l.s4 1983009808
    %v5609 = vunpack.c.0.s8 %v5608
    %v5610 = vlaneseq
    %v5611 = vshrl.u32 %v5610, 7
    %v5612 = vsub.s32 %v5609, %v5611
    %v5613 = vrot.slane %v5606, %v5612
    %v5615 = vadd.f32 %v5462, %v5613
    %v5616 = vxor.u32 %v5615, 2147483648
    %v5617 = vmul.f32 %v5616, 1.442695
    %v5618 = vpow.pop %v5617
    %v5619 = vadd.f32 %v5618, 1.0
    %v5620 = vrcp.pop %v5619
    %v5621 = vmul.f32 1.0, %v5620
    %v5622 = vadd.f32 %v5601, %v4716
    %v5623 = vmul.f32 %v5621, %v5622
    %v5625 = vrot.slane %v5462, 4
    %v5627 = vadd.f32 %v5625, %v5623
    %v5628 = vtanh.pop %v5627
    %v5630 = vrot.slane %v5621, 2
    %v5632 = vsub.f32 1.0, %v5630
    %v5633 = vmul.f32 %v5632, %v5628
    %v5634 = vmul.f32 %v5630, %v5461
    %v5635 = vadd.f32 %v5633, %v5634
    %v5636 = vld [vmem:[%s1513] sm:$0x3f]
    %5637 = vmatprep.subr.mxu0 %v4720
    %5638 = vmatpush1.msra.mxu0 %v4719
    %5639 = vmatprep.subr.mxu0 %v4723
    %5640 = vmatpush1.msra.mxu0 %v4722
    %5641 = vmatprep.subr.mxu0 %v4726
    %5642 = vmatpush1.msra.mxu0 %v4725
    %5643 = vmatprep.subr.mxu0 %v4729
    %5644 = vmatpush1.msra.mxu0 %v4728
    %5645 = vmatprep.subr.mxu0 %v4732
    %5646 = vmatpush1.msra.mxu0 %v4731
    %5647 = vmatprep.subr.mxu0 %v4735
    %5648 = vmatpush1.msra.mxu0 %v4734
    %5649 = vmatprep.subr.mxu0 %v4738
    %5650 = vmatpush1.msra.mxu0 %v4737
    %5651 = vmatprep.subr.mxu0 %v4741
    %5652 = vmatpush1.msra.mxu0 %v4740
    %5653 = vmatprep.subr.mxu0 %v4744
    %5654 = vmatpush1.msra.mxu0 %v4743
    %5655 = vmatprep.subr.mxu0 %v4747
    %5656 = vmatpush1.msra.mxu0 %v4746
    %5657 = vmatprep.subr.mxu0 %v4750
    %5658 = vmatpush1.msra.mxu0 %v4749
    %5659 = vmatprep.subr.mxu0 %v4753
    %5660 = vmatpush1.msra.mxu0 %v4752
    %5661 = vmatprep.subr.mxu0 %v4756
    %5662 = vmatpush1.msra.mxu0 %v4755
    %5663 = vmatprep.subr.mxu0 %v4759
    %5664 = vmatpush1.msra.mxu0 %v4758
    %5665 = vmatprep.subr.mxu0 %v4762
    %5666 = vmatpush1.msra.mxu0 %v4761
    %5667 = vmatprep.subr.mxu0 %v4765
    %5668 = vmatpush1.msra.mxu0 %v4764
    %5669 = vmatprep.subr.mxu0 0.0
    %5670 = vmatpush1.msra.mxu0 0.0
    %5671 = vmatprep.subr.mxu0 0.0
    %5672 = vmatpush1.msra.mxu0 0.0
    %5673 = vmatprep.subr.mxu0 0.0
    %5674 = vmatpush1.msra.mxu0 0.0
    %5675 = vmatprep.subr.mxu0 0.0
    %5676 = vmatpush1.msra.mxu0 0.0
    %5677 = vmatprep.subr.mxu0 0.0
    %5678 = vmatpush1.msra.mxu0 0.0
    %5679 = vmatprep.subr.mxu0 0.0
    %5680 = vmatpush1.msra.mxu0 0.0
    %5681 = vmatprep.subr.mxu0 0.0
    %5682 = vmatpush1.msra.mxu0 0.0
    %5683 = vmatprep.subr.mxu0 0.0
    %5684 = vmatpush1.msra.mxu0 0.0
    %5685 = vmatprep.subr.mxu0 0.0
    %5686 = vmatpush1.msra.mxu0 0.0
    %5687 = vmatprep.subr.mxu0 0.0
    %5688 = vmatpush1.msra.mxu0 0.0
    %5689 = vmatprep.subr.mxu0 0.0
    %5690 = vmatpush1.msra.mxu0 0.0
    %5691 = vmatprep.subr.mxu0 0.0
    %5692 = vmatpush1.msra.mxu0 0.0
    %5693 = vmatprep.subr.mxu0 0.0
    %5694 = vmatpush1.msra.mxu0 0.0
    %5695 = vmatprep.subr.mxu0 0.0
    %5696 = vmatpush1.msra.mxu0 0.0
    %5697 = vmatprep.subr.mxu0 0.0
    %5698 = vmatpush1.msra.mxu0 0.0
    %5699 = vmatprep.subr.mxu0 0.0
    %5700 = vmatpush1.msra.mxu0 0.0
    %5701 = vmatprep.mubr.f32.mxu0 0.0
    %5702 = vmatmul.mubr.f32.gmra.mrb[0].mxu0 %v5635
    %v5703 = vpop.f32.mrb[0].mxu0
    %v5704 = vadd.f32 0.0, %v5703
    %v5705 = vpop.f32.mrb[0].mxu0
    %v5706 = vadd.f32 0.0, %v5705
    %5707 = vdwg.mxu0
    %5708 = vmatprep.subr.mxu0 0.0
    %5709 = vmatpush1.msra.mxu0 %v4721
    %5710 = vmatprep.subr.mxu0 0.0
    %5711 = vmatpush1.msra.mxu0 %v4724
    %5712 = vmatprep.subr.mxu0 0.0
    %5713 = vmatpush1.msra.mxu0 %v4727
    %5714 = vmatprep.subr.mxu0 0.0
    %5715 = vmatpush1.msra.mxu0 %v4730
    %5716 = vmatprep.subr.mxu0 0.0
    %5717 = vmatpush1.msra.mxu0 %v4733
    %5718 = vmatprep.subr.mxu0 0.0
    %5719 = vmatpush1.msra.mxu0 %v4736
    %5720 = vmatprep.subr.mxu0 0.0
    %5721 = vmatpush1.msra.mxu0 %v4739
    %5722 = vmatprep.subr.mxu0 0.0
    %5723 = vmatpush1.msra.mxu0 %v4742
    %5724 = vmatprep.subr.mxu0 0.0
    %5725 = vmatpush1.msra.mxu0 %v4745
    %5726 = vmatprep.subr.mxu0 0.0
    %5727 = vmatpush1.msra.mxu0 %v4748
    %5728 = vmatprep.subr.mxu0 0.0
    %5729 = vmatpush1.msra.mxu0 %v4751
    %5730 = vmatprep.subr.mxu0 0.0
    %5731 = vmatpush1.msra.mxu0 %v4754
    %5732 = vmatprep.subr.mxu0 0.0
    %5733 = vmatpush1.msra.mxu0 %v4757
    %5734 = vmatprep.subr.mxu0 0.0
    %5735 = vmatpush1.msra.mxu0 %v4760
    %5736 = vmatprep.subr.mxu0 0.0
    %5737 = vmatpush1.msra.mxu0 %v4763
    %5738 = vmatprep.subr.mxu0 0.0
    %5739 = vmatpush1.msra.mxu0 %v4766
    %5740 = vmatprep.subr.mxu0 0.0
    %5741 = vmatpush1.msra.mxu0 0.0
    %5742 = vmatprep.subr.mxu0 0.0
    %5743 = vmatpush1.msra.mxu0 0.0
    %5744 = vmatprep.subr.mxu0 0.0
    %5745 = vmatpush1.msra.mxu0 0.0
    %5746 = vmatprep.subr.mxu0 0.0
    %5747 = vmatpush1.msra.mxu0 0.0
    %5748 = vmatprep.subr.mxu0 0.0
    %5749 = vmatpush1.msra.mxu0 0.0
    %5750 = vmatprep.subr.mxu0 0.0
    %5751 = vmatpush1.msra.mxu0 0.0
    %5752 = vmatprep.subr.mxu0 0.0
    %5753 = vmatpush1.msra.mxu0 0.0
    %5754 = vmatprep.subr.mxu0 0.0
    %5755 = vmatpush1.msra.mxu0 0.0
    %5756 = vmatprep.subr.mxu0 0.0
    %5757 = vmatpush1.msra.mxu0 0.0
    %5758 = vmatprep.subr.mxu0 0.0
    %5759 = vmatpush1.msra.mxu0 0.0
    %5760 = vmatprep.subr.mxu0 0.0
    %5761 = vmatpush1.msra.mxu0 0.0
    %5762 = vmatprep.subr.mxu0 0.0
    %5763 = vmatpush1.msra.mxu0 0.0
    %5764 = vmatprep.subr.mxu0 0.0
    %5765 = vmatpush1.msra.mxu0 0.0
    %5766 = vmatprep.subr.mxu0 0.0
    %5767 = vmatpush1.msra.mxu0 0.0
    %5768 = vmatprep.subr.mxu0 0.0
    %5769 = vmatpush1.msra.mxu0 0.0
    %5770 = vmatprep.subr.mxu0 0.0
    %5771 = vmatpush1.msra.mxu0 0.0
    %5772 = vmatprep.mubr.f32.mxu0 0.0
    %5773 = vmatmul.mubr.f32.gmra.mrb[0].mxu0 %v5635
    %v5774 = vpop.f32.mrb[0].mxu0
    %v5775 = vadd.f32 0.0, %v5774
    %v5776 = vpop.f32.mrb[0].mxu0
    %5777 = vdwg.mxu0
    %v5780 = vcombine.low %v5704, %v5706
    %v5782 = vunpack.c.l.s4 1983009808
    %v5783 = vunpack.c.0.s8 %v5782
    %v5784 = vlaneseq
    %v5785 = vshrl.u32 %v5784, 7
    %v5786 = vsub.s32 %v5783, %v5785
    %v5787 = vrot.slane %v5780, %v5786
    %v5789 = vadd.f32 %v5636, %v5787
    %v5790 = vxor.u32 %v5789, 2147483648
    %v5791 = vmul.f32 %v5790, 1.442695
    %v5792 = vpow.pop %v5791
    %v5793 = vadd.f32 %v5792, 1.0
    %v5794 = vrcp.pop %v5793
    %v5795 = vmul.f32 1.0, %v5794
    %v5796 = vadd.f32 %v5775, %v4716
    %v5797 = vmul.f32 %v5795, %v5796
    %v5799 = vrot.slane %v5636, 4
    %v5801 = vadd.f32 %v5799, %v5797
    %v5802 = vtanh.pop %v5801
    %v5804 = vrot.slane %v5795, 2
    %v5806 = vsub.f32 1.0, %v5804
    %v5807 = vmul.f32 %v5806, %v5802
    %v5808 = vmul.f32 %v5804, %v5635
    %v5809 = vadd.f32 %v5807, %v5808
    %v5810 = vld [vmem:[%s1738] sm:$0x3f]
    %5811 = vmatprep.subr.mxu0 %v4720
    %5812 = vmatpush1.msra.mxu0 %v4719
    %5813 = vmatprep.subr.mxu0 %v4723
    %5814 = vmatpush1.msra.mxu0 %v4722
    %5815 = vmatprep.subr.mxu0 %v4726
    %5816 = vmatpush1.msra.mxu0 %v4725
    %5817 = vmatprep.subr.mxu0 %v4729
    %5818 = vmatpush1.msra.mxu0 %v4728
    %5819 = vmatprep.subr.mxu0 %v4732
    %5820 = vmatpush1.msra.mxu0 %v4731
    %5821 = vmatprep.subr.mxu0 %v4735
    %5822 = vmatpush1.msra.mxu0 %v4734
    %5823 = vmatprep.subr.mxu0 %v4738
    %5824 = vmatpush1.msra.mxu0 %v4737
    %5825 = vmatprep.subr.mxu0 %v4741
    %5826 = vmatpush1.msra.mxu0 %v4740
    %5827 = vmatprep.subr.mxu0 %v4744
    %5828 = vmatpush1.msra.mxu0 %v4743
    %5829 = vmatprep.subr.mxu0 %v4747
    %5830 = vmatpush1.msra.mxu0 %v4746
    %5831 = vmatprep.subr.mxu0 %v4750
    %5832 = vmatpush1.msra.mxu0 %v4749
    %5833 = vmatprep.subr.mxu0 %v4753
    %5834 = vmatpush1.msra.mxu0 %v4752
    %5835 = vmatprep.subr.mxu0 %v4756
    %5836 = vmatpush1.msra.mxu0 %v4755
    %5837 = vmatprep.subr.mxu0 %v4759
    %5838 = vmatpush1.msra.mxu0 %v4758
    %5839 = vmatprep.subr.mxu0 %v4762
    %5840 = vmatpush1.msra.mxu0 %v4761
    %5841 = vmatprep.subr.mxu0 %v4765
    %5842 = vmatpush1.msra.mxu0 %v4764
    %5843 = vmatprep.subr.mxu0 0.0
    %5844 = vmatpush1.msra.mxu0 0.0
    %5845 = vmatprep.subr.mxu0 0.0
    %5846 = vmatpush1.msra.mxu0 0.0
    %5847 = vmatprep.subr.mxu0 0.0
    %5848 = vmatpush1.msra.mxu0 0.0
    %5849 = vmatprep.subr.mxu0 0.0
    %5850 = vmatpush1.msra.mxu0 0.0
    %5851 = vmatprep.subr.mxu0 0.0
    %5852 = vmatpush1.msra.mxu0 0.0
    %5853 = vmatprep.subr.mxu0 0.0
    %5854 = vmatpush1.msra.mxu0 0.0
    %5855 = vmatprep.subr.mxu0 0.0
    %5856 = vmatpush1.msra.mxu0 0.0
    %5857 = vmatprep.subr.mxu0 0.0
    %5858 = vmatpush1.msra.mxu0 0.0
    %5859 = vmatprep.subr.mxu0 0.0
    %5860 = vmatpush1.msra.mxu0 0.0
    %5861 = vmatprep.subr.mxu0 0.0
    %5862 = vmatpush1.msra.mxu0 0.0
    %5863 = vmatprep.subr.mxu0 0.0
    %5864 = vmatpush1.msra.mxu0 0.0
    %5865 = vmatprep.subr.mxu0 0.0
    %5866 = vmatpush1.msra.mxu0 0.0
    %5867 = vmatprep.subr.mxu0 0.0
    %5868 = vmatpush1.msra.mxu0 0.0
    %5869 = vmatprep.subr.mxu0 0.0
    %5870 = vmatpush1.msra.mxu0 0.0
    %5871 = vmatprep.subr.mxu0 0.0
    %5872 = vmatpush1.msra.mxu0 0.0
    %5873 = vmatprep.subr.mxu0 0.0
    %5874 = vmatpush1.msra.mxu0 0.0
    %5875 = vmatprep.mubr.f32.mxu0 0.0
    %5876 = vmatmul.mubr.f32.gmra.mrb[0].mxu0 %v5809
    %v5877 = vpop.f32.mrb[0].mxu0
    %v5878 = vadd.f32 0.0, %v5877
    %v5879 = vpop.f32.mrb[0].mxu0
    %v5880 = vadd.f32 0.0, %v5879
    %5881 = vdwg.mxu0
    %5882 = vmatprep.subr.mxu0 0.0
    %5883 = vmatpush1.msra.mxu0 %v4721
    %5884 = vmatprep.subr.mxu0 0.0
    %5885 = vmatpush1.msra.mxu0 %v4724
    %5886 = vmatprep.subr.mxu0 0.0
    %5887 = vmatpush1.msra.mxu0 %v4727
    %5888 = vmatprep.subr.mxu0 0.0
    %5889 = vmatpush1.msra.mxu0 %v4730
    %5890 = vmatprep.subr.mxu0 0.0
    %5891 = vmatpush1.msra.mxu0 %v4733
    %5892 = vmatprep.subr.mxu0 0.0
    %5893 = vmatpush1.msra.mxu0 %v4736
    %5894 = vmatprep.subr.mxu0 0.0
    %5895 = vmatpush1.msra.mxu0 %v4739
    %5896 = vmatprep.subr.mxu0 0.0
    %5897 = vmatpush1.msra.mxu0 %v4742
    %5898 = vmatprep.subr.mxu0 0.0
    %5899 = vmatpush1.msra.mxu0 %v4745
    %5900 = vmatprep.subr.mxu0 0.0
    %5901 = vmatpush1.msra.mxu0 %v4748
    %5902 = vmatprep.subr.mxu0 0.0
    %5903 = vmatpush1.msra.mxu0 %v4751
    %5904 = vmatprep.subr.mxu0 0.0
    %5905 = vmatpush1.msra.mxu0 %v4754
    %5906 = vmatprep.subr.mxu0 0.0
    %5907 = vmatpush1.msra.mxu0 %v4757
    %5908 = vmatprep.subr.mxu0 0.0
    %5909 = vmatpush1.msra.mxu0 %v4760
    %5910 = vmatprep.subr.mxu0 0.0
    %5911 = vmatpush1.msra.mxu0 %v4763
    %5912 = vmatprep.subr.mxu0 0.0
    %5913 = vmatpush1.msra.mxu0 %v4766
    %5914 = vmatprep.subr.mxu0 0.0
    %5915 = vmatpush1.msra.mxu0 0.0
    %5916 = vmatprep.subr.mxu0 0.0
    %5917 = vmatpush1.msra.mxu0 0.0
    %5918 = vmatprep.subr.mxu0 0.0
    %5919 = vmatpush1.msra.mxu0 0.0
    %5920 = vmatprep.subr.mxu0 0.0
    %5921 = vmatpush1.msra.mxu0 0.0
    %5922 = vmatprep.subr.mxu0 0.0
    %5923 = vmatpush1.msra.mxu0 0.0
    %5924 = vmatprep.subr.mxu0 0.0
    %5925 = vmatpush1.msra.mxu0 0.0
    %5926 = vmatprep.subr.mxu0 0.0
    %5927 = vmatpush1.msra.mxu0 0.0
    %5928 = vmatprep.subr.mxu0 0.0
    %5929 = vmatpush1.msra.mxu0 0.0
    %5930 = vmatprep.subr.mxu0 0.0
    %5931 = vmatpush1.msra.mxu0 0.0
    %5932 = vmatprep.subr.mxu0 0.0
    %5933 = vmatpush1.msra.mxu0 0.0
    %5934 = vmatprep.subr.mxu0 0.0
    %5935 = vmatpush1.msra.mxu0 0.0
    %5936 = vmatprep.subr.mxu0 0.0
    %5937 = vmatpush1.msra.mxu0 0.0
    %5938 = vmatprep.subr.mxu0 0.0
    %5939 = vmatpush1.msra.mxu0 0.0
    %5940 = vmatprep.subr.mxu0 0.0
    %5941 = vmatpush1.msra.mxu0 0.0
    %5942 = vmatprep.subr.mxu0 0.0
    %5943 = vmatpush1.msra.mxu0 0.0
    %5944 = vmatprep.subr.mxu0 0.0
    %5945 = vmatpush1.msra.mxu0 0.0
    %5946 = vmatprep.mubr.f32.mxu0 0.0
    %5947 = vmatmul.mubr.f32.gmra.mrb[0].mxu0 %v5809
    %v5948 = vpop.f32.mrb[0].mxu0
    %v5949 = vadd.f32 0.0, %v5948
    %v5950 = vpop.f32.mrb[0].mxu0
    %5951 = vdwg.mxu0
    %v5954 = vcombine.low %v5878, %v5880
    %v5956 = vunpack.c.l.s4 1983009808
    %v5957 = vunpack.c.0.s8 %v5956
    %v5958 = vlaneseq
    %v5959 = vshrl.u32 %v5958, 7
    %v5960 = vsub.s32 %v5957, %v5959
    %v5961 = vrot.slane %v5954, %v5960
    %v5963 = vadd.f32 %v5810, %v5961
    %v5964 = vxor.u32 %v5963, 2147483648
    %v5965 = vmul.f32 %v5964, 1.442695
    %v5966 = vpow.pop %v5965
    %v5967 = vadd.f32 %v5966, 1.0
    %v5968 = vrcp.pop %v5967
    %v5969 = vmul.f32 1.0, %v5968
    %v5970 = vadd.f32 %v5949, %v4716
    %v5971 = vmul.f32 %v5969, %v5970
    %v5973 = vrot.slane %v5810, 4
    %v5975 = vadd.f32 %v5973, %v5971
    %v5976 = vtanh.pop %v5975
    %v5978 = vrot.slane %v5969, 2
    %v5980 = vsub.f32 1.0, %v5978
    %v5981 = vmul.f32 %v5980, %v5976
    %v5982 = vmul.f32 %v5978, %v5809
    %v5983 = vadd.f32 %v5981, %v5982
    %v5984 = vld [vmem:[%s1963] sm:$0x3f]
    %5985 = vmatprep.subr.mxu0 %v4720
    %5986 = vmatpush1.msra.mxu0 %v4719
    %5987 = vmatprep.subr.mxu0 %v4723
    %5988 = vmatpush1.msra.mxu0 %v4722
    %5989 = vmatprep.subr.mxu0 %v4726
    %5990 = vmatpush1.msra.mxu0 %v4725
    %5991 = vmatprep.subr.mxu0 %v4729
    %5992 = vmatpush1.msra.mxu0 %v4728
    %5993 = vmatprep.subr.mxu0 %v4732
    %5994 = vmatpush1.msra.mxu0 %v4731
    %5995 = vmatprep.subr.mxu0 %v4735
    %5996 = vmatpush1.msra.mxu0 %v4734
    %5997 = vmatprep.subr.mxu0 %v4738
    %5998 = vmatpush1.msra.mxu0 %v4737
    %5999 = vmatprep.subr.mxu0 %v4741
    %6000 = vmatpush1.msra.mxu0 %v4740
    %6001 = vmatprep.subr.mxu0 %v4744
    %6002 = vmatpush1.msra.mxu0 %v4743
    %6003 = vmatprep.subr.mxu0 %v4747
    %6004 = vmatpush1.msra.mxu0 %v4746
    %6005 = vmatprep.subr.mxu0 %v4750
    %6006 = vmatpush1.msra.mxu0 %v4749
    %6007 = vmatprep.subr.mxu0 %v4753
    %6008 = vmatpush1.msra.mxu0 %v4752
    %6009 = vmatprep.subr.mxu0 %v4756
    %6010 = vmatpush1.msra.mxu0 %v4755
    %6011 = vmatprep.subr.mxu0 %v4759
    %6012 = vmatpush1.msra.mxu0 %v4758
    %6013 = vmatprep.subr.mxu0 %v4762
    %6014 = vmatpush1.msra.mxu0 %v4761
    %6015 = vmatprep.subr.mxu0 %v4765
    %6016 = vmatpush1.msra.mxu0 %v4764
    %6017 = vmatprep.subr.mxu0 0.0
    %6018 = vmatpush1.msra.mxu0 0.0
    %6019 = vmatprep.subr.mxu0 0.0
    %6020 = vmatpush1.msra.mxu0 0.0
    %6021 = vmatprep.subr.mxu0 0.0
    %6022 = vmatpush1.msra.mxu0 0.0
    %6023 = vmatprep.subr.mxu0 0.0
    %6024 = vmatpush1.msra.mxu0 0.0
    %6025 = vmatprep.subr.mxu0 0.0
    %6026 = vmatpush1.msra.mxu0 0.0
    %6027 = vmatprep.subr.mxu0 0.0
    %6028 = vmatpush1.msra.mxu0 0.0
    %6029 = vmatprep.subr.mxu0 0.0
    %6030 = vmatpush1.msra.mxu0 0.0
    %6031 = vmatprep.subr.mxu0 0.0
    %6032 = vmatpush1.msra.mxu0 0.0
    %6033 = vmatprep.subr.mxu0 0.0
    %6034 = vmatpush1.msra.mxu0 0.0
    %6035 = vmatprep.subr.mxu0 0.0
    %6036 = vmatpush1.msra.mxu0 0.0
    %6037 = vmatprep.subr.mxu0 0.0
    %6038 = vmatpush1.msra.mxu0 0.0
    %6039 = vmatprep.subr.mxu0 0.0
    %6040 = vmatpush1.msra.mxu0 0.0
    %6041 = vmatprep.subr.mxu0 0.0
    %6042 = vmatpush1.msra.mxu0 0.0
    %6043 = vmatprep.subr.mxu0 0.0
    %6044 = vmatpush1.msra.mxu0 0.0
    %6045 = vmatprep.subr.mxu0 0.0
    %6046 = vmatpush1.msra.mxu0 0.0
    %6047 = vmatprep.subr.mxu0 0.0
    %6048 = vmatpush1.msra.mxu0 0.0
    %6049 = vmatprep.mubr.f32.mxu0 0.0
    %6050 = vmatmul.mubr.f32.gmra.mrb[0].mxu0 %v5983
    %v6051 = vpop.f32.mrb[0].mxu0
    %v6052 = vadd.f32 0.0, %v6051
    %v6053 = vpop.f32.mrb[0].mxu0
    %v6054 = vadd.f32 0.0, %v6053
    %6055 = vdwg.mxu0
    %6056 = vmatprep.subr.mxu0 0.0
    %6057 = vmatpush1.msra.mxu0 %v4721
    %6058 = vmatprep.subr.mxu0 0.0
    %6059 = vmatpush1.msra.mxu0 %v4724
    %6060 = vmatprep.subr.mxu0 0.0
    %6061 = vmatpush1.msra.mxu0 %v4727
    %6062 = vmatprep.subr.mxu0 0.0
    %6063 = vmatpush1.msra.mxu0 %v4730
    %6064 = vmatprep.subr.mxu0 0.0
    %6065 = vmatpush1.msra.mxu0 %v4733
    %6066 = vmatprep.subr.mxu0 0.0
    %6067 = vmatpush1.msra.mxu0 %v4736
    %6068 = vmatprep.subr.mxu0 0.0
    %6069 = vmatpush1.msra.mxu0 %v4739
    %6070 = vmatprep.subr.mxu0 0.0
    %6071 = vmatpush1.msra.mxu0 %v4742
    %6072 = vmatprep.subr.mxu0 0.0
    %6073 = vmatpush1.msra.mxu0 %v4745
    %6074 = vmatprep.subr.mxu0 0.0
    %6075 = vmatpush1.msra.mxu0 %v4748
    %6076 = vmatprep.subr.mxu0 0.0
    %6077 = vmatpush1.msra.mxu0 %v4751
    %6078 = vmatprep.subr.mxu0 0.0
    %6079 = vmatpush1.msra.mxu0 %v4754
    %6080 = vmatprep.subr.mxu0 0.0
    %6081 = vmatpush1.msra.mxu0 %v4757
    %6082 = vmatprep.subr.mxu0 0.0
    %6083 = vmatpush1.msra.mxu0 %v4760
    %6084 = vmatprep.subr.mxu0 0.0
    %6085 = vmatpush1.msra.mxu0 %v4763
    %6086 = vmatprep.subr.mxu0 0.0
    %6087 = vmatpush1.msra.mxu0 %v4766
    %6088 = vmatprep.subr.mxu0 0.0
    %6089 = vmatpush1.msra.mxu0 0.0
    %6090 = vmatprep.subr.mxu0 0.0
    %6091 = vmatpush1.msra.mxu0 0.0
    %6092 = vmatprep.subr.mxu0 0.0
    %6093 = vmatpush1.msra.mxu0 0.0
    %6094 = vmatprep.subr.mxu0 0.0
    %6095 = vmatpush1.msra.mxu0 0.0
    %6096 = vmatprep.subr.mxu0 0.0
    %6097 = vmatpush1.msra.mxu0 0.0
    %6098 = vmatprep.subr.mxu0 0.0
    %6099 = vmatpush1.msra.mxu0 0.0
    %6100 = vmatprep.subr.mxu0 0.0
    %6101 = vmatpush1.msra.mxu0 0.0
    %6102 = vmatprep.subr.mxu0 0.0
    %6103 = vmatpush1.msra.mxu0 0.0
    %6104 = vmatprep.subr.mxu0 0.0
    %6105 = vmatpush1.msra.mxu0 0.0
    %6106 = vmatprep.subr.mxu0 0.0
    %6107 = vmatpush1.msra.mxu0 0.0
    %6108 = vmatprep.subr.mxu0 0.0
    %6109 = vmatpush1.msra.mxu0 0.0
    %6110 = vmatprep.subr.mxu0 0.0
    %6111 = vmatpush1.msra.mxu0 0.0
    %6112 = vmatprep.subr.mxu0 0.0
    %6113 = vmatpush1.msra.mxu0 0.0
    %6114 = vmatprep.subr.mxu0 0.0
    %6115 = vmatpush1.msra.mxu0 0.0
    %6116 = vmatprep.subr.mxu0 0.0
    %6117 = vmatpush1.msra.mxu0 0.0
    %6118 = vmatprep.subr.mxu0 0.0
    %6119 = vmatpush1.msra.mxu0 0.0
    %6120 = vmatprep.mubr.f32.mxu0 0.0
    %6121 = vmatmul.mubr.f32.gmra.mrb[0].mxu0 %v5983
    %v6122 = vpop.f32.mrb[0].mxu0
    %v6123 = vadd.f32 0.0, %v6122
    %v6124 = vpop.f32.mrb[0].mxu0
    %6125 = vdwg.mxu0
    %v6128 = vcombine.low %v6052, %v6054
    %v6130 = vunpack.c.l.s4 1983009808
    %v6131 = vunpack.c.0.s8 %v6130
    %v6132 = vlaneseq
    %v6133 = vshrl.u32 %v6132, 7
    %v6134 = vsub.s32 %v6131, %v6133
    %v6135 = vrot.slane %v6128, %v6134
    %v6137 = vadd.f32 %v5984, %v6135
    %v6138 = vxor.u32 %v6137, 2147483648
    %v6139 = vmul.f32 %v6138, 1.442695
    %v6140 = vpow.pop %v6139
    %v6141 = vadd.f32 %v6140, 1.0
    %v6142 = vrcp.pop %v6141
    %v6143 = vmul.f32 1.0, %v6142
    %v6144 = vadd.f32 %v6123, %v4716
    %v6145 = vmul.f32 %v6143, %v6144
    %v6147 = vrot.slane %v5984, 4
    %v6149 = vadd.f32 %v6147, %v6145
    %v6150 = vtanh.pop %v6149
    %v6152 = vrot.slane %v6143, 2
    %v6154 = vsub.f32 1.0, %v6152
    %v6155 = vmul.f32 %v6154, %v6150
    %v6156 = vmul.f32 %v6152, %v5983
    %v6157 = vadd.f32 %v6155, %v6156
    %v6158 = vld [vmem:[%s13] sm:$0xff]
    %v6159 = vld [vmem:[%s13 + $0x8] sm:$0xff]
    %v6160 = vld [vmem:[%s13 + $0x10] sm:$0xff]
    %v6161 = vld [vmem:[%s13 + $0x18] sm:$0xff]
    %v6162 = vld [vmem:[%s13 + $0x20] sm:$0xff]
    %v6163 = vld [vmem:[%s13 + $0x28] sm:$0xff]
    %v6164 = vld [vmem:[%s13 + $0x30] sm:$0xff]
    %v6165 = vld [vmem:[%s13 + $0x38] sm:$0xff]
    %v6166 = vld [vmem:[%s13 + $0x40] sm:$0xff]
    %v6167 = vld [vmem:[%s13 + $0x48] sm:$0xff]
    %v6168 = vld [vmem:[%s13 + $0x50] sm:$0xff]
    %v6169 = vld [vmem:[%s13 + $0x58] sm:$0xff]
    %v6170 = vld [vmem:[%s13 + $0x60] sm:$0xff]
    %v6171 = vld [vmem:[%s13 + $0x68] sm:$0xff]
    %v6172 = vld [vmem:[%s13 + $0x70] sm:$0xff]
    %v6173 = vld [vmem:[%s13 + $0x78] sm:$0xff]
    %v6174 = vld [vmem:[#allocation7] sm:$0x1]
    %v6176 = vlaneseq
    %v6177 = vshrl.u32 %v6176, 7
    %v6178 = vsub.s32 0, %v6177
    %v6179 = vrot.slane %v6174, %v6178
    %6181 = vmatprep.subr.mxu0 0.0
    %6182 = vmatpush1.msra.mxu0 %v6158
    %6183 = vmatprep.subr.mxu0 0.0
    %6184 = vmatpush1.msra.mxu0 %v6159
    %6185 = vmatprep.subr.mxu0 0.0
    %6186 = vmatpush1.msra.mxu0 %v6160
    %6187 = vmatprep.subr.mxu0 0.0
    %6188 = vmatpush1.msra.mxu0 %v6161
    %6189 = vmatprep.subr.mxu0 0.0
    %6190 = vmatpush1.msra.mxu0 %v6162
    %6191 = vmatprep.subr.mxu0 0.0
    %6192 = vmatpush1.msra.mxu0 %v6163
    %6193 = vmatprep.subr.mxu0 0.0
    %6194 = vmatpush1.msra.mxu0 %v6164
    %6195 = vmatprep.subr.mxu0 0.0
    %6196 = vmatpush1.msra.mxu0 %v6165
    %6197 = vmatprep.subr.mxu0 0.0
    %6198 = vmatpush1.msra.mxu0 %v6166
    %6199 = vmatprep.subr.mxu0 0.0
    %6200 = vmatpush1.msra.mxu0 %v6167
    %6201 = vmatprep.subr.mxu0 0.0
    %6202 = vmatpush1.msra.mxu0 %v6168
    %6203 = vmatprep.subr.mxu0 0.0
    %6204 = vmatpush1.msra.mxu0 %v6169
    %6205 = vmatprep.subr.mxu0 0.0
    %6206 = vmatpush1.msra.mxu0 %v6170
    %6207 = vmatprep.subr.mxu0 0.0
    %6208 = vmatpush1.msra.mxu0 %v6171
    %6209 = vmatprep.subr.mxu0 0.0
    %6210 = vmatpush1.msra.mxu0 %v6172
    %6211 = vmatprep.subr.mxu0 0.0
    %6212 = vmatpush1.msra.mxu0 %v6173
    %6213 = vmatprep.subr.mxu0 0.0
    %6214 = vmatpush1.msra.mxu0 0.0
    %6215 = vmatprep.subr.mxu0 0.0
    %6216 = vmatpush1.msra.mxu0 0.0
    %6217 = vmatprep.subr.mxu0 0.0
    %6218 = vmatpush1.msra.mxu0 0.0
    %6219 = vmatprep.subr.mxu0 0.0
    %6220 = vmatpush1.msra.mxu0 0.0
    %6221 = vmatprep.subr.mxu0 0.0
    %6222 = vmatpush1.msra.mxu0 0.0
    %6223 = vmatprep.subr.mxu0 0.0
    %6224 = vmatpush1.msra.mxu0 0.0
    %6225 = vmatprep.subr.mxu0 0.0
    %6226 = vmatpush1.msra.mxu0 0.0
    %6227 = vmatprep.subr.mxu0 0.0
    %6228 = vmatpush1.msra.mxu0 0.0
    %6229 = vmatprep.subr.mxu0 0.0
    %6230 = vmatpush1.msra.mxu0 0.0
    %6231 = vmatprep.subr.mxu0 0.0
    %6232 = vmatpush1.msra.mxu0 0.0
    %6233 = vmatprep.subr.mxu0 0.0
    %6234 = vmatpush1.msra.mxu0 0.0
    %6235 = vmatprep.subr.mxu0 0.0
    %6236 = vmatpush1.msra.mxu0 0.0
    %6237 = vmatprep.subr.mxu0 0.0
    %6238 = vmatpush1.msra.mxu0 0.0
    %6239 = vmatprep.subr.mxu0 0.0
    %6240 = vmatpush1.msra.mxu0 0.0
    %6241 = vmatprep.subr.mxu0 0.0
    %6242 = vmatpush1.msra.mxu0 0.0
    %6243 = vmatprep.subr.mxu0 0.0
    %6244 = vmatpush1.msra.mxu0 0.0
    %6245 = vmatprep.mubr.f32.mxu0 0.0
    %6246 = vmatmul.mubr.f32.gmra.mrb[0].mxu0 %v6157
    %v6247 = vpop.f32.mrb[0].mxu0
    %v6248 = vadd.f32 %v6179, %v6247
    %v6249 = vpop.f32.mrb[0].mxu0
    %6250 = vdwg.mxu0
    %vm6251 = vcmask 1024
    %6252 = vst.msk [vmem:[%s15] sm:$0x3] %vm6251, %v6248
    // Predicated region
    $region66: #{radar_gru_forward.1} parent=1 // pred_check
      _
    $region67: #{radar_gru_forward.1} parent=1 // pred_check_branch
      %6254 = sbr.rel (0) target = $region69
    $region68: #{radar_gru_forward.1} parent=1 // pred_region
      _
    $region69: #{radar_gru_forward.1} parent=1 // pred_fallthru
      _
    // Predicated region
    $region70: #{radar_gru_forward.1} parent=1 // pred_check
      _
    $region71: #{radar_gru_forward.1} parent=1 // pred_check_branch
      %6256 = sbr.rel (0) target = $region73
    $region72: #{radar_gru_forward.1} parent=1 // pred_region
      _
    $region73: #{radar_gru_forward.1} parent=1 // pred_fallthru
      _
    %6257 = vsyncpa [#allocation9], 1
  %6258 = vsyncmov [#allocation4]
  %s6259 = vpop.sfrf %6258
  %p6260 = scmp.eq.s32.totalorder %s6259, 0
  %p6261 = pneg %p6260
  %6263 = shalt.err (%p6261)
  %s6264 = scalar_lea.sflag [#allocation4], 1
  %6265 = vsyncmov %s6264
  %s6266 = vpop.sfrf %6265
  %p6267 = scmp.eq.s32.totalorder %s6266, 0
  %p6268 = pneg %p6267
  %6270 = shalt.err (%p6268)
  %s6271 = scalar_lea.sflag [#allocation4], 2
  %6272 = vsyncmov %s6271
  %s6273 = vpop.sfrf %6272
  %p6274 = scmp.eq.s32.totalorder %s6273, 0
  %p6275 = pneg %p6274
  %6277 = shalt.err (%p6275)
  %s6278 = scalar_lea.sflag [#allocation4], 3
  %6279 = vsyncmov %s6278
  %s6280 = vpop.sfrf %6279
  %p6281 = scmp.eq.s32.totalorder %s6280, 0
  %p6282 = pneg %p6281
  %6284 = shalt.err (%p6282)

</llo_original>
